<compile_context>
chip_gen: v5e
topology: v5e:2x2
jax: 0.10.0
libtpu: 0.0.40
codegen_flags: <defaults>
</compile_context>

<pallas_src>
import jax
import jax.numpy as jnp
from jax.experimental import pallas as pl
from jax.experimental.pallas import tpu as pltpu


# ----------------------------------------------------------------------------
# Kernel helpers
# ----------------------------------------------------------------------------
def _zero_halo_rows(ref):
    """Zero the first / last time rows of a (Bb, T+2, C) padded scratch."""
    Bb, Tp2, C = ref.shape
    z = jnp.zeros((Bb, 1, C), ref.dtype)
    ref[:, pl.ds(0, 1), :] = z
    ref[:, pl.ds(Tp2 - 1, 1), :] = z


def _conv3_relu(src_ref, w_ref, b_ref):
    """k=3 'same' conv over time of a padded (Bb, T+2, Cin) bf16 scratch.

    Returns ReLU(conv) as (Bb*T, Cout) f32.  The three taps are MXU matmuls
    with bf16 operands and f32 accumulation; M = Bb*T (batch-blocked).
    """
    Bb, Tp2, Cin = src_ref.shape
    T = Tp2 - 2
    a0 = src_ref[:, pl.ds(0, T), :].reshape(Bb * T, Cin)
    a1 = src_ref[:, pl.ds(1, T), :].reshape(Bb * T, Cin)
    a2 = src_ref[:, pl.ds(2, T), :].reshape(Bb * T, Cin)
    y = (jnp.dot(a0, w_ref[0], preferred_element_type=jnp.float32)
         + jnp.dot(a1, w_ref[1], preferred_element_type=jnp.float32)
         + jnp.dot(a2, w_ref[2], preferred_element_type=jnp.float32)
         + b_ref[...])
    return jnp.maximum(y, 0.0)


# ----------------------------------------------------------------------------
# Fused kernel: conv1+pool -> conv2+pool -> conv3+avgpool+fc1
# ----------------------------------------------------------------------------
def _eeg_fused_kernel(x_ref, w1_ref, b1_ref, w2_ref, b2_ref, w3_ref, b3_ref,
                      fcw_ref, fcb_ref, o_ref, xp1, xp2, xp3):
    Bb, T, _ = x_ref.shape
    T2, T4 = T // 2, T // 4
    c1, c2, c3 = w1_ref.shape[2], w2_ref.shape[2], w3_ref.shape[2]

    # ---- Stage 1: conv1 (63->128, padded to 64 in-channels) + ReLU + maxpool
    _zero_halo_rows(xp1)
    xp1[:, pl.ds(1, T), :] = x_ref[...].astype(xp1.dtype)
    y1 = _conv3_relu(xp1, w1_ref, b1_ref)                 # (Bb*T, 128) f32
    # MaxPool1d(2,2): fold adjacent time rows into lanes, take elementwise max.
    y1p = y1.reshape(Bb, T2, 2 * c1)                      # order-preserving
    p1 = jnp.maximum(y1p[:, :, :c1], y1p[:, :, c1:])      # (Bb, T/2, 128)

    # ---- Stage 2: conv2 (128->256) + ReLU + maxpool
    _zero_halo_rows(xp2)
    xp2[:, pl.ds(1, T2), :] = p1.astype(xp2.dtype)
    y2 = _conv3_relu(xp2, w2_ref, b2_ref)                 # (Bb*T/2, 256) f32
    y2p = y2.reshape(Bb, T4, 2 * c2)
    p2 = jnp.maximum(y2p[:, :, :c2], y2p[:, :, c2:])      # (Bb, T/4, 256)

    # ---- Stage 3: conv3 (256->512) + ReLU + AdaptiveAvgPool1d(1) + fc1
    _zero_halo_rows(xp3)
    xp3[:, pl.ds(1, T4), :] = p2.astype(xp3.dtype)
    y3 = _conv3_relu(xp3, w3_ref, b3_ref)                 # (Bb*T/4, 512) f32
    h = jnp.sum(y3.reshape(Bb, T4, c3), axis=1) * (1.0 / T4)   # (Bb, 512)
    out = (jnp.dot(h.astype(jnp.bfloat16), fcw_ref[...],
                   preferred_element_type=jnp.float32)
           + fcb_ref[...])                                # (Bb, 512) f32
    o_ref[...] = out.astype(o_ref.dtype)


# ----------------------------------------------------------------------------
# Wrapper
# ----------------------------------------------------------------------------
def eeg_encoder_forward(x_nct, params, *, block_batch=8):
    """x_nct: (B, 63, T) matching PyTorch NCW input. Returns (B, 512) f32."""
    B, Cin, T = x_nct.shape
    assert Cin == 63, Cin
    assert T % 4 == 0, "two MaxPool1d(2,2) stages require T % 4 == 0"

    bb = min(block_batch, B)
    while B % bb != 0:            # pick a batch block that divides B
        bb -= 1

    # Channels-last, pad 63 -> 64 channels, cast to bf16 (one fused XLA copy).
    x = jnp.transpose(x_nct, (0, 2, 1))                       # (B, T, 63)
    x = jnp.pad(x, ((0, 0), (0, 0), (0, 1))).astype(jnp.bfloat16)  # (B, T, 64)

    w1 = jnp.pad(params["w1"], ((0, 0), (0, 1), (0, 0))).astype(jnp.bfloat16)
    w2 = params["w2"].astype(jnp.bfloat16)
    w3 = params["w3"].astype(jnp.bfloat16)
    fcw = params["fcw"].astype(jnp.bfloat16)
    b1 = params["b1"].reshape(1, -1).astype(jnp.float32)
    b2 = params["b2"].reshape(1, -1).astype(jnp.float32)
    b3 = params["b3"].reshape(1, -1).astype(jnp.float32)
    fcb = params["fcb"].reshape(1, -1).astype(jnp.float32)

    T2, T4 = T // 2, T // 4
    c1, c2, c3 = w1.shape[2], w2.shape[2], w3.shape[2]

    return pl.pallas_call(
        _eeg_fused_kernel,
        out_shape=jax.ShapeDtypeStruct((B, c3), jnp.float32),
        grid_spec=pltpu.PrefetchScalarGridSpec(
            num_scalar_prefetch=0,
            grid=(B // bb,),
            in_specs=[
                pl.BlockSpec((bb, T, 64), lambda i: (i, 0, 0)),   # x (bf16)
                pl.BlockSpec(w1.shape, lambda i: (0, 0, 0)),      # resident weights
                pl.BlockSpec(b1.shape, lambda i: (0, 0)),
                pl.BlockSpec(w2.shape, lambda i: (0, 0, 0)),
                pl.BlockSpec(b2.shape, lambda i: (0, 0)),
                pl.BlockSpec(w3.shape, lambda i: (0, 0, 0)),
                pl.BlockSpec(b3.shape, lambda i: (0, 0)),
                pl.BlockSpec(fcw.shape, lambda i: (0, 0)),
                pl.BlockSpec(fcb.shape, lambda i: (0, 0)),
            ],
            out_specs=pl.BlockSpec((bb, c3), lambda i: (i, 0)),
            scratch_shapes=[
                pltpu.VMEM((bb, T + 2, 64), jnp.bfloat16),    # padded stage-1 input
                pltpu.VMEM((bb, T2 + 2, c1), jnp.bfloat16),   # padded stage-2 input
                pltpu.VMEM((bb, T4 + 2, c2), jnp.bfloat16),   # padded stage-3 input
            ],
        ),
        compiler_params=pltpu.CompilerParams(
            dimension_semantics=("parallel",)),
    )(x, w1, b1, w2, b2, w3, b3, fcw, fcb)


# ----------------------------------------------------------------------------
# Pure-JAX f32 reference (semantics check for the Pallas path)
# ----------------------------------------------------------------------------
def _ref_conv(x, w, b):
    T = x.shape[1]
    xp = jnp.pad(x, ((0, 0), (1, 1), (0, 0)))
    return (jnp.einsum("btc,cd->btd", xp[:, 0:T], w[0])
            + jnp.einsum("btc,cd->btd", xp[:, 1:T + 1], w[1])
            + jnp.einsum("btc,cd->btd", xp[:, 2:T + 2], w[2])
            + b[None, None, :])


def ref_forward(x_nct, params):
    x = jnp.transpose(x_nct, (0, 2, 1))
    x = jax.nn.relu(_ref_conv(x, params["w1"], params["b1"]))
    x = jnp.max(x.reshape(x.shape[0], x.shape[1] // 2, 2, x.shape[2]), axis=2)
    x = jax.nn.relu(_ref_conv(x, params["w2"], params["b2"]))
    x = jnp.max(x.reshape(x.shape[0], x.shape[1] // 2, 2, x.shape[2]), axis=2)
    x = jax.nn.relu(_ref_conv(x, params["w3"], params["b3"]))
    h = jnp.mean(x, axis=1)
    return h @ params["fcw"] + params["fcb"]


# ----------------------------------------------------------------------------
# Main
# ----------------------------------------------------------------------------
if __name__ == "__main__":
    key = jax.random.PRNGKey(0)
    ks = jax.random.split(key, 10)

    # Channels fixed by the module (63 -> 128 -> 256 -> 512); small batch/seq.
    B, C_IN, T = 16, 63, 32

    scale = 0.05
    params = {
        "w1": jax.random.normal(ks[0], (3, 63, 128), jnp.float32) * scale,
        "b1": jax.random.normal(ks[1], (128,), jnp.float32) * scale,
        "w2": jax.random.normal(ks[2], (3, 128, 256), jnp.float32) * scale,
        "b2": jax.random.normal(ks[3], (256,), jnp.float32) * scale,
        "w3": jax.random.normal(ks[4], (3, 256, 512), jnp.float32) * scale,
        "b3": jax.random.normal(ks[5], (512,), jnp.float32) * scale,
        "fcw": jax.random.normal(ks[6], (512, 512), jnp.float32) * scale,
        "fcb": jax.random.normal(ks[7], (512,), jnp.float32) * scale,
        # logit_scale exists in the module but is unused in forward().
    }

    x = jax.random.normal(ks[8], (B, C_IN, T), jnp.float32)  # PyTorch NCW input

    out = jax.jit(eeg_encoder_forward)(x, params)
    out = jax.block_until_ready(out)
    assert out.shape == (B, 512), out.shape

    ref = ref_forward(x, params)
    # bf16 operands with f32 accumulation -> slightly relaxed tolerance.
    if not jnp.allclose(out, ref, atol=5e-2, rtol=5e-2):
        max_err = jnp.max(jnp.abs(out - ref))
        raise AssertionError(f"Pallas output mismatch, max abs err = {max_err}")

    print("KERNEL_OK")
</pallas_src>

<mosaic_0001>
module attributes {stable_mosaic.version = 11 : i64} {
  func.func @_eeg_fused_kernel(%arg0: i32, %arg1: memref<8x32x64xbf16, #tpu.memory_space<vmem>>, %arg2: memref<3x64x128xbf16, #tpu.memory_space<vmem>>, %arg3: memref<1x128xf32, #tpu.memory_space<vmem>>, %arg4: memref<3x128x256xbf16, #tpu.memory_space<vmem>>, %arg5: memref<1x256xf32, #tpu.memory_space<vmem>>, %arg6: memref<3x256x512xbf16, #tpu.memory_space<vmem>>, %arg7: memref<1x512xf32, #tpu.memory_space<vmem>>, %arg8: memref<512x512xbf16, #tpu.memory_space<vmem>>, %arg9: memref<1x512xf32, #tpu.memory_space<vmem>>, %arg10: memref<8x512xf32, #tpu.memory_space<vmem>>, %arg11: memref<8x34x64xbf16, #tpu.memory_space<vmem>>, %arg12: memref<8x18x128xbf16, #tpu.memory_space<vmem>>, %arg13: memref<8x10x256xbf16, #tpu.memory_space<vmem>>) attributes {dimension_semantics = [#tpu.dimension_semantics<parallel>], iteration_bounds = array<i64: 2>, scalar_prefetch = 0 : i64, scratch_operands = 3 : i64, tpu.core_type = #tpu.core_type<tc>, window_params = [{transform_indices = @transform_0, window_bounds = array<i64: 8, 32, 64>}, {pipeline_mode = #tpu.pipeline_mode<synchronous>, transform_indices = @transform_1, window_bounds = array<i64: 3, 64, 128>}, {pipeline_mode = #tpu.pipeline_mode<synchronous>, transform_indices = @transform_2, window_bounds = array<i64: 1, 128>}, {pipeline_mode = #tpu.pipeline_mode<synchronous>, transform_indices = @transform_3, window_bounds = array<i64: 3, 128, 256>}, {pipeline_mode = #tpu.pipeline_mode<synchronous>, transform_indices = @transform_4, window_bounds = array<i64: 1, 256>}, {pipeline_mode = #tpu.pipeline_mode<synchronous>, transform_indices = @transform_5, window_bounds = array<i64: 3, 256, 512>}, {pipeline_mode = #tpu.pipeline_mode<synchronous>, transform_indices = @transform_6, window_bounds = array<i64: 1, 512>}, {pipeline_mode = #tpu.pipeline_mode<synchronous>, transform_indices = @transform_7, window_bounds = array<i64: 512, 512>}, {pipeline_mode = #tpu.pipeline_mode<synchronous>, transform_indices = @transform_8, window_bounds = array<i64: 1, 512>}, {transform_indices = @transform_9, window_bounds = array<i64: 8, 512>}]} {
    %cst = arith.constant 0.000000e+00 : bf16
    %0 = vector.broadcast %cst : bf16 to vector<8x1x64xbf16>
    %c0 = arith.constant 0 : index
    %c0_0 = arith.constant 0 : index
    %c0_1 = arith.constant 0 : index
    %1 = vector.load %arg11[%c0, %c0_0, %c0_1] : memref<8x34x64xbf16, #tpu.memory_space<vmem>>, vector<8x1x64xbf16>
    tpu.vector_store %arg11[%c0, %c0_0, %c0_1], %0 {strides = array<i32>} : memref<8x34x64xbf16, #tpu.memory_space<vmem>>, vector<8x1x64xbf16>,
    %c0_2 = arith.constant 0 : index
    %c33 = arith.constant 33 : index
    %c0_3 = arith.constant 0 : index
    %2 = vector.load %arg11[%c0_2, %c33, %c0_3] : memref<8x34x64xbf16, #tpu.memory_space<vmem>>, vector<8x1x64xbf16>
    tpu.vector_store %arg11[%c0_2, %c33, %c0_3], %0 {strides = array<i32>} : memref<8x34x64xbf16, #tpu.memory_space<vmem>>, vector<8x1x64xbf16>,
    %c0_4 = arith.constant 0 : index
    %c0_5 = arith.constant 0 : index
    %c0_6 = arith.constant 0 : index
    %3 = vector.load %arg1[%c0_4, %c0_5, %c0_6] : memref<8x32x64xbf16, #tpu.memory_space<vmem>>, vector<8x32x64xbf16>
    %c0_7 = arith.constant 0 : index
    %c1 = arith.constant 1 : index
    %c0_8 = arith.constant 0 : index
    %4 = vector.load %arg11[%c0_7, %c1, %c0_8] : memref<8x34x64xbf16, #tpu.memory_space<vmem>>, vector<8x32x64xbf16>
    tpu.vector_store %arg11[%c0_7, %c1, %c0_8], %3 {strides = array<i32>} : memref<8x34x64xbf16, #tpu.memory_space<vmem>>, vector<8x32x64xbf16>,
    %c0_9 = arith.constant 0 : index
    %c0_10 = arith.constant 0 : index
    %c0_11 = arith.constant 0 : index
    %5 = vector.load %arg11[%c0_9, %c0_10, %c0_11] : memref<8x34x64xbf16, #tpu.memory_space<vmem>>, vector<8x32x64xbf16>
    %6 = vector.shape_cast %5 : vector<8x32x64xbf16> to vector<256x64xbf16>
    %c0_12 = arith.constant 0 : index
    %c1_13 = arith.constant 1 : index
    %c0_14 = arith.constant 0 : index
    %7 = vector.load %arg11[%c0_12, %c1_13, %c0_14] : memref<8x34x64xbf16, #tpu.memory_space<vmem>>, vector<8x32x64xbf16>
    %8 = vector.shape_cast %7 : vector<8x32x64xbf16> to vector<256x64xbf16>
    %c0_15 = arith.constant 0 : index
    %c2 = arith.constant 2 : index
    %c0_16 = arith.constant 0 : index
    %9 = vector.load %arg11[%c0_15, %c2, %c0_16] : memref<8x34x64xbf16, #tpu.memory_space<vmem>>, vector<8x32x64xbf16>
    %10 = vector.shape_cast %9 : vector<8x32x64xbf16> to vector<256x64xbf16>
    %c0_17 = arith.constant 0 : index
    %c0_18 = arith.constant 0 : index
    %c0_19 = arith.constant 0 : index
    %11 = vector.load %arg2[%c0_17, %c0_18, %c0_19] : memref<3x64x128xbf16, #tpu.memory_space<vmem>>, vector<1x64x128xbf16>
    %12 = vector.shape_cast %11 : vector<1x64x128xbf16> to vector<64x128xbf16>
    %cst_20 = arith.constant dense<0.000000e+00> : vector<256x128xf32>
    %13 = tpu.matmul %6, %12, %cst_20 {dimension_numbers = #tpu.dot_dimension_numbers<[1], [0], [0], [1], [0, 0, 1, 1], [], []>} : vector<256x64xbf16>, vector<64x128xbf16>, vector<256x128xf32> -> vector<256x128xf32>
    %c1_21 = arith.constant 1 : index
    %c0_22 = arith.constant 0 : index
    %c0_23 = arith.constant 0 : index
    %14 = vector.load %arg2[%c1_21, %c0_22, %c0_23] : memref<3x64x128xbf16, #tpu.memory_space<vmem>>, vector<1x64x128xbf16>
    %15 = vector.shape_cast %14 : vector<1x64x128xbf16> to vector<64x128xbf16>
    %cst_24 = arith.constant dense<0.000000e+00> : vector<256x128xf32>
    %16 = tpu.matmul %8, %15, %cst_24 {dimension_numbers = #tpu.dot_dimension_numbers<[1], [0], [0], [1], [0, 0, 1, 1], [], []>} : vector<256x64xbf16>, vector<64x128xbf16>, vector<256x128xf32> -> vector<256x128xf32>
    %17 = arith.addf %13, %16 : vector<256x128xf32>
    %c2_25 = arith.constant 2 : index
    %c0_26 = arith.constant 0 : index
    %c0_27 = arith.constant 0 : index
    %18 = vector.load %arg2[%c2_25, %c0_26, %c0_27] : memref<3x64x128xbf16, #tpu.memory_space<vmem>>, vector<1x64x128xbf16>
    %19 = vector.shape_cast %18 : vector<1x64x128xbf16> to vector<64x128xbf16>
    %cst_28 = arith.constant dense<0.000000e+00> : vector<256x128xf32>
    %20 = tpu.matmul %10, %19, %cst_28 {dimension_numbers = #tpu.dot_dimension_numbers<[1], [0], [0], [1], [0, 0, 1, 1], [], []>} : vector<256x64xbf16>, vector<64x128xbf16>, vector<256x128xf32> -> vector<256x128xf32>
    %21 = arith.addf %17, %20 : vector<256x128xf32>
    %c0_29 = arith.constant 0 : index
    %c0_30 = arith.constant 0 : index
    %22 = vector.load %arg3[%c0_29, %c0_30] : memref<1x128xf32, #tpu.memory_space<vmem>>, vector<1x128xf32>
    %23 = vector.broadcast %22 : vector<1x128xf32> to vector<256x128xf32>
    %24 = arith.addf %21, %23 : vector<256x128xf32>
    %cst_31 = arith.constant 0.000000e+00 : f32
    %25 = vector.broadcast %cst_31 : f32 to vector<256x128xf32>
    %26 = arith.maximumf %24, %25 : vector<256x128xf32>
    %27 = vector.shape_cast %26 : vector<256x128xf32> to vector<8x16x256xf32>
    %28 = vector.extract_strided_slice %27 {offsets = [0, 0, 0], sizes = [8, 16, 128], strides = [1, 1, 1]} : vector<8x16x256xf32> to vector<8x16x128xf32>
    %29 = vector.extract_strided_slice %27 {offsets = [0, 0, 128], sizes = [8, 16, 128], strides = [1, 1, 1]} : vector<8x16x256xf32> to vector<8x16x128xf32>
    %30 = arith.maximumf %28, %29 : vector<8x16x128xf32>
    %cst_32 = arith.constant 0.000000e+00 : bf16
    %31 = vector.broadcast %cst_32 : bf16 to vector<8x1x128xbf16>
    %c0_33 = arith.constant 0 : index
    %c0_34 = arith.constant 0 : index
    %c0_35 = arith.constant 0 : index
    %32 = vector.load %arg12[%c0_33, %c0_34, %c0_35] : memref<8x18x128xbf16, #tpu.memory_space<vmem>>, vector<8x1x128xbf16>
    tpu.vector_store %arg12[%c0_33, %c0_34, %c0_35], %31 {strides = array<i32>} : memref<8x18x128xbf16, #tpu.memory_space<vmem>>, vector<8x1x128xbf16>,
    %c0_36 = arith.constant 0 : index
    %c17 = arith.constant 17 : index
    %c0_37 = arith.constant 0 : index
    %33 = vector.load %arg12[%c0_36, %c17, %c0_37] : memref<8x18x128xbf16, #tpu.memory_space<vmem>>, vector<8x1x128xbf16>
    tpu.vector_store %arg12[%c0_36, %c17, %c0_37], %31 {strides = array<i32>} : memref<8x18x128xbf16, #tpu.memory_space<vmem>>, vector<8x1x128xbf16>,
    %34 = arith.truncf %30 : vector<8x16x128xf32> to vector<8x16x128xbf16>
    %c0_38 = arith.constant 0 : index
    %c1_39 = arith.constant 1 : index
    %c0_40 = arith.constant 0 : index
    %35 = vector.load %arg12[%c0_38, %c1_39, %c0_40] : memref<8x18x128xbf16, #tpu.memory_space<vmem>>, vector<8x16x128xbf16>
    tpu.vector_store %arg12[%c0_38, %c1_39, %c0_40], %34 {strides = array<i32>} : memref<8x18x128xbf16, #tpu.memory_space<vmem>>, vector<8x16x128xbf16>,
    %c0_41 = arith.constant 0 : index
    %c0_42 = arith.constant 0 : index
    %c0_43 = arith.constant 0 : index
    %36 = vector.load %arg12[%c0_41, %c0_42, %c0_43] : memref<8x18x128xbf16, #tpu.memory_space<vmem>>, vector<8x16x128xbf16>
    %37 = vector.shape_cast %36 : vector<8x16x128xbf16> to vector<128x128xbf16>
    %c0_44 = arith.constant 0 : index
    %c1_45 = arith.constant 1 : index
    %c0_46 = arith.constant 0 : index
    %38 = vector.load %arg12[%c0_44, %c1_45, %c0_46] : memref<8x18x128xbf16, #tpu.memory_space<vmem>>, vector<8x16x128xbf16>
    %39 = vector.shape_cast %38 : vector<8x16x128xbf16> to vector<128x128xbf16>
    %c0_47 = arith.constant 0 : index
    %c2_48 = arith.constant 2 : index
    %c0_49 = arith.constant 0 : index
    %40 = vector.load %arg12[%c0_47, %c2_48, %c0_49] : memref<8x18x128xbf16, #tpu.memory_space<vmem>>, vector<8x16x128xbf16>
    %41 = vector.shape_cast %40 : vector<8x16x128xbf16> to vector<128x128xbf16>
    %c0_50 = arith.constant 0 : index
    %c0_51 = arith.constant 0 : index
    %c0_52 = arith.constant 0 : index
    %42 = vector.load %arg4[%c0_50, %c0_51, %c0_52] : memref<3x128x256xbf16, #tpu.memory_space<vmem>>, vector<1x128x256xbf16>
    %43 = vector.shape_cast %42 : vector<1x128x256xbf16> to vector<128x256xbf16>
    %cst_53 = arith.constant dense<0.000000e+00> : vector<128x256xf32>
    %44 = tpu.matmul %37, %43, %cst_53 {dimension_numbers = #tpu.dot_dimension_numbers<[1], [0], [0], [1], [0, 0, 1, 1], [], []>} : vector<128x128xbf16>, vector<128x256xbf16>, vector<128x256xf32> -> vector<128x256xf32>
    %c1_54 = arith.constant 1 : index
    %c0_55 = arith.constant 0 : index
    %c0_56 = arith.constant 0 : index
    %45 = vector.load %arg4[%c1_54, %c0_55, %c0_56] : memref<3x128x256xbf16, #tpu.memory_space<vmem>>, vector<1x128x256xbf16>
    %46 = vector.shape_cast %45 : vector<1x128x256xbf16> to vector<128x256xbf16>
    %cst_57 = arith.constant dense<0.000000e+00> : vector<128x256xf32>
    %47 = tpu.matmul %39, %46, %cst_57 {dimension_numbers = #tpu.dot_dimension_numbers<[1], [0], [0], [1], [0, 0, 1, 1], [], []>} : vector<128x128xbf16>, vector<128x256xbf16>, vector<128x256xf32> -> vector<128x256xf32>
    %48 = arith.addf %44, %47 : vector<128x256xf32>
    %c2_58 = arith.constant 2 : index
    %c0_59 = arith.constant 0 : index
    %c0_60 = arith.constant 0 : index
    %49 = vector.load %arg4[%c2_58, %c0_59, %c0_60] : memref<3x128x256xbf16, #tpu.memory_space<vmem>>, vector<1x128x256xbf16>
    %50 = vector.shape_cast %49 : vector<1x128x256xbf16> to vector<128x256xbf16>
    %cst_61 = arith.constant dense<0.000000e+00> : vector<128x256xf32>
    %51 = tpu.matmul %41, %50, %cst_61 {dimension_numbers = #tpu.dot_dimension_numbers<[1], [0], [0], [1], [0, 0, 1, 1], [], []>} : vector<128x128xbf16>, vector<128x256xbf16>, vector<128x256xf32> -> vector<128x256xf32>
    %52 = arith.addf %48, %51 : vector<128x256xf32>
    %c0_62 = arith.constant 0 : index
    %c0_63 = arith.constant 0 : index
    %53 = vector.load %arg5[%c0_62, %c0_63] : memref<1x256xf32, #tpu.memory_space<vmem>>, vector<1x256xf32>
    %54 = vector.broadcast %53 : vector<1x256xf32> to vector<128x256xf32>
    %55 = arith.addf %52, %54 : vector<128x256xf32>
    %cst_64 = arith.constant 0.000000e+00 : f32
    %56 = vector.broadcast %cst_64 : f32 to vector<128x256xf32>
    %57 = arith.maximumf %55, %56 : vector<128x256xf32>
    %58 = vector.shape_cast %57 : vector<128x256xf32> to vector<8x8x512xf32>
    %59 = vector.extract_strided_slice %58 {offsets = [0, 0, 0], sizes = [8, 8, 256], strides = [1, 1, 1]} : vector<8x8x512xf32> to vector<8x8x256xf32>
    %60 = vector.extract_strided_slice %58 {offsets = [0, 0, 256], sizes = [8, 8, 256], strides = [1, 1, 1]} : vector<8x8x512xf32> to vector<8x8x256xf32>
    %61 = arith.maximumf %59, %60 : vector<8x8x256xf32>
    %cst_65 = arith.constant 0.000000e+00 : bf16
    %62 = vector.broadcast %cst_65 : bf16 to vector<8x1x256xbf16>
    %c0_66 = arith.constant 0 : index
    %c0_67 = arith.constant 0 : index
    %c0_68 = arith.constant 0 : index
    %63 = vector.load %arg13[%c0_66, %c0_67, %c0_68] : memref<8x10x256xbf16, #tpu.memory_space<vmem>>, vector<8x1x256xbf16>
    tpu.vector_store %arg13[%c0_66, %c0_67, %c0_68], %62 {strides = array<i32>} : memref<8x10x256xbf16, #tpu.memory_space<vmem>>, vector<8x1x256xbf16>,
    %c0_69 = arith.constant 0 : index
    %c9 = arith.constant 9 : index
    %c0_70 = arith.constant 0 : index
    %64 = vector.load %arg13[%c0_69, %c9, %c0_70] : memref<8x10x256xbf16, #tpu.memory_space<vmem>>, vector<8x1x256xbf16>
    tpu.vector_store %arg13[%c0_69, %c9, %c0_70], %62 {strides = array<i32>} : memref<8x10x256xbf16, #tpu.memory_space<vmem>>, vector<8x1x256xbf16>,
    %65 = arith.truncf %61 : vector<8x8x256xf32> to vector<8x8x256xbf16>
    %c0_71 = arith.constant 0 : index
    %c1_72 = arith.constant 1 : index
    %c0_73 = arith.constant 0 : index
    %66 = vector.load %arg13[%c0_71, %c1_72, %c0_73] : memref<8x10x256xbf16, #tpu.memory_space<vmem>>, vector<8x8x256xbf16>
    tpu.vector_store %arg13[%c0_71, %c1_72, %c0_73], %65 {strides = array<i32>} : memref<8x10x256xbf16, #tpu.memory_space<vmem>>, vector<8x8x256xbf16>,
    %c0_74 = arith.constant 0 : index
    %c0_75 = arith.constant 0 : index
    %c0_76 = arith.constant 0 : index
    %67 = vector.load %arg13[%c0_74, %c0_75, %c0_76] : memref<8x10x256xbf16, #tpu.memory_space<vmem>>, vector<8x8x256xbf16>
    %68 = vector.shape_cast %67 : vector<8x8x256xbf16> to vector<64x256xbf16>
    %c0_77 = arith.constant 0 : index
    %c1_78 = arith.constant 1 : index
    %c0_79 = arith.constant 0 : index
    %69 = vector.load %arg13[%c0_77, %c1_78, %c0_79] : memref<8x10x256xbf16, #tpu.memory_space<vmem>>, vector<8x8x256xbf16>
    %70 = vector.shape_cast %69 : vector<8x8x256xbf16> to vector<64x256xbf16>
    %c0_80 = arith.constant 0 : index
    %c2_81 = arith.constant 2 : index
    %c0_82 = arith.constant 0 : index
    %71 = vector.load %arg13[%c0_80, %c2_81, %c0_82] : memref<8x10x256xbf16, #tpu.memory_space<vmem>>, vector<8x8x256xbf16>
    %72 = vector.shape_cast %71 : vector<8x8x256xbf16> to vector<64x256xbf16>
    %c0_83 = arith.constant 0 : index
    %c0_84 = arith.constant 0 : index
    %c0_85 = arith.constant 0 : index
    %73 = vector.load %arg6[%c0_83, %c0_84, %c0_85] : memref<3x256x512xbf16, #tpu.memory_space<vmem>>, vector<1x256x512xbf16>
    %74 = vector.shape_cast %73 : vector<1x256x512xbf16> to vector<256x512xbf16>
    %cst_86 = arith.constant dense<0.000000e+00> : vector<64x512xf32>
    %75 = tpu.matmul %68, %74, %cst_86 {dimension_numbers = #tpu.dot_dimension_numbers<[1], [0], [0], [1], [0, 0, 1, 1], [], []>} : vector<64x256xbf16>, vector<256x512xbf16>, vector<64x512xf32> -> vector<64x512xf32>
    %c1_87 = arith.constant 1 : index
    %c0_88 = arith.constant 0 : index
    %c0_89 = arith.constant 0 : index
    %76 = vector.load %arg6[%c1_87, %c0_88, %c0_89] : memref<3x256x512xbf16, #tpu.memory_space<vmem>>, vector<1x256x512xbf16>
    %77 = vector.shape_cast %76 : vector<1x256x512xbf16> to vector<256x512xbf16>
    %cst_90 = arith.constant dense<0.000000e+00> : vector<64x512xf32>
    %78 = tpu.matmul %70, %77, %cst_90 {dimension_numbers = #tpu.dot_dimension_numbers<[1], [0], [0], [1], [0, 0, 1, 1], [], []>} : vector<64x256xbf16>, vector<256x512xbf16>, vector<64x512xf32> -> vector<64x512xf32>
    %79 = arith.addf %75, %78 : vector<64x512xf32>
    %c2_91 = arith.constant 2 : index
    %c0_92 = arith.constant 0 : index
    %c0_93 = arith.constant 0 : index
    %80 = vector.load %arg6[%c2_91, %c0_92, %c0_93] : memref<3x256x512xbf16, #tpu.memory_space<vmem>>, vector<1x256x512xbf16>
    %81 = vector.shape_cast %80 : vector<1x256x512xbf16> to vector<256x512xbf16>
    %cst_94 = arith.constant dense<0.000000e+00> : vector<64x512xf32>
    %82 = tpu.matmul %72, %81, %cst_94 {dimension_numbers = #tpu.dot_dimension_numbers<[1], [0], [0], [1], [0, 0, 1, 1], [], []>} : vector<64x256xbf16>, vector<256x512xbf16>, vector<64x512xf32> -> vector<64x512xf32>
    %83 = arith.addf %79, %82 : vector<64x512xf32>
    %c0_95 = arith.constant 0 : index
    %c0_96 = arith.constant 0 : index
    %84 = vector.load %arg7[%c0_95, %c0_96] : memref<1x512xf32, #tpu.memory_space<vmem>>, vector<1x512xf32>
    %85 = vector.broadcast %84 : vector<1x512xf32> to vector<64x512xf32>
    %86 = arith.addf %83, %85 : vector<64x512xf32>
    %cst_97 = arith.constant 0.000000e+00 : f32
    %87 = vector.broadcast %cst_97 : f32 to vector<64x512xf32>
    %88 = arith.maximumf %86, %87 : vector<64x512xf32>
    %89 = vector.shape_cast %88 : vector<64x512xf32> to vector<8x8x512xf32>
    %cst_98 = arith.constant dense<0.000000e+00> : vector<8x512xf32>
    %90 = vector.multi_reduction <add>, %89, %cst_98 [1] : vector<8x8x512xf32> to vector<8x512xf32>
    %cst_99 = arith.constant 1.250000e-01 : f32
    %91 = vector.broadcast %cst_99 : f32 to vector<8x512xf32>
    %92 = arith.mulf %90, %91 : vector<8x512xf32>
    %93 = arith.truncf %92 : vector<8x512xf32> to vector<8x512xbf16>
    %c0_100 = arith.constant 0 : index
    %c0_101 = arith.constant 0 : index
    %94 = vector.load %arg8[%c0_100, %c0_101] : memref<512x512xbf16, #tpu.memory_space<vmem>>, vector<512x512xbf16>
    %cst_102 = arith.constant dense<0.000000e+00> : vector<8x512xf32>
    %95 = tpu.matmul %93, %94, %cst_102 {dimension_numbers = #tpu.dot_dimension_numbers<[1], [0], [0], [1], [0, 0, 1, 1], [], []>} : vector<8x512xbf16>, vector<512x512xbf16>, vector<8x512xf32> -> vector<8x512xf32>
    %c0_103 = arith.constant 0 : index
    %c0_104 = arith.constant 0 : index
    %96 = vector.load %arg9[%c0_103, %c0_104] : memref<1x512xf32, #tpu.memory_space<vmem>>, vector<1x512xf32>
    %97 = vector.broadcast %96 : vector<1x512xf32> to vector<8x512xf32>
    %98 = arith.addf %95, %97 : vector<8x512xf32>
    %c0_105 = arith.constant 0 : index
    %c0_106 = arith.constant 0 : index
    %99 = vector.load %arg10[%c0_105, %c0_106] : memref<8x512xf32, #tpu.memory_space<vmem>>, vector<8x512xf32>
    tpu.vector_store %arg10[%c0_105, %c0_106], %98 {strides = array<i32>} : memref<8x512xf32, #tpu.memory_space<vmem>>, vector<8x512xf32>,
    return
  }
  func.func @transform_0(%arg0: i32) -> (i32, i32, i32) {
    %c0_i32 = arith.constant 0 : i32
    %c0_i32_0 = arith.constant 0 : i32
    %c0_i32_1 = arith.constant 0 : i32
    return %arg0, %c0_i32, %c0_i32_0 : i32, i32, i32
  }
  func.func @transform_1(%arg0: i32) -> (i32, i32, i32) {
    %c0_i32 = arith.constant 0 : i32
    %c0_i32_0 = arith.constant 0 : i32
    %c0_i32_1 = arith.constant 0 : i32
    %c0_i32_2 = arith.constant 0 : i32
    return %c0_i32, %c0_i32_0, %c0_i32_1 : i32, i32, i32
  }
  func.func @transform_2(%arg0: i32) -> (i32, i32) {
    %c0_i32 = arith.constant 0 : i32
    %c0_i32_0 = arith.constant 0 : i32
    %c0_i32_1 = arith.constant 0 : i32
    return %c0_i32, %c0_i32_0 : i32, i32
  }
  func.func @transform_3(%arg0: i32) -> (i32, i32, i32) {
    %c0_i32 = arith.constant 0 : i32
    %c0_i32_0 = arith.constant 0 : i32
    %c0_i32_1 = arith.constant 0 : i32
    %c0_i32_2 = arith.constant 0 : i32
    return %c0_i32, %c0_i32_0, %c0_i32_1 : i32, i32, i32
  }
  func.func @transform_4(%arg0: i32) -> (i32, i32) {
    %c0_i32 = arith.constant 0 : i32
    %c0_i32_0 = arith.constant 0 : i32
    %c0_i32_1 = arith.constant 0 : i32
    return %c0_i32, %c0_i32_0 : i32, i32
  }
  func.func @transform_5(%arg0: i32) -> (i32, i32, i32) {
    %c0_i32 = arith.constant 0 : i32
    %c0_i32_0 = arith.constant 0 : i32
    %c0_i32_1 = arith.constant 0 : i32
    %c0_i32_2 = arith.constant 0 : i32
    return %c0_i32, %c0_i32_0, %c0_i32_1 : i32, i32, i32
  }
  func.func @transform_6(%arg0: i32) -> (i32, i32) {
    %c0_i32 = arith.constant 0 : i32
    %c0_i32_0 = arith.constant 0 : i32
    %c0_i32_1 = arith.constant 0 : i32
    return %c0_i32, %c0_i32_0 : i32, i32
  }
  func.func @transform_7(%arg0: i32) -> (i32, i32) {
    %c0_i32 = arith.constant 0 : i32
    %c0_i32_0 = arith.constant 0 : i32
    %c0_i32_1 = arith.constant 0 : i32
    return %c0_i32, %c0_i32_0 : i32, i32
  }
  func.func @transform_8(%arg0: i32) -> (i32, i32) {
    %c0_i32 = arith.constant 0 : i32
    %c0_i32_0 = arith.constant 0 : i32
    %c0_i32_1 = arith.constant 0 : i32
    return %c0_i32, %c0_i32_0 : i32, i32
  }
  func.func @transform_9(%arg0: i32) -> (i32, i32) {
    %c0_i32 = arith.constant 0 : i32
    %c0_i32_0 = arith.constant 0 : i32
    return %arg0, %c0_i32 : i32, i32
  }
}

</mosaic_0001>

<llo_original>
// kernel: eeg_encoder_forward.1
$region0: #{eeg_encoder_forward.1}
  #allocation0 [shape = 'u32[]', space=smem, size = 0x4, offset = 0x4, fixed_abs, tag = 'smem constant byte address 0x4 - core index']
  #allocation1 [shape = 'u32[72,128]{1,0:T(1,128)}', space=vmem, size = 0x9000, scoped, tag = 'internal scratch']
  #allocation2 [shape = 'bf16[8,34,64]{2,1,0:T(8,128)(2,1)}', space=vmem, size = 0x14000, scoped, tag = 'scratch operand']
  #allocation3 [shape = 'bf16[8,18,128]{2,1,0:T(8,128)(2,1)}', space=vmem, size = 0xc000, scoped, tag = 'scratch operand']
  #allocation4 [shape = 'bf16[8,10,256]{2,1,0:T(8,128)(2,1)}', space=vmem, size = 0x10000, scoped, tag = 'scratch operand']
  %s0 = inlined_call_operand.vmem [shape: bf16[16,32,64], index: 0, kind: input, shape index: {}]
  %s1 = inlined_call_operand.vmem [shape: bf16[3,64,128], index: 1, kind: input, shape index: {}]
  %s2 = inlined_call_operand.vmem [shape: f32[1,128], index: 2, kind: input, shape index: {}]
  %s3 = inlined_call_operand.vmem [shape: bf16[3,128,256], index: 3, kind: input, shape index: {}]
  %s4 = inlined_call_operand.vmem [shape: f32[1,256], index: 4, kind: input, shape index: {}]
  %s5 = inlined_call_operand.vmem [shape: bf16[3,256,512], index: 5, kind: input, shape index: {}]
  %s6 = inlined_call_operand.vmem [shape: f32[1,512], index: 6, kind: input, shape index: {}]
  %s7 = inlined_call_operand.vmem [shape: bf16[512,512], index: 7, kind: input, shape index: {}]
  %s8 = inlined_call_operand.vmem [shape: f32[1,512], index: 8, kind: input, shape index: {}]
  %s9 = inlined_call_operand.hbm [shape: f32[16,512], index: 9, kind: output, shape index: {}]
  %s10 = sld [smem:[#allocation0]]
  $region69: #{eeg_encoder_forward.1} parent=0
    _
  %s12 = ssub.s32 1, %s10
  %s13 = scalar_select 0, %s12, %s10
  $region1: #{eeg_encoder_forward.1} parent=0
    #allocation5 [shape = 'u8[32768]{0}', space=vmem, size = 0x8000, scoped, tag = 'output window, operand 0']
    #allocation6 [shape = 's32[2]{0}', space=sflag, size = 0x8, scoped, tag = 'scoped memory for eeg_encoder_forward.1']
    %14 = vsyncpa [#allocation6], 0
    %s15 = scalar_lea.sflag [#allocation6], 1
    %16 = vsyncpa %s15, 0
    loop: start=0, step=1, limit=4
    $region2: #{eeg_encoder_forward.1} parent=1 // loop_pre_header
      _
    $region3: #{eeg_encoder_forward.1} parent=1 // loop_header
      %s18 = sphi 0, %s22
      %p19 = scmp.ge.s32.totalorder %s18, 4
      %s28 = sphi 0, %s30
      %s31 = sphi 0, %s28
      %s32 = sphi 0, %s31
      %s48 = sphi 0, %s32
      %s52 = sphi 0, %s52
      %s54 = sphi 0, %s52
      %s55 = sphi 0, %s54
      %s69 = sphi 0, %s55
      %s73 = sphi 0, %s73
      %s75 = sphi 0, %s73
      %s76 = sphi 0, %s75
      %s90 = sphi 0, %s76
      %s94 = sphi 0, %s94
      %s96 = sphi 0, %s94
      %s97 = sphi 0, %s96
      %s111 = sphi 0, %s97
      %s115 = sphi 0, %s115
      %s117 = sphi 0, %s115
      %s118 = sphi 0, %s117
      %s132 = sphi 0, %s118
      %s136 = sphi 0, %s136
      %s138 = sphi 0, %s136
      %s139 = sphi 0, %s138
      %s153 = sphi 0, %s139
      %s157 = sphi 0, %s157
      %s159 = sphi 0, %s157
      %s160 = sphi 0, %s159
      %s174 = sphi 0, %s160
      %s178 = sphi 0, %s178
      %s180 = sphi 0, %s178
      %s181 = sphi 0, %s180
      %s195 = sphi 0, %s181
      %s199 = sphi 0, %s199
      %s201 = sphi 0, %s199
      %s202 = sphi 0, %s201
      %s216 = sphi 0, %s202
      %s222 = sphi 0, %s224
      %s225 = sphi 0, %s222
      %s226 = sphi 0, %s225
      %s242 = sphi 0, %s226
    $region4: #{eeg_encoder_forward.1} parent=1 // loop_header_branch
      %21 = sbr.rel (%p19) target = $region8
    $region5: #{eeg_encoder_forward.1} parent=1 // loop_body
      %s23 = ssub.s32 %s18, 1
      %s24 = ssub.s32 %s18, 2
      %s25 = sadd.s32 %s18, 1
      %s26 = ssub.s32 %s18, %s25
      %p27 = scmp.eq.s32.totalorder %s26, 0
      %s29 = sadd.s32 %s28, 1
      %s30 = scalar_select %p27, %s28, %s29
      %p33 = pneg %p27
      %p34 = scmp.eq.s32.totalorder %s18, 1
      %p35 = por %p33, %p34
      %p36 = scmp.ne.s32.totalorder %s28, %s31
      %p37 = scmp.eq.s32.totalorder %s18, 0
      %p38 = por %p36, %p37
      %p39 = scmp.ne.s32.totalorder %s28, %s31
      %p40 = scmp.eq.s32.totalorder %s23, 1
      %p41 = por %p39, %p40
      %p42 = scmp.ne.s32.totalorder %s31, %s32
      %p43 = scmp.eq.s32.totalorder %s23, 0
      %p44 = por %p42, %p43
      %p45 = scmp.ne.s32.totalorder %s31, %s32
      %p46 = scmp.eq.s32.totalorder %s24, 1
      %p47 = por %p45, %p46
      %p49 = scmp.ne.s32.totalorder %s32, %s48
      %p50 = scmp.eq.s32.totalorder %s24, 0
      %p51 = por %p49, %p50
      %s53 = sadd.s32 %s52, 1
      %p56 = scmp.eq.s32.totalorder %s18, 1
      %p57 = scmp.ne.s32.totalorder %s52, %s54
      %p58 = scmp.eq.s32.totalorder %s18, 0
      %p59 = por %p57, %p58
      %p60 = scmp.ne.s32.totalorder %s52, %s54
      %p61 = scmp.eq.s32.totalorder %s23, 1
      %p62 = por %p60, %p61
      %p63 = scmp.ne.s32.totalorder %s54, %s55
      %p64 = scmp.eq.s32.totalorder %s23, 0
      %p65 = por %p63, %p64
      %p66 = scmp.ne.s32.totalorder %s54, %s55
      %p67 = scmp.eq.s32.totalorder %s24, 1
      %p68 = por %p66, %p67
      %p70 = scmp.ne.s32.totalorder %s55, %s69
      %p71 = scmp.eq.s32.totalorder %s24, 0
      %p72 = por %p70, %p71
      %s74 = sadd.s32 %s73, 1
      %p77 = scmp.eq.s32.totalorder %s18, 1
      %p78 = scmp.ne.s32.totalorder %s73, %s75
      %p79 = scmp.eq.s32.totalorder %s18, 0
      %p80 = por %p78, %p79
      %p81 = scmp.ne.s32.totalorder %s73, %s75
      %p82 = scmp.eq.s32.totalorder %s23, 1
      %p83 = por %p81, %p82
      %p84 = scmp.ne.s32.totalorder %s75, %s76
      %p85 = scmp.eq.s32.totalorder %s23, 0
      %p86 = por %p84, %p85
      %p87 = scmp.ne.s32.totalorder %s75, %s76
      %p88 = scmp.eq.s32.totalorder %s24, 1
      %p89 = por %p87, %p88
      %p91 = scmp.ne.s32.totalorder %s76, %s90
      %p92 = scmp.eq.s32.totalorder %s24, 0
      %p93 = por %p91, %p92
      %s95 = sadd.s32 %s94, 1
      %p98 = scmp.eq.s32.totalorder %s18, 1
      %p99 = scmp.ne.s32.totalorder %s94, %s96
      %p100 = scmp.eq.s32.totalorder %s18, 0
      %p101 = por %p99, %p100
      %p102 = scmp.ne.s32.totalorder %s94, %s96
      %p103 = scmp.eq.s32.totalorder %s23, 1
      %p104 = por %p102, %p103
      %p105 = scmp.ne.s32.totalorder %s96, %s97
      %p106 = scmp.eq.s32.totalorder %s23, 0
      %p107 = por %p105, %p106
      %p108 = scmp.ne.s32.totalorder %s96, %s97
      %p109 = scmp.eq.s32.totalorder %s24, 1
      %p110 = por %p108, %p109
      %p112 = scmp.ne.s32.totalorder %s97, %s111
      %p113 = scmp.eq.s32.totalorder %s24, 0
      %p114 = por %p112, %p113
      %s116 = sadd.s32 %s115, 1
      %p119 = scmp.eq.s32.totalorder %s18, 1
      %p120 = scmp.ne.s32.totalorder %s115, %s117
      %p121 = scmp.eq.s32.totalorder %s18, 0
      %p122 = por %p120, %p121
      %p123 = scmp.ne.s32.totalorder %s115, %s117
      %p124 = scmp.eq.s32.totalorder %s23, 1
      %p125 = por %p123, %p124
      %p126 = scmp.ne.s32.totalorder %s117, %s118
      %p127 = scmp.eq.s32.totalorder %s23, 0
      %p128 = por %p126, %p127
      %p129 = scmp.ne.s32.totalorder %s117, %s118
      %p130 = scmp.eq.s32.totalorder %s24, 1
      %p131 = por %p129, %p130
      %p133 = scmp.ne.s32.totalorder %s118, %s132
      %p134 = scmp.eq.s32.totalorder %s24, 0
      %p135 = por %p133, %p134
      %s137 = sadd.s32 %s136, 1
      %p140 = scmp.eq.s32.totalorder %s18, 1
      %p141 = scmp.ne.s32.totalorder %s136, %s138
      %p142 = scmp.eq.s32.totalorder %s18, 0
      %p143 = por %p141, %p142
      %p144 = scmp.ne.s32.totalorder %s136, %s138
      %p145 = scmp.eq.s32.totalorder %s23, 1
      %p146 = por %p144, %p145
      %p147 = scmp.ne.s32.totalorder %s138, %s139
      %p148 = scmp.eq.s32.totalorder %s23, 0
      %p149 = por %p147, %p148
      %p150 = scmp.ne.s32.totalorder %s138, %s139
      %p151 = scmp.eq.s32.totalorder %s24, 1
      %p152 = por %p150, %p151
      %p154 = scmp.ne.s32.totalorder %s139, %s153
      %p155 = scmp.eq.s32.totalorder %s24, 0
      %p156 = por %p154, %p155
      %s158 = sadd.s32 %s157, 1
      %p161 = scmp.eq.s32.totalorder %s18, 1
      %p162 = scmp.ne.s32.totalorder %s157, %s159
      %p163 = scmp.eq.s32.totalorder %s18, 0
      %p164 = por %p162, %p163
      %p165 = scmp.ne.s32.totalorder %s157, %s159
      %p166 = scmp.eq.s32.totalorder %s23, 1
      %p167 = por %p165, %p166
      %p168 = scmp.ne.s32.totalorder %s159, %s160
      %p169 = scmp.eq.s32.totalorder %s23, 0
      %p170 = por %p168, %p169
      %p171 = scmp.ne.s32.totalorder %s159, %s160
      %p172 = scmp.eq.s32.totalorder %s24, 1
      %p173 = por %p171, %p172
      %p175 = scmp.ne.s32.totalorder %s160, %s174
      %p176 = scmp.eq.s32.totalorder %s24, 0
      %p177 = por %p175, %p176
      %s179 = sadd.s32 %s178, 1
      %p182 = scmp.eq.s32.totalorder %s18, 1
      %p183 = scmp.ne.s32.totalorder %s178, %s180
      %p184 = scmp.eq.s32.totalorder %s18, 0
      %p185 = por %p183, %p184
      %p186 = scmp.ne.s32.totalorder %s178, %s180
      %p187 = scmp.eq.s32.totalorder %s23, 1
      %p188 = por %p186, %p187
      %p189 = scmp.ne.s32.totalorder %s180, %s181
      %p190 = scmp.eq.s32.totalorder %s23, 0
      %p191 = por %p189, %p190
      %p192 = scmp.ne.s32.totalorder %s180, %s181
      %p193 = scmp.eq.s32.totalorder %s24, 1
      %p194 = por %p192, %p193
      %p196 = scmp.ne.s32.totalorder %s181, %s195
      %p197 = scmp.eq.s32.totalorder %s24, 0
      %p198 = por %p196, %p197
      %s200 = sadd.s32 %s199, 1
      %p203 = scmp.eq.s32.totalorder %s18, 1
      %p204 = scmp.ne.s32.totalorder %s199, %s201
      %p205 = scmp.eq.s32.totalorder %s18, 0
      %p206 = por %p204, %p205
      %p207 = scmp.ne.s32.totalorder %s199, %s201
      %p208 = scmp.eq.s32.totalorder %s23, 1
      %p209 = por %p207, %p208
      %p210 = scmp.ne.s32.totalorder %s201, %s202
      %p211 = scmp.eq.s32.totalorder %s23, 0
      %p212 = por %p210, %p211
      %p213 = scmp.ne.s32.totalorder %s201, %s202
      %p214 = scmp.eq.s32.totalorder %s24, 1
      %p215 = por %p213, %p214
      %p217 = scmp.ne.s32.totalorder %s202, %s216
      %p218 = scmp.eq.s32.totalorder %s24, 0
      %p219 = por %p217, %p218
      %s220 = ssub.s32 %s18, %s25
      %p221 = scmp.eq.s32.totalorder %s220, 0
      %s223 = sadd.s32 %s222, 1
      %s224 = scalar_select %p221, %s222, %s223
      %p227 = pneg %p221
      %p228 = scmp.eq.s32.totalorder %s18, 1
      %p229 = por %p227, %p228
      %p230 = scmp.ne.s32.totalorder %s222, %s225
      %p231 = scmp.eq.s32.totalorder %s18, 0
      %p232 = por %p230, %p231
      %p233 = scmp.ne.s32.totalorder %s222, %s225
      %p234 = scmp.eq.s32.totalorder %s23, 1
      %p235 = por %p233, %p234
      %p236 = scmp.ne.s32.totalorder %s225, %s226
      %p237 = scmp.eq.s32.totalorder %s23, 0
      %p238 = por %p236, %p237
      %p239 = scmp.ne.s32.totalorder %s225, %s226
      %p240 = scmp.eq.s32.totalorder %s24, 1
      %p241 = por %p239, %p240
      %p243 = scmp.ne.s32.totalorder %s226, %s242
      %p244 = scmp.eq.s32.totalorder %s24, 0
      %p245 = por %p243, %p244
      %p246 = scmp.le.s32.totalorder 1, %s18
      %p247 = scmp.lt.s32.totalorder %s18, 3
      %p248 = pnand %p246, %p247
      %p249 = pneg %p248
      // Predicated region
      $region9: #{eeg_encoder_forward.1} parent=5 // pred_check
        _
      $region10: #{eeg_encoder_forward.1} parent=5 // pred_check_branch
        %251 = sbr.rel (%p248) target = $region12
      $region11: #{eeg_encoder_forward.1} parent=5 // pred_region
        %s252 = ssub.s32 %s18, 1
        // Predicated region
        $region13: #{eeg_encoder_forward.1} parent=11 // pred_check
          %p253 = pneg %p65
        $region14: #{eeg_encoder_forward.1} parent=11 // pred_check_branch
          %255 = sbr.rel (%p253) target = $region16
        $region15: #{eeg_encoder_forward.1} parent=11 // pred_region
          _
        $region16: #{eeg_encoder_forward.1} parent=11 // pred_fallthru
          _
        // Predicated region
        $region17: #{eeg_encoder_forward.1} parent=11 // pred_check
          %p256 = pneg %p86
        $region18: #{eeg_encoder_forward.1} parent=11 // pred_check_branch
          %258 = sbr.rel (%p256) target = $region20
        $region19: #{eeg_encoder_forward.1} parent=11 // pred_region
          _
        $region20: #{eeg_encoder_forward.1} parent=11 // pred_fallthru
          _
        // Predicated region
        $region21: #{eeg_encoder_forward.1} parent=11 // pred_check
          %p259 = pneg %p107
        $region22: #{eeg_encoder_forward.1} parent=11 // pred_check_branch
          %261 = sbr.rel (%p259) target = $region24
        $region23: #{eeg_encoder_forward.1} parent=11 // pred_region
          _
        $region24: #{eeg_encoder_forward.1} parent=11 // pred_fallthru
          _
        // Predicated region
        $region25: #{eeg_encoder_forward.1} parent=11 // pred_check
          %p262 = pneg %p128
        $region26: #{eeg_encoder_forward.1} parent=11 // pred_check_branch
          %264 = sbr.rel (%p262) target = $region28
        $region27: #{eeg_encoder_forward.1} parent=11 // pred_region
          _
        $region28: #{eeg_encoder_forward.1} parent=11 // pred_fallthru
          _
        // Predicated region
        $region29: #{eeg_encoder_forward.1} parent=11 // pred_check
          %p265 = pneg %p149
        $region30: #{eeg_encoder_forward.1} parent=11 // pred_check_branch
          %267 = sbr.rel (%p265) target = $region32
        $region31: #{eeg_encoder_forward.1} parent=11 // pred_region
          _
        $region32: #{eeg_encoder_forward.1} parent=11 // pred_fallthru
          _
        // Predicated region
        $region33: #{eeg_encoder_forward.1} parent=11 // pred_check
          %p268 = pneg %p170
        $region34: #{eeg_encoder_forward.1} parent=11 // pred_check_branch
          %270 = sbr.rel (%p268) target = $region36
        $region35: #{eeg_encoder_forward.1} parent=11 // pred_region
          _
        $region36: #{eeg_encoder_forward.1} parent=11 // pred_fallthru
          _
        // Predicated region
        $region37: #{eeg_encoder_forward.1} parent=11 // pred_check
          %p271 = pneg %p191
        $region38: #{eeg_encoder_forward.1} parent=11 // pred_check_branch
          %273 = sbr.rel (%p271) target = $region40
        $region39: #{eeg_encoder_forward.1} parent=11 // pred_region
          _
        $region40: #{eeg_encoder_forward.1} parent=11 // pred_fallthru
          _
        // Predicated region
        $region41: #{eeg_encoder_forward.1} parent=11 // pred_check
          %p274 = pneg %p212
        $region42: #{eeg_encoder_forward.1} parent=11 // pred_check_branch
          %276 = sbr.rel (%p274) target = $region44
        $region43: #{eeg_encoder_forward.1} parent=11 // pred_region
          _
        $region44: #{eeg_encoder_forward.1} parent=11 // pred_fallthru
          _
      $region12: #{eeg_encoder_forward.1} parent=5 // pred_fallthru
        _
      %p277 = scmp.lt.s32.totalorder %s18, 2
      // Predicated region
      $region45: #{eeg_encoder_forward.1} parent=5 // pred_check
        %p278 = pneg %p277
      $region46: #{eeg_encoder_forward.1} parent=5 // pred_check_branch
        %280 = sbr.rel (%p278) target = $region48
      $region47: #{eeg_encoder_forward.1} parent=5 // pred_region
        // Predicated region
        $region49: #{eeg_encoder_forward.1} parent=47 // pred_check
          %p281 = pneg %p38
        $region50: #{eeg_encoder_forward.1} parent=47 // pred_check_branch
          %283 = sbr.rel (%p281) target = $region52
        $region51: #{eeg_encoder_forward.1} parent=47 // pred_region
          %s284 = smul.u32 8, %s18
          %p285 = scmp.lt.s32.totalorder %s284, 15
          %s286 = scalar_select %p285, %s284, 15
          %s287 = smul.addr %s286, 4
          %s288 = smul.addr %s287, 4
          %s289 = scalar_lea.vmem %s0, %s288
          %s290 = smul.u32 8, %s18
        $region52: #{eeg_encoder_forward.1} parent=47 // pred_fallthru
          _
      $region48: #{eeg_encoder_forward.1} parent=5 // pred_fallthru
        _
      %p291 = scmp.le.s32.totalorder 1, %s18
      %p292 = scmp.lt.s32.totalorder %s18, 3
      %p293 = pnand %p291, %p292
      %p294 = pneg %p293
      // Predicated region
      $region53: #{eeg_encoder_forward.1} parent=5 // pred_check
        _
      $region54: #{eeg_encoder_forward.1} parent=5 // pred_check_branch
        %296 = sbr.rel (%p293) target = $region56
      $region55: #{eeg_encoder_forward.1} parent=5 // pred_region
        %s297 = ssub.s32 %s18, 1
        %s298 = smul.u32 8, %s23
        %p299 = scmp.lt.s32.totalorder %s298, 15
        %s300 = scalar_select %p299, %s298, 15
        %s301 = smul.addr %s300, 4
        %s302 = smul.addr %s301, 4
        %s303 = scalar_lea.vmem %s0, %s302
        %p304 = pneg %p44
        %p305 = pneg %p41
        %p306 = pneg %p65
        %p307 = pneg %p62
        %p308 = pneg %p86
        %p309 = pneg %p83
        %p310 = pneg %p107
        %p311 = pneg %p104
        %p312 = pneg %p128
        %p313 = pneg %p125
        %p314 = pneg %p149
        %p315 = pneg %p146
        %p316 = pneg %p170
        %p317 = pneg %p167
        %p318 = pneg %p191
        %p319 = pneg %p188
        %p320 = pneg %p212
        %p321 = pneg %p209
        %p322 = pneg %p238
        %p323 = pneg %p235
        %s324 = sand.u32 %s225, 1
        %s325 = scalar_lea.sflag [#allocation6], %s324
        %s326 = sand.u32 %s225, 1
        %s327 = smul.addr %s326, 32
        %s328 = scalar_lea.vmem [#allocation5], %s327
        %s329 = smul.u32 8, %s23
        %p330 = scmp.lt.s32.totalorder %s329, 15
        %s331 = scalar_select %p330, %s329, 15
        %s332 = smul.addr %s331, 4
        %s333 = smul.addr %s332, 4
        %s334 = scalar_lea.vmem %s0, %s333
        %s335 = smul.u32 8, %s23
        %vm337 = vcmask 516096
        %vm338 = vsmask.f32 256
        %vm339 = vmand %vm337, %vm338
        %v340 = vld [vmem:[#allocation2] sm:$0x1]
        %v341 = vsel %vm339, 0, %v340
        %342 = vst [vmem:[#allocation2] sm:$0x1] %v341
        %v343 = vld [vmem:[#allocation2 + $0x14] sm:$0x1]
        %v344 = vsel %vm339, 0, %v343
        %345 = vst [vmem:[#allocation2 + $0x14] sm:$0x1] %v344
        %v346 = vld [vmem:[#allocation2 + $0x28] sm:$0x1]
        %v347 = vsel %vm339, 0, %v346
        %348 = vst [vmem:[#allocation2 + $0x28] sm:$0x1] %v347
        %v349 = vld [vmem:[#allocation2 + $0x3c] sm:$0x1]
        %v350 = vsel %vm339, 0, %v349
        %351 = vst [vmem:[#allocation2 + $0x3c] sm:$0x1] %v350
        %v352 = vld [vmem:[#allocation2 + $0x50] sm:$0x1]
        %v353 = vsel %vm339, 0, %v352
        %354 = vst [vmem:[#allocation2 + $0x50] sm:$0x1] %v353
        %v355 = vld [vmem:[#allocation2 + $0x64] sm:$0x1]
        %v356 = vsel %vm339, 0, %v355
        %357 = vst [vmem:[#allocation2 + $0x64] sm:$0x1] %v356
        %v358 = vld [vmem:[#allocation2 + $0x78] sm:$0x1]
        %v359 = vsel %vm339, 0, %v358
        %360 = vst [vmem:[#allocation2 + $0x78] sm:$0x1] %v359
        %v361 = vld [vmem:[#allocation2 + $0x8c] sm:$0x1]
        %v362 = vsel %vm339, 0, %v361
        %363 = vst [vmem:[#allocation2 + $0x8c] sm:$0x1] %v362
        %vm364 = vsmask.f32 7938
        %vm365 = vmand %vm337, %vm364
        %v366 = vld [vmem:[#allocation2 + $0x10] sm:$0x1]
        %v367 = vsel %vm365, 0, %v366
        %368 = vst [vmem:[#allocation2 + $0x10] sm:$0x1] %v367
        %v369 = vld [vmem:[#allocation2 + $0x24] sm:$0x1]
        %v370 = vsel %vm365, 0, %v369
        %371 = vst [vmem:[#allocation2 + $0x24] sm:$0x1] %v370
        %v372 = vld [vmem:[#allocation2 + $0x38] sm:$0x1]
        %v373 = vsel %vm365, 0, %v372
        %374 = vst [vmem:[#allocation2 + $0x38] sm:$0x1] %v373
        %v375 = vld [vmem:[#allocation2 + $0x4c] sm:$0x1]
        %v376 = vsel %vm365, 0, %v375
        %377 = vst [vmem:[#allocation2 + $0x4c] sm:$0x1] %v376
        %v378 = vld [vmem:[#allocation2 + $0x60] sm:$0x1]
        %v379 = vsel %vm365, 0, %v378
        %380 = vst [vmem:[#allocation2 + $0x60] sm:$0x1] %v379
        %v381 = vld [vmem:[#allocation2 + $0x74] sm:$0x1]
        %v382 = vsel %vm365, 0, %v381
        %383 = vst [vmem:[#allocation2 + $0x74] sm:$0x1] %v382
        %v384 = vld [vmem:[#allocation2 + $0x88] sm:$0x1]
        %v385 = vsel %vm365, 0, %v384
        %386 = vst [vmem:[#allocation2 + $0x88] sm:$0x1] %v385
        %v387 = vld [vmem:[#allocation2 + $0x9c] sm:$0x1]
        %v388 = vsel %vm365, 0, %v387
        %389 = vst [vmem:[#allocation2 + $0x9c] sm:$0x1] %v388
        %v390 = vld [vmem:[%s334] sm:$0xf]
        %v391 = vld [vmem:[%s334 + $0x4] sm:$0xf]
        %v392 = vld [vmem:[%s334 + $0x8] sm:$0xf]
        %v393 = vld [vmem:[%s334 + $0xc] sm:$0xf]
        %v394 = vld [vmem:[%s334 + $0x10] sm:$0xf]
        %v395 = vld [vmem:[%s334 + $0x14] sm:$0xf]
        %v396 = vld [vmem:[%s334 + $0x18] sm:$0xf]
        %v397 = vld [vmem:[%s334 + $0x1c] sm:$0xf]
        %v398 = vld [vmem:[%s334 + $0x20] sm:$0xf]
        %v399 = vld [vmem:[%s334 + $0x24] sm:$0xf]
        %v400 = vld [vmem:[%s334 + $0x28] sm:$0xf]
        %v401 = vld [vmem:[%s334 + $0x2c] sm:$0xf]
        %v402 = vld [vmem:[%s334 + $0x30] sm:$0xf]
        %v403 = vld [vmem:[%s334 + $0x34] sm:$0xf]
        %v404 = vld [vmem:[%s334 + $0x38] sm:$0xf]
        %v405 = vld [vmem:[%s334 + $0x3c] sm:$0xf]
        %v406 = vld [vmem:[%s334 + $0x40] sm:$0xf]
        %v407 = vld [vmem:[%s334 + $0x44] sm:$0xf]
        %v408 = vld [vmem:[%s334 + $0x48] sm:$0xf]
        %v409 = vld [vmem:[%s334 + $0x4c] sm:$0xf]
        %v410 = vld [vmem:[%s334 + $0x50] sm:$0xf]
        %v411 = vld [vmem:[%s334 + $0x54] sm:$0xf]
        %v412 = vld [vmem:[%s334 + $0x58] sm:$0xf]
        %v413 = vld [vmem:[%s334 + $0x5c] sm:$0xf]
        %v414 = vld [vmem:[%s334 + $0x60] sm:$0xf]
        %v415 = vld [vmem:[%s334 + $0x64] sm:$0xf]
        %v416 = vld [vmem:[%s334 + $0x68] sm:$0xf]
        %v417 = vld [vmem:[%s334 + $0x6c] sm:$0xf]
        %v418 = vld [vmem:[%s334 + $0x70] sm:$0xf]
        %v419 = vld [vmem:[%s334 + $0x74] sm:$0xf]
        %v420 = vld [vmem:[%s334 + $0x78] sm:$0xf]
        %v421 = vld [vmem:[%s334 + $0x7c] sm:$0xf]
        %vm422 = vsmask.f32 4368
        %vm423 = vmor %vm338, %vm422
        %v425 = vshrl.u32 %v390, 16
        %v427 = vrot.slane %v425, 7
        %v428 = vshll.u32 %v390, 16
        %v430 = vor.u32 %v427, %v428
        %v431 = vrot.slane %v427, 4
        %v433 = vshrl.u32 %v391, 16
        %v435 = vrot.slane %v433, 7
        %v436 = vshll.u32 %v391, 16
        %v438 = vor.u32 %v435, %v436
        %v439 = vsel %vm423, %v431, %v438
        %v440 = vrot.slane %v435, 4
        %v442 = vshrl.u32 %v392, 16
        %v444 = vrot.slane %v442, 7
        %v445 = vshll.u32 %v392, 16
        %v447 = vor.u32 %v444, %v445
        %v448 = vsel %vm423, %v440, %v447
        %v449 = vrot.slane %v444, 4
        %v451 = vshrl.u32 %v393, 16
        %v453 = vrot.slane %v451, 7
        %v454 = vshll.u32 %v393, 16
        %v456 = vor.u32 %v453, %v454
        %v457 = vsel %vm423, %v449, %v456
        %v458 = vrot.slane %v453, 4
        %v460 = vshrl.u32 %v394, 16
        %v462 = vrot.slane %v460, 7
        %v463 = vshll.u32 %v394, 16
        %v465 = vor.u32 %v462, %v463
        %v466 = vrot.slane %v462, 4
        %v468 = vshrl.u32 %v395, 16
        %v470 = vrot.slane %v468, 7
        %v471 = vshll.u32 %v395, 16
        %v473 = vor.u32 %v470, %v471
        %v474 = vsel %vm423, %v466, %v473
        %v475 = vrot.slane %v470, 4
        %v477 = vshrl.u32 %v396, 16
        %v479 = vrot.slane %v477, 7
        %v480 = vshll.u32 %v396, 16
        %v482 = vor.u32 %v479, %v480
        %v483 = vsel %vm423, %v475, %v482
        %v484 = vrot.slane %v479, 4
        %v486 = vshrl.u32 %v397, 16
        %v488 = vrot.slane %v486, 7
        %v489 = vshll.u32 %v397, 16
        %v491 = vor.u32 %v488, %v489
        %v492 = vsel %vm423, %v484, %v491
        %v493 = vrot.slane %v488, 4
        %v495 = vshrl.u32 %v398, 16
        %v497 = vrot.slane %v495, 7
        %v498 = vshll.u32 %v398, 16
        %v500 = vor.u32 %v497, %v498
        %v501 = vrot.slane %v497, 4
        %v503 = vshrl.u32 %v399, 16
        %v505 = vrot.slane %v503, 7
        %v506 = vshll.u32 %v399, 16
        %v508 = vor.u32 %v505, %v506
        %v509 = vsel %vm423, %v501, %v508
        %v510 = vrot.slane %v505, 4
        %v512 = vshrl.u32 %v400, 16
        %v514 = vrot.slane %v512, 7
        %v515 = vshll.u32 %v400, 16
        %v517 = vor.u32 %v514, %v515
        %v518 = vsel %vm423, %v510, %v517
        %v519 = vrot.slane %v514, 4
        %v521 = vshrl.u32 %v401, 16
        %v523 = vrot.slane %v521, 7
        %v524 = vshll.u32 %v401, 16
        %v526 = vor.u32 %v523, %v524
        %v527 = vsel %vm423, %v519, %v526
        %v528 = vrot.slane %v523, 4
        %v530 = vshrl.u32 %v402, 16
        %v532 = vrot.slane %v530, 7
        %v533 = vshll.u32 %v402, 16
        %v535 = vor.u32 %v532, %v533
        %v536 = vrot.slane %v532, 4
        %v538 = vshrl.u32 %v403, 16
        %v540 = vrot.slane %v538, 7
        %v541 = vshll.u32 %v403, 16
        %v543 = vor.u32 %v540, %v541
        %v544 = vsel %vm423, %v536, %v543
        %v545 = vrot.slane %v540, 4
        %v547 = vshrl.u32 %v404, 16
        %v549 = vrot.slane %v547, 7
        %v550 = vshll.u32 %v404, 16
        %v552 = vor.u32 %v549, %v550
        %v553 = vsel %vm423, %v545, %v552
        %v554 = vrot.slane %v549, 4
        %v556 = vshrl.u32 %v405, 16
        %v558 = vrot.slane %v556, 7
        %v559 = vshll.u32 %v405, 16
        %v561 = vor.u32 %v558, %v559
        %v562 = vsel %vm423, %v554, %v561
        %v563 = vrot.slane %v558, 4
        %v565 = vshrl.u32 %v406, 16
        %v567 = vrot.slane %v565, 7
        %v568 = vshll.u32 %v406, 16
        %v570 = vor.u32 %v567, %v568
        %v571 = vrot.slane %v567, 4
        %v573 = vshrl.u32 %v407, 16
        %v575 = vrot.slane %v573, 7
        %v576 = vshll.u32 %v407, 16
        %v578 = vor.u32 %v575, %v576
        %v579 = vsel %vm423, %v571, %v578
        %v580 = vrot.slane %v575, 4
        %v582 = vshrl.u32 %v408, 16
        %v584 = vrot.slane %v582, 7
        %v585 = vshll.u32 %v408, 16
        %v587 = vor.u32 %v584, %v585
        %v588 = vsel %vm423, %v580, %v587
        %v589 = vrot.slane %v584, 4
        %v591 = vshrl.u32 %v409, 16
        %v593 = vrot.slane %v591, 7
        %v594 = vshll.u32 %v409, 16
        %v596 = vor.u32 %v593, %v594
        %v597 = vsel %vm423, %v589, %v596
        %v598 = vrot.slane %v593, 4
        %v600 = vshrl.u32 %v410, 16
        %v602 = vrot.slane %v600, 7
        %v603 = vshll.u32 %v410, 16
        %v605 = vor.u32 %v602, %v603
        %v606 = vrot.slane %v602, 4
        %v608 = vshrl.u32 %v411, 16
        %v610 = vrot.slane %v608, 7
        %v611 = vshll.u32 %v411, 16
        %v613 = vor.u32 %v610, %v611
        %v614 = vsel %vm423, %v606, %v613
        %v615 = vrot.slane %v610, 4
        %v617 = vshrl.u32 %v412, 16
        %v619 = vrot.slane %v617, 7
        %v620 = vshll.u32 %v412, 16
        %v622 = vor.u32 %v619, %v620
        %v623 = vsel %vm423, %v615, %v622
        %v624 = vrot.slane %v619, 4
        %v626 = vshrl.u32 %v413, 16
        %v628 = vrot.slane %v626, 7
        %v629 = vshll.u32 %v413, 16
        %v631 = vor.u32 %v628, %v629
        %v632 = vsel %vm423, %v624, %v631
        %v633 = vrot.slane %v628, 4
        %v635 = vshrl.u32 %v414, 16
        %v637 = vrot.slane %v635, 7
        %v638 = vshll.u32 %v414, 16
        %v640 = vor.u32 %v637, %v638
        %v641 = vrot.slane %v637, 4
        %v643 = vshrl.u32 %v415, 16
        %v645 = vrot.slane %v643, 7
        %v646 = vshll.u32 %v415, 16
        %v648 = vor.u32 %v645, %v646
        %v649 = vsel %vm423, %v641, %v648
        %v650 = vrot.slane %v645, 4
        %v652 = vshrl.u32 %v416, 16
        %v654 = vrot.slane %v652, 7
        %v655 = vshll.u32 %v416, 16
        %v657 = vor.u32 %v654, %v655
        %v658 = vsel %vm423, %v650, %v657
        %v659 = vrot.slane %v654, 4
        %v661 = vshrl.u32 %v417, 16
        %v663 = vrot.slane %v661, 7
        %v664 = vshll.u32 %v417, 16
        %v666 = vor.u32 %v663, %v664
        %v667 = vsel %vm423, %v659, %v666
        %v668 = vrot.slane %v663, 4
        %v670 = vshrl.u32 %v418, 16
        %v672 = vrot.slane %v670, 7
        %v673 = vshll.u32 %v418, 16
        %v675 = vor.u32 %v672, %v673
        %v676 = vrot.slane %v672, 4
        %v678 = vshrl.u32 %v419, 16
        %v680 = vrot.slane %v678, 7
        %v681 = vshll.u32 %v419, 16
        %v683 = vor.u32 %v680, %v681
        %v684 = vsel %vm423, %v676, %v683
        %v685 = vrot.slane %v680, 4
        %v687 = vshrl.u32 %v420, 16
        %v689 = vrot.slane %v687, 7
        %v690 = vshll.u32 %v420, 16
        %v692 = vor.u32 %v689, %v690
        %v693 = vsel %vm423, %v685, %v692
        %v694 = vrot.slane %v689, 4
        %v696 = vshrl.u32 %v421, 16
        %v698 = vrot.slane %v696, 7
        %v699 = vshll.u32 %v421, 16
        %v701 = vor.u32 %v698, %v699
        %v702 = vsel %vm423, %v694, %v701
        %v703 = vrot.slane %v698, 4
        %vm744 = vcmask 519168
        %vm745 = vmand %vm744, %vm364
        %v746 = vld [vmem:[#allocation2] sm:$0xf]
        %v747 = vsel %vm745, %v430, %v746
        %748 = vst [vmem:[#allocation2] sm:$0xf] %v747
        %vm749 = vcmask 519168
        %750 = vst.msk [vmem:[#allocation2 + $0x4] sm:$0xf] %vm749, %v439
        %751 = vst.msk [vmem:[#allocation2 + $0x8] sm:$0xf] %vm749, %v448
        %752 = vst.msk [vmem:[#allocation2 + $0xc] sm:$0xf] %vm749, %v457
        %v753 = vld [vmem:[#allocation2 + $0x10] sm:$0x1]
        %v754 = vsel %vm339, %v458, %v753
        %755 = vst [vmem:[#allocation2 + $0x10] sm:$0x1] %v754
        %v756 = vld [vmem:[#allocation2 + $0x14] sm:$0xf]
        %v757 = vsel %vm745, %v465, %v756
        %758 = vst [vmem:[#allocation2 + $0x14] sm:$0xf] %v757
        %759 = vst.msk [vmem:[#allocation2 + $0x18] sm:$0xf] %vm749, %v474
        %760 = vst.msk [vmem:[#allocation2 + $0x1c] sm:$0xf] %vm749, %v483
        %761 = vst.msk [vmem:[#allocation2 + $0x20] sm:$0xf] %vm749, %v492
        %v762 = vld [vmem:[#allocation2 + $0x24] sm:$0x1]
        %v763 = vsel %vm339, %v493, %v762
        %764 = vst [vmem:[#allocation2 + $0x24] sm:$0x1] %v763
        %v765 = vld [vmem:[#allocation2 + $0x28] sm:$0xf]
        %v766 = vsel %vm745, %v500, %v765
        %767 = vst [vmem:[#allocation2 + $0x28] sm:$0xf] %v766
        %768 = vst.msk [vmem:[#allocation2 + $0x2c] sm:$0xf] %vm749, %v509
        %769 = vst.msk [vmem:[#allocation2 + $0x30] sm:$0xf] %vm749, %v518
        %770 = vst.msk [vmem:[#allocation2 + $0x34] sm:$0xf] %vm749, %v527
        %v771 = vld [vmem:[#allocation2 + $0x38] sm:$0x1]
        %v772 = vsel %vm339, %v528, %v771
        %773 = vst [vmem:[#allocation2 + $0x38] sm:$0x1] %v772
        %v774 = vld [vmem:[#allocation2 + $0x3c] sm:$0xf]
        %v775 = vsel %vm745, %v535, %v774
        %776 = vst [vmem:[#allocation2 + $0x3c] sm:$0xf] %v775
        %777 = vst.msk [vmem:[#allocation2 + $0x40] sm:$0xf] %vm749, %v544
        %778 = vst.msk [vmem:[#allocation2 + $0x44] sm:$0xf] %vm749, %v553
        %779 = vst.msk [vmem:[#allocation2 + $0x48] sm:$0xf] %vm749, %v562
        %v780 = vld [vmem:[#allocation2 + $0x4c] sm:$0x1]
        %v781 = vsel %vm339, %v563, %v780
        %782 = vst [vmem:[#allocation2 + $0x4c] sm:$0x1] %v781
        %v783 = vld [vmem:[#allocation2 + $0x50] sm:$0xf]
        %v784 = vsel %vm745, %v570, %v783
        %785 = vst [vmem:[#allocation2 + $0x50] sm:$0xf] %v784
        %786 = vst.msk [vmem:[#allocation2 + $0x54] sm:$0xf] %vm749, %v579
        %787 = vst.msk [vmem:[#allocation2 + $0x58] sm:$0xf] %vm749, %v588
        %788 = vst.msk [vmem:[#allocation2 + $0x5c] sm:$0xf] %vm749, %v597
        %v789 = vld [vmem:[#allocation2 + $0x60] sm:$0x1]
        %v790 = vsel %vm339, %v598, %v789
        %791 = vst [vmem:[#allocation2 + $0x60] sm:$0x1] %v790
        %v792 = vld [vmem:[#allocation2 + $0x64] sm:$0xf]
        %v793 = vsel %vm745, %v605, %v792
        %794 = vst [vmem:[#allocation2 + $0x64] sm:$0xf] %v793
        %795 = vst.msk [vmem:[#allocation2 + $0x68] sm:$0xf] %vm749, %v614
        %796 = vst.msk [vmem:[#allocation2 + $0x6c] sm:$0xf] %vm749, %v623
        %797 = vst.msk [vmem:[#allocation2 + $0x70] sm:$0xf] %vm749, %v632
        %v798 = vld [vmem:[#allocation2 + $0x74] sm:$0x1]
        %v799 = vsel %vm339, %v633, %v798
        %800 = vst [vmem:[#allocation2 + $0x74] sm:$0x1] %v799
        %v801 = vld [vmem:[#allocation2 + $0x78] sm:$0xf]
        %v802 = vsel %vm745, %v640, %v801
        %803 = vst [vmem:[#allocation2 + $0x78] sm:$0xf] %v802
        %804 = vst.msk [vmem:[#allocation2 + $0x7c] sm:$0xf] %vm749, %v649
        %805 = vst.msk [vmem:[#allocation2 + $0x80] sm:$0xf] %vm749, %v658
        %806 = vst.msk [vmem:[#allocation2 + $0x84] sm:$0xf] %vm749, %v667
        %v807 = vld [vmem:[#allocation2 + $0x88] sm:$0x1]
        %v808 = vsel %vm339, %v668, %v807
        %809 = vst [vmem:[#allocation2 + $0x88] sm:$0x1] %v808
        %v810 = vld [vmem:[#allocation2 + $0x8c] sm:$0xf]
        %v811 = vsel %vm745, %v675, %v810
        %812 = vst [vmem:[#allocation2 + $0x8c] sm:$0xf] %v811
        %813 = vst.msk [vmem:[#allocation2 + $0x90] sm:$0xf] %vm749, %v684
        %814 = vst.msk [vmem:[#allocation2 + $0x94] sm:$0xf] %vm749, %v693
        %815 = vst.msk [vmem:[#allocation2 + $0x98] sm:$0xf] %vm749, %v702
        %v816 = vld [vmem:[#allocation2 + $0x9c] sm:$0x1]
        %v817 = vsel %vm339, %v703, %v816
        %818 = vst [vmem:[#allocation2 + $0x9c] sm:$0x1] %v817
        %v819 = vld [vmem:[#allocation2] sm:$0xf]
        %v820 = vld [vmem:[#allocation2 + $0x4] sm:$0xf]
        %v821 = vld [vmem:[#allocation2 + $0x8] sm:$0xf]
        %v822 = vld [vmem:[#allocation2 + $0xc] sm:$0xf]
        %v823 = vld [vmem:[#allocation2 + $0x14] sm:$0xf]
        %v824 = vld [vmem:[#allocation2 + $0x18] sm:$0xf]
        %v825 = vld [vmem:[#allocation2 + $0x1c] sm:$0xf]
        %v826 = vld [vmem:[#allocation2 + $0x20] sm:$0xf]
        %v827 = vld [vmem:[#allocation2 + $0x28] sm:$0xf]
        %v828 = vld [vmem:[#allocation2 + $0x2c] sm:$0xf]
        %v829 = vld [vmem:[#allocation2 + $0x30] sm:$0xf]
        %v830 = vld [vmem:[#allocation2 + $0x34] sm:$0xf]
        %v831 = vld [vmem:[#allocation2 + $0x3c] sm:$0xf]
        %v832 = vld [vmem:[#allocation2 + $0x40] sm:$0xf]
        %v833 = vld [vmem:[#allocation2 + $0x44] sm:$0xf]
        %v834 = vld [vmem:[#allocation2 + $0x48] sm:$0xf]
        %v835 = vld [vmem:[#allocation2 + $0x50] sm:$0xf]
        %v836 = vld [vmem:[#allocation2 + $0x54] sm:$0xf]
        %v837 = vld [vmem:[#allocation2 + $0x58] sm:$0xf]
        %v838 = vld [vmem:[#allocation2 + $0x5c] sm:$0xf]
        %v839 = vld [vmem:[#allocation2 + $0x64] sm:$0xf]
        %v840 = vld [vmem:[#allocation2 + $0x68] sm:$0xf]
        %v841 = vld [vmem:[#allocation2 + $0x6c] sm:$0xf]
        %v842 = vld [vmem:[#allocation2 + $0x70] sm:$0xf]
        %v843 = vld [vmem:[#allocation2 + $0x78] sm:$0xf]
        %v844 = vld [vmem:[#allocation2 + $0x7c] sm:$0xf]
        %v845 = vld [vmem:[#allocation2 + $0x80] sm:$0xf]
        %v846 = vld [vmem:[#allocation2 + $0x84] sm:$0xf]
        %v847 = vld [vmem:[#allocation2 + $0x8c] sm:$0xf]
        %v848 = vld [vmem:[#allocation2 + $0x90] sm:$0xf]
        %v849 = vld [vmem:[#allocation2 + $0x94] sm:$0xf]
        %v850 = vld [vmem:[#allocation2 + $0x98] sm:$0xf]
        %v851 = vld [vmem:[#allocation2 + $0x10] sm:$0x1]
        %v852 = vld [vmem:[#allocation2 + $0x24] sm:$0x1]
        %v853 = vld [vmem:[#allocation2 + $0x38] sm:$0x1]
        %v854 = vld [vmem:[#allocation2 + $0x4c] sm:$0x1]
        %v855 = vld [vmem:[#allocation2 + $0x60] sm:$0x1]
        %v856 = vld [vmem:[#allocation2 + $0x74] sm:$0x1]
        %v857 = vld [vmem:[#allocation2 + $0x88] sm:$0x1]
        %v858 = vld [vmem:[#allocation2 + $0x9c] sm:$0x1]
        %vm859 = vsmask.f32 3328
        %vm860 = vsmask.f32 7440
        %vm861 = vmor %vm859, %vm860
        %v863 = vshrl.u32 %v819, 16
        %v865 = vrot.slane %v863, 4
        %v866 = vshll.u32 %v819, 16
        %v868 = vrot.slane %v866, 5
        %v869 = vor.u32 %v865, %v868
        %v870 = vrot.slane %v869, 4
        %v872 = vshll.u32 %v820, 16
        %v874 = vrot.slane %v872, 5
        %v875 = vsel %vm861, %v870, %v874
        %v876 = vshrl.u32 %v820, 16
        %v878 = vrot.slane %v876, 4
        %v879 = vor.u32 %v878, %v874
        %v880 = vrot.slane %v879, 4
        %v882 = vshll.u32 %v821, 16
        %v884 = vrot.slane %v882, 5
        %v885 = vsel %vm861, %v880, %v884
        %v886 = vshrl.u32 %v821, 16
        %v888 = vrot.slane %v886, 4
        %v889 = vor.u32 %v888, %v884
        %v890 = vrot.slane %v889, 4
        %v892 = vshll.u32 %v822, 16
        %v894 = vrot.slane %v892, 5
        %v895 = vsel %vm861, %v890, %v894
        %v896 = vshrl.u32 %v822, 16
        %v898 = vrot.slane %v896, 4
        %v899 = vor.u32 %v898, %v894
        %v900 = vrot.slane %v899, 4
        %v902 = vshll.u32 %v851, 16
        %v904 = vrot.slane %v902, 5
        %v905 = vsel %vm861, %v900, %v904
        %v907 = vshrl.u32 %v823, 16
        %v909 = vrot.slane %v907, 4
        %v910 = vshll.u32 %v823, 16
        %v912 = vrot.slane %v910, 5
        %v913 = vor.u32 %v909, %v912
        %v914 = vrot.slane %v913, 4
        %v916 = vshll.u32 %v824, 16
        %v918 = vrot.slane %v916, 5
        %v919 = vsel %vm861, %v914, %v918
        %v920 = vshrl.u32 %v824, 16
        %v922 = vrot.slane %v920, 4
        %v923 = vor.u32 %v922, %v918
        %v924 = vrot.slane %v923, 4
        %v926 = vshll.u32 %v825, 16
        %v928 = vrot.slane %v926, 5
        %v929 = vsel %vm861, %v924, %v928
        %v930 = vshrl.u32 %v825, 16
        %v932 = vrot.slane %v930, 4
        %v933 = vor.u32 %v932, %v928
        %v934 = vrot.slane %v933, 4
        %v936 = vshll.u32 %v826, 16
        %v938 = vrot.slane %v936, 5
        %v939 = vsel %vm861, %v934, %v938
        %v940 = vshrl.u32 %v826, 16
        %v942 = vrot.slane %v940, 4
        %v943 = vor.u32 %v942, %v938
        %v944 = vrot.slane %v943, 4
        %v946 = vshll.u32 %v852, 16
        %v948 = vrot.slane %v946, 5
        %v949 = vsel %vm861, %v944, %v948
        %v951 = vshrl.u32 %v827, 16
        %v953 = vrot.slane %v951, 4
        %v954 = vshll.u32 %v827, 16
        %v956 = vrot.slane %v954, 5
        %v957 = vor.u32 %v953, %v956
        %v958 = vrot.slane %v957, 4
        %v960 = vshll.u32 %v828, 16
        %v962 = vrot.slane %v960, 5
        %v963 = vsel %vm861, %v958, %v962
        %v964 = vshrl.u32 %v828, 16
        %v966 = vrot.slane %v964, 4
        %v967 = vor.u32 %v966, %v962
        %v968 = vrot.slane %v967, 4
        %v970 = vshll.u32 %v829, 16
        %v972 = vrot.slane %v970, 5
        %v973 = vsel %vm861, %v968, %v972
        %v974 = vshrl.u32 %v829, 16
        %v976 = vrot.slane %v974, 4
        %v977 = vor.u32 %v976, %v972
        %v978 = vrot.slane %v977, 4
        %v980 = vshll.u32 %v830, 16
        %v982 = vrot.slane %v980, 5
        %v983 = vsel %vm861, %v978, %v982
        %v984 = vshrl.u32 %v830, 16
        %v986 = vrot.slane %v984, 4
        %v987 = vor.u32 %v986, %v982
        %v988 = vrot.slane %v987, 4
        %v990 = vshll.u32 %v853, 16
        %v992 = vrot.slane %v990, 5
        %v993 = vsel %vm861, %v988, %v992
        %v995 = vshrl.u32 %v831, 16
        %v997 = vrot.slane %v995, 4
        %v998 = vshll.u32 %v831, 16
        %v1000 = vrot.slane %v998, 5
        %v1001 = vor.u32 %v997, %v1000
        %v1002 = vrot.slane %v1001, 4
        %v1004 = vshll.u32 %v832, 16
        %v1006 = vrot.slane %v1004, 5
        %v1007 = vsel %vm861, %v1002, %v1006
        %v1008 = vshrl.u32 %v832, 16
        %v1010 = vrot.slane %v1008, 4
        %v1011 = vor.u32 %v1010, %v1006
        %v1012 = vrot.slane %v1011, 4
        %v1014 = vshll.u32 %v833, 16
        %v1016 = vrot.slane %v1014, 5
        %v1017 = vsel %vm861, %v1012, %v1016
        %v1018 = vshrl.u32 %v833, 16
        %v1020 = vrot.slane %v1018, 4
        %v1021 = vor.u32 %v1020, %v1016
        %v1022 = vrot.slane %v1021, 4
        %v1024 = vshll.u32 %v834, 16
        %v1026 = vrot.slane %v1024, 5
        %v1027 = vsel %vm861, %v1022, %v1026
        %v1028 = vshrl.u32 %v834, 16
        %v1030 = vrot.slane %v1028, 4
        %v1031 = vor.u32 %v1030, %v1026
        %v1032 = vrot.slane %v1031, 4
        %v1034 = vshll.u32 %v854, 16
        %v1036 = vrot.slane %v1034, 5
        %v1037 = vsel %vm861, %v1032, %v1036
        %v1039 = vshrl.u32 %v835, 16
        %v1041 = vrot.slane %v1039, 4
        %v1042 = vshll.u32 %v835, 16
        %v1044 = vrot.slane %v1042, 5
        %v1045 = vor.u32 %v1041, %v1044
        %v1046 = vrot.slane %v1045, 4
        %v1048 = vshll.u32 %v836, 16
        %v1050 = vrot.slane %v1048, 5
        %v1051 = vsel %vm861, %v1046, %v1050
        %v1052 = vshrl.u32 %v836, 16
        %v1054 = vrot.slane %v1052, 4
        %v1055 = vor.u32 %v1054, %v1050
        %v1056 = vrot.slane %v1055, 4
        %v1058 = vshll.u32 %v837, 16
        %v1060 = vrot.slane %v1058, 5
        %v1061 = vsel %vm861, %v1056, %v1060
        %v1062 = vshrl.u32 %v837, 16
        %v1064 = vrot.slane %v1062, 4
        %v1065 = vor.u32 %v1064, %v1060
        %v1066 = vrot.slane %v1065, 4
        %v1068 = vshll.u32 %v838, 16
        %v1070 = vrot.slane %v1068, 5
        %v1071 = vsel %vm861, %v1066, %v1070
        %v1072 = vshrl.u32 %v838, 16
        %v1074 = vrot.slane %v1072, 4
        %v1075 = vor.u32 %v1074, %v1070
        %v1076 = vrot.slane %v1075, 4
        %v1078 = vshll.u32 %v855, 16
        %v1080 = vrot.slane %v1078, 5
        %v1081 = vsel %vm861, %v1076, %v1080
        %v1083 = vshrl.u32 %v839, 16
        %v1085 = vrot.slane %v1083, 4
        %v1086 = vshll.u32 %v839, 16
        %v1088 = vrot.slane %v1086, 5
        %v1089 = vor.u32 %v1085, %v1088
        %v1090 = vrot.slane %v1089, 4
        %v1092 = vshll.u32 %v840, 16
        %v1094 = vrot.slane %v1092, 5
        %v1095 = vsel %vm861, %v1090, %v1094
        %v1096 = vshrl.u32 %v840, 16
        %v1098 = vrot.slane %v1096, 4
        %v1099 = vor.u32 %v1098, %v1094
        %v1100 = vrot.slane %v1099, 4
        %v1102 = vshll.u32 %v841, 16
        %v1104 = vrot.slane %v1102, 5
        %v1105 = vsel %vm861, %v1100, %v1104
        %v1106 = vshrl.u32 %v841, 16
        %v1108 = vrot.slane %v1106, 4
        %v1109 = vor.u32 %v1108, %v1104
        %v1110 = vrot.slane %v1109, 4
        %v1112 = vshll.u32 %v842, 16
        %v1114 = vrot.slane %v1112, 5
        %v1115 = vsel %vm861, %v1110, %v1114
        %v1116 = vshrl.u32 %v842, 16
        %v1118 = vrot.slane %v1116, 4
        %v1119 = vor.u32 %v1118, %v1114
        %v1120 = vrot.slane %v1119, 4
        %v1122 = vshll.u32 %v856, 16
        %v1124 = vrot.slane %v1122, 5
        %v1125 = vsel %vm861, %v1120, %v1124
        %v1127 = vshrl.u32 %v843, 16
        %v1129 = vrot.slane %v1127, 4
        %v1130 = vshll.u32 %v843, 16
        %v1132 = vrot.slane %v1130, 5
        %v1133 = vor.u32 %v1129, %v1132
        %v1134 = vrot.slane %v1133, 4
        %v1136 = vshll.u32 %v844, 16
        %v1138 = vrot.slane %v1136, 5
        %v1139 = vsel %vm861, %v1134, %v1138
        %v1140 = vshrl.u32 %v844, 16
        %v1142 = vrot.slane %v1140, 4
        %v1143 = vor.u32 %v1142, %v1138
        %v1144 = vrot.slane %v1143, 4
        %v1146 = vshll.u32 %v845, 16
        %v1148 = vrot.slane %v1146, 5
        %v1149 = vsel %vm861, %v1144, %v1148
        %v1150 = vshrl.u32 %v845, 16
        %v1152 = vrot.slane %v1150, 4
        %v1153 = vor.u32 %v1152, %v1148
        %v1154 = vrot.slane %v1153, 4
        %v1156 = vshll.u32 %v846, 16
        %v1158 = vrot.slane %v1156, 5
        %v1159 = vsel %vm861, %v1154, %v1158
        %v1160 = vshrl.u32 %v846, 16
        %v1162 = vrot.slane %v1160, 4
        %v1163 = vor.u32 %v1162, %v1158
        %v1164 = vrot.slane %v1163, 4
        %v1166 = vshll.u32 %v857, 16
        %v1168 = vrot.slane %v1166, 5
        %v1169 = vsel %vm861, %v1164, %v1168
        %v1171 = vshrl.u32 %v847, 16
        %v1173 = vrot.slane %v1171, 4
        %v1174 = vshll.u32 %v847, 16
        %v1176 = vrot.slane %v1174, 5
        %v1177 = vor.u32 %v1173, %v1176
        %v1178 = vrot.slane %v1177, 4
        %v1180 = vshll.u32 %v848, 16
        %v1182 = vrot.slane %v1180, 5
        %v1183 = vsel %vm861, %v1178, %v1182
        %v1184 = vshrl.u32 %v848, 16
        %v1186 = vrot.slane %v1184, 4
        %v1187 = vor.u32 %v1186, %v1182
        %v1188 = vrot.slane %v1187, 4
        %v1190 = vshll.u32 %v849, 16
        %v1192 = vrot.slane %v1190, 5
        %v1193 = vsel %vm861, %v1188, %v1192
        %v1194 = vshrl.u32 %v849, 16
        %v1196 = vrot.slane %v1194, 4
        %v1197 = vor.u32 %v1196, %v1192
        %v1198 = vrot.slane %v1197, 4
        %v1200 = vshll.u32 %v850, 16
        %v1202 = vrot.slane %v1200, 5
        %v1203 = vsel %vm861, %v1198, %v1202
        %v1204 = vshrl.u32 %v850, 16
        %v1206 = vrot.slane %v1204, 4
        %v1207 = vor.u32 %v1206, %v1202
        %v1208 = vrot.slane %v1207, 4
        %v1210 = vshll.u32 %v858, 16
        %v1212 = vrot.slane %v1210, 5
        %v1213 = vsel %vm861, %v1208, %v1212
        %v1214 = vld [vmem:[#allocation2] sm:$0xe]
        %v1215 = vld [vmem:[#allocation2 + $0x14] sm:$0xe]
        %v1216 = vld [vmem:[#allocation2 + $0x28] sm:$0xe]
        %v1217 = vld [vmem:[#allocation2 + $0x3c] sm:$0xe]
        %v1218 = vld [vmem:[#allocation2 + $0x50] sm:$0xe]
        %v1219 = vld [vmem:[#allocation2 + $0x64] sm:$0xe]
        %v1220 = vld [vmem:[#allocation2 + $0x78] sm:$0xe]
        %v1221 = vld [vmem:[#allocation2 + $0x8c] sm:$0xe]
        %vm1262 = vcmask 1042432
        %vm1263 = vcmask 1046532
        %vm1264 = vmor %vm1262, %vm1263
        %v1265 = vrot.slane %v1214, 5
        %v1266 = vrot.slane %v1265, 4
        %v1267 = vrot.slane %v820, 5
        %v1268 = vsel %vm1264, %v1266, %v1267
        %v1269 = vrot.slane %v1267, 4
        %v1270 = vrot.slane %v821, 5
        %v1271 = vsel %vm1264, %v1269, %v1270
        %v1272 = vrot.slane %v1270, 4
        %v1273 = vrot.slane %v822, 5
        %v1274 = vsel %vm1264, %v1272, %v1273
        %v1275 = vrot.slane %v1273, 4
        %v1276 = vrot.slane %v851, 5
        %v1277 = vsel %vm1264, %v1275, %v1276
        %v1278 = vrot.slane %v1215, 5
        %v1279 = vrot.slane %v1278, 4
        %v1280 = vrot.slane %v824, 5
        %v1281 = vsel %vm1264, %v1279, %v1280
        %v1282 = vrot.slane %v1280, 4
        %v1283 = vrot.slane %v825, 5
        %v1284 = vsel %vm1264, %v1282, %v1283
        %v1285 = vrot.slane %v1283, 4
        %v1286 = vrot.slane %v826, 5
        %v1287 = vsel %vm1264, %v1285, %v1286
        %v1288 = vrot.slane %v1286, 4
        %v1289 = vrot.slane %v852, 5
        %v1290 = vsel %vm1264, %v1288, %v1289
        %v1291 = vrot.slane %v1216, 5
        %v1292 = vrot.slane %v1291, 4
        %v1293 = vrot.slane %v828, 5
        %v1294 = vsel %vm1264, %v1292, %v1293
        %v1295 = vrot.slane %v1293, 4
        %v1296 = vrot.slane %v829, 5
        %v1297 = vsel %vm1264, %v1295, %v1296
        %v1298 = vrot.slane %v1296, 4
        %v1299 = vrot.slane %v830, 5
        %v1300 = vsel %vm1264, %v1298, %v1299
        %v1301 = vrot.slane %v1299, 4
        %v1302 = vrot.slane %v853, 5
        %v1303 = vsel %vm1264, %v1301, %v1302
        %v1304 = vrot.slane %v1217, 5
        %v1305 = vrot.slane %v1304, 4
        %v1306 = vrot.slane %v832, 5
        %v1307 = vsel %vm1264, %v1305, %v1306
        %v1308 = vrot.slane %v1306, 4
        %v1309 = vrot.slane %v833, 5
        %v1310 = vsel %vm1264, %v1308, %v1309
        %v1311 = vrot.slane %v1309, 4
        %v1312 = vrot.slane %v834, 5
        %v1313 = vsel %vm1264, %v1311, %v1312
        %v1314 = vrot.slane %v1312, 4
        %v1315 = vrot.slane %v854, 5
        %v1316 = vsel %vm1264, %v1314, %v1315
        %v1317 = vrot.slane %v1218, 5
        %v1318 = vrot.slane %v1317, 4
        %v1319 = vrot.slane %v836, 5
        %v1320 = vsel %vm1264, %v1318, %v1319
        %v1321 = vrot.slane %v1319, 4
        %v1322 = vrot.slane %v837, 5
        %v1323 = vsel %vm1264, %v1321, %v1322
        %v1324 = vrot.slane %v1322, 4
        %v1325 = vrot.slane %v838, 5
        %v1326 = vsel %vm1264, %v1324, %v1325
        %v1327 = vrot.slane %v1325, 4
        %v1328 = vrot.slane %v855, 5
        %v1329 = vsel %vm1264, %v1327, %v1328
        %v1330 = vrot.slane %v1219, 5
        %v1331 = vrot.slane %v1330, 4
        %v1332 = vrot.slane %v840, 5
        %v1333 = vsel %vm1264, %v1331, %v1332
        %v1334 = vrot.slane %v1332, 4
        %v1335 = vrot.slane %v841, 5
        %v1336 = vsel %vm1264, %v1334, %v1335
        %v1337 = vrot.slane %v1335, 4
        %v1338 = vrot.slane %v842, 5
        %v1339 = vsel %vm1264, %v1337, %v1338
        %v1340 = vrot.slane %v1338, 4
        %v1341 = vrot.slane %v856, 5
        %v1342 = vsel %vm1264, %v1340, %v1341
        %v1343 = vrot.slane %v1220, 5
        %v1344 = vrot.slane %v1343, 4
        %v1345 = vrot.slane %v844, 5
        %v1346 = vsel %vm1264, %v1344, %v1345
        %v1347 = vrot.slane %v1345, 4
        %v1348 = vrot.slane %v845, 5
        %v1349 = vsel %vm1264, %v1347, %v1348
        %v1350 = vrot.slane %v1348, 4
        %v1351 = vrot.slane %v846, 5
        %v1352 = vsel %vm1264, %v1350, %v1351
        %v1353 = vrot.slane %v1351, 4
        %v1354 = vrot.slane %v857, 5
        %v1355 = vsel %vm1264, %v1353, %v1354
        %v1356 = vrot.slane %v1221, 5
        %v1357 = vrot.slane %v1356, 4
        %v1358 = vrot.slane %v848, 5
        %v1359 = vsel %vm1264, %v1357, %v1358
        %v1360 = vrot.slane %v1358, 4
        %v1361 = vrot.slane %v849, 5
        %v1362 = vsel %vm1264, %v1360, %v1361
        %v1363 = vrot.slane %v1361, 4
        %v1364 = vrot.slane %v850, 5
        %v1365 = vsel %vm1264, %v1363, %v1364
        %v1366 = vrot.slane %v1364, 4
        %v1367 = vrot.slane %v858, 5
        %v1368 = vsel %vm1264, %v1366, %v1367
        %v1369 = vld [vmem:[%s1] sm:$0xf]
        %v1370 = vld [vmem:[%s1 + $0x4] sm:$0xf]
        %v1371 = vld [vmem:[%s1 + $0x8] sm:$0xf]
        %v1372 = vld [vmem:[%s1 + $0xc] sm:$0xf]
        %v1373 = vld [vmem:[%s1 + $0x10] sm:$0xf]
        %v1374 = vld [vmem:[%s1 + $0x14] sm:$0xf]
        %v1375 = vld [vmem:[%s1 + $0x18] sm:$0xf]
        %v1376 = vld [vmem:[%s1 + $0x1c] sm:$0xf]
        %s1377 = scalar_lea.vmem %s1, 32
        %v1378 = vld [vmem:[%s1377] sm:$0xf]
        %v1379 = vld [vmem:[%s1377 + $0x4] sm:$0xf]
        %v1380 = vld [vmem:[%s1377 + $0x8] sm:$0xf]
        %v1381 = vld [vmem:[%s1377 + $0xc] sm:$0xf]
        %v1382 = vld [vmem:[%s1377 + $0x10] sm:$0xf]
        %v1383 = vld [vmem:[%s1377 + $0x14] sm:$0xf]
        %v1384 = vld [vmem:[%s1377 + $0x18] sm:$0xf]
        %v1385 = vld [vmem:[%s1377 + $0x1c] sm:$0xf]
        %v1386 = vunpack.c.l.b16 %v875
        %v1387 = vunpack.c.l.b16 %v885
        %v1388 = vunpack.c.l.b16 %v895
        %v1389 = vunpack.c.l.b16 %v905
        %v1390 = vunpack.c.l.b16 %v919
        %v1391 = vunpack.c.l.b16 %v929
        %v1392 = vunpack.c.l.b16 %v939
        %v1393 = vunpack.c.l.b16 %v949
        %v1394 = vunpack.c.l.b16 %v963
        %v1395 = vunpack.c.l.b16 %v973
        %v1396 = vunpack.c.l.b16 %v983
        %v1397 = vunpack.c.l.b16 %v993
        %v1398 = vunpack.c.l.b16 %v1007
        %v1399 = vunpack.c.l.b16 %v1017
        %v1400 = vunpack.c.l.b16 %v1027
        %v1401 = vunpack.c.l.b16 %v1037
        %v1402 = vunpack.c.l.b16 %v1051
        %v1403 = vunpack.c.l.b16 %v1061
        %v1404 = vunpack.c.l.b16 %v1071
        %v1405 = vunpack.c.l.b16 %v1081
        %v1406 = vunpack.c.l.b16 %v1095
        %v1407 = vunpack.c.l.b16 %v1105
        %v1408 = vunpack.c.l.b16 %v1115
        %v1409 = vunpack.c.l.b16 %v1125
        %v1410 = vunpack.c.l.b16 %v1139
        %v1411 = vunpack.c.l.b16 %v1149
        %v1412 = vunpack.c.l.b16 %v1159
        %v1413 = vunpack.c.l.b16 %v1169
        %v1414 = vunpack.c.l.b16 %v1183
        %v1415 = vunpack.c.l.b16 %v1193
        %v1416 = vunpack.c.l.b16 %v1203
        %v1417 = vunpack.c.l.b16 %v1213
        %v1418 = vpack.c.b16 %v1387, %v1386
        %v1419 = vpack.c.b16 %v1389, %v1388
        %v1420 = vpack.c.b16 %v1391, %v1390
        %v1421 = vpack.c.b16 %v1393, %v1392
        %v1422 = vpack.c.b16 %v1395, %v1394
        %v1423 = vpack.c.b16 %v1397, %v1396
        %v1424 = vpack.c.b16 %v1399, %v1398
        %v1425 = vpack.c.b16 %v1401, %v1400
        %v1426 = vpack.c.b16 %v1403, %v1402
        %v1427 = vpack.c.b16 %v1405, %v1404
        %v1428 = vpack.c.b16 %v1407, %v1406
        %v1429 = vpack.c.b16 %v1409, %v1408
        %v1430 = vpack.c.b16 %v1411, %v1410
        %v1431 = vpack.c.b16 %v1413, %v1412
        %v1432 = vpack.c.b16 %v1415, %v1414
        %v1433 = vpack.c.b16 %v1417, %v1416
        %v1442 = vunpack.c.l.b16 %v1378
        %v1443 = vunpack.c.l.b16 %v1379
        %v1444 = vunpack.c.l.b16 %v1380
        %v1445 = vunpack.c.l.b16 %v1381
        %v1446 = vunpack.c.l.b16 %v1382
        %v1447 = vunpack.c.l.b16 %v1383
        %v1448 = vunpack.c.l.b16 %v1384
        %v1449 = vunpack.c.l.b16 %v1385
        %v1450 = vpack.c.b16 %v1443, %v1442
        %v1451 = vpack.c.b16 %v1445, %v1444
        %v1452 = vpack.c.b16 %v1447, %v1446
        %v1453 = vpack.c.b16 %v1449, %v1448
        %vm1458 = vcmask 523264
        %v1460 = vsel %vm1458, %v1418, 0
        %v1463 = vsel %vm1458, %v1419, 0
        %v1466 = vsel %vm1458, %v1420, 0
        %v1469 = vsel %vm1458, %v1421, 0
        %v1472 = vsel %vm1458, %v1422, 0
        %v1475 = vsel %vm1458, %v1423, 0
        %v1478 = vsel %vm1458, %v1424, 0
        %v1481 = vsel %vm1458, %v1425, 0
        %v1484 = vsel %vm1458, %v1426, 0
        %v1487 = vsel %vm1458, %v1427, 0
        %v1490 = vsel %vm1458, %v1428, 0
        %v1493 = vsel %vm1458, %v1429, 0
        %v1496 = vsel %vm1458, %v1430, 0
        %v1499 = vsel %vm1458, %v1431, 0
        %v1502 = vsel %vm1458, %v1432, 0
        %v1505 = vsel %vm1458, %v1433, 0
        %1507 = vmatpush.bf16.msra.mxu0 0
        %1508 = vmatpush.bf16.msra.mxu0 0
        %1509 = vmatpush.bf16.msra.mxu0 0
        %1510 = vmatpush.bf16.msra.mxu0 0
        %1511 = vmatpush.bf16.msra.mxu0 %v1453
        %1512 = vmatpush.bf16.msra.mxu0 %v1452
        %1513 = vmatpush.bf16.msra.mxu0 %v1451
        %1514 = vmatpush.bf16.msra.mxu0 %v1450
        %1515 = vmatmul.bf16.gmra.mxu0 %v1460
        %v1516 = vpop.f32.mrf.mxu0
        %v1517 = vadd.f32 0.0, %v1516
        %v1518 = vpop.f32.mrf.mxu0
        %v1519 = vadd.f32 0.0, %v1518
        %1520 = vmatmul.bf16.gmra.mxu0 %v1463
        %v1521 = vpop.f32.mrf.mxu0
        %v1522 = vadd.f32 0.0, %v1521
        %v1523 = vpop.f32.mrf.mxu0
        %v1524 = vadd.f32 0.0, %v1523
        %1525 = vmatmul.bf16.gmra.mxu0 %v1466
        %v1526 = vpop.f32.mrf.mxu0
        %v1527 = vadd.f32 0.0, %v1526
        %v1528 = vpop.f32.mrf.mxu0
        %v1529 = vadd.f32 0.0, %v1528
        %1530 = vmatmul.bf16.gmra.mxu0 %v1469
        %v1531 = vpop.f32.mrf.mxu0
        %v1532 = vadd.f32 0.0, %v1531
        %v1533 = vpop.f32.mrf.mxu0
        %v1534 = vadd.f32 0.0, %v1533
        %1535 = vmatmul.bf16.gmra.mxu0 %v1472
        %v1536 = vpop.f32.mrf.mxu0
        %v1537 = vadd.f32 0.0, %v1536
        %v1538 = vpop.f32.mrf.mxu0
        %v1539 = vadd.f32 0.0, %v1538
        %1540 = vmatmul.bf16.gmra.mxu0 %v1475
        %v1541 = vpop.f32.mrf.mxu0
        %v1542 = vadd.f32 0.0, %v1541
        %v1543 = vpop.f32.mrf.mxu0
        %v1544 = vadd.f32 0.0, %v1543
        %1545 = vmatmul.bf16.gmra.mxu0 %v1478
        %v1546 = vpop.f32.mrf.mxu0
        %v1547 = vadd.f32 0.0, %v1546
        %v1548 = vpop.f32.mrf.mxu0
        %v1549 = vadd.f32 0.0, %v1548
        %1550 = vmatmul.bf16.gmra.mxu0 %v1481
        %v1551 = vpop.f32.mrf.mxu0
        %v1552 = vadd.f32 0.0, %v1551
        %v1553 = vpop.f32.mrf.mxu0
        %v1554 = vadd.f32 0.0, %v1553
        %1555 = vmatmul.bf16.gmra.mxu0 %v1484
        %v1556 = vpop.f32.mrf.mxu0
        %v1557 = vadd.f32 0.0, %v1556
        %v1558 = vpop.f32.mrf.mxu0
        %v1559 = vadd.f32 0.0, %v1558
        %1560 = vmatmul.bf16.gmra.mxu0 %v1487
        %v1561 = vpop.f32.mrf.mxu0
        %v1562 = vadd.f32 0.0, %v1561
        %v1563 = vpop.f32.mrf.mxu0
        %v1564 = vadd.f32 0.0, %v1563
        %1565 = vmatmul.bf16.gmra.mxu0 %v1490
        %v1566 = vpop.f32.mrf.mxu0
        %v1567 = vadd.f32 0.0, %v1566
        %v1568 = vpop.f32.mrf.mxu0
        %v1569 = vadd.f32 0.0, %v1568
        %1570 = vmatmul.bf16.gmra.mxu0 %v1493
        %v1571 = vpop.f32.mrf.mxu0
        %v1572 = vadd.f32 0.0, %v1571
        %v1573 = vpop.f32.mrf.mxu0
        %v1574 = vadd.f32 0.0, %v1573
        %1575 = vmatmul.bf16.gmra.mxu0 %v1496
        %v1576 = vpop.f32.mrf.mxu0
        %v1577 = vadd.f32 0.0, %v1576
        %v1578 = vpop.f32.mrf.mxu0
        %v1579 = vadd.f32 0.0, %v1578
        %1580 = vmatmul.bf16.gmra.mxu0 %v1499
        %v1581 = vpop.f32.mrf.mxu0
        %v1582 = vadd.f32 0.0, %v1581
        %v1583 = vpop.f32.mrf.mxu0
        %v1584 = vadd.f32 0.0, %v1583
        %1585 = vmatmul.bf16.gmra.mxu0 %v1502
        %v1586 = vpop.f32.mrf.mxu0
        %v1587 = vadd.f32 0.0, %v1586
        %v1588 = vpop.f32.mrf.mxu0
        %v1589 = vadd.f32 0.0, %v1588
        %1590 = vmatmul.bf16.gmra.mxu0 %v1505
        %v1591 = vpop.f32.mrf.mxu0
        %v1592 = vadd.f32 0.0, %v1591
        %v1593 = vpop.f32.mrf.mxu0
        %v1594 = vadd.f32 0.0, %v1593
        %1595 = vdwg.mxu0
        %v1604 = vunpack.c.l.b16 %v819
        %v1605 = vunpack.c.l.b16 %v820
        %v1606 = vunpack.c.l.b16 %v821
        %v1607 = vunpack.c.l.b16 %v822
        %v1608 = vunpack.c.l.b16 %v823
        %v1609 = vunpack.c.l.b16 %v824
        %v1610 = vunpack.c.l.b16 %v825
        %v1611 = vunpack.c.l.b16 %v826
        %v1612 = vunpack.c.l.b16 %v827
        %v1613 = vunpack.c.l.b16 %v828
        %v1614 = vunpack.c.l.b16 %v829
        %v1615 = vunpack.c.l.b16 %v830
        %v1616 = vunpack.c.l.b16 %v831
        %v1617 = vunpack.c.l.b16 %v832
        %v1618 = vunpack.c.l.b16 %v833
        %v1619 = vunpack.c.l.b16 %v834
        %v1620 = vunpack.c.l.b16 %v835
        %v1621 = vunpack.c.l.b16 %v836
        %v1622 = vunpack.c.l.b16 %v837
        %v1623 = vunpack.c.l.b16 %v838
        %v1624 = vunpack.c.l.b16 %v839
        %v1625 = vunpack.c.l.b16 %v840
        %v1626 = vunpack.c.l.b16 %v841
        %v1627 = vunpack.c.l.b16 %v842
        %v1628 = vunpack.c.l.b16 %v843
        %v1629 = vunpack.c.l.b16 %v844
        %v1630 = vunpack.c.l.b16 %v845
        %v1631 = vunpack.c.l.b16 %v846
        %v1632 = vunpack.c.l.b16 %v847
        %v1633 = vunpack.c.l.b16 %v848
        %v1634 = vunpack.c.l.b16 %v849
        %v1635 = vunpack.c.l.b16 %v850
        %v1636 = vpack.c.b16 %v1605, %v1604
        %v1637 = vpack.c.b16 %v1607, %v1606
        %v1638 = vpack.c.b16 %v1609, %v1608
        %v1639 = vpack.c.b16 %v1611, %v1610
        %v1640 = vpack.c.b16 %v1613, %v1612
        %v1641 = vpack.c.b16 %v1615, %v1614
        %v1642 = vpack.c.b16 %v1617, %v1616
        %v1643 = vpack.c.b16 %v1619, %v1618
        %v1644 = vpack.c.b16 %v1621, %v1620
        %v1645 = vpack.c.b16 %v1623, %v1622
        %v1646 = vpack.c.b16 %v1625, %v1624
        %v1647 = vpack.c.b16 %v1627, %v1626
        %v1648 = vpack.c.b16 %v1629, %v1628
        %v1649 = vpack.c.b16 %v1631, %v1630
        %v1650 = vpack.c.b16 %v1633, %v1632
        %v1651 = vpack.c.b16 %v1635, %v1634
        %v1660 = vunpack.c.l.b16 %v1369
        %v1661 = vunpack.c.l.b16 %v1370
        %v1662 = vunpack.c.l.b16 %v1371
        %v1663 = vunpack.c.l.b16 %v1372
        %v1664 = vunpack.c.l.b16 %v1373
        %v1665 = vunpack.c.l.b16 %v1374
        %v1666 = vunpack.c.l.b16 %v1375
        %v1667 = vunpack.c.l.b16 %v1376
        %v1668 = vpack.c.b16 %v1661, %v1660
        %v1669 = vpack.c.b16 %v1663, %v1662
        %v1670 = vpack.c.b16 %v1665, %v1664
        %v1671 = vpack.c.b16 %v1667, %v1666
        %v1677 = vsel %vm1458, %v1636, 0
        %v1680 = vsel %vm1458, %v1637, 0
        %v1683 = vsel %vm1458, %v1638, 0
        %v1686 = vsel %vm1458, %v1639, 0
        %v1689 = vsel %vm1458, %v1640, 0
        %v1692 = vsel %vm1458, %v1641, 0
        %v1695 = vsel %vm1458, %v1642, 0
        %v1698 = vsel %vm1458, %v1643, 0
        %v1701 = vsel %vm1458, %v1644, 0
        %v1704 = vsel %vm1458, %v1645, 0
        %v1707 = vsel %vm1458, %v1646, 0
        %v1710 = vsel %vm1458, %v1647, 0
        %v1713 = vsel %vm1458, %v1648, 0
        %v1716 = vsel %vm1458, %v1649, 0
        %v1719 = vsel %vm1458, %v1650, 0
        %v1722 = vsel %vm1458, %v1651, 0
        %1724 = vmatpush.bf16.msra.mxu0 0
        %1725 = vmatpush.bf16.msra.mxu0 0
        %1726 = vmatpush.bf16.msra.mxu0 0
        %1727 = vmatpush.bf16.msra.mxu0 0
        %1728 = vmatpush.bf16.msra.mxu0 %v1671
        %1729 = vmatpush.bf16.msra.mxu0 %v1670
        %1730 = vmatpush.bf16.msra.mxu0 %v1669
        %1731 = vmatpush.bf16.msra.mxu0 %v1668
        %1732 = vmatmul.bf16.gmra.mxu0 %v1677
        %v1733 = vpop.f32.mrf.mxu0
        %v1734 = vadd.f32 %v1517, %v1733
        %v1735 = vpop.f32.mrf.mxu0
        %v1736 = vadd.f32 %v1519, %v1735
        %1737 = vmatmul.bf16.gmra.mxu0 %v1680
        %v1738 = vpop.f32.mrf.mxu0
        %v1739 = vadd.f32 %v1522, %v1738
        %v1740 = vpop.f32.mrf.mxu0
        %v1741 = vadd.f32 %v1524, %v1740
        %1742 = vmatmul.bf16.gmra.mxu0 %v1683
        %v1743 = vpop.f32.mrf.mxu0
        %v1744 = vadd.f32 %v1527, %v1743
        %v1745 = vpop.f32.mrf.mxu0
        %v1746 = vadd.f32 %v1529, %v1745
        %1747 = vmatmul.bf16.gmra.mxu0 %v1686
        %v1748 = vpop.f32.mrf.mxu0
        %v1749 = vadd.f32 %v1532, %v1748
        %v1750 = vpop.f32.mrf.mxu0
        %v1751 = vadd.f32 %v1534, %v1750
        %1752 = vmatmul.bf16.gmra.mxu0 %v1689
        %v1753 = vpop.f32.mrf.mxu0
        %v1754 = vadd.f32 %v1537, %v1753
        %v1755 = vpop.f32.mrf.mxu0
        %v1756 = vadd.f32 %v1539, %v1755
        %1757 = vmatmul.bf16.gmra.mxu0 %v1692
        %v1758 = vpop.f32.mrf.mxu0
        %v1759 = vadd.f32 %v1542, %v1758
        %v1760 = vpop.f32.mrf.mxu0
        %v1761 = vadd.f32 %v1544, %v1760
        %1762 = vmatmul.bf16.gmra.mxu0 %v1695
        %v1763 = vpop.f32.mrf.mxu0
        %v1764 = vadd.f32 %v1547, %v1763
        %v1765 = vpop.f32.mrf.mxu0
        %v1766 = vadd.f32 %v1549, %v1765
        %1767 = vmatmul.bf16.gmra.mxu0 %v1698
        %v1768 = vpop.f32.mrf.mxu0
        %v1769 = vadd.f32 %v1552, %v1768
        %v1770 = vpop.f32.mrf.mxu0
        %v1771 = vadd.f32 %v1554, %v1770
        %1772 = vmatmul.bf16.gmra.mxu0 %v1701
        %v1773 = vpop.f32.mrf.mxu0
        %v1774 = vadd.f32 %v1557, %v1773
        %v1775 = vpop.f32.mrf.mxu0
        %v1776 = vadd.f32 %v1559, %v1775
        %1777 = vmatmul.bf16.gmra.mxu0 %v1704
        %v1778 = vpop.f32.mrf.mxu0
        %v1779 = vadd.f32 %v1562, %v1778
        %v1780 = vpop.f32.mrf.mxu0
        %v1781 = vadd.f32 %v1564, %v1780
        %1782 = vmatmul.bf16.gmra.mxu0 %v1707
        %v1783 = vpop.f32.mrf.mxu0
        %v1784 = vadd.f32 %v1567, %v1783
        %v1785 = vpop.f32.mrf.mxu0
        %v1786 = vadd.f32 %v1569, %v1785
        %1787 = vmatmul.bf16.gmra.mxu0 %v1710
        %v1788 = vpop.f32.mrf.mxu0
        %v1789 = vadd.f32 %v1572, %v1788
        %v1790 = vpop.f32.mrf.mxu0
        %v1791 = vadd.f32 %v1574, %v1790
        %1792 = vmatmul.bf16.gmra.mxu0 %v1713
        %v1793 = vpop.f32.mrf.mxu0
        %v1794 = vadd.f32 %v1577, %v1793
        %v1795 = vpop.f32.mrf.mxu0
        %v1796 = vadd.f32 %v1579, %v1795
        %1797 = vmatmul.bf16.gmra.mxu0 %v1716
        %v1798 = vpop.f32.mrf.mxu0
        %v1799 = vadd.f32 %v1582, %v1798
        %v1800 = vpop.f32.mrf.mxu0
        %v1801 = vadd.f32 %v1584, %v1800
        %1802 = vmatmul.bf16.gmra.mxu0 %v1719
        %v1803 = vpop.f32.mrf.mxu0
        %v1804 = vadd.f32 %v1587, %v1803
        %v1805 = vpop.f32.mrf.mxu0
        %v1806 = vadd.f32 %v1589, %v1805
        %1807 = vmatmul.bf16.gmra.mxu0 %v1722
        %v1808 = vpop.f32.mrf.mxu0
        %v1809 = vadd.f32 %v1592, %v1808
        %v1810 = vpop.f32.mrf.mxu0
        %v1811 = vadd.f32 %v1594, %v1810
        %1812 = vdwg.mxu0
        %s1813 = scalar_lea.vmem %s1, 64
        %v1814 = vld [vmem:[%s1813] sm:$0xf]
        %v1815 = vld [vmem:[%s1813 + $0x4] sm:$0xf]
        %v1816 = vld [vmem:[%s1813 + $0x8] sm:$0xf]
        %v1817 = vld [vmem:[%s1813 + $0xc] sm:$0xf]
        %v1818 = vld [vmem:[%s1813 + $0x10] sm:$0xf]
        %v1819 = vld [vmem:[%s1813 + $0x14] sm:$0xf]
        %v1820 = vld [vmem:[%s1813 + $0x18] sm:$0xf]
        %v1821 = vld [vmem:[%s1813 + $0x1c] sm:$0xf]
        %v1822 = vunpack.c.l.b16 %v1268
        %v1823 = vunpack.c.l.b16 %v1271
        %v1824 = vunpack.c.l.b16 %v1274
        %v1825 = vunpack.c.l.b16 %v1277
        %v1826 = vunpack.c.l.b16 %v1281
        %v1827 = vunpack.c.l.b16 %v1284
        %v1828 = vunpack.c.l.b16 %v1287
        %v1829 = vunpack.c.l.b16 %v1290
        %v1830 = vunpack.c.l.b16 %v1294
        %v1831 = vunpack.c.l.b16 %v1297
        %v1832 = vunpack.c.l.b16 %v1300
        %v1833 = vunpack.c.l.b16 %v1303
        %v1834 = vunpack.c.l.b16 %v1307
        %v1835 = vunpack.c.l.b16 %v1310
        %v1836 = vunpack.c.l.b16 %v1313
        %v1837 = vunpack.c.l.b16 %v1316
        %v1838 = vunpack.c.l.b16 %v1320
        %v1839 = vunpack.c.l.b16 %v1323
        %v1840 = vunpack.c.l.b16 %v1326
        %v1841 = vunpack.c.l.b16 %v1329
        %v1842 = vunpack.c.l.b16 %v1333
        %v1843 = vunpack.c.l.b16 %v1336
        %v1844 = vunpack.c.l.b16 %v1339
        %v1845 = vunpack.c.l.b16 %v1342
        %v1846 = vunpack.c.l.b16 %v1346
        %v1847 = vunpack.c.l.b16 %v1349
        %v1848 = vunpack.c.l.b16 %v1352
        %v1849 = vunpack.c.l.b16 %v1355
        %v1850 = vunpack.c.l.b16 %v1359
        %v1851 = vunpack.c.l.b16 %v1362
        %v1852 = vunpack.c.l.b16 %v1365
        %v1853 = vunpack.c.l.b16 %v1368
        %v1854 = vpack.c.b16 %v1823, %v1822
        %v1855 = vpack.c.b16 %v1825, %v1824
        %v1856 = vpack.c.b16 %v1827, %v1826
        %v1857 = vpack.c.b16 %v1829, %v1828
        %v1858 = vpack.c.b16 %v1831, %v1830
        %v1859 = vpack.c.b16 %v1833, %v1832
        %v1860 = vpack.c.b16 %v1835, %v1834
        %v1861 = vpack.c.b16 %v1837, %v1836
        %v1862 = vpack.c.b16 %v1839, %v1838
        %v1863 = vpack.c.b16 %v1841, %v1840
        %v1864 = vpack.c.b16 %v1843, %v1842
        %v1865 = vpack.c.b16 %v1845, %v1844
        %v1866 = vpack.c.b16 %v1847, %v1846
        %v1867 = vpack.c.b16 %v1849, %v1848
        %v1868 = vpack.c.b16 %v1851, %v1850
        %v1869 = vpack.c.b16 %v1853, %v1852
        %v1878 = vunpack.c.l.b16 %v1814
        %v1879 = vunpack.c.l.b16 %v1815
        %v1880 = vunpack.c.l.b16 %v1816
        %v1881 = vunpack.c.l.b16 %v1817
        %v1882 = vunpack.c.l.b16 %v1818
        %v1883 = vunpack.c.l.b16 %v1819
        %v1884 = vunpack.c.l.b16 %v1820
        %v1885 = vunpack.c.l.b16 %v1821
        %v1886 = vpack.c.b16 %v1879, %v1878
        %v1887 = vpack.c.b16 %v1881, %v1880
        %v1888 = vpack.c.b16 %v1883, %v1882
        %v1889 = vpack.c.b16 %v1885, %v1884
        %v1895 = vsel %vm1458, %v1854, 0
        %v1898 = vsel %vm1458, %v1855, 0
        %v1901 = vsel %vm1458, %v1856, 0
        %v1904 = vsel %vm1458, %v1857, 0
        %v1907 = vsel %vm1458, %v1858, 0
        %v1910 = vsel %vm1458, %v1859, 0
        %v1913 = vsel %vm1458, %v1860, 0
        %v1916 = vsel %vm1458, %v1861, 0
        %v1919 = vsel %vm1458, %v1862, 0
        %v1922 = vsel %vm1458, %v1863, 0
        %v1925 = vsel %vm1458, %v1864, 0
        %v1928 = vsel %vm1458, %v1865, 0
        %v1931 = vsel %vm1458, %v1866, 0
        %v1934 = vsel %vm1458, %v1867, 0
        %v1937 = vsel %vm1458, %v1868, 0
        %v1940 = vsel %vm1458, %v1869, 0
        %1942 = vmatpush.bf16.msra.mxu0 0
        %1943 = vmatpush.bf16.msra.mxu0 0
        %1944 = vmatpush.bf16.msra.mxu0 0
        %1945 = vmatpush.bf16.msra.mxu0 0
        %1946 = vmatpush.bf16.msra.mxu0 %v1889
        %1947 = vmatpush.bf16.msra.mxu0 %v1888
        %1948 = vmatpush.bf16.msra.mxu0 %v1887
        %1949 = vmatpush.bf16.msra.mxu0 %v1886
        %1950 = vmatmul.bf16.gmra.mxu0 %v1895
        %v1951 = vpop.f32.mrf.mxu0
        %v1952 = vadd.f32 0.0, %v1951
        %v1953 = vpop.f32.mrf.mxu0
        %v1954 = vadd.f32 0.0, %v1953
        %1955 = vmatmul.bf16.gmra.mxu0 %v1898
        %v1956 = vpop.f32.mrf.mxu0
        %v1957 = vadd.f32 0.0, %v1956
        %v1958 = vpop.f32.mrf.mxu0
        %v1959 = vadd.f32 0.0, %v1958
        %1960 = vmatmul.bf16.gmra.mxu0 %v1901
        %v1961 = vpop.f32.mrf.mxu0
        %v1962 = vadd.f32 0.0, %v1961
        %v1963 = vpop.f32.mrf.mxu0
        %v1964 = vadd.f32 0.0, %v1963
        %1965 = vmatmul.bf16.gmra.mxu0 %v1904
        %v1966 = vpop.f32.mrf.mxu0
        %v1967 = vadd.f32 0.0, %v1966
        %v1968 = vpop.f32.mrf.mxu0
        %v1969 = vadd.f32 0.0, %v1968
        %1970 = vmatmul.bf16.gmra.mxu0 %v1907
        %v1971 = vpop.f32.mrf.mxu0
        %v1972 = vadd.f32 0.0, %v1971
        %v1973 = vpop.f32.mrf.mxu0
        %v1974 = vadd.f32 0.0, %v1973
        %1975 = vmatmul.bf16.gmra.mxu0 %v1910
        %v1976 = vpop.f32.mrf.mxu0
        %v1977 = vadd.f32 0.0, %v1976
        %v1978 = vpop.f32.mrf.mxu0
        %v1979 = vadd.f32 0.0, %v1978
        %1980 = vmatmul.bf16.gmra.mxu0 %v1913
        %v1981 = vpop.f32.mrf.mxu0
        %v1982 = vadd.f32 0.0, %v1981
        %v1983 = vpop.f32.mrf.mxu0
        %v1984 = vadd.f32 0.0, %v1983
        %1985 = vmatmul.bf16.gmra.mxu0 %v1916
        %v1986 = vpop.f32.mrf.mxu0
        %v1987 = vadd.f32 0.0, %v1986
        %v1988 = vpop.f32.mrf.mxu0
        %v1989 = vadd.f32 0.0, %v1988
        %1990 = vmatmul.bf16.gmra.mxu0 %v1919
        %v1991 = vpop.f32.mrf.mxu0
        %v1992 = vadd.f32 0.0, %v1991
        %v1993 = vpop.f32.mrf.mxu0
        %v1994 = vadd.f32 0.0, %v1993
        %1995 = vmatmul.bf16.gmra.mxu0 %v1922
        %v1996 = vpop.f32.mrf.mxu0
        %v1997 = vadd.f32 0.0, %v1996
        %v1998 = vpop.f32.mrf.mxu0
        %v1999 = vadd.f32 0.0, %v1998
        %2000 = vmatmul.bf16.gmra.mxu0 %v1925
        %v2001 = vpop.f32.mrf.mxu0
        %v2002 = vadd.f32 0.0, %v2001
        %v2003 = vpop.f32.mrf.mxu0
        %v2004 = vadd.f32 0.0, %v2003
        %2005 = vmatmul.bf16.gmra.mxu0 %v1928
        %v2006 = vpop.f32.mrf.mxu0
        %v2007 = vadd.f32 0.0, %v2006
        %v2008 = vpop.f32.mrf.mxu0
        %v2009 = vadd.f32 0.0, %v2008
        %2010 = vmatmul.bf16.gmra.mxu0 %v1931
        %v2011 = vpop.f32.mrf.mxu0
        %v2012 = vadd.f32 0.0, %v2011
        %v2013 = vpop.f32.mrf.mxu0
        %v2014 = vadd.f32 0.0, %v2013
        %2015 = vmatmul.bf16.gmra.mxu0 %v1934
        %v2016 = vpop.f32.mrf.mxu0
        %v2017 = vadd.f32 0.0, %v2016
        %v2018 = vpop.f32.mrf.mxu0
        %v2019 = vadd.f32 0.0, %v2018
        %2020 = vmatmul.bf16.gmra.mxu0 %v1937
        %v2021 = vpop.f32.mrf.mxu0
        %v2022 = vadd.f32 0.0, %v2021
        %v2023 = vpop.f32.mrf.mxu0
        %v2024 = vadd.f32 0.0, %v2023
        %2025 = vmatmul.bf16.gmra.mxu0 %v1940
        %v2026 = vpop.f32.mrf.mxu0
        %v2027 = vadd.f32 0.0, %v2026
        %v2028 = vpop.f32.mrf.mxu0
        %v2029 = vadd.f32 0.0, %v2028
        %2030 = vdwg.mxu0
        %v2031 = vadd.f32 %v1734, %v1952
        %v2032 = vadd.f32 %v1736, %v1954
        %v2033 = vadd.f32 %v1739, %v1957
        %v2034 = vadd.f32 %v1741, %v1959
        %v2035 = vadd.f32 %v1744, %v1962
        %v2036 = vadd.f32 %v1746, %v1964
        %v2037 = vadd.f32 %v1749, %v1967
        %v2038 = vadd.f32 %v1751, %v1969
        %v2039 = vadd.f32 %v1754, %v1972
        %v2040 = vadd.f32 %v1756, %v1974
        %v2041 = vadd.f32 %v1759, %v1977
        %v2042 = vadd.f32 %v1761, %v1979
        %v2043 = vadd.f32 %v1764, %v1982
        %v2044 = vadd.f32 %v1766, %v1984
        %v2045 = vadd.f32 %v1769, %v1987
        %v2046 = vadd.f32 %v1771, %v1989
        %v2047 = vadd.f32 %v1774, %v1992
        %v2048 = vadd.f32 %v1776, %v1994
        %v2049 = vadd.f32 %v1779, %v1997
        %v2050 = vadd.f32 %v1781, %v1999
        %v2051 = vadd.f32 %v1784, %v2002
        %v2052 = vadd.f32 %v1786, %v2004
        %v2053 = vadd.f32 %v1789, %v2007
        %v2054 = vadd.f32 %v1791, %v2009
        %v2055 = vadd.f32 %v1794, %v2012
        %v2056 = vadd.f32 %v1796, %v2014
        %v2057 = vadd.f32 %v1799, %v2017
        %v2058 = vadd.f32 %v1801, %v2019
        %v2059 = vadd.f32 %v1804, %v2022
        %v2060 = vadd.f32 %v1806, %v2024
        %v2061 = vadd.f32 %v1809, %v2027
        %v2062 = vadd.f32 %v1811, %v2029
        %v2063 = vld [vmem:[%s2] sm:$0x1]
        %v2065 = vperm.slane %v2063, 0
        %v2067 = vadd.f32 %v2031, %v2065
        %v2068 = vadd.f32 %v2032, %v2065
        %v2069 = vadd.f32 %v2033, %v2065
        %v2070 = vadd.f32 %v2034, %v2065
        %v2071 = vadd.f32 %v2035, %v2065
        %v2072 = vadd.f32 %v2036, %v2065
        %v2073 = vadd.f32 %v2037, %v2065
        %v2074 = vadd.f32 %v2038, %v2065
        %v2075 = vadd.f32 %v2039, %v2065
        %v2076 = vadd.f32 %v2040, %v2065
        %v2077 = vadd.f32 %v2041, %v2065
        %v2078 = vadd.f32 %v2042, %v2065
        %v2079 = vadd.f32 %v2043, %v2065
        %v2080 = vadd.f32 %v2044, %v2065
        %v2081 = vadd.f32 %v2045, %v2065
        %v2082 = vadd.f32 %v2046, %v2065
        %v2083 = vadd.f32 %v2047, %v2065
        %v2084 = vadd.f32 %v2048, %v2065
        %v2085 = vadd.f32 %v2049, %v2065
        %v2086 = vadd.f32 %v2050, %v2065
        %v2087 = vadd.f32 %v2051, %v2065
        %v2088 = vadd.f32 %v2052, %v2065
        %v2089 = vadd.f32 %v2053, %v2065
        %v2090 = vadd.f32 %v2054, %v2065
        %v2091 = vadd.f32 %v2055, %v2065
        %v2092 = vadd.f32 %v2056, %v2065
        %v2093 = vadd.f32 %v2057, %v2065
        %v2094 = vadd.f32 %v2058, %v2065
        %v2095 = vadd.f32 %v2059, %v2065
        %v2096 = vadd.f32 %v2060, %v2065
        %v2097 = vadd.f32 %v2061, %v2065
        %v2098 = vadd.f32 %v2062, %v2065
        %v2099 = vmax.f32 %v2067, 0.0
        %v2100 = vmax.f32 %v2068, 0.0
        %v2101 = vmax.f32 %v2069, 0.0
        %v2102 = vmax.f32 %v2070, 0.0
        %v2103 = vmax.f32 %v2071, 0.0
        %v2104 = vmax.f32 %v2072, 0.0
        %v2105 = vmax.f32 %v2073, 0.0
        %v2106 = vmax.f32 %v2074, 0.0
        %v2107 = vmax.f32 %v2075, 0.0
        %v2108 = vmax.f32 %v2076, 0.0
        %v2109 = vmax.f32 %v2077, 0.0
        %v2110 = vmax.f32 %v2078, 0.0
        %v2111 = vmax.f32 %v2079, 0.0
        %v2112 = vmax.f32 %v2080, 0.0
        %v2113 = vmax.f32 %v2081, 0.0
        %v2114 = vmax.f32 %v2082, 0.0
        %v2115 = vmax.f32 %v2083, 0.0
        %v2116 = vmax.f32 %v2084, 0.0
        %v2117 = vmax.f32 %v2085, 0.0
        %v2118 = vmax.f32 %v2086, 0.0
        %v2119 = vmax.f32 %v2087, 0.0
        %v2120 = vmax.f32 %v2088, 0.0
        %v2121 = vmax.f32 %v2089, 0.0
        %v2122 = vmax.f32 %v2090, 0.0
        %v2123 = vmax.f32 %v2091, 0.0
        %v2124 = vmax.f32 %v2092, 0.0
        %v2125 = vmax.f32 %v2093, 0.0
        %v2126 = vmax.f32 %v2094, 0.0
        %v2127 = vmax.f32 %v2095, 0.0
        %v2128 = vmax.f32 %v2096, 0.0
        %v2129 = vmax.f32 %v2097, 0.0
        %v2130 = vmax.f32 %v2098, 0.0
        %v2132 = vunpack.c.l.s4 1966171168
        %v2133 = vunpack.c.0.s8 %v2132
        %v2134 = vperm.slane %v2099, %v2133
        %v2136 = vunpack.c.l.s4 1966171168
        %v2137 = vunpack.c.0.s8 %v2136
        %v2138 = vperm.slane %v2100, %v2137
        %v2140 = vunpack.c.l.s4 1966171168
        %v2141 = vunpack.c.0.s8 %v2140
        %v2142 = vperm.slane %v2101, %v2141
        %v2144 = vunpack.c.l.s4 1966171168
        %v2145 = vunpack.c.0.s8 %v2144
        %v2146 = vperm.slane %v2102, %v2145
        %v2148 = vunpack.c.l.s4 1966171168
        %v2149 = vunpack.c.0.s8 %v2148
        %v2150 = vperm.slane %v2103, %v2149
        %v2152 = vunpack.c.l.s4 1966171168
        %v2153 = vunpack.c.0.s8 %v2152
        %v2154 = vperm.slane %v2104, %v2153
        %v2156 = vunpack.c.l.s4 1966171168
        %v2157 = vunpack.c.0.s8 %v2156
        %v2158 = vperm.slane %v2105, %v2157
        %v2160 = vunpack.c.l.s4 1966171168
        %v2161 = vunpack.c.0.s8 %v2160
        %v2162 = vperm.slane %v2106, %v2161
        %v2164 = vunpack.c.l.s4 1966171168
        %v2165 = vunpack.c.0.s8 %v2164
        %v2166 = vperm.slane %v2107, %v2165
        %v2168 = vunpack.c.l.s4 1966171168
        %v2169 = vunpack.c.0.s8 %v2168
        %v2170 = vperm.slane %v2108, %v2169
        %v2172 = vunpack.c.l.s4 1966171168
        %v2173 = vunpack.c.0.s8 %v2172
        %v2174 = vperm.slane %v2109, %v2173
        %v2176 = vunpack.c.l.s4 1966171168
        %v2177 = vunpack.c.0.s8 %v2176
        %v2178 = vperm.slane %v2110, %v2177
        %v2180 = vunpack.c.l.s4 1966171168
        %v2181 = vunpack.c.0.s8 %v2180
        %v2182 = vperm.slane %v2111, %v2181
        %v2184 = vunpack.c.l.s4 1966171168
        %v2185 = vunpack.c.0.s8 %v2184
        %v2186 = vperm.slane %v2112, %v2185
        %v2188 = vunpack.c.l.s4 1966171168
        %v2189 = vunpack.c.0.s8 %v2188
        %v2190 = vperm.slane %v2113, %v2189
        %v2192 = vunpack.c.l.s4 1966171168
        %v2193 = vunpack.c.0.s8 %v2192
        %v2194 = vperm.slane %v2114, %v2193
        %v2196 = vunpack.c.l.s4 1966171168
        %v2197 = vunpack.c.0.s8 %v2196
        %v2198 = vperm.slane %v2115, %v2197
        %v2200 = vunpack.c.l.s4 1966171168
        %v2201 = vunpack.c.0.s8 %v2200
        %v2202 = vperm.slane %v2116, %v2201
        %v2204 = vunpack.c.l.s4 1966171168
        %v2205 = vunpack.c.0.s8 %v2204
        %v2206 = vperm.slane %v2117, %v2205
        %v2208 = vunpack.c.l.s4 1966171168
        %v2209 = vunpack.c.0.s8 %v2208
        %v2210 = vperm.slane %v2118, %v2209
        %v2212 = vunpack.c.l.s4 1966171168
        %v2213 = vunpack.c.0.s8 %v2212
        %v2214 = vperm.slane %v2119, %v2213
        %v2216 = vunpack.c.l.s4 1966171168
        %v2217 = vunpack.c.0.s8 %v2216
        %v2218 = vperm.slane %v2120, %v2217
        %v2220 = vunpack.c.l.s4 1966171168
        %v2221 = vunpack.c.0.s8 %v2220
        %v2222 = vperm.slane %v2121, %v2221
        %v2224 = vunpack.c.l.s4 1966171168
        %v2225 = vunpack.c.0.s8 %v2224
        %v2226 = vperm.slane %v2122, %v2225
        %v2228 = vunpack.c.l.s4 1966171168
        %v2229 = vunpack.c.0.s8 %v2228
        %v2230 = vperm.slane %v2123, %v2229
        %v2232 = vunpack.c.l.s4 1966171168
        %v2233 = vunpack.c.0.s8 %v2232
        %v2234 = vperm.slane %v2124, %v2233
        %v2236 = vunpack.c.l.s4 1966171168
        %v2237 = vunpack.c.0.s8 %v2236
        %v2238 = vperm.slane %v2125, %v2237
        %v2240 = vunpack.c.l.s4 1966171168
        %v2241 = vunpack.c.0.s8 %v2240
        %v2242 = vperm.slane %v2126, %v2241
        %v2244 = vunpack.c.l.s4 1966171168
        %v2245 = vunpack.c.0.s8 %v2244
        %v2246 = vperm.slane %v2127, %v2245
        %v2248 = vunpack.c.l.s4 1966171168
        %v2249 = vunpack.c.0.s8 %v2248
        %v2250 = vperm.slane %v2128, %v2249
        %v2252 = vunpack.c.l.s4 1966171168
        %v2253 = vunpack.c.0.s8 %v2252
        %v2254 = vperm.slane %v2129, %v2253
        %v2256 = vunpack.c.l.s4 1966171168
        %v2257 = vunpack.c.0.s8 %v2256
        %v2258 = vperm.slane %v2130, %v2257
        %v2291 = vrot.slane %v2134, 4
        %v2292 = vrot.slane %v2138, 4
        %v2293 = vrot.slane %v2142, 4
        %v2294 = vrot.slane %v2146, 4
        %v2295 = vrot.slane %v2150, 4
        %v2296 = vrot.slane %v2154, 4
        %v2297 = vrot.slane %v2158, 4
        %v2298 = vrot.slane %v2162, 4
        %v2299 = vrot.slane %v2166, 4
        %v2300 = vrot.slane %v2170, 4
        %v2301 = vrot.slane %v2174, 4
        %v2302 = vrot.slane %v2178, 4
        %v2303 = vrot.slane %v2182, 4
        %v2304 = vrot.slane %v2186, 4
        %v2305 = vrot.slane %v2190, 4
        %v2306 = vrot.slane %v2194, 4
        %v2307 = vrot.slane %v2198, 4
        %v2308 = vrot.slane %v2202, 4
        %v2309 = vrot.slane %v2206, 4
        %v2310 = vrot.slane %v2210, 4
        %v2311 = vrot.slane %v2214, 4
        %v2312 = vrot.slane %v2218, 4
        %v2313 = vrot.slane %v2222, 4
        %v2314 = vrot.slane %v2226, 4
        %v2315 = vrot.slane %v2230, 4
        %v2316 = vrot.slane %v2234, 4
        %v2317 = vrot.slane %v2238, 4
        %v2318 = vrot.slane %v2242, 4
        %v2319 = vrot.slane %v2246, 4
        %v2320 = vrot.slane %v2250, 4
        %v2321 = vrot.slane %v2254, 4
        %v2322 = vrot.slane %v2258, 4
        %v2355 = vmax.f32 %v2134, %v2291
        %v2356 = vmax.f32 %v2138, %v2292
        %v2357 = vmax.f32 %v2142, %v2293
        %v2358 = vmax.f32 %v2146, %v2294
        %v2359 = vmax.f32 %v2150, %v2295
        %v2360 = vmax.f32 %v2154, %v2296
        %v2361 = vmax.f32 %v2158, %v2297
        %v2362 = vmax.f32 %v2162, %v2298
        %v2363 = vmax.f32 %v2166, %v2299
        %v2364 = vmax.f32 %v2170, %v2300
        %v2365 = vmax.f32 %v2174, %v2301
        %v2366 = vmax.f32 %v2178, %v2302
        %v2367 = vmax.f32 %v2182, %v2303
        %v2368 = vmax.f32 %v2186, %v2304
        %v2369 = vmax.f32 %v2190, %v2305
        %v2370 = vmax.f32 %v2194, %v2306
        %v2371 = vmax.f32 %v2198, %v2307
        %v2372 = vmax.f32 %v2202, %v2308
        %v2373 = vmax.f32 %v2206, %v2309
        %v2374 = vmax.f32 %v2210, %v2310
        %v2375 = vmax.f32 %v2214, %v2311
        %v2376 = vmax.f32 %v2218, %v2312
        %v2377 = vmax.f32 %v2222, %v2313
        %v2378 = vmax.f32 %v2226, %v2314
        %v2379 = vmax.f32 %v2230, %v2315
        %v2380 = vmax.f32 %v2234, %v2316
        %v2381 = vmax.f32 %v2238, %v2317
        %v2382 = vmax.f32 %v2242, %v2318
        %v2383 = vmax.f32 %v2246, %v2319
        %v2384 = vmax.f32 %v2250, %v2320
        %v2385 = vmax.f32 %v2254, %v2321
        %v2386 = vmax.f32 %v2258, %v2322
        %vm2387 = vcmask 1040384
        %vm2388 = vmand %vm2387, %vm338
        %v2389 = vld [vmem:[#allocation3] sm:$0x1]
        %v2390 = vsel %vm2388, 0, %v2389
        %2391 = vst [vmem:[#allocation3] sm:$0x1] %v2390
        %v2392 = vld [vmem:[#allocation3 + $0xc] sm:$0x1]
        %v2393 = vsel %vm2388, 0, %v2392
        %2394 = vst [vmem:[#allocation3 + $0xc] sm:$0x1] %v2393
        %v2395 = vld [vmem:[#allocation3 + $0x18] sm:$0x1]
        %v2396 = vsel %vm2388, 0, %v2395
        %2397 = vst [vmem:[#allocation3 + $0x18] sm:$0x1] %v2396
        %v2398 = vld [vmem:[#allocation3 + $0x24] sm:$0x1]
        %v2399 = vsel %vm2388, 0, %v2398
        %2400 = vst [vmem:[#allocation3 + $0x24] sm:$0x1] %v2399
        %v2401 = vld [vmem:[#allocation3 + $0x30] sm:$0x1]
        %v2402 = vsel %vm2388, 0, %v2401
        %2403 = vst [vmem:[#allocation3 + $0x30] sm:$0x1] %v2402
        %v2404 = vld [vmem:[#allocation3 + $0x3c] sm:$0x1]
        %v2405 = vsel %vm2388, 0, %v2404
        %2406 = vst [vmem:[#allocation3 + $0x3c] sm:$0x1] %v2405
        %v2407 = vld [vmem:[#allocation3 + $0x48] sm:$0x1]
        %v2408 = vsel %vm2388, 0, %v2407
        %2409 = vst [vmem:[#allocation3 + $0x48] sm:$0x1] %v2408
        %v2410 = vld [vmem:[#allocation3 + $0x54] sm:$0x1]
        %v2411 = vsel %vm2388, 0, %v2410
        %2412 = vst [vmem:[#allocation3 + $0x54] sm:$0x1] %v2411
        %vm2413 = vmand %vm2387, %vm364
        %v2414 = vld [vmem:[#allocation3 + $0x8] sm:$0x1]
        %v2415 = vsel %vm2413, 0, %v2414
        %2416 = vst [vmem:[#allocation3 + $0x8] sm:$0x1] %v2415
        %v2417 = vld [vmem:[#allocation3 + $0x14] sm:$0x1]
        %v2418 = vsel %vm2413, 0, %v2417
        %2419 = vst [vmem:[#allocation3 + $0x14] sm:$0x1] %v2418
        %v2420 = vld [vmem:[#allocation3 + $0x20] sm:$0x1]
        %v2421 = vsel %vm2413, 0, %v2420
        %2422 = vst [vmem:[#allocation3 + $0x20] sm:$0x1] %v2421
        %v2423 = vld [vmem:[#allocation3 + $0x2c] sm:$0x1]
        %v2424 = vsel %vm2413, 0, %v2423
        %2425 = vst [vmem:[#allocation3 + $0x2c] sm:$0x1] %v2424
        %v2426 = vld [vmem:[#allocation3 + $0x38] sm:$0x1]
        %v2427 = vsel %vm2413, 0, %v2426
        %2428 = vst [vmem:[#allocation3 + $0x38] sm:$0x1] %v2427
        %v2429 = vld [vmem:[#allocation3 + $0x44] sm:$0x1]
        %v2430 = vsel %vm2413, 0, %v2429
        %2431 = vst [vmem:[#allocation3 + $0x44] sm:$0x1] %v2430
        %v2432 = vld [vmem:[#allocation3 + $0x50] sm:$0x1]
        %v2433 = vsel %vm2413, 0, %v2432
        %2434 = vst [vmem:[#allocation3 + $0x50] sm:$0x1] %v2433
        %v2435 = vld [vmem:[#allocation3 + $0x5c] sm:$0x1]
        %v2436 = vsel %vm2413, 0, %v2435
        %2437 = vst [vmem:[#allocation3 + $0x5c] sm:$0x1] %v2436
        %2470 = vst [vmem:[#allocation1] ss:$2 sm:$0xff] %v2355
        %s2471 = scalar_lea.vmem [#allocation1], 1
        %2472 = vst [vmem:[%s2471] ss:$2 sm:$0xff] %v2356
        %s2473 = scalar_lea.vmem [#allocation1], 16
        %2474 = vst [vmem:[%s2473] ss:$2 sm:$0xff] %v2357
        %s2475 = scalar_lea.vmem [#allocation1], 17
        %2476 = vst [vmem:[%s2475] ss:$2 sm:$0xff] %v2358
        %v2477 = vld.sshfl [vmem:[#allocation1] sm:$0xff pattern:$0x75316420]
        %v2478 = vld.sshfl [vmem:[#allocation1 + $0x10] sm:$0xff pattern:$0x75316420]
        %s2479 = scalar_lea.vmem [#allocation1], 32
        %2480 = vst [vmem:[%s2479] ss:$2 sm:$0xff] %v2359
        %s2481 = scalar_lea.vmem [#allocation1], 33
        %2482 = vst [vmem:[%s2481] ss:$2 sm:$0xff] %v2360
        %s2483 = scalar_lea.vmem [#allocation1], 48
        %2484 = vst [vmem:[%s2483] ss:$2 sm:$0xff] %v2361
        %s2485 = scalar_lea.vmem [#allocation1], 49
        %2486 = vst [vmem:[%s2485] ss:$2 sm:$0xff] %v2362
        %v2487 = vld.sshfl [vmem:[#allocation1 + $0x20] sm:$0xff pattern:$0x75316420]
        %v2488 = vld.sshfl [vmem:[#allocation1 + $0x30] sm:$0xff pattern:$0x75316420]
        %2489 = vst [vmem:[#allocation1] ss:$2 sm:$0xff] %v2363
        %2490 = vst [vmem:[%s2471] ss:$2 sm:$0xff] %v2364
        %2491 = vst [vmem:[%s2473] ss:$2 sm:$0xff] %v2365
        %2492 = vst [vmem:[%s2475] ss:$2 sm:$0xff] %v2366
        %v2493 = vld.sshfl [vmem:[#allocation1] sm:$0xff pattern:$0x75316420]
        %v2494 = vld.sshfl [vmem:[#allocation1 + $0x10] sm:$0xff pattern:$0x75316420]
        %2495 = vst [vmem:[%s2479] ss:$2 sm:$0xff] %v2367
        %2496 = vst [vmem:[%s2481] ss:$2 sm:$0xff] %v2368
        %2497 = vst [vmem:[%s2483] ss:$2 sm:$0xff] %v2369
        %2498 = vst [vmem:[%s2485] ss:$2 sm:$0xff] %v2370
        %v2499 = vld.sshfl [vmem:[#allocation1 + $0x20] sm:$0xff pattern:$0x75316420]
        %v2500 = vld.sshfl [vmem:[#allocation1 + $0x30] sm:$0xff pattern:$0x75316420]
        %2501 = vst [vmem:[#allocation1] ss:$2 sm:$0xff] %v2371
        %2502 = vst [vmem:[%s2471] ss:$2 sm:$0xff] %v2372
        %2503 = vst [vmem:[%s2473] ss:$2 sm:$0xff] %v2373
        %2504 = vst [vmem:[%s2475] ss:$2 sm:$0xff] %v2374
        %v2505 = vld.sshfl [vmem:[#allocation1] sm:$0xff pattern:$0x75316420]
        %v2506 = vld.sshfl [vmem:[#allocation1 + $0x10] sm:$0xff pattern:$0x75316420]
        %2507 = vst [vmem:[%s2479] ss:$2 sm:$0xff] %v2375
        %2508 = vst [vmem:[%s2481] ss:$2 sm:$0xff] %v2376
        %2509 = vst [vmem:[%s2483] ss:$2 sm:$0xff] %v2377
        %2510 = vst [vmem:[%s2485] ss:$2 sm:$0xff] %v2378
        %v2511 = vld.sshfl [vmem:[#allocation1 + $0x20] sm:$0xff pattern:$0x75316420]
        %v2512 = vld.sshfl [vmem:[#allocation1 + $0x30] sm:$0xff pattern:$0x75316420]
        %2513 = vst [vmem:[#allocation1] ss:$2 sm:$0xff] %v2379
        %2514 = vst [vmem:[%s2471] ss:$2 sm:$0xff] %v2380
        %2515 = vst [vmem:[%s2473] ss:$2 sm:$0xff] %v2381
        %2516 = vst [vmem:[%s2475] ss:$2 sm:$0xff] %v2382
        %v2517 = vld.sshfl [vmem:[#allocation1] sm:$0xff pattern:$0x75316420]
        %v2518 = vld.sshfl [vmem:[#allocation1 + $0x10] sm:$0xff pattern:$0x75316420]
        %2519 = vst [vmem:[%s2479] ss:$2 sm:$0xff] %v2383
        %2520 = vst [vmem:[%s2481] ss:$2 sm:$0xff] %v2384
        %2521 = vst [vmem:[%s2483] ss:$2 sm:$0xff] %v2385
        %2522 = vst [vmem:[%s2485] ss:$2 sm:$0xff] %v2386
        %v2523 = vld.sshfl [vmem:[#allocation1 + $0x20] sm:$0xff pattern:$0x75316420]
        %v2524 = vld.sshfl [vmem:[#allocation1 + $0x30] sm:$0xff pattern:$0x75316420]
        %v2541 = vpack.c.bf16 %v2477, %v2477
        %v2542 = vpack.c.bf16 %v2478, %v2478
        %v2543 = vpack.c.bf16 %v2487, %v2487
        %v2544 = vpack.c.bf16 %v2488, %v2488
        %v2545 = vpack.c.bf16 %v2493, %v2493
        %v2546 = vpack.c.bf16 %v2494, %v2494
        %v2547 = vpack.c.bf16 %v2499, %v2499
        %v2548 = vpack.c.bf16 %v2500, %v2500
        %v2549 = vpack.c.bf16 %v2505, %v2505
        %v2550 = vpack.c.bf16 %v2506, %v2506
        %v2551 = vpack.c.bf16 %v2511, %v2511
        %v2552 = vpack.c.bf16 %v2512, %v2512
        %v2553 = vpack.c.bf16 %v2517, %v2517
        %v2554 = vpack.c.bf16 %v2518, %v2518
        %v2555 = vpack.c.bf16 %v2523, %v2523
        %v2556 = vpack.c.bf16 %v2524, %v2524
        %v2558 = vshrl.u32 %v2541, 16
        %v2560 = vrot.slane %v2558, 7
        %v2561 = vshll.u32 %v2541, 16
        %v2563 = vor.u32 %v2560, %v2561
        %v2564 = vrot.slane %v2560, 4
        %v2566 = vshrl.u32 %v2542, 16
        %v2568 = vrot.slane %v2566, 7
        %v2569 = vshll.u32 %v2542, 16
        %v2571 = vor.u32 %v2568, %v2569
        %v2572 = vsel %vm423, %v2564, %v2571
        %v2573 = vrot.slane %v2568, 4
        %v2575 = vshrl.u32 %v2543, 16
        %v2577 = vrot.slane %v2575, 7
        %v2578 = vshll.u32 %v2543, 16
        %v2580 = vor.u32 %v2577, %v2578
        %v2581 = vrot.slane %v2577, 4
        %v2583 = vshrl.u32 %v2544, 16
        %v2585 = vrot.slane %v2583, 7
        %v2586 = vshll.u32 %v2544, 16
        %v2588 = vor.u32 %v2585, %v2586
        %v2589 = vsel %vm423, %v2581, %v2588
        %v2590 = vrot.slane %v2585, 4
        %v2592 = vshrl.u32 %v2545, 16
        %v2594 = vrot.slane %v2592, 7
        %v2595 = vshll.u32 %v2545, 16
        %v2597 = vor.u32 %v2594, %v2595
        %v2598 = vrot.slane %v2594, 4
        %v2600 = vshrl.u32 %v2546, 16
        %v2602 = vrot.slane %v2600, 7
        %v2603 = vshll.u32 %v2546, 16
        %v2605 = vor.u32 %v2602, %v2603
        %v2606 = vsel %vm423, %v2598, %v2605
        %v2607 = vrot.slane %v2602, 4
        %v2609 = vshrl.u32 %v2547, 16
        %v2611 = vrot.slane %v2609, 7
        %v2612 = vshll.u32 %v2547, 16
        %v2614 = vor.u32 %v2611, %v2612
        %v2615 = vrot.slane %v2611, 4
        %v2617 = vshrl.u32 %v2548, 16
        %v2619 = vrot.slane %v2617, 7
        %v2620 = vshll.u32 %v2548, 16
        %v2622 = vor.u32 %v2619, %v2620
        %v2623 = vsel %vm423, %v2615, %v2622
        %v2624 = vrot.slane %v2619, 4
        %v2626 = vshrl.u32 %v2549, 16
        %v2628 = vrot.slane %v2626, 7
        %v2629 = vshll.u32 %v2549, 16
        %v2631 = vor.u32 %v2628, %v2629
        %v2632 = vrot.slane %v2628, 4
        %v2634 = vshrl.u32 %v2550, 16
        %v2636 = vrot.slane %v2634, 7
        %v2637 = vshll.u32 %v2550, 16
        %v2639 = vor.u32 %v2636, %v2637
        %v2640 = vsel %vm423, %v2632, %v2639
        %v2641 = vrot.slane %v2636, 4
        %v2643 = vshrl.u32 %v2551, 16
        %v2645 = vrot.slane %v2643, 7
        %v2646 = vshll.u32 %v2551, 16
        %v2648 = vor.u32 %v2645, %v2646
        %v2649 = vrot.slane %v2645, 4
        %v2651 = vshrl.u32 %v2552, 16
        %v2653 = vrot.slane %v2651, 7
        %v2654 = vshll.u32 %v2552, 16
        %v2656 = vor.u32 %v2653, %v2654
        %v2657 = vsel %vm423, %v2649, %v2656
        %v2658 = vrot.slane %v2653, 4
        %v2660 = vshrl.u32 %v2553, 16
        %v2662 = vrot.slane %v2660, 7
        %v2663 = vshll.u32 %v2553, 16
        %v2665 = vor.u32 %v2662, %v2663
        %v2666 = vrot.slane %v2662, 4
        %v2668 = vshrl.u32 %v2554, 16
        %v2670 = vrot.slane %v2668, 7
        %v2671 = vshll.u32 %v2554, 16
        %v2673 = vor.u32 %v2670, %v2671
        %v2674 = vsel %vm423, %v2666, %v2673
        %v2675 = vrot.slane %v2670, 4
        %v2677 = vshrl.u32 %v2555, 16
        %v2679 = vrot.slane %v2677, 7
        %v2680 = vshll.u32 %v2555, 16
        %v2682 = vor.u32 %v2679, %v2680
        %v2683 = vrot.slane %v2679, 4
        %v2685 = vshrl.u32 %v2556, 16
        %v2687 = vrot.slane %v2685, 7
        %v2688 = vshll.u32 %v2556, 16
        %v2690 = vor.u32 %v2687, %v2688
        %v2691 = vsel %vm423, %v2683, %v2690
        %v2692 = vrot.slane %v2687, 4
        %vm2717 = vcmask 1043456
        %vm2718 = vmand %vm2717, %vm364
        %v2719 = vld [vmem:[#allocation3] sm:$0xf]
        %v2720 = vsel %vm2718, %v2563, %v2719
        %2721 = vst [vmem:[#allocation3] sm:$0xf] %v2720
        %2722 = vst [vmem:[#allocation3 + $0x4] sm:$0xf] %v2572
        %v2723 = vld [vmem:[#allocation3 + $0x8] sm:$0x1]
        %v2724 = vsel %vm2388, %v2573, %v2723
        %2725 = vst [vmem:[#allocation3 + $0x8] sm:$0x1] %v2724
        %v2726 = vld [vmem:[#allocation3 + $0xc] sm:$0xf]
        %v2727 = vsel %vm2718, %v2580, %v2726
        %2728 = vst [vmem:[#allocation3 + $0xc] sm:$0xf] %v2727
        %2729 = vst [vmem:[#allocation3 + $0x10] sm:$0xf] %v2589
        %v2730 = vld [vmem:[#allocation3 + $0x14] sm:$0x1]
        %v2731 = vsel %vm2388, %v2590, %v2730
        %2732 = vst [vmem:[#allocation3 + $0x14] sm:$0x1] %v2731
        %v2733 = vld [vmem:[#allocation3 + $0x18] sm:$0xf]
        %v2734 = vsel %vm2718, %v2597, %v2733
        %2735 = vst [vmem:[#allocation3 + $0x18] sm:$0xf] %v2734
        %2736 = vst [vmem:[#allocation3 + $0x1c] sm:$0xf] %v2606
        %v2737 = vld [vmem:[#allocation3 + $0x20] sm:$0x1]
        %v2738 = vsel %vm2388, %v2607, %v2737
        %2739 = vst [vmem:[#allocation3 + $0x20] sm:$0x1] %v2738
        %v2740 = vld [vmem:[#allocation3 + $0x24] sm:$0xf]
        %v2741 = vsel %vm2718, %v2614, %v2740
        %2742 = vst [vmem:[#allocation3 + $0x24] sm:$0xf] %v2741
        %2743 = vst [vmem:[#allocation3 + $0x28] sm:$0xf] %v2623
        %v2744 = vld [vmem:[#allocation3 + $0x2c] sm:$0x1]
        %v2745 = vsel %vm2388, %v2624, %v2744
        %2746 = vst [vmem:[#allocation3 + $0x2c] sm:$0x1] %v2745
        %v2747 = vld [vmem:[#allocation3 + $0x30] sm:$0xf]
        %v2748 = vsel %vm2718, %v2631, %v2747
        %2749 = vst [vmem:[#allocation3 + $0x30] sm:$0xf] %v2748
        %2750 = vst [vmem:[#allocation3 + $0x34] sm:$0xf] %v2640
        %v2751 = vld [vmem:[#allocation3 + $0x38] sm:$0x1]
        %v2752 = vsel %vm2388, %v2641, %v2751
        %2753 = vst [vmem:[#allocation3 + $0x38] sm:$0x1] %v2752
        %v2754 = vld [vmem:[#allocation3 + $0x3c] sm:$0xf]
        %v2755 = vsel %vm2718, %v2648, %v2754
        %2756 = vst [vmem:[#allocation3 + $0x3c] sm:$0xf] %v2755
        %2757 = vst [vmem:[#allocation3 + $0x40] sm:$0xf] %v2657
        %v2758 = vld [vmem:[#allocation3 + $0x44] sm:$0x1]
        %v2759 = vsel %vm2388, %v2658, %v2758
        %2760 = vst [vmem:[#allocation3 + $0x44] sm:$0x1] %v2759
        %v2761 = vld [vmem:[#allocation3 + $0x48] sm:$0xf]
        %v2762 = vsel %vm2718, %v2665, %v2761
        %2763 = vst [vmem:[#allocation3 + $0x48] sm:$0xf] %v2762
        %2764 = vst [vmem:[#allocation3 + $0x4c] sm:$0xf] %v2674
        %v2765 = vld [vmem:[#allocation3 + $0x50] sm:$0x1]
        %v2766 = vsel %vm2388, %v2675, %v2765
        %2767 = vst [vmem:[#allocation3 + $0x50] sm:$0x1] %v2766
        %v2768 = vld [vmem:[#allocation3 + $0x54] sm:$0xf]
        %v2769 = vsel %vm2718, %v2682, %v2768
        %2770 = vst [vmem:[#allocation3 + $0x54] sm:$0xf] %v2769
        %2771 = vst [vmem:[#allocation3 + $0x58] sm:$0xf] %v2691
        %v2772 = vld [vmem:[#allocation3 + $0x5c] sm:$0x1]
        %v2773 = vsel %vm2388, %v2692, %v2772
        %2774 = vst [vmem:[#allocation3 + $0x5c] sm:$0x1] %v2773
        %v2775 = vld [vmem:[#allocation3] sm:$0xf]
        %v2776 = vld [vmem:[#allocation3 + $0x4] sm:$0xf]
        %v2777 = vld [vmem:[#allocation3 + $0xc] sm:$0xf]
        %v2778 = vld [vmem:[#allocation3 + $0x10] sm:$0xf]
        %v2779 = vld [vmem:[#allocation3 + $0x18] sm:$0xf]
        %v2780 = vld [vmem:[#allocation3 + $0x1c] sm:$0xf]
        %v2781 = vld [vmem:[#allocation3 + $0x24] sm:$0xf]
        %v2782 = vld [vmem:[#allocation3 + $0x28] sm:$0xf]
        %v2783 = vld [vmem:[#allocation3 + $0x30] sm:$0xf]
        %v2784 = vld [vmem:[#allocation3 + $0x34] sm:$0xf]
        %v2785 = vld [vmem:[#allocation3 + $0x3c] sm:$0xf]
        %v2786 = vld [vmem:[#allocation3 + $0x40] sm:$0xf]
        %v2787 = vld [vmem:[#allocation3 + $0x48] sm:$0xf]
        %v2788 = vld [vmem:[#allocation3 + $0x4c] sm:$0xf]
        %v2789 = vld [vmem:[#allocation3 + $0x54] sm:$0xf]
        %v2790 = vld [vmem:[#allocation3 + $0x58] sm:$0xf]
        %v2791 = vld [vmem:[#allocation3 + $0x8] sm:$0x1]
        %v2792 = vld [vmem:[#allocation3 + $0x14] sm:$0x1]
        %v2793 = vld [vmem:[#allocation3 + $0x20] sm:$0x1]
        %v2794 = vld [vmem:[#allocation3 + $0x2c] sm:$0x1]
        %v2795 = vld [vmem:[#allocation3 + $0x38] sm:$0x1]
        %v2796 = vld [vmem:[#allocation3 + $0x44] sm:$0x1]
        %v2797 = vld [vmem:[#allocation3 + $0x50] sm:$0x1]
        %v2798 = vld [vmem:[#allocation3 + $0x5c] sm:$0x1]
        %v2800 = vshrl.u32 %v2775, 16
        %v2802 = vrot.slane %v2800, 4
        %v2803 = vshll.u32 %v2775, 16
        %v2805 = vrot.slane %v2803, 5
        %v2806 = vor.u32 %v2802, %v2805
        %v2807 = vrot.slane %v2806, 4
        %v2809 = vshll.u32 %v2776, 16
        %v2811 = vrot.slane %v2809, 5
        %v2812 = vsel %vm861, %v2807, %v2811
        %v2813 = vshrl.u32 %v2776, 16
        %v2815 = vrot.slane %v2813, 4
        %v2816 = vor.u32 %v2815, %v2811
        %v2817 = vrot.slane %v2816, 4
        %v2819 = vshll.u32 %v2791, 16
        %v2821 = vrot.slane %v2819, 5
        %v2822 = vsel %vm861, %v2817, %v2821
        %v2824 = vshrl.u32 %v2777, 16
        %v2826 = vrot.slane %v2824, 4
        %v2827 = vshll.u32 %v2777, 16
        %v2829 = vrot.slane %v2827, 5
        %v2830 = vor.u32 %v2826, %v2829
        %v2831 = vrot.slane %v2830, 4
        %v2833 = vshll.u32 %v2778, 16
        %v2835 = vrot.slane %v2833, 5
        %v2836 = vsel %vm861, %v2831, %v2835
        %v2837 = vshrl.u32 %v2778, 16
        %v2839 = vrot.slane %v2837, 4
        %v2840 = vor.u32 %v2839, %v2835
        %v2841 = vrot.slane %v2840, 4
        %v2843 = vshll.u32 %v2792, 16
        %v2845 = vrot.slane %v2843, 5
        %v2846 = vsel %vm861, %v2841, %v2845
        %v2848 = vshrl.u32 %v2779, 16
        %v2850 = vrot.slane %v2848, 4
        %v2851 = vshll.u32 %v2779, 16
        %v2853 = vrot.slane %v2851, 5
        %v2854 = vor.u32 %v2850, %v2853
        %v2855 = vrot.slane %v2854, 4
        %v2857 = vshll.u32 %v2780, 16
        %v2859 = vrot.slane %v2857, 5
        %v2860 = vsel %vm861, %v2855, %v2859
        %v2861 = vshrl.u32 %v2780, 16
        %v2863 = vrot.slane %v2861, 4
        %v2864 = vor.u32 %v2863, %v2859
        %v2865 = vrot.slane %v2864, 4
        %v2867 = vshll.u32 %v2793, 16
        %v2869 = vrot.slane %v2867, 5
        %v2870 = vsel %vm861, %v2865, %v2869
        %v2872 = vshrl.u32 %v2781, 16
        %v2874 = vrot.slane %v2872, 4
        %v2875 = vshll.u32 %v2781, 16
        %v2877 = vrot.slane %v2875, 5
        %v2878 = vor.u32 %v2874, %v2877
        %v2879 = vrot.slane %v2878, 4
        %v2881 = vshll.u32 %v2782, 16
        %v2883 = vrot.slane %v2881, 5
        %v2884 = vsel %vm861, %v2879, %v2883
        %v2885 = vshrl.u32 %v2782, 16
        %v2887 = vrot.slane %v2885, 4
        %v2888 = vor.u32 %v2887, %v2883
        %v2889 = vrot.slane %v2888, 4
        %v2891 = vshll.u32 %v2794, 16
        %v2893 = vrot.slane %v2891, 5
        %v2894 = vsel %vm861, %v2889, %v2893
        %v2896 = vshrl.u32 %v2783, 16
        %v2898 = vrot.slane %v2896, 4
        %v2899 = vshll.u32 %v2783, 16
        %v2901 = vrot.slane %v2899, 5
        %v2902 = vor.u32 %v2898, %v2901
        %v2903 = vrot.slane %v2902, 4
        %v2905 = vshll.u32 %v2784, 16
        %v2907 = vrot.slane %v2905, 5
        %v2908 = vsel %vm861, %v2903, %v2907
        %v2909 = vshrl.u32 %v2784, 16
        %v2911 = vrot.slane %v2909, 4
        %v2912 = vor.u32 %v2911, %v2907
        %v2913 = vrot.slane %v2912, 4
        %v2915 = vshll.u32 %v2795, 16
        %v2917 = vrot.slane %v2915, 5
        %v2918 = vsel %vm861, %v2913, %v2917
        %v2920 = vshrl.u32 %v2785, 16
        %v2922 = vrot.slane %v2920, 4
        %v2923 = vshll.u32 %v2785, 16
        %v2925 = vrot.slane %v2923, 5
        %v2926 = vor.u32 %v2922, %v2925
        %v2927 = vrot.slane %v2926, 4
        %v2929 = vshll.u32 %v2786, 16
        %v2931 = vrot.slane %v2929, 5
        %v2932 = vsel %vm861, %v2927, %v2931
        %v2933 = vshrl.u32 %v2786, 16
        %v2935 = vrot.slane %v2933, 4
        %v2936 = vor.u32 %v2935, %v2931
        %v2937 = vrot.slane %v2936, 4
        %v2939 = vshll.u32 %v2796, 16
        %v2941 = vrot.slane %v2939, 5
        %v2942 = vsel %vm861, %v2937, %v2941
        %v2944 = vshrl.u32 %v2787, 16
        %v2946 = vrot.slane %v2944, 4
        %v2947 = vshll.u32 %v2787, 16
        %v2949 = vrot.slane %v2947, 5
        %v2950 = vor.u32 %v2946, %v2949
        %v2951 = vrot.slane %v2950, 4
        %v2953 = vshll.u32 %v2788, 16
        %v2955 = vrot.slane %v2953, 5
        %v2956 = vsel %vm861, %v2951, %v2955
        %v2957 = vshrl.u32 %v2788, 16
        %v2959 = vrot.slane %v2957, 4
        %v2960 = vor.u32 %v2959, %v2955
        %v2961 = vrot.slane %v2960, 4
        %v2963 = vshll.u32 %v2797, 16
        %v2965 = vrot.slane %v2963, 5
        %v2966 = vsel %vm861, %v2961, %v2965
        %v2968 = vshrl.u32 %v2789, 16
        %v2970 = vrot.slane %v2968, 4
        %v2971 = vshll.u32 %v2789, 16
        %v2973 = vrot.slane %v2971, 5
        %v2974 = vor.u32 %v2970, %v2973
        %v2975 = vrot.slane %v2974, 4
        %v2977 = vshll.u32 %v2790, 16
        %v2979 = vrot.slane %v2977, 5
        %v2980 = vsel %vm861, %v2975, %v2979
        %v2981 = vshrl.u32 %v2790, 16
        %v2983 = vrot.slane %v2981, 4
        %v2984 = vor.u32 %v2983, %v2979
        %v2985 = vrot.slane %v2984, 4
        %v2987 = vshll.u32 %v2798, 16
        %v2989 = vrot.slane %v2987, 5
        %v2990 = vsel %vm861, %v2985, %v2989
        %v2991 = vld [vmem:[#allocation3] sm:$0xe]
        %v2992 = vld [vmem:[#allocation3 + $0xc] sm:$0xe]
        %v2993 = vld [vmem:[#allocation3 + $0x18] sm:$0xe]
        %v2994 = vld [vmem:[#allocation3 + $0x24] sm:$0xe]
        %v2995 = vld [vmem:[#allocation3 + $0x30] sm:$0xe]
        %v2996 = vld [vmem:[#allocation3 + $0x3c] sm:$0xe]
        %v2997 = vld [vmem:[#allocation3 + $0x48] sm:$0xe]
        %v2998 = vld [vmem:[#allocation3 + $0x54] sm:$0xe]
        %v3023 = vrot.slane %v2991, 5
        %v3024 = vrot.slane %v3023, 4
        %v3025 = vrot.slane %v2776, 5
        %v3026 = vsel %vm1264, %v3024, %v3025
        %v3027 = vrot.slane %v3025, 4
        %v3028 = vrot.slane %v2791, 5
        %v3029 = vsel %vm1264, %v3027, %v3028
        %v3030 = vrot.slane %v2992, 5
        %v3031 = vrot.slane %v3030, 4
        %v3032 = vrot.slane %v2778, 5
        %v3033 = vsel %vm1264, %v3031, %v3032
        %v3034 = vrot.slane %v3032, 4
        %v3035 = vrot.slane %v2792, 5
        %v3036 = vsel %vm1264, %v3034, %v3035
        %v3037 = vrot.slane %v2993, 5
        %v3038 = vrot.slane %v3037, 4
        %v3039 = vrot.slane %v2780, 5
        %v3040 = vsel %vm1264, %v3038, %v3039
        %v3041 = vrot.slane %v3039, 4
        %v3042 = vrot.slane %v2793, 5
        %v3043 = vsel %vm1264, %v3041, %v3042
        %v3044 = vrot.slane %v2994, 5
        %v3045 = vrot.slane %v3044, 4
        %v3046 = vrot.slane %v2782, 5
        %v3047 = vsel %vm1264, %v3045, %v3046
        %v3048 = vrot.slane %v3046, 4
        %v3049 = vrot.slane %v2794, 5
        %v3050 = vsel %vm1264, %v3048, %v3049
        %v3051 = vrot.slane %v2995, 5
        %v3052 = vrot.slane %v3051, 4
        %v3053 = vrot.slane %v2784, 5
        %v3054 = vsel %vm1264, %v3052, %v3053
        %v3055 = vrot.slane %v3053, 4
        %v3056 = vrot.slane %v2795, 5
        %v3057 = vsel %vm1264, %v3055, %v3056
        %v3058 = vrot.slane %v2996, 5
        %v3059 = vrot.slane %v3058, 4
        %v3060 = vrot.slane %v2786, 5
        %v3061 = vsel %vm1264, %v3059, %v3060
        %v3062 = vrot.slane %v3060, 4
        %v3063 = vrot.slane %v2796, 5
        %v3064 = vsel %vm1264, %v3062, %v3063
        %v3065 = vrot.slane %v2997, 5
        %v3066 = vrot.slane %v3065, 4
        %v3067 = vrot.slane %v2788, 5
        %v3068 = vsel %vm1264, %v3066, %v3067
        %v3069 = vrot.slane %v3067, 4
        %v3070 = vrot.slane %v2797, 5
        %v3071 = vsel %vm1264, %v3069, %v3070
        %v3072 = vrot.slane %v2998, 5
        %v3073 = vrot.slane %v3072, 4
        %v3074 = vrot.slane %v2790, 5
        %v3075 = vsel %vm1264, %v3073, %v3074
        %v3076 = vrot.slane %v3074, 4
        %v3077 = vrot.slane %v2798, 5
        %v3078 = vsel %vm1264, %v3076, %v3077
        %v3079 = vld [vmem:[%s3] sm:$0xff]
        %v3080 = vld [vmem:[%s3 + $0x8] sm:$0xff]
        %v3081 = vld [vmem:[%s3 + $0x10] sm:$0xff]
        %v3082 = vld [vmem:[%s3 + $0x18] sm:$0xff]
        %v3083 = vld [vmem:[%s3 + $0x20] sm:$0xff]
        %v3084 = vld [vmem:[%s3 + $0x28] sm:$0xff]
        %v3085 = vld [vmem:[%s3 + $0x30] sm:$0xff]
        %v3086 = vld [vmem:[%s3 + $0x38] sm:$0xff]
        %v3087 = vld [vmem:[%s3 + $0x40] sm:$0xff]
        %v3088 = vld [vmem:[%s3 + $0x48] sm:$0xff]
        %v3089 = vld [vmem:[%s3 + $0x50] sm:$0xff]
        %v3090 = vld [vmem:[%s3 + $0x58] sm:$0xff]
        %v3091 = vld [vmem:[%s3 + $0x60] sm:$0xff]
        %v3092 = vld [vmem:[%s3 + $0x68] sm:$0xff]
        %v3093 = vld [vmem:[%s3 + $0x70] sm:$0xff]
        %v3094 = vld [vmem:[%s3 + $0x78] sm:$0xff]
        %s3095 = scalar_lea.vmem %s3, 128
        %v3096 = vld [vmem:[%s3095] sm:$0xff]
        %v3097 = vld [vmem:[%s3095 + $0x8] sm:$0xff]
        %v3098 = vld [vmem:[%s3095 + $0x10] sm:$0xff]
        %v3099 = vld [vmem:[%s3095 + $0x18] sm:$0xff]
        %v3100 = vld [vmem:[%s3095 + $0x20] sm:$0xff]
        %v3101 = vld [vmem:[%s3095 + $0x28] sm:$0xff]
        %v3102 = vld [vmem:[%s3095 + $0x30] sm:$0xff]
        %v3103 = vld [vmem:[%s3095 + $0x38] sm:$0xff]
        %v3104 = vld [vmem:[%s3095 + $0x40] sm:$0xff]
        %v3105 = vld [vmem:[%s3095 + $0x48] sm:$0xff]
        %v3106 = vld [vmem:[%s3095 + $0x50] sm:$0xff]
        %v3107 = vld [vmem:[%s3095 + $0x58] sm:$0xff]
        %v3108 = vld [vmem:[%s3095 + $0x60] sm:$0xff]
        %v3109 = vld [vmem:[%s3095 + $0x68] sm:$0xff]
        %v3110 = vld [vmem:[%s3095 + $0x70] sm:$0xff]
        %v3111 = vld [vmem:[%s3095 + $0x78] sm:$0xff]
        %v3112 = vunpack.c.l.b16 %v2812
        %v3113 = vunpack.c.l.b16 %v2822
        %v3114 = vunpack.c.l.b16 %v2836
        %v3115 = vunpack.c.l.b16 %v2846
        %v3116 = vunpack.c.l.b16 %v2860
        %v3117 = vunpack.c.l.b16 %v2870
        %v3118 = vunpack.c.l.b16 %v2884
        %v3119 = vunpack.c.l.b16 %v2894
        %v3120 = vunpack.c.l.b16 %v2908
        %v3121 = vunpack.c.l.b16 %v2918
        %v3122 = vunpack.c.l.b16 %v2932
        %v3123 = vunpack.c.l.b16 %v2942
        %v3124 = vunpack.c.l.b16 %v2956
        %v3125 = vunpack.c.l.b16 %v2966
        %v3126 = vunpack.c.l.b16 %v2980
        %v3127 = vunpack.c.l.b16 %v2990
        %v3128 = vpack.c.b16 %v3113, %v3112
        %v3129 = vpack.c.b16 %v3115, %v3114
        %v3130 = vpack.c.b16 %v3117, %v3116
        %v3131 = vpack.c.b16 %v3119, %v3118
        %v3132 = vpack.c.b16 %v3121, %v3120
        %v3133 = vpack.c.b16 %v3123, %v3122
        %v3134 = vpack.c.b16 %v3125, %v3124
        %v3135 = vpack.c.b16 %v3127, %v3126
        %v3160 = vunpack.c.l.b16 %v3096
        %v3161 = vunpack.c.h.b16 %v3096
        %v3162 = vunpack.c.l.b16 %v3097
        %v3163 = vunpack.c.h.b16 %v3097
        %v3164 = vunpack.c.l.b16 %v3098
        %v3165 = vunpack.c.h.b16 %v3098
        %v3166 = vunpack.c.l.b16 %v3099
        %v3167 = vunpack.c.h.b16 %v3099
        %v3168 = vunpack.c.l.b16 %v3100
        %v3169 = vunpack.c.h.b16 %v3100
        %v3170 = vunpack.c.l.b16 %v3101
        %v3171 = vunpack.c.h.b16 %v3101
        %v3172 = vunpack.c.l.b16 %v3102
        %v3173 = vunpack.c.h.b16 %v3102
        %v3174 = vunpack.c.l.b16 %v3103
        %v3175 = vunpack.c.h.b16 %v3103
        %v3176 = vunpack.c.l.b16 %v3104
        %v3177 = vunpack.c.h.b16 %v3104
        %v3178 = vunpack.c.l.b16 %v3105
        %v3179 = vunpack.c.h.b16 %v3105
        %v3180 = vunpack.c.l.b16 %v3106
        %v3181 = vunpack.c.h.b16 %v3106
        %v3182 = vunpack.c.l.b16 %v3107
        %v3183 = vunpack.c.h.b16 %v3107
        %v3184 = vunpack.c.l.b16 %v3108
        %v3185 = vunpack.c.h.b16 %v3108
        %v3186 = vunpack.c.l.b16 %v3109
        %v3187 = vunpack.c.h.b16 %v3109
        %v3188 = vunpack.c.l.b16 %v3110
        %v3189 = vunpack.c.h.b16 %v3110
        %v3190 = vunpack.c.l.b16 %v3111
        %v3191 = vunpack.c.h.b16 %v3111
        %v3192 = vpack.c.b16 %v3162, %v3160
        %v3193 = vpack.c.b16 %v3163, %v3161
        %v3194 = vpack.c.b16 %v3166, %v3164
        %v3195 = vpack.c.b16 %v3167, %v3165
        %v3196 = vpack.c.b16 %v3170, %v3168
        %v3197 = vpack.c.b16 %v3171, %v3169
        %v3198 = vpack.c.b16 %v3174, %v3172
        %v3199 = vpack.c.b16 %v3175, %v3173
        %v3200 = vpack.c.b16 %v3178, %v3176
        %v3201 = vpack.c.b16 %v3179, %v3177
        %v3202 = vpack.c.b16 %v3182, %v3180
        %v3203 = vpack.c.b16 %v3183, %v3181
        %v3204 = vpack.c.b16 %v3186, %v3184
        %v3205 = vpack.c.b16 %v3187, %v3185
        %v3206 = vpack.c.b16 %v3190, %v3188
        %v3207 = vpack.c.b16 %v3191, %v3189
        %3224 = vmatpush.bf16.msra.mxu0 %v3206
        %3225 = vmatpush.bf16.msra.mxu0 %v3204
        %3226 = vmatpush.bf16.msra.mxu0 %v3202
        %3227 = vmatpush.bf16.msra.mxu0 %v3200
        %3228 = vmatpush.bf16.msra.mxu0 %v3198
        %3229 = vmatpush.bf16.msra.mxu0 %v3196
        %3230 = vmatpush.bf16.msra.mxu0 %v3194
        %3231 = vmatpush.bf16.msra.mxu0 %v3192
        %3232 = vmatmul.bf16.gmra.mxu0 %v3128
        %v3233 = vpop.f32.mrf.mxu0
        %v3234 = vadd.f32 0.0, %v3233
        %v3235 = vpop.f32.mrf.mxu0
        %v3236 = vadd.f32 0.0, %v3235
        %3237 = vmatmul.bf16.gmra.mxu0 %v3129
        %v3238 = vpop.f32.mrf.mxu0
        %v3239 = vadd.f32 0.0, %v3238
        %v3240 = vpop.f32.mrf.mxu0
        %v3241 = vadd.f32 0.0, %v3240
        %3242 = vmatmul.bf16.gmra.mxu0 %v3130
        %v3243 = vpop.f32.mrf.mxu0
        %v3244 = vadd.f32 0.0, %v3243
        %v3245 = vpop.f32.mrf.mxu0
        %v3246 = vadd.f32 0.0, %v3245
        %3247 = vmatmul.bf16.gmra.mxu0 %v3131
        %v3248 = vpop.f32.mrf.mxu0
        %v3249 = vadd.f32 0.0, %v3248
        %v3250 = vpop.f32.mrf.mxu0
        %v3251 = vadd.f32 0.0, %v3250
        %3252 = vmatmul.bf16.gmra.mxu0 %v3132
        %v3253 = vpop.f32.mrf.mxu0
        %v3254 = vadd.f32 0.0, %v3253
        %v3255 = vpop.f32.mrf.mxu0
        %v3256 = vadd.f32 0.0, %v3255
        %3257 = vmatmul.bf16.gmra.mxu0 %v3133
        %v3258 = vpop.f32.mrf.mxu0
        %v3259 = vadd.f32 0.0, %v3258
        %v3260 = vpop.f32.mrf.mxu0
        %v3261 = vadd.f32 0.0, %v3260
        %3262 = vmatmul.bf16.gmra.mxu0 %v3134
        %v3263 = vpop.f32.mrf.mxu0
        %v3264 = vadd.f32 0.0, %v3263
        %v3265 = vpop.f32.mrf.mxu0
        %v3266 = vadd.f32 0.0, %v3265
        %3267 = vmatmul.bf16.gmra.mxu0 %v3135
        %v3268 = vpop.f32.mrf.mxu0
        %v3269 = vadd.f32 0.0, %v3268
        %v3270 = vpop.f32.mrf.mxu0
        %v3271 = vadd.f32 0.0, %v3270
        %3272 = vdwg.mxu0
        %3273 = vmatpush.bf16.msra.mxu0 %v3207
        %3274 = vmatpush.bf16.msra.mxu0 %v3205
        %3275 = vmatpush.bf16.msra.mxu0 %v3203
        %3276 = vmatpush.bf16.msra.mxu0 %v3201
        %3277 = vmatpush.bf16.msra.mxu0 %v3199
        %3278 = vmatpush.bf16.msra.mxu0 %v3197
        %3279 = vmatpush.bf16.msra.mxu0 %v3195
        %3280 = vmatpush.bf16.msra.mxu0 %v3193
        %3281 = vmatmul.bf16.gmra.mxu0 %v3128
        %v3282 = vpop.f32.mrf.mxu0
        %v3283 = vadd.f32 0.0, %v3282
        %v3284 = vpop.f32.mrf.mxu0
        %v3285 = vadd.f32 0.0, %v3284
        %3286 = vmatmul.bf16.gmra.mxu0 %v3129
        %v3287 = vpop.f32.mrf.mxu0
        %v3288 = vadd.f32 0.0, %v3287
        %v3289 = vpop.f32.mrf.mxu0
        %v3290 = vadd.f32 0.0, %v3289
        %3291 = vmatmul.bf16.gmra.mxu0 %v3130
        %v3292 = vpop.f32.mrf.mxu0
        %v3293 = vadd.f32 0.0, %v3292
        %v3294 = vpop.f32.mrf.mxu0
        %v3295 = vadd.f32 0.0, %v3294
        %3296 = vmatmul.bf16.gmra.mxu0 %v3131
        %v3297 = vpop.f32.mrf.mxu0
        %v3298 = vadd.f32 0.0, %v3297
        %v3299 = vpop.f32.mrf.mxu0
        %v3300 = vadd.f32 0.0, %v3299
        %3301 = vmatmul.bf16.gmra.mxu0 %v3132
        %v3302 = vpop.f32.mrf.mxu0
        %v3303 = vadd.f32 0.0, %v3302
        %v3304 = vpop.f32.mrf.mxu0
        %v3305 = vadd.f32 0.0, %v3304
        %3306 = vmatmul.bf16.gmra.mxu0 %v3133
        %v3307 = vpop.f32.mrf.mxu0
        %v3308 = vadd.f32 0.0, %v3307
        %v3309 = vpop.f32.mrf.mxu0
        %v3310 = vadd.f32 0.0, %v3309
        %3311 = vmatmul.bf16.gmra.mxu0 %v3134
        %v3312 = vpop.f32.mrf.mxu0
        %v3313 = vadd.f32 0.0, %v3312
        %v3314 = vpop.f32.mrf.mxu0
        %v3315 = vadd.f32 0.0, %v3314
        %3316 = vmatmul.bf16.gmra.mxu0 %v3135
        %v3317 = vpop.f32.mrf.mxu0
        %v3318 = vadd.f32 0.0, %v3317
        %v3319 = vpop.f32.mrf.mxu0
        %v3320 = vadd.f32 0.0, %v3319
        %3321 = vdwg.mxu0
        %v3330 = vunpack.c.l.b16 %v2775
        %v3331 = vunpack.c.l.b16 %v2776
        %v3332 = vunpack.c.l.b16 %v2777
        %v3333 = vunpack.c.l.b16 %v2778
        %v3334 = vunpack.c.l.b16 %v2779
        %v3335 = vunpack.c.l.b16 %v2780
        %v3336 = vunpack.c.l.b16 %v2781
        %v3337 = vunpack.c.l.b16 %v2782
        %v3338 = vunpack.c.l.b16 %v2783
        %v3339 = vunpack.c.l.b16 %v2784
        %v3340 = vunpack.c.l.b16 %v2785
        %v3341 = vunpack.c.l.b16 %v2786
        %v3342 = vunpack.c.l.b16 %v2787
        %v3343 = vunpack.c.l.b16 %v2788
        %v3344 = vunpack.c.l.b16 %v2789
        %v3345 = vunpack.c.l.b16 %v2790
        %v3346 = vpack.c.b16 %v3331, %v3330
        %v3347 = vpack.c.b16 %v3333, %v3332
        %v3348 = vpack.c.b16 %v3335, %v3334
        %v3349 = vpack.c.b16 %v3337, %v3336
        %v3350 = vpack.c.b16 %v3339, %v3338
        %v3351 = vpack.c.b16 %v3341, %v3340
        %v3352 = vpack.c.b16 %v3343, %v3342
        %v3353 = vpack.c.b16 %v3345, %v3344
        %v3378 = vunpack.c.l.b16 %v3079
        %v3379 = vunpack.c.h.b16 %v3079
        %v3380 = vunpack.c.l.b16 %v3080
        %v3381 = vunpack.c.h.b16 %v3080
        %v3382 = vunpack.c.l.b16 %v3081
        %v3383 = vunpack.c.h.b16 %v3081
        %v3384 = vunpack.c.l.b16 %v3082
        %v3385 = vunpack.c.h.b16 %v3082
        %v3386 = vunpack.c.l.b16 %v3083
        %v3387 = vunpack.c.h.b16 %v3083
        %v3388 = vunpack.c.l.b16 %v3084
        %v3389 = vunpack.c.h.b16 %v3084
        %v3390 = vunpack.c.l.b16 %v3085
        %v3391 = vunpack.c.h.b16 %v3085
        %v3392 = vunpack.c.l.b16 %v3086
        %v3393 = vunpack.c.h.b16 %v3086
        %v3394 = vunpack.c.l.b16 %v3087
        %v3395 = vunpack.c.h.b16 %v3087
        %v3396 = vunpack.c.l.b16 %v3088
        %v3397 = vunpack.c.h.b16 %v3088
        %v3398 = vunpack.c.l.b16 %v3089
        %v3399 = vunpack.c.h.b16 %v3089
        %v3400 = vunpack.c.l.b16 %v3090
        %v3401 = vunpack.c.h.b16 %v3090
        %v3402 = vunpack.c.l.b16 %v3091
        %v3403 = vunpack.c.h.b16 %v3091
        %v3404 = vunpack.c.l.b16 %v3092
        %v3405 = vunpack.c.h.b16 %v3092
        %v3406 = vunpack.c.l.b16 %v3093
        %v3407 = vunpack.c.h.b16 %v3093
        %v3408 = vunpack.c.l.b16 %v3094
        %v3409 = vunpack.c.h.b16 %v3094
        %v3410 = vpack.c.b16 %v3380, %v3378
        %v3411 = vpack.c.b16 %v3381, %v3379
        %v3412 = vpack.c.b16 %v3384, %v3382
        %v3413 = vpack.c.b16 %v3385, %v3383
        %v3414 = vpack.c.b16 %v3388, %v3386
        %v3415 = vpack.c.b16 %v3389, %v3387
        %v3416 = vpack.c.b16 %v3392, %v3390
        %v3417 = vpack.c.b16 %v3393, %v3391
        %v3418 = vpack.c.b16 %v3396, %v3394
        %v3419 = vpack.c.b16 %v3397, %v3395
        %v3420 = vpack.c.b16 %v3400, %v3398
        %v3421 = vpack.c.b16 %v3401, %v3399
        %v3422 = vpack.c.b16 %v3404, %v3402
        %v3423 = vpack.c.b16 %v3405, %v3403
        %v3424 = vpack.c.b16 %v3408, %v3406
        %v3425 = vpack.c.b16 %v3409, %v3407
        %3442 = vmatpush.bf16.msra.mxu0 %v3424
        %3443 = vmatpush.bf16.msra.mxu0 %v3422
        %3444 = vmatpush.bf16.msra.mxu0 %v3420
        %3445 = vmatpush.bf16.msra.mxu0 %v3418
        %3446 = vmatpush.bf16.msra.mxu0 %v3416
        %3447 = vmatpush.bf16.msra.mxu0 %v3414
        %3448 = vmatpush.bf16.msra.mxu0 %v3412
        %3449 = vmatpush.bf16.msra.mxu0 %v3410
        %3450 = vmatmul.bf16.gmra.mxu0 %v3346
        %v3451 = vpop.f32.mrf.mxu0
        %v3452 = vadd.f32 %v3234, %v3451
        %v3453 = vpop.f32.mrf.mxu0
        %v3454 = vadd.f32 %v3236, %v3453
        %3455 = vmatmul.bf16.gmra.mxu0 %v3347
        %v3456 = vpop.f32.mrf.mxu0
        %v3457 = vadd.f32 %v3239, %v3456
        %v3458 = vpop.f32.mrf.mxu0
        %v3459 = vadd.f32 %v3241, %v3458
        %3460 = vmatmul.bf16.gmra.mxu0 %v3348
        %v3461 = vpop.f32.mrf.mxu0
        %v3462 = vadd.f32 %v3244, %v3461
        %v3463 = vpop.f32.mrf.mxu0
        %v3464 = vadd.f32 %v3246, %v3463
        %3465 = vmatmul.bf16.gmra.mxu0 %v3349
        %v3466 = vpop.f32.mrf.mxu0
        %v3467 = vadd.f32 %v3249, %v3466
        %v3468 = vpop.f32.mrf.mxu0
        %v3469 = vadd.f32 %v3251, %v3468
        %3470 = vmatmul.bf16.gmra.mxu0 %v3350
        %v3471 = vpop.f32.mrf.mxu0
        %v3472 = vadd.f32 %v3254, %v3471
        %v3473 = vpop.f32.mrf.mxu0
        %v3474 = vadd.f32 %v3256, %v3473
        %3475 = vmatmul.bf16.gmra.mxu0 %v3351
        %v3476 = vpop.f32.mrf.mxu0
        %v3477 = vadd.f32 %v3259, %v3476
        %v3478 = vpop.f32.mrf.mxu0
        %v3479 = vadd.f32 %v3261, %v3478
        %3480 = vmatmul.bf16.gmra.mxu0 %v3352
        %v3481 = vpop.f32.mrf.mxu0
        %v3482 = vadd.f32 %v3264, %v3481
        %v3483 = vpop.f32.mrf.mxu0
        %v3484 = vadd.f32 %v3266, %v3483
        %3485 = vmatmul.bf16.gmra.mxu0 %v3353
        %v3486 = vpop.f32.mrf.mxu0
        %v3487 = vadd.f32 %v3269, %v3486
        %v3488 = vpop.f32.mrf.mxu0
        %v3489 = vadd.f32 %v3271, %v3488
        %3490 = vdwg.mxu0
        %3491 = vmatpush.bf16.msra.mxu0 %v3425
        %3492 = vmatpush.bf16.msra.mxu0 %v3423
        %3493 = vmatpush.bf16.msra.mxu0 %v3421
        %3494 = vmatpush.bf16.msra.mxu0 %v3419
        %3495 = vmatpush.bf16.msra.mxu0 %v3417
        %3496 = vmatpush.bf16.msra.mxu0 %v3415
        %3497 = vmatpush.bf16.msra.mxu0 %v3413
        %3498 = vmatpush.bf16.msra.mxu0 %v3411
        %3499 = vmatmul.bf16.gmra.mxu0 %v3346
        %v3500 = vpop.f32.mrf.mxu0
        %v3501 = vadd.f32 %v3283, %v3500
        %v3502 = vpop.f32.mrf.mxu0
        %v3503 = vadd.f32 %v3285, %v3502
        %3504 = vmatmul.bf16.gmra.mxu0 %v3347
        %v3505 = vpop.f32.mrf.mxu0
        %v3506 = vadd.f32 %v3288, %v3505
        %v3507 = vpop.f32.mrf.mxu0
        %v3508 = vadd.f32 %v3290, %v3507
        %3509 = vmatmul.bf16.gmra.mxu0 %v3348
        %v3510 = vpop.f32.mrf.mxu0
        %v3511 = vadd.f32 %v3293, %v3510
        %v3512 = vpop.f32.mrf.mxu0
        %v3513 = vadd.f32 %v3295, %v3512
        %3514 = vmatmul.bf16.gmra.mxu0 %v3349
        %v3515 = vpop.f32.mrf.mxu0
        %v3516 = vadd.f32 %v3298, %v3515
        %v3517 = vpop.f32.mrf.mxu0
        %v3518 = vadd.f32 %v3300, %v3517
        %3519 = vmatmul.bf16.gmra.mxu0 %v3350
        %v3520 = vpop.f32.mrf.mxu0
        %v3521 = vadd.f32 %v3303, %v3520
        %v3522 = vpop.f32.mrf.mxu0
        %v3523 = vadd.f32 %v3305, %v3522
        %3524 = vmatmul.bf16.gmra.mxu0 %v3351
        %v3525 = vpop.f32.mrf.mxu0
        %v3526 = vadd.f32 %v3308, %v3525
        %v3527 = vpop.f32.mrf.mxu0
        %v3528 = vadd.f32 %v3310, %v3527
        %3529 = vmatmul.bf16.gmra.mxu0 %v3352
        %v3530 = vpop.f32.mrf.mxu0
        %v3531 = vadd.f32 %v3313, %v3530
        %v3532 = vpop.f32.mrf.mxu0
        %v3533 = vadd.f32 %v3315, %v3532
        %3534 = vmatmul.bf16.gmra.mxu0 %v3353
        %v3535 = vpop.f32.mrf.mxu0
        %v3536 = vadd.f32 %v3318, %v3535
        %v3537 = vpop.f32.mrf.mxu0
        %v3538 = vadd.f32 %v3320, %v3537
        %3539 = vdwg.mxu0
        %s3540 = scalar_lea.vmem %s3, 256
        %v3541 = vld [vmem:[%s3540] sm:$0xff]
        %v3542 = vld [vmem:[%s3540 + $0x8] sm:$0xff]
        %v3543 = vld [vmem:[%s3540 + $0x10] sm:$0xff]
        %v3544 = vld [vmem:[%s3540 + $0x18] sm:$0xff]
        %v3545 = vld [vmem:[%s3540 + $0x20] sm:$0xff]
        %v3546 = vld [vmem:[%s3540 + $0x28] sm:$0xff]
        %v3547 = vld [vmem:[%s3540 + $0x30] sm:$0xff]
        %v3548 = vld [vmem:[%s3540 + $0x38] sm:$0xff]
        %v3549 = vld [vmem:[%s3540 + $0x40] sm:$0xff]
        %v3550 = vld [vmem:[%s3540 + $0x48] sm:$0xff]
        %v3551 = vld [vmem:[%s3540 + $0x50] sm:$0xff]
        %v3552 = vld [vmem:[%s3540 + $0x58] sm:$0xff]
        %v3553 = vld [vmem:[%s3540 + $0x60] sm:$0xff]
        %v3554 = vld [vmem:[%s3540 + $0x68] sm:$0xff]
        %v3555 = vld [vmem:[%s3540 + $0x70] sm:$0xff]
        %v3556 = vld [vmem:[%s3540 + $0x78] sm:$0xff]
        %v3557 = vunpack.c.l.b16 %v3026
        %v3558 = vunpack.c.l.b16 %v3029
        %v3559 = vunpack.c.l.b16 %v3033
        %v3560 = vunpack.c.l.b16 %v3036
        %v3561 = vunpack.c.l.b16 %v3040
        %v3562 = vunpack.c.l.b16 %v3043
        %v3563 = vunpack.c.l.b16 %v3047
        %v3564 = vunpack.c.l.b16 %v3050
        %v3565 = vunpack.c.l.b16 %v3054
        %v3566 = vunpack.c.l.b16 %v3057
        %v3567 = vunpack.c.l.b16 %v3061
        %v3568 = vunpack.c.l.b16 %v3064
        %v3569 = vunpack.c.l.b16 %v3068
        %v3570 = vunpack.c.l.b16 %v3071
        %v3571 = vunpack.c.l.b16 %v3075
        %v3572 = vunpack.c.l.b16 %v3078
        %v3573 = vpack.c.b16 %v3558, %v3557
        %v3574 = vpack.c.b16 %v3560, %v3559
        %v3575 = vpack.c.b16 %v3562, %v3561
        %v3576 = vpack.c.b16 %v3564, %v3563
        %v3577 = vpack.c.b16 %v3566, %v3565
        %v3578 = vpack.c.b16 %v3568, %v3567
        %v3579 = vpack.c.b16 %v3570, %v3569
        %v3580 = vpack.c.b16 %v3572, %v3571
        %v3605 = vunpack.c.l.b16 %v3541
        %v3606 = vunpack.c.h.b16 %v3541
        %v3607 = vunpack.c.l.b16 %v3542
        %v3608 = vunpack.c.h.b16 %v3542
        %v3609 = vunpack.c.l.b16 %v3543
        %v3610 = vunpack.c.h.b16 %v3543
        %v3611 = vunpack.c.l.b16 %v3544
        %v3612 = vunpack.c.h.b16 %v3544
        %v3613 = vunpack.c.l.b16 %v3545
        %v3614 = vunpack.c.h.b16 %v3545
        %v3615 = vunpack.c.l.b16 %v3546
        %v3616 = vunpack.c.h.b16 %v3546
        %v3617 = vunpack.c.l.b16 %v3547
        %v3618 = vunpack.c.h.b16 %v3547
        %v3619 = vunpack.c.l.b16 %v3548
        %v3620 = vunpack.c.h.b16 %v3548
        %v3621 = vunpack.c.l.b16 %v3549
        %v3622 = vunpack.c.h.b16 %v3549
        %v3623 = vunpack.c.l.b16 %v3550
        %v3624 = vunpack.c.h.b16 %v3550
        %v3625 = vunpack.c.l.b16 %v3551
        %v3626 = vunpack.c.h.b16 %v3551
        %v3627 = vunpack.c.l.b16 %v3552
        %v3628 = vunpack.c.h.b16 %v3552
        %v3629 = vunpack.c.l.b16 %v3553
        %v3630 = vunpack.c.h.b16 %v3553
        %v3631 = vunpack.c.l.b16 %v3554
        %v3632 = vunpack.c.h.b16 %v3554
        %v3633 = vunpack.c.l.b16 %v3555
        %v3634 = vunpack.c.h.b16 %v3555
        %v3635 = vunpack.c.l.b16 %v3556
        %v3636 = vunpack.c.h.b16 %v3556
        %v3637 = vpack.c.b16 %v3607, %v3605
        %v3638 = vpack.c.b16 %v3608, %v3606
        %v3639 = vpack.c.b16 %v3611, %v3609
        %v3640 = vpack.c.b16 %v3612, %v3610
        %v3641 = vpack.c.b16 %v3615, %v3613
        %v3642 = vpack.c.b16 %v3616, %v3614
        %v3643 = vpack.c.b16 %v3619, %v3617
        %v3644 = vpack.c.b16 %v3620, %v3618
        %v3645 = vpack.c.b16 %v3623, %v3621
        %v3646 = vpack.c.b16 %v3624, %v3622
        %v3647 = vpack.c.b16 %v3627, %v3625
        %v3648 = vpack.c.b16 %v3628, %v3626
        %v3649 = vpack.c.b16 %v3631, %v3629
        %v3650 = vpack.c.b16 %v3632, %v3630
        %v3651 = vpack.c.b16 %v3635, %v3633
        %v3652 = vpack.c.b16 %v3636, %v3634
        %3669 = vmatpush.bf16.msra.mxu0 %v3651
        %3670 = vmatpush.bf16.msra.mxu0 %v3649
        %3671 = vmatpush.bf16.msra.mxu0 %v3647
        %3672 = vmatpush.bf16.msra.mxu0 %v3645
        %3673 = vmatpush.bf16.msra.mxu0 %v3643
        %3674 = vmatpush.bf16.msra.mxu0 %v3641
        %3675 = vmatpush.bf16.msra.mxu0 %v3639
        %3676 = vmatpush.bf16.msra.mxu0 %v3637
        %3677 = vmatmul.bf16.gmra.mxu0 %v3573
        %v3678 = vpop.f32.mrf.mxu0
        %v3679 = vadd.f32 0.0, %v3678
        %v3680 = vpop.f32.mrf.mxu0
        %v3681 = vadd.f32 0.0, %v3680
        %3682 = vmatmul.bf16.gmra.mxu0 %v3574
        %v3683 = vpop.f32.mrf.mxu0
        %v3684 = vadd.f32 0.0, %v3683
        %v3685 = vpop.f32.mrf.mxu0
        %v3686 = vadd.f32 0.0, %v3685
        %3687 = vmatmul.bf16.gmra.mxu0 %v3575
        %v3688 = vpop.f32.mrf.mxu0
        %v3689 = vadd.f32 0.0, %v3688
        %v3690 = vpop.f32.mrf.mxu0
        %v3691 = vadd.f32 0.0, %v3690
        %3692 = vmatmul.bf16.gmra.mxu0 %v3576
        %v3693 = vpop.f32.mrf.mxu0
        %v3694 = vadd.f32 0.0, %v3693
        %v3695 = vpop.f32.mrf.mxu0
        %v3696 = vadd.f32 0.0, %v3695
        %3697 = vmatmul.bf16.gmra.mxu0 %v3577
        %v3698 = vpop.f32.mrf.mxu0
        %v3699 = vadd.f32 0.0, %v3698
        %v3700 = vpop.f32.mrf.mxu0
        %v3701 = vadd.f32 0.0, %v3700
        %3702 = vmatmul.bf16.gmra.mxu0 %v3578
        %v3703 = vpop.f32.mrf.mxu0
        %v3704 = vadd.f32 0.0, %v3703
        %v3705 = vpop.f32.mrf.mxu0
        %v3706 = vadd.f32 0.0, %v3705
        %3707 = vmatmul.bf16.gmra.mxu0 %v3579
        %v3708 = vpop.f32.mrf.mxu0
        %v3709 = vadd.f32 0.0, %v3708
        %v3710 = vpop.f32.mrf.mxu0
        %v3711 = vadd.f32 0.0, %v3710
        %3712 = vmatmul.bf16.gmra.mxu0 %v3580
        %v3713 = vpop.f32.mrf.mxu0
        %v3714 = vadd.f32 0.0, %v3713
        %v3715 = vpop.f32.mrf.mxu0
        %v3716 = vadd.f32 0.0, %v3715
        %3717 = vdwg.mxu0
        %3718 = vmatpush.bf16.msra.mxu0 %v3652
        %3719 = vmatpush.bf16.msra.mxu0 %v3650
        %3720 = vmatpush.bf16.msra.mxu0 %v3648
        %3721 = vmatpush.bf16.msra.mxu0 %v3646
        %3722 = vmatpush.bf16.msra.mxu0 %v3644
        %3723 = vmatpush.bf16.msra.mxu0 %v3642
        %3724 = vmatpush.bf16.msra.mxu0 %v3640
        %3725 = vmatpush.bf16.msra.mxu0 %v3638
        %3726 = vmatmul.bf16.gmra.mxu0 %v3573
        %v3727 = vpop.f32.mrf.mxu0
        %v3728 = vadd.f32 0.0, %v3727
        %v3729 = vpop.f32.mrf.mxu0
        %v3730 = vadd.f32 0.0, %v3729
        %3731 = vmatmul.bf16.gmra.mxu0 %v3574
        %v3732 = vpop.f32.mrf.mxu0
        %v3733 = vadd.f32 0.0, %v3732
        %v3734 = vpop.f32.mrf.mxu0
        %v3735 = vadd.f32 0.0, %v3734
        %3736 = vmatmul.bf16.gmra.mxu0 %v3575
        %v3737 = vpop.f32.mrf.mxu0
        %v3738 = vadd.f32 0.0, %v3737
        %v3739 = vpop.f32.mrf.mxu0
        %v3740 = vadd.f32 0.0, %v3739
        %3741 = vmatmul.bf16.gmra.mxu0 %v3576
        %v3742 = vpop.f32.mrf.mxu0
        %v3743 = vadd.f32 0.0, %v3742
        %v3744 = vpop.f32.mrf.mxu0
        %v3745 = vadd.f32 0.0, %v3744
        %3746 = vmatmul.bf16.gmra.mxu0 %v3577
        %v3747 = vpop.f32.mrf.mxu0
        %v3748 = vadd.f32 0.0, %v3747
        %v3749 = vpop.f32.mrf.mxu0
        %v3750 = vadd.f32 0.0, %v3749
        %3751 = vmatmul.bf16.gmra.mxu0 %v3578
        %v3752 = vpop.f32.mrf.mxu0
        %v3753 = vadd.f32 0.0, %v3752
        %v3754 = vpop.f32.mrf.mxu0
        %v3755 = vadd.f32 0.0, %v3754
        %3756 = vmatmul.bf16.gmra.mxu0 %v3579
        %v3757 = vpop.f32.mrf.mxu0
        %v3758 = vadd.f32 0.0, %v3757
        %v3759 = vpop.f32.mrf.mxu0
        %v3760 = vadd.f32 0.0, %v3759
        %3761 = vmatmul.bf16.gmra.mxu0 %v3580
        %v3762 = vpop.f32.mrf.mxu0
        %v3763 = vadd.f32 0.0, %v3762
        %v3764 = vpop.f32.mrf.mxu0
        %v3765 = vadd.f32 0.0, %v3764
        %3766 = vdwg.mxu0
        %v3767 = vadd.f32 %v3452, %v3679
        %v3768 = vadd.f32 %v3501, %v3728
        %v3769 = vadd.f32 %v3454, %v3681
        %v3770 = vadd.f32 %v3503, %v3730
        %v3771 = vadd.f32 %v3457, %v3684
        %v3772 = vadd.f32 %v3506, %v3733
        %v3773 = vadd.f32 %v3459, %v3686
        %v3774 = vadd.f32 %v3508, %v3735
        %v3775 = vadd.f32 %v3462, %v3689
        %v3776 = vadd.f32 %v3511, %v3738
        %v3777 = vadd.f32 %v3464, %v3691
        %v3778 = vadd.f32 %v3513, %v3740
        %v3779 = vadd.f32 %v3467, %v3694
        %v3780 = vadd.f32 %v3516, %v3743
        %v3781 = vadd.f32 %v3469, %v3696
        %v3782 = vadd.f32 %v3518, %v3745
        %v3783 = vadd.f32 %v3472, %v3699
        %v3784 = vadd.f32 %v3521, %v3748
        %v3785 = vadd.f32 %v3474, %v3701
        %v3786 = vadd.f32 %v3523, %v3750
        %v3787 = vadd.f32 %v3477, %v3704
        %v3788 = vadd.f32 %v3526, %v3753
        %v3789 = vadd.f32 %v3479, %v3706
        %v3790 = vadd.f32 %v3528, %v3755
        %v3791 = vadd.f32 %v3482, %v3709
        %v3792 = vadd.f32 %v3531, %v3758
        %v3793 = vadd.f32 %v3484, %v3711
        %v3794 = vadd.f32 %v3533, %v3760
        %v3795 = vadd.f32 %v3487, %v3714
        %v3796 = vadd.f32 %v3536, %v3763
        %v3797 = vadd.f32 %v3489, %v3716
        %v3798 = vadd.f32 %v3538, %v3765
        %v3799 = vld [vmem:[%s4] sm:$0x3]
        %v3801 = vperm.slane %v3799, 0
        %v3802 = vperm.slane %v3799, 1
        %v3805 = vadd.f32 %v3767, %v3801
        %v3806 = vadd.f32 %v3768, %v3802
        %v3807 = vadd.f32 %v3769, %v3801
        %v3808 = vadd.f32 %v3770, %v3802
        %v3809 = vadd.f32 %v3771, %v3801
        %v3810 = vadd.f32 %v3772, %v3802
        %v3811 = vadd.f32 %v3773, %v3801
        %v3812 = vadd.f32 %v3774, %v3802
        %v3813 = vadd.f32 %v3775, %v3801
        %v3814 = vadd.f32 %v3776, %v3802
        %v3815 = vadd.f32 %v3777, %v3801
        %v3816 = vadd.f32 %v3778, %v3802
        %v3817 = vadd.f32 %v3779, %v3801
        %v3818 = vadd.f32 %v3780, %v3802
        %v3819 = vadd.f32 %v3781, %v3801
        %v3820 = vadd.f32 %v3782, %v3802
        %v3821 = vadd.f32 %v3783, %v3801
        %v3822 = vadd.f32 %v3784, %v3802
        %v3823 = vadd.f32 %v3785, %v3801
        %v3824 = vadd.f32 %v3786, %v3802
        %v3825 = vadd.f32 %v3787, %v3801
        %v3826 = vadd.f32 %v3788, %v3802
        %v3827 = vadd.f32 %v3789, %v3801
        %v3828 = vadd.f32 %v3790, %v3802
        %v3829 = vadd.f32 %v3791, %v3801
        %v3830 = vadd.f32 %v3792, %v3802
        %v3831 = vadd.f32 %v3793, %v3801
        %v3832 = vadd.f32 %v3794, %v3802
        %v3833 = vadd.f32 %v3795, %v3801
        %v3834 = vadd.f32 %v3796, %v3802
        %v3835 = vadd.f32 %v3797, %v3801
        %v3836 = vadd.f32 %v3798, %v3802
        %v3837 = vmax.f32 %v3805, 0.0
        %v3838 = vmax.f32 %v3806, 0.0
        %v3839 = vmax.f32 %v3807, 0.0
        %v3840 = vmax.f32 %v3808, 0.0
        %v3841 = vmax.f32 %v3809, 0.0
        %v3842 = vmax.f32 %v3810, 0.0
        %v3843 = vmax.f32 %v3811, 0.0
        %v3844 = vmax.f32 %v3812, 0.0
        %v3845 = vmax.f32 %v3813, 0.0
        %v3846 = vmax.f32 %v3814, 0.0
        %v3847 = vmax.f32 %v3815, 0.0
        %v3848 = vmax.f32 %v3816, 0.0
        %v3849 = vmax.f32 %v3817, 0.0
        %v3850 = vmax.f32 %v3818, 0.0
        %v3851 = vmax.f32 %v3819, 0.0
        %v3852 = vmax.f32 %v3820, 0.0
        %v3853 = vmax.f32 %v3821, 0.0
        %v3854 = vmax.f32 %v3822, 0.0
        %v3855 = vmax.f32 %v3823, 0.0
        %v3856 = vmax.f32 %v3824, 0.0
        %v3857 = vmax.f32 %v3825, 0.0
        %v3858 = vmax.f32 %v3826, 0.0
        %v3859 = vmax.f32 %v3827, 0.0
        %v3860 = vmax.f32 %v3828, 0.0
        %v3861 = vmax.f32 %v3829, 0.0
        %v3862 = vmax.f32 %v3830, 0.0
        %v3863 = vmax.f32 %v3831, 0.0
        %v3864 = vmax.f32 %v3832, 0.0
        %v3865 = vmax.f32 %v3833, 0.0
        %v3866 = vmax.f32 %v3834, 0.0
        %v3867 = vmax.f32 %v3835, 0.0
        %v3868 = vmax.f32 %v3836, 0.0
        %v3901 = vrot.slane %v3838, 4
        %v3902 = vrot.slane %v3840, 4
        %v3903 = vrot.slane %v3842, 4
        %v3904 = vrot.slane %v3844, 4
        %v3905 = vrot.slane %v3846, 4
        %v3906 = vrot.slane %v3848, 4
        %v3907 = vrot.slane %v3850, 4
        %v3908 = vrot.slane %v3852, 4
        %v3909 = vrot.slane %v3854, 4
        %v3910 = vrot.slane %v3856, 4
        %v3911 = vrot.slane %v3858, 4
        %v3912 = vrot.slane %v3860, 4
        %v3913 = vrot.slane %v3862, 4
        %v3914 = vrot.slane %v3864, 4
        %v3915 = vrot.slane %v3866, 4
        %v3916 = vrot.slane %v3868, 4
        %vm3917 = vcmask 1043456
        %v3918 = vsel %vm3917, %v3837, %v3901
        %v3919 = vsel %vm3917, %v3901, %v3837
        %v3920 = vrot.slane %v3919, 4
        %v3921 = vsel %vm3917, %v3839, %v3902
        %v3922 = vsel %vm3917, %v3902, %v3839
        %v3923 = vrot.slane %v3922, 4
        %v3924 = vsel %vm3917, %v3841, %v3903
        %v3925 = vsel %vm3917, %v3903, %v3841
        %v3926 = vrot.slane %v3925, 4
        %v3927 = vsel %vm3917, %v3843, %v3904
        %v3928 = vsel %vm3917, %v3904, %v3843
        %v3929 = vrot.slane %v3928, 4
        %v3930 = vsel %vm3917, %v3845, %v3905
        %v3931 = vsel %vm3917, %v3905, %v3845
        %v3932 = vrot.slane %v3931, 4
        %v3933 = vsel %vm3917, %v3847, %v3906
        %v3934 = vsel %vm3917, %v3906, %v3847
        %v3935 = vrot.slane %v3934, 4
        %v3936 = vsel %vm3917, %v3849, %v3907
        %v3937 = vsel %vm3917, %v3907, %v3849
        %v3938 = vrot.slane %v3937, 4
        %v3939 = vsel %vm3917, %v3851, %v3908
        %v3940 = vsel %vm3917, %v3908, %v3851
        %v3941 = vrot.slane %v3940, 4
        %v3942 = vsel %vm3917, %v3853, %v3909
        %v3943 = vsel %vm3917, %v3909, %v3853
        %v3944 = vrot.slane %v3943, 4
        %v3945 = vsel %vm3917, %v3855, %v3910
        %v3946 = vsel %vm3917, %v3910, %v3855
        %v3947 = vrot.slane %v3946, 4
        %v3948 = vsel %vm3917, %v3857, %v3911
        %v3949 = vsel %vm3917, %v3911, %v3857
        %v3950 = vrot.slane %v3949, 4
        %v3951 = vsel %vm3917, %v3859, %v3912
        %v3952 = vsel %vm3917, %v3912, %v3859
        %v3953 = vrot.slane %v3952, 4
        %v3954 = vsel %vm3917, %v3861, %v3913
        %v3955 = vsel %vm3917, %v3913, %v3861
        %v3956 = vrot.slane %v3955, 4
        %v3957 = vsel %vm3917, %v3863, %v3914
        %v3958 = vsel %vm3917, %v3914, %v3863
        %v3959 = vrot.slane %v3958, 4
        %v3960 = vsel %vm3917, %v3865, %v3915
        %v3961 = vsel %vm3917, %v3915, %v3865
        %v3962 = vrot.slane %v3961, 4
        %v3963 = vsel %vm3917, %v3867, %v3916
        %v3964 = vsel %vm3917, %v3916, %v3867
        %v3965 = vrot.slane %v3964, 4
        %v3999 = vunpack.c.l.s4 1966171168
        %v4000 = vunpack.c.0.s8 %v3999
        %v4001 = vperm.slane %v3918, %v4000
        %v4003 = vunpack.c.l.s4 1966171168
        %v4004 = vunpack.c.0.s8 %v4003
        %v4005 = vperm.slane %v3920, %v4004
        %v4007 = vunpack.c.l.s4 1966171168
        %v4008 = vunpack.c.0.s8 %v4007
        %v4009 = vperm.slane %v3921, %v4008
        %v4011 = vunpack.c.l.s4 1966171168
        %v4012 = vunpack.c.0.s8 %v4011
        %v4013 = vperm.slane %v3923, %v4012
        %v4015 = vunpack.c.l.s4 1966171168
        %v4016 = vunpack.c.0.s8 %v4015
        %v4017 = vperm.slane %v3924, %v4016
        %v4019 = vunpack.c.l.s4 1966171168
        %v4020 = vunpack.c.0.s8 %v4019
        %v4021 = vperm.slane %v3926, %v4020
        %v4023 = vunpack.c.l.s4 1966171168
        %v4024 = vunpack.c.0.s8 %v4023
        %v4025 = vperm.slane %v3927, %v4024
        %v4027 = vunpack.c.l.s4 1966171168
        %v4028 = vunpack.c.0.s8 %v4027
        %v4029 = vperm.slane %v3929, %v4028
        %v4031 = vunpack.c.l.s4 1966171168
        %v4032 = vunpack.c.0.s8 %v4031
        %v4033 = vperm.slane %v3930, %v4032
        %v4035 = vunpack.c.l.s4 1966171168
        %v4036 = vunpack.c.0.s8 %v4035
        %v4037 = vperm.slane %v3932, %v4036
        %v4039 = vunpack.c.l.s4 1966171168
        %v4040 = vunpack.c.0.s8 %v4039
        %v4041 = vperm.slane %v3933, %v4040
        %v4043 = vunpack.c.l.s4 1966171168
        %v4044 = vunpack.c.0.s8 %v4043
        %v4045 = vperm.slane %v3935, %v4044
        %v4047 = vunpack.c.l.s4 1966171168
        %v4048 = vunpack.c.0.s8 %v4047
        %v4049 = vperm.slane %v3936, %v4048
        %v4051 = vunpack.c.l.s4 1966171168
        %v4052 = vunpack.c.0.s8 %v4051
        %v4053 = vperm.slane %v3938, %v4052
        %v4055 = vunpack.c.l.s4 1966171168
        %v4056 = vunpack.c.0.s8 %v4055
        %v4057 = vperm.slane %v3939, %v4056
        %v4059 = vunpack.c.l.s4 1966171168
        %v4060 = vunpack.c.0.s8 %v4059
        %v4061 = vperm.slane %v3941, %v4060
        %v4063 = vunpack.c.l.s4 1966171168
        %v4064 = vunpack.c.0.s8 %v4063
        %v4065 = vperm.slane %v3942, %v4064
        %v4067 = vunpack.c.l.s4 1966171168
        %v4068 = vunpack.c.0.s8 %v4067
        %v4069 = vperm.slane %v3944, %v4068
        %v4071 = vunpack.c.l.s4 1966171168
        %v4072 = vunpack.c.0.s8 %v4071
        %v4073 = vperm.slane %v3945, %v4072
        %v4075 = vunpack.c.l.s4 1966171168
        %v4076 = vunpack.c.0.s8 %v4075
        %v4077 = vperm.slane %v3947, %v4076
        %v4079 = vunpack.c.l.s4 1966171168
        %v4080 = vunpack.c.0.s8 %v4079
        %v4081 = vperm.slane %v3948, %v4080
        %v4083 = vunpack.c.l.s4 1966171168
        %v4084 = vunpack.c.0.s8 %v4083
        %v4085 = vperm.slane %v3950, %v4084
        %v4087 = vunpack.c.l.s4 1966171168
        %v4088 = vunpack.c.0.s8 %v4087
        %v4089 = vperm.slane %v3951, %v4088
        %v4091 = vunpack.c.l.s4 1966171168
        %v4092 = vunpack.c.0.s8 %v4091
        %v4093 = vperm.slane %v3953, %v4092
        %v4095 = vunpack.c.l.s4 1966171168
        %v4096 = vunpack.c.0.s8 %v4095
        %v4097 = vperm.slane %v3954, %v4096
        %v4099 = vunpack.c.l.s4 1966171168
        %v4100 = vunpack.c.0.s8 %v4099
        %v4101 = vperm.slane %v3956, %v4100
        %v4103 = vunpack.c.l.s4 1966171168
        %v4104 = vunpack.c.0.s8 %v4103
        %v4105 = vperm.slane %v3957, %v4104
        %v4107 = vunpack.c.l.s4 1966171168
        %v4108 = vunpack.c.0.s8 %v4107
        %v4109 = vperm.slane %v3959, %v4108
        %v4111 = vunpack.c.l.s4 1966171168
        %v4112 = vunpack.c.0.s8 %v4111
        %v4113 = vperm.slane %v3960, %v4112
        %v4115 = vunpack.c.l.s4 1966171168
        %v4116 = vunpack.c.0.s8 %v4115
        %v4117 = vperm.slane %v3962, %v4116
        %v4119 = vunpack.c.l.s4 1966171168
        %v4120 = vunpack.c.0.s8 %v4119
        %v4121 = vperm.slane %v3963, %v4120
        %v4123 = vunpack.c.l.s4 1966171168
        %v4124 = vunpack.c.0.s8 %v4123
        %v4125 = vperm.slane %v3965, %v4124
        %v4158 = vrot.slane %v4001, 4
        %v4159 = vrot.slane %v4005, 4
        %v4160 = vrot.slane %v4009, 4
        %v4161 = vrot.slane %v4013, 4
        %v4162 = vrot.slane %v4017, 4
        %v4163 = vrot.slane %v4021, 4
        %v4164 = vrot.slane %v4025, 4
        %v4165 = vrot.slane %v4029, 4
        %v4166 = vrot.slane %v4033, 4
        %v4167 = vrot.slane %v4037, 4
        %v4168 = vrot.slane %v4041, 4
        %v4169 = vrot.slane %v4045, 4
        %v4170 = vrot.slane %v4049, 4
        %v4171 = vrot.slane %v4053, 4
        %v4172 = vrot.slane %v4057, 4
        %v4173 = vrot.slane %v4061, 4
        %v4174 = vrot.slane %v4065, 4
        %v4175 = vrot.slane %v4069, 4
        %v4176 = vrot.slane %v4073, 4
        %v4177 = vrot.slane %v4077, 4
        %v4178 = vrot.slane %v4081, 4
        %v4179 = vrot.slane %v4085, 4
        %v4180 = vrot.slane %v4089, 4
        %v4181 = vrot.slane %v4093, 4
        %v4182 = vrot.slane %v4097, 4
        %v4183 = vrot.slane %v4101, 4
        %v4184 = vrot.slane %v4105, 4
        %v4185 = vrot.slane %v4109, 4
        %v4186 = vrot.slane %v4113, 4
        %v4187 = vrot.slane %v4117, 4
        %v4188 = vrot.slane %v4121, 4
        %v4189 = vrot.slane %v4125, 4
        %v4222 = vmax.f32 %v4001, %v4158
        %v4223 = vmax.f32 %v4005, %v4159
        %v4224 = vmax.f32 %v4009, %v4160
        %v4225 = vmax.f32 %v4013, %v4161
        %v4226 = vmax.f32 %v4017, %v4162
        %v4227 = vmax.f32 %v4021, %v4163
        %v4228 = vmax.f32 %v4025, %v4164
        %v4229 = vmax.f32 %v4029, %v4165
        %v4230 = vmax.f32 %v4033, %v4166
        %v4231 = vmax.f32 %v4037, %v4167
        %v4232 = vmax.f32 %v4041, %v4168
        %v4233 = vmax.f32 %v4045, %v4169
        %v4234 = vmax.f32 %v4049, %v4170
        %v4235 = vmax.f32 %v4053, %v4171
        %v4236 = vmax.f32 %v4057, %v4172
        %v4237 = vmax.f32 %v4061, %v4173
        %v4238 = vmax.f32 %v4065, %v4174
        %v4239 = vmax.f32 %v4069, %v4175
        %v4240 = vmax.f32 %v4073, %v4176
        %v4241 = vmax.f32 %v4077, %v4177
        %v4242 = vmax.f32 %v4081, %v4178
        %v4243 = vmax.f32 %v4085, %v4179
        %v4244 = vmax.f32 %v4089, %v4180
        %v4245 = vmax.f32 %v4093, %v4181
        %v4246 = vmax.f32 %v4097, %v4182
        %v4247 = vmax.f32 %v4101, %v4183
        %v4248 = vmax.f32 %v4105, %v4184
        %v4249 = vmax.f32 %v4109, %v4185
        %v4250 = vmax.f32 %v4113, %v4186
        %v4251 = vmax.f32 %v4117, %v4187
        %v4252 = vmax.f32 %v4121, %v4188
        %v4253 = vmax.f32 %v4125, %v4189
        %vm4254 = vcmask 1044484
        %vm4255 = vsmask.f32 4352
        %vm4256 = vmand %vm4254, %vm4255
        %vm4257 = vmor %vm4256, %vm2388
        %v4258 = vld [vmem:[#allocation4] sm:$0x11]
        %v4259 = vsel %vm4257, 0, %v4258
        %4260 = vst [vmem:[#allocation4] sm:$0x11] %v4259
        %v4261 = vld [vmem:[#allocation4 + $0x10] sm:$0x11]
        %v4262 = vsel %vm4257, 0, %v4261
        %4263 = vst [vmem:[#allocation4 + $0x10] sm:$0x11] %v4262
        %v4264 = vld [vmem:[#allocation4 + $0x20] sm:$0x11]
        %v4265 = vsel %vm4257, 0, %v4264
        %4266 = vst [vmem:[#allocation4 + $0x20] sm:$0x11] %v4265
        %v4267 = vld [vmem:[#allocation4 + $0x30] sm:$0x11]
        %v4268 = vsel %vm4257, 0, %v4267
        %4269 = vst [vmem:[#allocation4 + $0x30] sm:$0x11] %v4268
        %v4270 = vld [vmem:[#allocation4 + $0x40] sm:$0x11]
        %v4271 = vsel %vm4257, 0, %v4270
        %4272 = vst [vmem:[#allocation4 + $0x40] sm:$0x11] %v4271
        %v4273 = vld [vmem:[#allocation4 + $0x50] sm:$0x11]
        %v4274 = vsel %vm4257, 0, %v4273
        %4275 = vst [vmem:[#allocation4 + $0x50] sm:$0x11] %v4274
        %v4276 = vld [vmem:[#allocation4 + $0x60] sm:$0x11]
        %v4277 = vsel %vm4257, 0, %v4276
        %4278 = vst [vmem:[#allocation4 + $0x60] sm:$0x11] %v4277
        %v4279 = vld [vmem:[#allocation4 + $0x70] sm:$0x11]
        %v4280 = vsel %vm4257, 0, %v4279
        %4281 = vst [vmem:[#allocation4 + $0x70] sm:$0x11] %v4280
        %vm4282 = vsmask.f32 7954
        %vm4283 = vmand %vm4254, %vm4282
        %vm4284 = vmor %vm4283, %vm2413
        %v4285 = vld [vmem:[#allocation4 + $0x8] sm:$0x11]
        %v4286 = vsel %vm4284, 0, %v4285
        %4287 = vst [vmem:[#allocation4 + $0x8] sm:$0x11] %v4286
        %v4288 = vld [vmem:[#allocation4 + $0x18] sm:$0x11]
        %v4289 = vsel %vm4284, 0, %v4288
        %4290 = vst [vmem:[#allocation4 + $0x18] sm:$0x11] %v4289
        %v4291 = vld [vmem:[#allocation4 + $0x28] sm:$0x11]
        %v4292 = vsel %vm4284, 0, %v4291
        %4293 = vst [vmem:[#allocation4 + $0x28] sm:$0x11] %v4292
        %v4294 = vld [vmem:[#allocation4 + $0x38] sm:$0x11]
        %v4295 = vsel %vm4284, 0, %v4294
        %4296 = vst [vmem:[#allocation4 + $0x38] sm:$0x11] %v4295
        %v4297 = vld [vmem:[#allocation4 + $0x48] sm:$0x11]
        %v4298 = vsel %vm4284, 0, %v4297
        %4299 = vst [vmem:[#allocation4 + $0x48] sm:$0x11] %v4298
        %v4300 = vld [vmem:[#allocation4 + $0x58] sm:$0x11]
        %v4301 = vsel %vm4284, 0, %v4300
        %4302 = vst [vmem:[#allocation4 + $0x58] sm:$0x11] %v4301
        %v4303 = vld [vmem:[#allocation4 + $0x68] sm:$0x11]
        %v4304 = vsel %vm4284, 0, %v4303
        %4305 = vst [vmem:[#allocation4 + $0x68] sm:$0x11] %v4304
        %v4306 = vld [vmem:[#allocation4 + $0x78] sm:$0x11]
        %v4307 = vsel %vm4284, 0, %v4306
        %4308 = vst [vmem:[#allocation4 + $0x78] sm:$0x11] %v4307
        %4341 = vst [vmem:[#allocation1] ss:$4 sm:$0xff] %v4222
        %s4342 = scalar_lea.vmem [#allocation1], 1
        %4343 = vst [vmem:[%s4342] ss:$4 sm:$0xff] %v4223
        %s4344 = scalar_lea.vmem [#allocation1], 2
        %4345 = vst [vmem:[%s4344] ss:$4 sm:$0xff] %v4224
        %s4346 = scalar_lea.vmem [#allocation1], 3
        %4347 = vst [vmem:[%s4346] ss:$4 sm:$0xff] %v4225
        %v4348 = vld.sshfl [vmem:[#allocation1] sm:$0xff pattern:$0x73625140]
        %v4349 = vld.sshfl [vmem:[#allocation1 + $0x8] sm:$0xff pattern:$0x73625140]
        %s4350 = scalar_lea.vmem [#allocation1], 32
        %4351 = vst [vmem:[%s4350] ss:$4 sm:$0xff] %v4226
        %s4352 = scalar_lea.vmem [#allocation1], 33
        %4353 = vst [vmem:[%s4352] ss:$4 sm:$0xff] %v4227
        %s4354 = scalar_lea.vmem [#allocation1], 34
        %4355 = vst [vmem:[%s4354] ss:$4 sm:$0xff] %v4228
        %s4356 = scalar_lea.vmem [#allocation1], 35
        %4357 = vst [vmem:[%s4356] ss:$4 sm:$0xff] %v4229
        %v4358 = vld.sshfl [vmem:[#allocation1 + $0x20] sm:$0xff pattern:$0x73625140]
        %v4359 = vld.sshfl [vmem:[#allocation1 + $0x28] sm:$0xff pattern:$0x73625140]
        %4360 = vst [vmem:[#allocation1] ss:$4 sm:$0xff] %v4230
        %4361 = vst [vmem:[%s4342] ss:$4 sm:$0xff] %v4231
        %4362 = vst [vmem:[%s4344] ss:$4 sm:$0xff] %v4232
        %4363 = vst [vmem:[%s4346] ss:$4 sm:$0xff] %v4233
        %v4364 = vld.sshfl [vmem:[#allocation1] sm:$0xff pattern:$0x73625140]
        %v4365 = vld.sshfl [vmem:[#allocation1 + $0x8] sm:$0xff pattern:$0x73625140]
        %4366 = vst [vmem:[%s4350] ss:$4 sm:$0xff] %v4234
        %4367 = vst [vmem:[%s4352] ss:$4 sm:$0xff] %v4235
        %4368 = vst [vmem:[%s4354] ss:$4 sm:$0xff] %v4236
        %4369 = vst [vmem:[%s4356] ss:$4 sm:$0xff] %v4237
        %v4370 = vld.sshfl [vmem:[#allocation1 + $0x20] sm:$0xff pattern:$0x73625140]
        %v4371 = vld.sshfl [vmem:[#allocation1 + $0x28] sm:$0xff pattern:$0x73625140]
        %4372 = vst [vmem:[#allocation1] ss:$4 sm:$0xff] %v4238
        %4373 = vst [vmem:[%s4342] ss:$4 sm:$0xff] %v4239
        %4374 = vst [vmem:[%s4344] ss:$4 sm:$0xff] %v4240
        %4375 = vst [vmem:[%s4346] ss:$4 sm:$0xff] %v4241
        %v4376 = vld.sshfl [vmem:[#allocation1] sm:$0xff pattern:$0x73625140]
        %v4377 = vld.sshfl [vmem:[#allocation1 + $0x8] sm:$0xff pattern:$0x73625140]
        %4378 = vst [vmem:[%s4350] ss:$4 sm:$0xff] %v4242
        %4379 = vst [vmem:[%s4352] ss:$4 sm:$0xff] %v4243
        %4380 = vst [vmem:[%s4354] ss:$4 sm:$0xff] %v4244
        %4381 = vst [vmem:[%s4356] ss:$4 sm:$0xff] %v4245
        %v4382 = vld.sshfl [vmem:[#allocation1 + $0x20] sm:$0xff pattern:$0x73625140]
        %v4383 = vld.sshfl [vmem:[#allocation1 + $0x28] sm:$0xff pattern:$0x73625140]
        %4384 = vst [vmem:[#allocation1] ss:$4 sm:$0xff] %v4246
        %4385 = vst [vmem:[%s4342] ss:$4 sm:$0xff] %v4247
        %4386 = vst [vmem:[%s4344] ss:$4 sm:$0xff] %v4248
        %4387 = vst [vmem:[%s4346] ss:$4 sm:$0xff] %v4249
        %v4388 = vld.sshfl [vmem:[#allocation1] sm:$0xff pattern:$0x73625140]
        %v4389 = vld.sshfl [vmem:[#allocation1 + $0x8] sm:$0xff pattern:$0x73625140]
        %4390 = vst [vmem:[%s4350] ss:$4 sm:$0xff] %v4250
        %4391 = vst [vmem:[%s4352] ss:$4 sm:$0xff] %v4251
        %4392 = vst [vmem:[%s4354] ss:$4 sm:$0xff] %v4252
        %4393 = vst [vmem:[%s4356] ss:$4 sm:$0xff] %v4253
        %v4394 = vld.sshfl [vmem:[#allocation1 + $0x20] sm:$0xff pattern:$0x73625140]
        %v4395 = vld.sshfl [vmem:[#allocation1 + $0x28] sm:$0xff pattern:$0x73625140]
        %v4412 = vpack.c.bf16 %v4349, %v4348
        %v4413 = vpack.c.bf16 %v4359, %v4358
        %v4414 = vpack.c.bf16 %v4365, %v4364
        %v4415 = vpack.c.bf16 %v4371, %v4370
        %v4416 = vpack.c.bf16 %v4377, %v4376
        %v4417 = vpack.c.bf16 %v4383, %v4382
        %v4418 = vpack.c.bf16 %v4389, %v4388
        %v4419 = vpack.c.bf16 %v4395, %v4394
        %v4421 = vshrl.u32 %v4412, 16
        %v4423 = vrot.slane %v4421, 7
        %v4424 = vshll.u32 %v4412, 16
        %v4426 = vor.u32 %v4423, %v4424
        %v4427 = vrot.slane %v4423, 4
        %v4429 = vshrl.u32 %v4413, 16
        %v4431 = vrot.slane %v4429, 7
        %v4432 = vshll.u32 %v4413, 16
        %v4434 = vor.u32 %v4431, %v4432
        %v4435 = vrot.slane %v4431, 4
        %v4437 = vshrl.u32 %v4414, 16
        %v4439 = vrot.slane %v4437, 7
        %v4440 = vshll.u32 %v4414, 16
        %v4442 = vor.u32 %v4439, %v4440
        %v4443 = vrot.slane %v4439, 4
        %v4445 = vshrl.u32 %v4415, 16
        %v4447 = vrot.slane %v4445, 7
        %v4448 = vshll.u32 %v4415, 16
        %v4450 = vor.u32 %v4447, %v4448
        %v4451 = vrot.slane %v4447, 4
        %v4453 = vshrl.u32 %v4416, 16
        %v4455 = vrot.slane %v4453, 7
        %v4456 = vshll.u32 %v4416, 16
        %v4458 = vor.u32 %v4455, %v4456
        %v4459 = vrot.slane %v4455, 4
        %v4461 = vshrl.u32 %v4417, 16
        %v4463 = vrot.slane %v4461, 7
        %v4464 = vshll.u32 %v4417, 16
        %v4466 = vor.u32 %v4463, %v4464
        %v4467 = vrot.slane %v4463, 4
        %v4469 = vshrl.u32 %v4418, 16
        %v4471 = vrot.slane %v4469, 7
        %v4472 = vshll.u32 %v4418, 16
        %v4474 = vor.u32 %v4471, %v4472
        %v4475 = vrot.slane %v4471, 4
        %v4477 = vshrl.u32 %v4419, 16
        %v4479 = vrot.slane %v4477, 7
        %v4480 = vshll.u32 %v4419, 16
        %v4482 = vor.u32 %v4479, %v4480
        %v4483 = vrot.slane %v4479, 4
        %vm4500 = vcmask 1047556
        %vm4501 = vmand %vm4500, %vm4282
        %vm4502 = vmor %vm4501, %vm2718
        %v4503 = vld [vmem:[#allocation4] sm:$0xff]
        %v4504 = vsel %vm4502, %v4426, %v4503
        %4505 = vst [vmem:[#allocation4] sm:$0xff] %v4504
        %v4506 = vld [vmem:[#allocation4 + $0x8] sm:$0x11]
        %v4507 = vsel %vm4257, %v4427, %v4506
        %4508 = vst [vmem:[#allocation4 + $0x8] sm:$0x11] %v4507
        %v4509 = vld [vmem:[#allocation4 + $0x10] sm:$0xff]
        %v4510 = vsel %vm4502, %v4434, %v4509
        %4511 = vst [vmem:[#allocation4 + $0x10] sm:$0xff] %v4510
        %v4512 = vld [vmem:[#allocation4 + $0x18] sm:$0x11]
        %v4513 = vsel %vm4257, %v4435, %v4512
        %4514 = vst [vmem:[#allocation4 + $0x18] sm:$0x11] %v4513
        %v4515 = vld [vmem:[#allocation4 + $0x20] sm:$0xff]
        %v4516 = vsel %vm4502, %v4442, %v4515
        %4517 = vst [vmem:[#allocation4 + $0x20] sm:$0xff] %v4516
        %v4518 = vld [vmem:[#allocation4 + $0x28] sm:$0x11]
        %v4519 = vsel %vm4257, %v4443, %v4518
        %4520 = vst [vmem:[#allocation4 + $0x28] sm:$0x11] %v4519
        %v4521 = vld [vmem:[#allocation4 + $0x30] sm:$0xff]
        %v4522 = vsel %vm4502, %v4450, %v4521
        %4523 = vst [vmem:[#allocation4 + $0x30] sm:$0xff] %v4522
        %v4524 = vld [vmem:[#allocation4 + $0x38] sm:$0x11]
        %v4525 = vsel %vm4257, %v4451, %v4524
        %4526 = vst [vmem:[#allocation4 + $0x38] sm:$0x11] %v4525
        %v4527 = vld [vmem:[#allocation4 + $0x40] sm:$0xff]
        %v4528 = vsel %vm4502, %v4458, %v4527
        %4529 = vst [vmem:[#allocation4 + $0x40] sm:$0xff] %v4528
        %v4530 = vld [vmem:[#allocation4 + $0x48] sm:$0x11]
        %v4531 = vsel %vm4257, %v4459, %v4530
        %4532 = vst [vmem:[#allocation4 + $0x48] sm:$0x11] %v4531
        %v4533 = vld [vmem:[#allocation4 + $0x50] sm:$0xff]
        %v4534 = vsel %vm4502, %v4466, %v4533
        %4535 = vst [vmem:[#allocation4 + $0x50] sm:$0xff] %v4534
        %v4536 = vld [vmem:[#allocation4 + $0x58] sm:$0x11]
        %v4537 = vsel %vm4257, %v4467, %v4536
        %4538 = vst [vmem:[#allocation4 + $0x58] sm:$0x11] %v4537
        %v4539 = vld [vmem:[#allocation4 + $0x60] sm:$0xff]
        %v4540 = vsel %vm4502, %v4474, %v4539
        %4541 = vst [vmem:[#allocation4 + $0x60] sm:$0xff] %v4540
        %v4542 = vld [vmem:[#allocation4 + $0x68] sm:$0x11]
        %v4543 = vsel %vm4257, %v4475, %v4542
        %4544 = vst [vmem:[#allocation4 + $0x68] sm:$0x11] %v4543
        %v4545 = vld [vmem:[#allocation4 + $0x70] sm:$0xff]
        %v4546 = vsel %vm4502, %v4482, %v4545
        %4547 = vst [vmem:[#allocation4 + $0x70] sm:$0xff] %v4546
        %v4548 = vld [vmem:[#allocation4 + $0x78] sm:$0x11]
        %v4549 = vsel %vm4257, %v4483, %v4548
        %4550 = vst [vmem:[#allocation4 + $0x78] sm:$0x11] %v4549
        %v4551 = vld [vmem:[#allocation4] sm:$0xff]
        %v4552 = vld [vmem:[#allocation4 + $0x10] sm:$0xff]
        %v4553 = vld [vmem:[#allocation4 + $0x20] sm:$0xff]
        %v4554 = vld [vmem:[#allocation4 + $0x30] sm:$0xff]
        %v4555 = vld [vmem:[#allocation4 + $0x40] sm:$0xff]
        %v4556 = vld [vmem:[#allocation4 + $0x50] sm:$0xff]
        %v4557 = vld [vmem:[#allocation4 + $0x60] sm:$0xff]
        %v4558 = vld [vmem:[#allocation4 + $0x70] sm:$0xff]
        %v4559 = vld [vmem:[#allocation4 + $0x8] sm:$0x11]
        %v4560 = vld [vmem:[#allocation4 + $0x18] sm:$0x11]
        %v4561 = vld [vmem:[#allocation4 + $0x28] sm:$0x11]
        %v4562 = vld [vmem:[#allocation4 + $0x38] sm:$0x11]
        %v4563 = vld [vmem:[#allocation4 + $0x48] sm:$0x11]
        %v4564 = vld [vmem:[#allocation4 + $0x58] sm:$0x11]
        %v4565 = vld [vmem:[#allocation4 + $0x68] sm:$0x11]
        %v4566 = vld [vmem:[#allocation4 + $0x78] sm:$0x11]
        %v4568 = vshrl.u32 %v4551, 16
        %v4570 = vrot.slane %v4568, 4
        %v4571 = vshll.u32 %v4551, 16
        %v4573 = vrot.slane %v4571, 5
        %v4574 = vor.u32 %v4570, %v4573
        %v4575 = vrot.slane %v4574, 4
        %v4577 = vshll.u32 %v4559, 16
        %v4579 = vrot.slane %v4577, 5
        %v4580 = vsel %vm861, %v4575, %v4579
        %v4582 = vshrl.u32 %v4552, 16
        %v4584 = vrot.slane %v4582, 4
        %v4585 = vshll.u32 %v4552, 16
        %v4587 = vrot.slane %v4585, 5
        %v4588 = vor.u32 %v4584, %v4587
        %v4589 = vrot.slane %v4588, 4
        %v4591 = vshll.u32 %v4560, 16
        %v4593 = vrot.slane %v4591, 5
        %v4594 = vsel %vm861, %v4589, %v4593
        %v4596 = vshrl.u32 %v4553, 16
        %v4598 = vrot.slane %v4596, 4
        %v4599 = vshll.u32 %v4553, 16
        %v4601 = vrot.slane %v4599, 5
        %v4602 = vor.u32 %v4598, %v4601
        %v4603 = vrot.slane %v4602, 4
        %v4605 = vshll.u32 %v4561, 16
        %v4607 = vrot.slane %v4605, 5
        %v4608 = vsel %vm861, %v4603, %v4607
        %v4610 = vshrl.u32 %v4554, 16
        %v4612 = vrot.slane %v4610, 4
        %v4613 = vshll.u32 %v4554, 16
        %v4615 = vrot.slane %v4613, 5
        %v4616 = vor.u32 %v4612, %v4615
        %v4617 = vrot.slane %v4616, 4
        %v4619 = vshll.u32 %v4562, 16
        %v4621 = vrot.slane %v4619, 5
        %v4622 = vsel %vm861, %v4617, %v4621
        %v4624 = vshrl.u32 %v4555, 16
        %v4626 = vrot.slane %v4624, 4
        %v4627 = vshll.u32 %v4555, 16
        %v4629 = vrot.slane %v4627, 5
        %v4630 = vor.u32 %v4626, %v4629
        %v4631 = vrot.slane %v4630, 4
        %v4633 = vshll.u32 %v4563, 16
        %v4635 = vrot.slane %v4633, 5
        %v4636 = vsel %vm861, %v4631, %v4635
        %v4638 = vshrl.u32 %v4556, 16
        %v4640 = vrot.slane %v4638, 4
        %v4641 = vshll.u32 %v4556, 16
        %v4643 = vrot.slane %v4641, 5
        %v4644 = vor.u32 %v4640, %v4643
        %v4645 = vrot.slane %v4644, 4
        %v4647 = vshll.u32 %v4564, 16
        %v4649 = vrot.slane %v4647, 5
        %v4650 = vsel %vm861, %v4645, %v4649
        %v4652 = vshrl.u32 %v4557, 16
        %v4654 = vrot.slane %v4652, 4
        %v4655 = vshll.u32 %v4557, 16
        %v4657 = vrot.slane %v4655, 5
        %v4658 = vor.u32 %v4654, %v4657
        %v4659 = vrot.slane %v4658, 4
        %v4661 = vshll.u32 %v4565, 16
        %v4663 = vrot.slane %v4661, 5
        %v4664 = vsel %vm861, %v4659, %v4663
        %v4666 = vshrl.u32 %v4558, 16
        %v4668 = vrot.slane %v4666, 4
        %v4669 = vshll.u32 %v4558, 16
        %v4671 = vrot.slane %v4669, 5
        %v4672 = vor.u32 %v4668, %v4671
        %v4673 = vrot.slane %v4672, 4
        %v4675 = vshll.u32 %v4566, 16
        %v4677 = vrot.slane %v4675, 5
        %v4678 = vsel %vm861, %v4673, %v4677
        %v4679 = vld [vmem:[#allocation4] sm:$0xee]
        %v4680 = vld [vmem:[#allocation4 + $0x10] sm:$0xee]
        %v4681 = vld [vmem:[#allocation4 + $0x20] sm:$0xee]
        %v4682 = vld [vmem:[#allocation4 + $0x30] sm:$0xee]
        %v4683 = vld [vmem:[#allocation4 + $0x40] sm:$0xee]
        %v4684 = vld [vmem:[#allocation4 + $0x50] sm:$0xee]
        %v4685 = vld [vmem:[#allocation4 + $0x60] sm:$0xee]
        %v4686 = vld [vmem:[#allocation4 + $0x70] sm:$0xee]
        %v4703 = vrot.slane %v4679, 5
        %v4704 = vrot.slane %v4703, 4
        %v4705 = vrot.slane %v4559, 5
        %v4706 = vsel %vm1264, %v4704, %v4705
        %v4707 = vrot.slane %v4680, 5
        %v4708 = vrot.slane %v4707, 4
        %v4709 = vrot.slane %v4560, 5
        %v4710 = vsel %vm1264, %v4708, %v4709
        %v4711 = vrot.slane %v4681, 5
        %v4712 = vrot.slane %v4711, 4
        %v4713 = vrot.slane %v4561, 5
        %v4714 = vsel %vm1264, %v4712, %v4713
        %v4715 = vrot.slane %v4682, 5
        %v4716 = vrot.slane %v4715, 4
        %v4717 = vrot.slane %v4562, 5
        %v4718 = vsel %vm1264, %v4716, %v4717
        %v4719 = vrot.slane %v4683, 5
        %v4720 = vrot.slane %v4719, 4
        %v4721 = vrot.slane %v4563, 5
        %v4722 = vsel %vm1264, %v4720, %v4721
        %v4723 = vrot.slane %v4684, 5
        %v4724 = vrot.slane %v4723, 4
        %v4725 = vrot.slane %v4564, 5
        %v4726 = vsel %vm1264, %v4724, %v4725
        %v4727 = vrot.slane %v4685, 5
        %v4728 = vrot.slane %v4727, 4
        %v4729 = vrot.slane %v4565, 5
        %v4730 = vsel %vm1264, %v4728, %v4729
        %v4731 = vrot.slane %v4686, 5
        %v4732 = vrot.slane %v4731, 4
        %v4733 = vrot.slane %v4566, 5
        %v4734 = vsel %vm1264, %v4732, %v4733
        %v4735 = vld [vmem:[%s5] sm:$0xff]
        %v4736 = vld [vmem:[%s5 + $0x8] sm:$0xff]
        %v4737 = vld [vmem:[%s5 + $0x10] sm:$0xff]
        %v4738 = vld [vmem:[%s5 + $0x18] sm:$0xff]
        %v4739 = vld [vmem:[%s5 + $0x20] sm:$0xff]
        %v4740 = vld [vmem:[%s5 + $0x28] sm:$0xff]
        %v4741 = vld [vmem:[%s5 + $0x30] sm:$0xff]
        %v4742 = vld [vmem:[%s5 + $0x38] sm:$0xff]
        %v4743 = vld [vmem:[%s5 + $0x40] sm:$0xff]
        %v4744 = vld [vmem:[%s5 + $0x48] sm:$0xff]
        %v4745 = vld [vmem:[%s5 + $0x50] sm:$0xff]
        %v4746 = vld [vmem:[%s5 + $0x58] sm:$0xff]
        %v4747 = vld [vmem:[%s5 + $0x60] sm:$0xff]
        %v4748 = vld [vmem:[%s5 + $0x68] sm:$0xff]
        %v4749 = vld [vmem:[%s5 + $0x70] sm:$0xff]
        %v4750 = vld [vmem:[%s5 + $0x78] sm:$0xff]
        %v4751 = vld [vmem:[%s5 + $0x80] sm:$0xff]
        %v4752 = vld [vmem:[%s5 + $0x88] sm:$0xff]
        %v4753 = vld [vmem:[%s5 + $0x90] sm:$0xff]
        %v4754 = vld [vmem:[%s5 + $0x98] sm:$0xff]
        %v4755 = vld [vmem:[%s5 + $0xa0] sm:$0xff]
        %v4756 = vld [vmem:[%s5 + $0xa8] sm:$0xff]
        %v4757 = vld [vmem:[%s5 + $0xb0] sm:$0xff]
        %v4758 = vld [vmem:[%s5 + $0xb8] sm:$0xff]
        %v4759 = vld [vmem:[%s5 + $0xc0] sm:$0xff]
        %v4760 = vld [vmem:[%s5 + $0xc8] sm:$0xff]
        %v4761 = vld [vmem:[%s5 + $0xd0] sm:$0xff]
        %v4762 = vld [vmem:[%s5 + $0xd8] sm:$0xff]
        %v4763 = vld [vmem:[%s5 + $0xe0] sm:$0xff]
        %v4764 = vld [vmem:[%s5 + $0xe8] sm:$0xff]
        %v4765 = vld [vmem:[%s5 + $0xf0] sm:$0xff]
        %v4766 = vld [vmem:[%s5 + $0xf8] sm:$0xff]
        %v4767 = vld [vmem:[%s5 + $0x100] sm:$0xff]
        %v4768 = vld [vmem:[%s5 + $0x108] sm:$0xff]
        %v4769 = vld [vmem:[%s5 + $0x110] sm:$0xff]
        %v4770 = vld [vmem:[%s5 + $0x118] sm:$0xff]
        %v4771 = vld [vmem:[%s5 + $0x120] sm:$0xff]
        %v4772 = vld [vmem:[%s5 + $0x128] sm:$0xff]
        %v4773 = vld [vmem:[%s5 + $0x130] sm:$0xff]
        %v4774 = vld [vmem:[%s5 + $0x138] sm:$0xff]
        %v4775 = vld [vmem:[%s5 + $0x140] sm:$0xff]
        %v4776 = vld [vmem:[%s5 + $0x148] sm:$0xff]
        %v4777 = vld [vmem:[%s5 + $0x150] sm:$0xff]
        %v4778 = vld [vmem:[%s5 + $0x158] sm:$0xff]
        %v4779 = vld [vmem:[%s5 + $0x160] sm:$0xff]
        %v4780 = vld [vmem:[%s5 + $0x168] sm:$0xff]
        %v4781 = vld [vmem:[%s5 + $0x170] sm:$0xff]
        %v4782 = vld [vmem:[%s5 + $0x178] sm:$0xff]
        %v4783 = vld [vmem:[%s5 + $0x180] sm:$0xff]
        %v4784 = vld [vmem:[%s5 + $0x188] sm:$0xff]
        %v4785 = vld [vmem:[%s5 + $0x190] sm:$0xff]
        %v4786 = vld [vmem:[%s5 + $0x198] sm:$0xff]
        %v4787 = vld [vmem:[%s5 + $0x1a0] sm:$0xff]
        %v4788 = vld [vmem:[%s5 + $0x1a8] sm:$0xff]
        %v4789 = vld [vmem:[%s5 + $0x1b0] sm:$0xff]
        %v4790 = vld [vmem:[%s5 + $0x1b8] sm:$0xff]
        %v4791 = vld [vmem:[%s5 + $0x1c0] sm:$0xff]
        %v4792 = vld [vmem:[%s5 + $0x1c8] sm:$0xff]
        %v4793 = vld [vmem:[%s5 + $0x1d0] sm:$0xff]
        %v4794 = vld [vmem:[%s5 + $0x1d8] sm:$0xff]
        %v4795 = vld [vmem:[%s5 + $0x1e0] sm:$0xff]
        %v4796 = vld [vmem:[%s5 + $0x1e8] sm:$0xff]
        %v4797 = vld [vmem:[%s5 + $0x1f0] sm:$0xff]
        %v4798 = vld [vmem:[%s5 + $0x1f8] sm:$0xff]
        %s4799 = scalar_lea.vmem %s5, 512
        %v4800 = vld [vmem:[%s4799] sm:$0xff]
        %v4801 = vld [vmem:[%s4799 + $0x8] sm:$0xff]
        %v4802 = vld [vmem:[%s4799 + $0x10] sm:$0xff]
        %v4803 = vld [vmem:[%s4799 + $0x18] sm:$0xff]
        %v4804 = vld [vmem:[%s4799 + $0x20] sm:$0xff]
        %v4805 = vld [vmem:[%s4799 + $0x28] sm:$0xff]
        %v4806 = vld [vmem:[%s4799 + $0x30] sm:$0xff]
        %v4807 = vld [vmem:[%s4799 + $0x38] sm:$0xff]
        %v4808 = vld [vmem:[%s4799 + $0x40] sm:$0xff]
        %v4809 = vld [vmem:[%s4799 + $0x48] sm:$0xff]
        %v4810 = vld [vmem:[%s4799 + $0x50] sm:$0xff]
        %v4811 = vld [vmem:[%s4799 + $0x58] sm:$0xff]
        %v4812 = vld [vmem:[%s4799 + $0x60] sm:$0xff]
        %v4813 = vld [vmem:[%s4799 + $0x68] sm:$0xff]
        %v4814 = vld [vmem:[%s4799 + $0x70] sm:$0xff]
        %v4815 = vld [vmem:[%s4799 + $0x78] sm:$0xff]
        %v4816 = vld [vmem:[%s4799 + $0x80] sm:$0xff]
        %v4817 = vld [vmem:[%s4799 + $0x88] sm:$0xff]
        %v4818 = vld [vmem:[%s4799 + $0x90] sm:$0xff]
        %v4819 = vld [vmem:[%s4799 + $0x98] sm:$0xff]
        %v4820 = vld [vmem:[%s4799 + $0xa0] sm:$0xff]
        %v4821 = vld [vmem:[%s4799 + $0xa8] sm:$0xff]
        %v4822 = vld [vmem:[%s4799 + $0xb0] sm:$0xff]
        %v4823 = vld [vmem:[%s4799 + $0xb8] sm:$0xff]
        %v4824 = vld [vmem:[%s4799 + $0xc0] sm:$0xff]
        %v4825 = vld [vmem:[%s4799 + $0xc8] sm:$0xff]
        %v4826 = vld [vmem:[%s4799 + $0xd0] sm:$0xff]
        %v4827 = vld [vmem:[%s4799 + $0xd8] sm:$0xff]
        %v4828 = vld [vmem:[%s4799 + $0xe0] sm:$0xff]
        %v4829 = vld [vmem:[%s4799 + $0xe8] sm:$0xff]
        %v4830 = vld [vmem:[%s4799 + $0xf0] sm:$0xff]
        %v4831 = vld [vmem:[%s4799 + $0xf8] sm:$0xff]
        %v4832 = vld [vmem:[%s4799 + $0x100] sm:$0xff]
        %v4833 = vld [vmem:[%s4799 + $0x108] sm:$0xff]
        %v4834 = vld [vmem:[%s4799 + $0x110] sm:$0xff]
        %v4835 = vld [vmem:[%s4799 + $0x118] sm:$0xff]
        %v4836 = vld [vmem:[%s4799 + $0x120] sm:$0xff]
        %v4837 = vld [vmem:[%s4799 + $0x128] sm:$0xff]
        %v4838 = vld [vmem:[%s4799 + $0x130] sm:$0xff]
        %v4839 = vld [vmem:[%s4799 + $0x138] sm:$0xff]
        %v4840 = vld [vmem:[%s4799 + $0x140] sm:$0xff]
        %v4841 = vld [vmem:[%s4799 + $0x148] sm:$0xff]
        %v4842 = vld [vmem:[%s4799 + $0x150] sm:$0xff]
        %v4843 = vld [vmem:[%s4799 + $0x158] sm:$0xff]
        %v4844 = vld [vmem:[%s4799 + $0x160] sm:$0xff]
        %v4845 = vld [vmem:[%s4799 + $0x168] sm:$0xff]
        %v4846 = vld [vmem:[%s4799 + $0x170] sm:$0xff]
        %v4847 = vld [vmem:[%s4799 + $0x178] sm:$0xff]
        %v4848 = vld [vmem:[%s4799 + $0x180] sm:$0xff]
        %v4849 = vld [vmem:[%s4799 + $0x188] sm:$0xff]
        %v4850 = vld [vmem:[%s4799 + $0x190] sm:$0xff]
        %v4851 = vld [vmem:[%s4799 + $0x198] sm:$0xff]
        %v4852 = vld [vmem:[%s4799 + $0x1a0] sm:$0xff]
        %v4853 = vld [vmem:[%s4799 + $0x1a8] sm:$0xff]
        %v4854 = vld [vmem:[%s4799 + $0x1b0] sm:$0xff]
        %v4855 = vld [vmem:[%s4799 + $0x1b8] sm:$0xff]
        %v4856 = vld [vmem:[%s4799 + $0x1c0] sm:$0xff]
        %v4857 = vld [vmem:[%s4799 + $0x1c8] sm:$0xff]
        %v4858 = vld [vmem:[%s4799 + $0x1d0] sm:$0xff]
        %v4859 = vld [vmem:[%s4799 + $0x1d8] sm:$0xff]
        %v4860 = vld [vmem:[%s4799 + $0x1e0] sm:$0xff]
        %v4861 = vld [vmem:[%s4799 + $0x1e8] sm:$0xff]
        %v4862 = vld [vmem:[%s4799 + $0x1f0] sm:$0xff]
        %v4863 = vld [vmem:[%s4799 + $0x1f8] sm:$0xff]
        %v4864 = vunpack.c.l.b16 %v4580
        %v4865 = vunpack.c.h.b16 %v4580
        %v4866 = vunpack.c.l.b16 %v4594
        %v4867 = vunpack.c.h.b16 %v4594
        %v4868 = vunpack.c.l.b16 %v4608
        %v4869 = vunpack.c.h.b16 %v4608
        %v4870 = vunpack.c.l.b16 %v4622
        %v4871 = vunpack.c.h.b16 %v4622
        %v4872 = vunpack.c.l.b16 %v4636
        %v4873 = vunpack.c.h.b16 %v4636
        %v4874 = vunpack.c.l.b16 %v4650
        %v4875 = vunpack.c.h.b16 %v4650
        %v4876 = vunpack.c.l.b16 %v4664
        %v4877 = vunpack.c.h.b16 %v4664
        %v4878 = vunpack.c.l.b16 %v4678
        %v4879 = vunpack.c.h.b16 %v4678
        %v4880 = vpack.c.b16 %v4866, %v4864
        %v4881 = vpack.c.b16 %v4867, %v4865
        %v4882 = vpack.c.b16 %v4870, %v4868
        %v4883 = vpack.c.b16 %v4871, %v4869
        %v4884 = vpack.c.b16 %v4874, %v4872
        %v4885 = vpack.c.b16 %v4875, %v4873
        %v4886 = vpack.c.b16 %v4878, %v4876
        %v4887 = vpack.c.b16 %v4879, %v4877
        %v4960 = vunpack.c.l.b16 %v4800
        %v4961 = vunpack.c.h.b16 %v4800
        %v4962 = vunpack.c.l.b16 %v4801
        %v4963 = vunpack.c.h.b16 %v4801
        %v4964 = vunpack.c.l.b16 %v4802
        %v4965 = vunpack.c.h.b16 %v4802
        %v4966 = vunpack.c.l.b16 %v4803
        %v4967 = vunpack.c.h.b16 %v4803
        %v4968 = vunpack.c.l.b16 %v4804
        %v4969 = vunpack.c.h.b16 %v4804
        %v4970 = vunpack.c.l.b16 %v4805
        %v4971 = vunpack.c.h.b16 %v4805
        %v4972 = vunpack.c.l.b16 %v4806
        %v4973 = vunpack.c.h.b16 %v4806
        %v4974 = vunpack.c.l.b16 %v4807
        %v4975 = vunpack.c.h.b16 %v4807
        %v4976 = vunpack.c.l.b16 %v4808
        %v4977 = vunpack.c.h.b16 %v4808
        %v4978 = vunpack.c.l.b16 %v4809
        %v4979 = vunpack.c.h.b16 %v4809
        %v4980 = vunpack.c.l.b16 %v4810
        %v4981 = vunpack.c.h.b16 %v4810
        %v4982 = vunpack.c.l.b16 %v4811
        %v4983 = vunpack.c.h.b16 %v4811
        %v4984 = vunpack.c.l.b16 %v4812
        %v4985 = vunpack.c.h.b16 %v4812
        %v4986 = vunpack.c.l.b16 %v4813
        %v4987 = vunpack.c.h.b16 %v4813
        %v4988 = vunpack.c.l.b16 %v4814
        %v4989 = vunpack.c.h.b16 %v4814
        %v4990 = vunpack.c.l.b16 %v4815
        %v4991 = vunpack.c.h.b16 %v4815
        %v4992 = vunpack.c.l.b16 %v4816
        %v4993 = vunpack.c.h.b16 %v4816
        %v4994 = vunpack.c.l.b16 %v4817
        %v4995 = vunpack.c.h.b16 %v4817
        %v4996 = vunpack.c.l.b16 %v4818
        %v4997 = vunpack.c.h.b16 %v4818
        %v4998 = vunpack.c.l.b16 %v4819
        %v4999 = vunpack.c.h.b16 %v4819
        %v5000 = vunpack.c.l.b16 %v4820
        %v5001 = vunpack.c.h.b16 %v4820
        %v5002 = vunpack.c.l.b16 %v4821
        %v5003 = vunpack.c.h.b16 %v4821
        %v5004 = vunpack.c.l.b16 %v4822
        %v5005 = vunpack.c.h.b16 %v4822
        %v5006 = vunpack.c.l.b16 %v4823
        %v5007 = vunpack.c.h.b16 %v4823
        %v5008 = vunpack.c.l.b16 %v4824
        %v5009 = vunpack.c.h.b16 %v4824
        %v5010 = vunpack.c.l.b16 %v4825
        %v5011 = vunpack.c.h.b16 %v4825
        %v5012 = vunpack.c.l.b16 %v4826
        %v5013 = vunpack.c.h.b16 %v4826
        %v5014 = vunpack.c.l.b16 %v4827
        %v5015 = vunpack.c.h.b16 %v4827
        %v5016 = vunpack.c.l.b16 %v4828
        %v5017 = vunpack.c.h.b16 %v4828
        %v5018 = vunpack.c.l.b16 %v4829
        %v5019 = vunpack.c.h.b16 %v4829
        %v5020 = vunpack.c.l.b16 %v4830
        %v5021 = vunpack.c.h.b16 %v4830
        %v5022 = vunpack.c.l.b16 %v4831
        %v5023 = vunpack.c.h.b16 %v4831
        %v5024 = vunpack.c.l.b16 %v4832
        %v5025 = vunpack.c.h.b16 %v4832
        %v5026 = vunpack.c.l.b16 %v4833
        %v5027 = vunpack.c.h.b16 %v4833
        %v5028 = vunpack.c.l.b16 %v4834
        %v5029 = vunpack.c.h.b16 %v4834
        %v5030 = vunpack.c.l.b16 %v4835
        %v5031 = vunpack.c.h.b16 %v4835
        %v5032 = vunpack.c.l.b16 %v4836
        %v5033 = vunpack.c.h.b16 %v4836
        %v5034 = vunpack.c.l.b16 %v4837
        %v5035 = vunpack.c.h.b16 %v4837
        %v5036 = vunpack.c.l.b16 %v4838
        %v5037 = vunpack.c.h.b16 %v4838
        %v5038 = vunpack.c.l.b16 %v4839
        %v5039 = vunpack.c.h.b16 %v4839
        %v5040 = vunpack.c.l.b16 %v4840
        %v5041 = vunpack.c.h.b16 %v4840
        %v5042 = vunpack.c.l.b16 %v4841
        %v5043 = vunpack.c.h.b16 %v4841
        %v5044 = vunpack.c.l.b16 %v4842
        %v5045 = vunpack.c.h.b16 %v4842
        %v5046 = vunpack.c.l.b16 %v4843
        %v5047 = vunpack.c.h.b16 %v4843
        %v5048 = vunpack.c.l.b16 %v4844
        %v5049 = vunpack.c.h.b16 %v4844
        %v5050 = vunpack.c.l.b16 %v4845
        %v5051 = vunpack.c.h.b16 %v4845
        %v5052 = vunpack.c.l.b16 %v4846
        %v5053 = vunpack.c.h.b16 %v4846
        %v5054 = vunpack.c.l.b16 %v4847
        %v5055 = vunpack.c.h.b16 %v4847
        %v5056 = vunpack.c.l.b16 %v4848
        %v5057 = vunpack.c.h.b16 %v4848
        %v5058 = vunpack.c.l.b16 %v4849
        %v5059 = vunpack.c.h.b16 %v4849
        %v5060 = vunpack.c.l.b16 %v4850
        %v5061 = vunpack.c.h.b16 %v4850
        %v5062 = vunpack.c.l.b16 %v4851
        %v5063 = vunpack.c.h.b16 %v4851
        %v5064 = vunpack.c.l.b16 %v4852
        %v5065 = vunpack.c.h.b16 %v4852
        %v5066 = vunpack.c.l.b16 %v4853
        %v5067 = vunpack.c.h.b16 %v4853
        %v5068 = vunpack.c.l.b16 %v4854
        %v5069 = vunpack.c.h.b16 %v4854
        %v5070 = vunpack.c.l.b16 %v4855
        %v5071 = vunpack.c.h.b16 %v4855
        %v5072 = vunpack.c.l.b16 %v4856
        %v5073 = vunpack.c.h.b16 %v4856
        %v5074 = vunpack.c.l.b16 %v4857
        %v5075 = vunpack.c.h.b16 %v4857
        %v5076 = vunpack.c.l.b16 %v4858
        %v5077 = vunpack.c.h.b16 %v4858
        %v5078 = vunpack.c.l.b16 %v4859
        %v5079 = vunpack.c.h.b16 %v4859
        %v5080 = vunpack.c.l.b16 %v4860
        %v5081 = vunpack.c.h.b16 %v4860
        %v5082 = vunpack.c.l.b16 %v4861
        %v5083 = vunpack.c.h.b16 %v4861
        %v5084 = vunpack.c.l.b16 %v4862
        %v5085 = vunpack.c.h.b16 %v4862
        %v5086 = vunpack.c.l.b16 %v4863
        %v5087 = vunpack.c.h.b16 %v4863
        %v5088 = vpack.c.b16 %v4964, %v4960
        %v5089 = vpack.c.b16 %v4965, %v4961
        %v5090 = vpack.c.b16 %v4966, %v4962
        %v5091 = vpack.c.b16 %v4967, %v4963
        %v5092 = vpack.c.b16 %v4972, %v4968
        %v5093 = vpack.c.b16 %v4973, %v4969
        %v5094 = vpack.c.b16 %v4974, %v4970
        %v5095 = vpack.c.b16 %v4975, %v4971
        %v5096 = vpack.c.b16 %v4980, %v4976
        %v5097 = vpack.c.b16 %v4981, %v4977
        %v5098 = vpack.c.b16 %v4982, %v4978
        %v5099 = vpack.c.b16 %v4983, %v4979
        %v5100 = vpack.c.b16 %v4988, %v4984
        %v5101 = vpack.c.b16 %v4989, %v4985
        %v5102 = vpack.c.b16 %v4990, %v4986
        %v5103 = vpack.c.b16 %v4991, %v4987
        %v5104 = vpack.c.b16 %v4996, %v4992
        %v5105 = vpack.c.b16 %v4997, %v4993
        %v5106 = vpack.c.b16 %v4998, %v4994
        %v5107 = vpack.c.b16 %v4999, %v4995
        %v5108 = vpack.c.b16 %v5004, %v5000
        %v5109 = vpack.c.b16 %v5005, %v5001
        %v5110 = vpack.c.b16 %v5006, %v5002
        %v5111 = vpack.c.b16 %v5007, %v5003
        %v5112 = vpack.c.b16 %v5012, %v5008
        %v5113 = vpack.c.b16 %v5013, %v5009
        %v5114 = vpack.c.b16 %v5014, %v5010
        %v5115 = vpack.c.b16 %v5015, %v5011
        %v5116 = vpack.c.b16 %v5020, %v5016
        %v5117 = vpack.c.b16 %v5021, %v5017
        %v5118 = vpack.c.b16 %v5022, %v5018
        %v5119 = vpack.c.b16 %v5023, %v5019
        %v5120 = vpack.c.b16 %v5028, %v5024
        %v5121 = vpack.c.b16 %v5029, %v5025
        %v5122 = vpack.c.b16 %v5030, %v5026
        %v5123 = vpack.c.b16 %v5031, %v5027
        %v5124 = vpack.c.b16 %v5036, %v5032
        %v5125 = vpack.c.b16 %v5037, %v5033
        %v5126 = vpack.c.b16 %v5038, %v5034
        %v5127 = vpack.c.b16 %v5039, %v5035
        %v5128 = vpack.c.b16 %v5044, %v5040
        %v5129 = vpack.c.b16 %v5045, %v5041
        %v5130 = vpack.c.b16 %v5046, %v5042
        %v5131 = vpack.c.b16 %v5047, %v5043
        %v5132 = vpack.c.b16 %v5052, %v5048
        %v5133 = vpack.c.b16 %v5053, %v5049
        %v5134 = vpack.c.b16 %v5054, %v5050
        %v5135 = vpack.c.b16 %v5055, %v5051
        %v5136 = vpack.c.b16 %v5060, %v5056
        %v5137 = vpack.c.b16 %v5061, %v5057
        %v5138 = vpack.c.b16 %v5062, %v5058
        %v5139 = vpack.c.b16 %v5063, %v5059
        %v5140 = vpack.c.b16 %v5068, %v5064
        %v5141 = vpack.c.b16 %v5069, %v5065
        %v5142 = vpack.c.b16 %v5070, %v5066
        %v5143 = vpack.c.b16 %v5071, %v5067
        %v5144 = vpack.c.b16 %v5076, %v5072
        %v5145 = vpack.c.b16 %v5077, %v5073
        %v5146 = vpack.c.b16 %v5078, %v5074
        %v5147 = vpack.c.b16 %v5079, %v5075
        %v5148 = vpack.c.b16 %v5084, %v5080
        %v5149 = vpack.c.b16 %v5085, %v5081
        %v5150 = vpack.c.b16 %v5086, %v5082
        %v5151 = vpack.c.b16 %v5087, %v5083
        %5216 = vmatpush.bf16.msra.mxu0 %v5116
        %5217 = vmatpush.bf16.msra.mxu0 %v5112
        %5218 = vmatpush.bf16.msra.mxu0 %v5108
        %5219 = vmatpush.bf16.msra.mxu0 %v5104
        %5220 = vmatpush.bf16.msra.mxu0 %v5100
        %5221 = vmatpush.bf16.msra.mxu0 %v5096
        %5222 = vmatpush.bf16.msra.mxu0 %v5092
        %5223 = vmatpush.bf16.msra.mxu0 %v5088
        %5224 = vmatmul.bf16.gmra.mxu0 %v4880
        %v5225 = vpop.f32.mrf.mxu0
        %v5226 = vadd.f32 0.0, %v5225
        %v5227 = vpop.f32.mrf.mxu0
        %v5228 = vadd.f32 0.0, %v5227
        %5229 = vmatmul.bf16.gmra.mxu0 %v4882
        %v5230 = vpop.f32.mrf.mxu0
        %v5231 = vadd.f32 0.0, %v5230
        %v5232 = vpop.f32.mrf.mxu0
        %v5233 = vadd.f32 0.0, %v5232
        %5234 = vmatmul.bf16.gmra.mxu0 %v4884
        %v5235 = vpop.f32.mrf.mxu0
        %v5236 = vadd.f32 0.0, %v5235
        %v5237 = vpop.f32.mrf.mxu0
        %v5238 = vadd.f32 0.0, %v5237
        %5239 = vmatmul.bf16.gmra.mxu0 %v4886
        %v5240 = vpop.f32.mrf.mxu0
        %v5241 = vadd.f32 0.0, %v5240
        %v5242 = vpop.f32.mrf.mxu0
        %v5243 = vadd.f32 0.0, %v5242
        %5244 = vdwg.mxu0
        %5245 = vmatpush.bf16.msra.mxu0 %v5148
        %5246 = vmatpush.bf16.msra.mxu0 %v5144
        %5247 = vmatpush.bf16.msra.mxu0 %v5140
        %5248 = vmatpush.bf16.msra.mxu0 %v5136
        %5249 = vmatpush.bf16.msra.mxu0 %v5132
        %5250 = vmatpush.bf16.msra.mxu0 %v5128
        %5251 = vmatpush.bf16.msra.mxu0 %v5124
        %5252 = vmatpush.bf16.msra.mxu0 %v5120
        %5253 = vmatmul.bf16.gmra.mxu0 %v4881
        %v5254 = vpop.f32.mrf.mxu0
        %v5255 = vadd.f32 %v5226, %v5254
        %v5256 = vpop.f32.mrf.mxu0
        %v5257 = vadd.f32 %v5228, %v5256
        %5258 = vmatmul.bf16.gmra.mxu0 %v4883
        %v5259 = vpop.f32.mrf.mxu0
        %v5260 = vadd.f32 %v5231, %v5259
        %v5261 = vpop.f32.mrf.mxu0
        %v5262 = vadd.f32 %v5233, %v5261
        %5263 = vmatmul.bf16.gmra.mxu0 %v4885
        %v5264 = vpop.f32.mrf.mxu0
        %v5265 = vadd.f32 %v5236, %v5264
        %v5266 = vpop.f32.mrf.mxu0
        %v5267 = vadd.f32 %v5238, %v5266
        %5268 = vmatmul.bf16.gmra.mxu0 %v4887
        %v5269 = vpop.f32.mrf.mxu0
        %v5270 = vadd.f32 %v5241, %v5269
        %v5271 = vpop.f32.mrf.mxu0
        %v5272 = vadd.f32 %v5243, %v5271
        %5273 = vdwg.mxu0
        %5274 = vmatpush.bf16.msra.mxu0 %v5117
        %5275 = vmatpush.bf16.msra.mxu0 %v5113
        %5276 = vmatpush.bf16.msra.mxu0 %v5109
        %5277 = vmatpush.bf16.msra.mxu0 %v5105
        %5278 = vmatpush.bf16.msra.mxu0 %v5101
        %5279 = vmatpush.bf16.msra.mxu0 %v5097
        %5280 = vmatpush.bf16.msra.mxu0 %v5093
        %5281 = vmatpush.bf16.msra.mxu0 %v5089
        %5282 = vmatmul.bf16.gmra.mxu0 %v4880
        %v5283 = vpop.f32.mrf.mxu0
        %v5284 = vadd.f32 0.0, %v5283
        %v5285 = vpop.f32.mrf.mxu0
        %v5286 = vadd.f32 0.0, %v5285
        %5287 = vmatmul.bf16.gmra.mxu0 %v4882
        %v5288 = vpop.f32.mrf.mxu0
        %v5289 = vadd.f32 0.0, %v5288
        %v5290 = vpop.f32.mrf.mxu0
        %v5291 = vadd.f32 0.0, %v5290
        %5292 = vmatmul.bf16.gmra.mxu0 %v4884
        %v5293 = vpop.f32.mrf.mxu0
        %v5294 = vadd.f32 0.0, %v5293
        %v5295 = vpop.f32.mrf.mxu0
        %v5296 = vadd.f32 0.0, %v5295
        %5297 = vmatmul.bf16.gmra.mxu0 %v4886
        %v5298 = vpop.f32.mrf.mxu0
        %v5299 = vadd.f32 0.0, %v5298
        %v5300 = vpop.f32.mrf.mxu0
        %v5301 = vadd.f32 0.0, %v5300
        %5302 = vdwg.mxu0
        %5303 = vmatpush.bf16.msra.mxu0 %v5149
        %5304 = vmatpush.bf16.msra.mxu0 %v5145
        %5305 = vmatpush.bf16.msra.mxu0 %v5141
        %5306 = vmatpush.bf16.msra.mxu0 %v5137
        %5307 = vmatpush.bf16.msra.mxu0 %v5133
        %5308 = vmatpush.bf16.msra.mxu0 %v5129
        %5309 = vmatpush.bf16.msra.mxu0 %v5125
        %5310 = vmatpush.bf16.msra.mxu0 %v5121
        %5311 = vmatmul.bf16.gmra.mxu0 %v4881
        %v5312 = vpop.f32.mrf.mxu0
        %v5313 = vadd.f32 %v5284, %v5312
        %v5314 = vpop.f32.mrf.mxu0
        %v5315 = vadd.f32 %v5286, %v5314
        %5316 = vmatmul.bf16.gmra.mxu0 %v4883
        %v5317 = vpop.f32.mrf.mxu0
        %v5318 = vadd.f32 %v5289, %v5317
        %v5319 = vpop.f32.mrf.mxu0
        %v5320 = vadd.f32 %v5291, %v5319
        %5321 = vmatmul.bf16.gmra.mxu0 %v4885
        %v5322 = vpop.f32.mrf.mxu0
        %v5323 = vadd.f32 %v5294, %v5322
        %v5324 = vpop.f32.mrf.mxu0
        %v5325 = vadd.f32 %v5296, %v5324
        %5326 = vmatmul.bf16.gmra.mxu0 %v4887
        %v5327 = vpop.f32.mrf.mxu0
        %v5328 = vadd.f32 %v5299, %v5327
        %v5329 = vpop.f32.mrf.mxu0
        %v5330 = vadd.f32 %v5301, %v5329
        %5331 = vdwg.mxu0
        %5332 = vmatpush.bf16.msra.mxu0 %v5118
        %5333 = vmatpush.bf16.msra.mxu0 %v5114
        %5334 = vmatpush.bf16.msra.mxu0 %v5110
        %5335 = vmatpush.bf16.msra.mxu0 %v5106
        %5336 = vmatpush.bf16.msra.mxu0 %v5102
        %5337 = vmatpush.bf16.msra.mxu0 %v5098
        %5338 = vmatpush.bf16.msra.mxu0 %v5094
        %5339 = vmatpush.bf16.msra.mxu0 %v5090
        %5340 = vmatmul.bf16.gmra.mxu0 %v4880
        %v5341 = vpop.f32.mrf.mxu0
        %v5342 = vadd.f32 0.0, %v5341
        %v5343 = vpop.f32.mrf.mxu0
        %v5344 = vadd.f32 0.0, %v5343
        %5345 = vmatmul.bf16.gmra.mxu0 %v4882
        %v5346 = vpop.f32.mrf.mxu0
        %v5347 = vadd.f32 0.0, %v5346
        %v5348 = vpop.f32.mrf.mxu0
        %v5349 = vadd.f32 0.0, %v5348
        %5350 = vmatmul.bf16.gmra.mxu0 %v4884
        %v5351 = vpop.f32.mrf.mxu0
        %v5352 = vadd.f32 0.0, %v5351
        %v5353 = vpop.f32.mrf.mxu0
        %v5354 = vadd.f32 0.0, %v5353
        %5355 = vmatmul.bf16.gmra.mxu0 %v4886
        %v5356 = vpop.f32.mrf.mxu0
        %v5357 = vadd.f32 0.0, %v5356
        %v5358 = vpop.f32.mrf.mxu0
        %v5359 = vadd.f32 0.0, %v5358
        %5360 = vdwg.mxu0
        %5361 = vmatpush.bf16.msra.mxu0 %v5150
        %5362 = vmatpush.bf16.msra.mxu0 %v5146
        %5363 = vmatpush.bf16.msra.mxu0 %v5142
        %5364 = vmatpush.bf16.msra.mxu0 %v5138
        %5365 = vmatpush.bf16.msra.mxu0 %v5134
        %5366 = vmatpush.bf16.msra.mxu0 %v5130
        %5367 = vmatpush.bf16.msra.mxu0 %v5126
        %5368 = vmatpush.bf16.msra.mxu0 %v5122
        %5369 = vmatmul.bf16.gmra.mxu0 %v4881
        %v5370 = vpop.f32.mrf.mxu0
        %v5371 = vadd.f32 %v5342, %v5370
        %v5372 = vpop.f32.mrf.mxu0
        %v5373 = vadd.f32 %v5344, %v5372
        %5374 = vmatmul.bf16.gmra.mxu0 %v4883
        %v5375 = vpop.f32.mrf.mxu0
        %v5376 = vadd.f32 %v5347, %v5375
        %v5377 = vpop.f32.mrf.mxu0
        %v5378 = vadd.f32 %v5349, %v5377
        %5379 = vmatmul.bf16.gmra.mxu0 %v4885
        %v5380 = vpop.f32.mrf.mxu0
        %v5381 = vadd.f32 %v5352, %v5380
        %v5382 = vpop.f32.mrf.mxu0
        %v5383 = vadd.f32 %v5354, %v5382
        %5384 = vmatmul.bf16.gmra.mxu0 %v4887
        %v5385 = vpop.f32.mrf.mxu0
        %v5386 = vadd.f32 %v5357, %v5385
        %v5387 = vpop.f32.mrf.mxu0
        %v5388 = vadd.f32 %v5359, %v5387
        %5389 = vdwg.mxu0
        %5390 = vmatpush.bf16.msra.mxu0 %v5119
        %5391 = vmatpush.bf16.msra.mxu0 %v5115
        %5392 = vmatpush.bf16.msra.mxu0 %v5111
        %5393 = vmatpush.bf16.msra.mxu0 %v5107
        %5394 = vmatpush.bf16.msra.mxu0 %v5103
        %5395 = vmatpush.bf16.msra.mxu0 %v5099
        %5396 = vmatpush.bf16.msra.mxu0 %v5095
        %5397 = vmatpush.bf16.msra.mxu0 %v5091
        %5398 = vmatmul.bf16.gmra.mxu0 %v4880
        %v5399 = vpop.f32.mrf.mxu0
        %v5400 = vadd.f32 0.0, %v5399
        %v5401 = vpop.f32.mrf.mxu0
        %v5402 = vadd.f32 0.0, %v5401
        %5403 = vmatmul.bf16.gmra.mxu0 %v4882
        %v5404 = vpop.f32.mrf.mxu0
        %v5405 = vadd.f32 0.0, %v5404
        %v5406 = vpop.f32.mrf.mxu0
        %v5407 = vadd.f32 0.0, %v5406
        %5408 = vmatmul.bf16.gmra.mxu0 %v4884
        %v5409 = vpop.f32.mrf.mxu0
        %v5410 = vadd.f32 0.0, %v5409
        %v5411 = vpop.f32.mrf.mxu0
        %v5412 = vadd.f32 0.0, %v5411
        %5413 = vmatmul.bf16.gmra.mxu0 %v4886
        %v5414 = vpop.f32.mrf.mxu0
        %v5415 = vadd.f32 0.0, %v5414
        %v5416 = vpop.f32.mrf.mxu0
        %v5417 = vadd.f32 0.0, %v5416
        %5418 = vdwg.mxu0
        %5419 = vmatpush.bf16.msra.mxu0 %v5151
        %5420 = vmatpush.bf16.msra.mxu0 %v5147
        %5421 = vmatpush.bf16.msra.mxu0 %v5143
        %5422 = vmatpush.bf16.msra.mxu0 %v5139
        %5423 = vmatpush.bf16.msra.mxu0 %v5135
        %5424 = vmatpush.bf16.msra.mxu0 %v5131
        %5425 = vmatpush.bf16.msra.mxu0 %v5127
        %5426 = vmatpush.bf16.msra.mxu0 %v5123
        %5427 = vmatmul.bf16.gmra.mxu0 %v4881
        %v5428 = vpop.f32.mrf.mxu0
        %v5429 = vadd.f32 %v5400, %v5428
        %v5430 = vpop.f32.mrf.mxu0
        %v5431 = vadd.f32 %v5402, %v5430
        %5432 = vmatmul.bf16.gmra.mxu0 %v4883
        %v5433 = vpop.f32.mrf.mxu0
        %v5434 = vadd.f32 %v5405, %v5433
        %v5435 = vpop.f32.mrf.mxu0
        %v5436 = vadd.f32 %v5407, %v5435
        %5437 = vmatmul.bf16.gmra.mxu0 %v4885
        %v5438 = vpop.f32.mrf.mxu0
        %v5439 = vadd.f32 %v5410, %v5438
        %v5440 = vpop.f32.mrf.mxu0
        %v5441 = vadd.f32 %v5412, %v5440
        %5442 = vmatmul.bf16.gmra.mxu0 %v4887
        %v5443 = vpop.f32.mrf.mxu0
        %v5444 = vadd.f32 %v5415, %v5443
        %v5445 = vpop.f32.mrf.mxu0
        %v5446 = vadd.f32 %v5417, %v5445
        %5447 = vdwg.mxu0
        %v5456 = vunpack.c.l.b16 %v4551
        %v5457 = vunpack.c.h.b16 %v4551
        %v5458 = vunpack.c.l.b16 %v4552
        %v5459 = vunpack.c.h.b16 %v4552
        %v5460 = vunpack.c.l.b16 %v4553
        %v5461 = vunpack.c.h.b16 %v4553
        %v5462 = vunpack.c.l.b16 %v4554
        %v5463 = vunpack.c.h.b16 %v4554
        %v5464 = vunpack.c.l.b16 %v4555
        %v5465 = vunpack.c.h.b16 %v4555
        %v5466 = vunpack.c.l.b16 %v4556
        %v5467 = vunpack.c.h.b16 %v4556
        %v5468 = vunpack.c.l.b16 %v4557
        %v5469 = vunpack.c.h.b16 %v4557
        %v5470 = vunpack.c.l.b16 %v4558
        %v5471 = vunpack.c.h.b16 %v4558
        %v5472 = vpack.c.b16 %v5458, %v5456
        %v5473 = vpack.c.b16 %v5459, %v5457
        %v5474 = vpack.c.b16 %v5462, %v5460
        %v5475 = vpack.c.b16 %v5463, %v5461
        %v5476 = vpack.c.b16 %v5466, %v5464
        %v5477 = vpack.c.b16 %v5467, %v5465
        %v5478 = vpack.c.b16 %v5470, %v5468
        %v5479 = vpack.c.b16 %v5471, %v5469
        %v5552 = vunpack.c.l.b16 %v4735
        %v5553 = vunpack.c.h.b16 %v4735
        %v5554 = vunpack.c.l.b16 %v4736
        %v5555 = vunpack.c.h.b16 %v4736
        %v5556 = vunpack.c.l.b16 %v4737
        %v5557 = vunpack.c.h.b16 %v4737
        %v5558 = vunpack.c.l.b16 %v4738
        %v5559 = vunpack.c.h.b16 %v4738
        %v5560 = vunpack.c.l.b16 %v4739
        %v5561 = vunpack.c.h.b16 %v4739
        %v5562 = vunpack.c.l.b16 %v4740
        %v5563 = vunpack.c.h.b16 %v4740
        %v5564 = vunpack.c.l.b16 %v4741
        %v5565 = vunpack.c.h.b16 %v4741
        %v5566 = vunpack.c.l.b16 %v4742
        %v5567 = vunpack.c.h.b16 %v4742
        %v5568 = vunpack.c.l.b16 %v4743
        %v5569 = vunpack.c.h.b16 %v4743
        %v5570 = vunpack.c.l.b16 %v4744
        %v5571 = vunpack.c.h.b16 %v4744
        %v5572 = vunpack.c.l.b16 %v4745
        %v5573 = vunpack.c.h.b16 %v4745
        %v5574 = vunpack.c.l.b16 %v4746
        %v5575 = vunpack.c.h.b16 %v4746
        %v5576 = vunpack.c.l.b16 %v4747
        %v5577 = vunpack.c.h.b16 %v4747
        %v5578 = vunpack.c.l.b16 %v4748
        %v5579 = vunpack.c.h.b16 %v4748
        %v5580 = vunpack.c.l.b16 %v4749
        %v5581 = vunpack.c.h.b16 %v4749
        %v5582 = vunpack.c.l.b16 %v4750
        %v5583 = vunpack.c.h.b16 %v4750
        %v5584 = vunpack.c.l.b16 %v4751
        %v5585 = vunpack.c.h.b16 %v4751
        %v5586 = vunpack.c.l.b16 %v4752
        %v5587 = vunpack.c.h.b16 %v4752
        %v5588 = vunpack.c.l.b16 %v4753
        %v5589 = vunpack.c.h.b16 %v4753
        %v5590 = vunpack.c.l.b16 %v4754
        %v5591 = vunpack.c.h.b16 %v4754
        %v5592 = vunpack.c.l.b16 %v4755
        %v5593 = vunpack.c.h.b16 %v4755
        %v5594 = vunpack.c.l.b16 %v4756
        %v5595 = vunpack.c.h.b16 %v4756
        %v5596 = vunpack.c.l.b16 %v4757
        %v5597 = vunpack.c.h.b16 %v4757
        %v5598 = vunpack.c.l.b16 %v4758
        %v5599 = vunpack.c.h.b16 %v4758
        %v5600 = vunpack.c.l.b16 %v4759
        %v5601 = vunpack.c.h.b16 %v4759
        %v5602 = vunpack.c.l.b16 %v4760
        %v5603 = vunpack.c.h.b16 %v4760
        %v5604 = vunpack.c.l.b16 %v4761
        %v5605 = vunpack.c.h.b16 %v4761
        %v5606 = vunpack.c.l.b16 %v4762
        %v5607 = vunpack.c.h.b16 %v4762
        %v5608 = vunpack.c.l.b16 %v4763
        %v5609 = vunpack.c.h.b16 %v4763
        %v5610 = vunpack.c.l.b16 %v4764
        %v5611 = vunpack.c.h.b16 %v4764
        %v5612 = vunpack.c.l.b16 %v4765
        %v5613 = vunpack.c.h.b16 %v4765
        %v5614 = vunpack.c.l.b16 %v4766
        %v5615 = vunpack.c.h.b16 %v4766
        %v5616 = vunpack.c.l.b16 %v4767
        %v5617 = vunpack.c.h.b16 %v4767
        %v5618 = vunpack.c.l.b16 %v4768
        %v5619 = vunpack.c.h.b16 %v4768
        %v5620 = vunpack.c.l.b16 %v4769
        %v5621 = vunpack.c.h.b16 %v4769
        %v5622 = vunpack.c.l.b16 %v4770
        %v5623 = vunpack.c.h.b16 %v4770
        %v5624 = vunpack.c.l.b16 %v4771
        %v5625 = vunpack.c.h.b16 %v4771
        %v5626 = vunpack.c.l.b16 %v4772
        %v5627 = vunpack.c.h.b16 %v4772
        %v5628 = vunpack.c.l.b16 %v4773
        %v5629 = vunpack.c.h.b16 %v4773
        %v5630 = vunpack.c.l.b16 %v4774
        %v5631 = vunpack.c.h.b16 %v4774
        %v5632 = vunpack.c.l.b16 %v4775
        %v5633 = vunpack.c.h.b16 %v4775
        %v5634 = vunpack.c.l.b16 %v4776
        %v5635 = vunpack.c.h.b16 %v4776
        %v5636 = vunpack.c.l.b16 %v4777
        %v5637 = vunpack.c.h.b16 %v4777
        %v5638 = vunpack.c.l.b16 %v4778
        %v5639 = vunpack.c.h.b16 %v4778
        %v5640 = vunpack.c.l.b16 %v4779
        %v5641 = vunpack.c.h.b16 %v4779
        %v5642 = vunpack.c.l.b16 %v4780
        %v5643 = vunpack.c.h.b16 %v4780
        %v5644 = vunpack.c.l.b16 %v4781
        %v5645 = vunpack.c.h.b16 %v4781
        %v5646 = vunpack.c.l.b16 %v4782
        %v5647 = vunpack.c.h.b16 %v4782
        %v5648 = vunpack.c.l.b16 %v4783
        %v5649 = vunpack.c.h.b16 %v4783
        %v5650 = vunpack.c.l.b16 %v4784
        %v5651 = vunpack.c.h.b16 %v4784
        %v5652 = vunpack.c.l.b16 %v4785
        %v5653 = vunpack.c.h.b16 %v4785
        %v5654 = vunpack.c.l.b16 %v4786
        %v5655 = vunpack.c.h.b16 %v4786
        %v5656 = vunpack.c.l.b16 %v4787
        %v5657 = vunpack.c.h.b16 %v4787
        %v5658 = vunpack.c.l.b16 %v4788
        %v5659 = vunpack.c.h.b16 %v4788
        %v5660 = vunpack.c.l.b16 %v4789
        %v5661 = vunpack.c.h.b16 %v4789
        %v5662 = vunpack.c.l.b16 %v4790
        %v5663 = vunpack.c.h.b16 %v4790
        %v5664 = vunpack.c.l.b16 %v4791
        %v5665 = vunpack.c.h.b16 %v4791
        %v5666 = vunpack.c.l.b16 %v4792
        %v5667 = vunpack.c.h.b16 %v4792
        %v5668 = vunpack.c.l.b16 %v4793
        %v5669 = vunpack.c.h.b16 %v4793
        %v5670 = vunpack.c.l.b16 %v4794
        %v5671 = vunpack.c.h.b16 %v4794
        %v5672 = vunpack.c.l.b16 %v4795
        %v5673 = vunpack.c.h.b16 %v4795
        %v5674 = vunpack.c.l.b16 %v4796
        %v5675 = vunpack.c.h.b16 %v4796
        %v5676 = vunpack.c.l.b16 %v4797
        %v5677 = vunpack.c.h.b16 %v4797
        %v5678 = vunpack.c.l.b16 %v4798
        %v5679 = vunpack.c.h.b16 %v4798
        %v5680 = vpack.c.b16 %v5556, %v5552
        %v5681 = vpack.c.b16 %v5557, %v5553
        %v5682 = vpack.c.b16 %v5558, %v5554
        %v5683 = vpack.c.b16 %v5559, %v5555
        %v5684 = vpack.c.b16 %v5564, %v5560
        %v5685 = vpack.c.b16 %v5565, %v5561
        %v5686 = vpack.c.b16 %v5566, %v5562
        %v5687 = vpack.c.b16 %v5567, %v5563
        %v5688 = vpack.c.b16 %v5572, %v5568
        %v5689 = vpack.c.b16 %v5573, %v5569
        %v5690 = vpack.c.b16 %v5574, %v5570
        %v5691 = vpack.c.b16 %v5575, %v5571
        %v5692 = vpack.c.b16 %v5580, %v5576
        %v5693 = vpack.c.b16 %v5581, %v5577
        %v5694 = vpack.c.b16 %v5582, %v5578
        %v5695 = vpack.c.b16 %v5583, %v5579
        %v5696 = vpack.c.b16 %v5588, %v5584
        %v5697 = vpack.c.b16 %v5589, %v5585
        %v5698 = vpack.c.b16 %v5590, %v5586
        %v5699 = vpack.c.b16 %v5591, %v5587
        %v5700 = vpack.c.b16 %v5596, %v5592
        %v5701 = vpack.c.b16 %v5597, %v5593
        %v5702 = vpack.c.b16 %v5598, %v5594
        %v5703 = vpack.c.b16 %v5599, %v5595
        %v5704 = vpack.c.b16 %v5604, %v5600
        %v5705 = vpack.c.b16 %v5605, %v5601
        %v5706 = vpack.c.b16 %v5606, %v5602
        %v5707 = vpack.c.b16 %v5607, %v5603
        %v5708 = vpack.c.b16 %v5612, %v5608
        %v5709 = vpack.c.b16 %v5613, %v5609
        %v5710 = vpack.c.b16 %v5614, %v5610
        %v5711 = vpack.c.b16 %v5615, %v5611
        %v5712 = vpack.c.b16 %v5620, %v5616
        %v5713 = vpack.c.b16 %v5621, %v5617
        %v5714 = vpack.c.b16 %v5622, %v5618
        %v5715 = vpack.c.b16 %v5623, %v5619
        %v5716 = vpack.c.b16 %v5628, %v5624
        %v5717 = vpack.c.b16 %v5629, %v5625
        %v5718 = vpack.c.b16 %v5630, %v5626
        %v5719 = vpack.c.b16 %v5631, %v5627
        %v5720 = vpack.c.b16 %v5636, %v5632
        %v5721 = vpack.c.b16 %v5637, %v5633
        %v5722 = vpack.c.b16 %v5638, %v5634
        %v5723 = vpack.c.b16 %v5639, %v5635
        %v5724 = vpack.c.b16 %v5644, %v5640
        %v5725 = vpack.c.b16 %v5645, %v5641
        %v5726 = vpack.c.b16 %v5646, %v5642
        %v5727 = vpack.c.b16 %v5647, %v5643
        %v5728 = vpack.c.b16 %v5652, %v5648
        %v5729 = vpack.c.b16 %v5653, %v5649
        %v5730 = vpack.c.b16 %v5654, %v5650
        %v5731 = vpack.c.b16 %v5655, %v5651
        %v5732 = vpack.c.b16 %v5660, %v5656
        %v5733 = vpack.c.b16 %v5661, %v5657
        %v5734 = vpack.c.b16 %v5662, %v5658
        %v5735 = vpack.c.b16 %v5663, %v5659
        %v5736 = vpack.c.b16 %v5668, %v5664
        %v5737 = vpack.c.b16 %v5669, %v5665
        %v5738 = vpack.c.b16 %v5670, %v5666
        %v5739 = vpack.c.b16 %v5671, %v5667
        %v5740 = vpack.c.b16 %v5676, %v5672
        %v5741 = vpack.c.b16 %v5677, %v5673
        %v5742 = vpack.c.b16 %v5678, %v5674
        %v5743 = vpack.c.b16 %v5679, %v5675
        %5808 = vmatpush.bf16.msra.mxu0 %v5708
        %5809 = vmatpush.bf16.msra.mxu0 %v5704
        %5810 = vmatpush.bf16.msra.mxu0 %v5700
        %5811 = vmatpush.bf16.msra.mxu0 %v5696
        %5812 = vmatpush.bf16.msra.mxu0 %v5692
        %5813 = vmatpush.bf16.msra.mxu0 %v5688
        %5814 = vmatpush.bf16.msra.mxu0 %v5684
        %5815 = vmatpush.bf16.msra.mxu0 %v5680
        %5816 = vmatmul.bf16.gmra.mxu0 %v5472
        %v5817 = vpop.f32.mrf.mxu0
        %v5818 = vadd.f32 %v5255, %v5817
        %v5819 = vpop.f32.mrf.mxu0
        %v5820 = vadd.f32 %v5257, %v5819
        %5821 = vmatmul.bf16.gmra.mxu0 %v5474
        %v5822 = vpop.f32.mrf.mxu0
        %v5823 = vadd.f32 %v5260, %v5822
        %v5824 = vpop.f32.mrf.mxu0
        %v5825 = vadd.f32 %v5262, %v5824
        %5826 = vmatmul.bf16.gmra.mxu0 %v5476
        %v5827 = vpop.f32.mrf.mxu0
        %v5828 = vadd.f32 %v5265, %v5827
        %v5829 = vpop.f32.mrf.mxu0
        %v5830 = vadd.f32 %v5267, %v5829
        %5831 = vmatmul.bf16.gmra.mxu0 %v5478
        %v5832 = vpop.f32.mrf.mxu0
        %v5833 = vadd.f32 %v5270, %v5832
        %v5834 = vpop.f32.mrf.mxu0
        %v5835 = vadd.f32 %v5272, %v5834
        %5836 = vdwg.mxu0
        %5837 = vmatpush.bf16.msra.mxu0 %v5740
        %5838 = vmatpush.bf16.msra.mxu0 %v5736
        %5839 = vmatpush.bf16.msra.mxu0 %v5732
        %5840 = vmatpush.bf16.msra.mxu0 %v5728
        %5841 = vmatpush.bf16.msra.mxu0 %v5724
        %5842 = vmatpush.bf16.msra.mxu0 %v5720
        %5843 = vmatpush.bf16.msra.mxu0 %v5716
        %5844 = vmatpush.bf16.msra.mxu0 %v5712
        %5845 = vmatmul.bf16.gmra.mxu0 %v5473
        %v5846 = vpop.f32.mrf.mxu0
        %v5847 = vadd.f32 %v5818, %v5846
        %v5848 = vpop.f32.mrf.mxu0
        %v5849 = vadd.f32 %v5820, %v5848
        %5850 = vmatmul.bf16.gmra.mxu0 %v5475
        %v5851 = vpop.f32.mrf.mxu0
        %v5852 = vadd.f32 %v5823, %v5851
        %v5853 = vpop.f32.mrf.mxu0
        %v5854 = vadd.f32 %v5825, %v5853
        %5855 = vmatmul.bf16.gmra.mxu0 %v5477
        %v5856 = vpop.f32.mrf.mxu0
        %v5857 = vadd.f32 %v5828, %v5856
        %v5858 = vpop.f32.mrf.mxu0
        %v5859 = vadd.f32 %v5830, %v5858
        %5860 = vmatmul.bf16.gmra.mxu0 %v5479
        %v5861 = vpop.f32.mrf.mxu0
        %v5862 = vadd.f32 %v5833, %v5861
        %v5863 = vpop.f32.mrf.mxu0
        %v5864 = vadd.f32 %v5835, %v5863
        %5865 = vdwg.mxu0
        %5866 = vmatpush.bf16.msra.mxu0 %v5709
        %5867 = vmatpush.bf16.msra.mxu0 %v5705
        %5868 = vmatpush.bf16.msra.mxu0 %v5701
        %5869 = vmatpush.bf16.msra.mxu0 %v5697
        %5870 = vmatpush.bf16.msra.mxu0 %v5693
        %5871 = vmatpush.bf16.msra.mxu0 %v5689
        %5872 = vmatpush.bf16.msra.mxu0 %v5685
        %5873 = vmatpush.bf16.msra.mxu0 %v5681
        %5874 = vmatmul.bf16.gmra.mxu0 %v5472
        %v5875 = vpop.f32.mrf.mxu0
        %v5876 = vadd.f32 %v5313, %v5875
        %v5877 = vpop.f32.mrf.mxu0
        %v5878 = vadd.f32 %v5315, %v5877
        %5879 = vmatmul.bf16.gmra.mxu0 %v5474
        %v5880 = vpop.f32.mrf.mxu0
        %v5881 = vadd.f32 %v5318, %v5880
        %v5882 = vpop.f32.mrf.mxu0
        %v5883 = vadd.f32 %v5320, %v5882
        %5884 = vmatmul.bf16.gmra.mxu0 %v5476
        %v5885 = vpop.f32.mrf.mxu0
        %v5886 = vadd.f32 %v5323, %v5885
        %v5887 = vpop.f32.mrf.mxu0
        %v5888 = vadd.f32 %v5325, %v5887
        %5889 = vmatmul.bf16.gmra.mxu0 %v5478
        %v5890 = vpop.f32.mrf.mxu0
        %v5891 = vadd.f32 %v5328, %v5890
        %v5892 = vpop.f32.mrf.mxu0
        %v5893 = vadd.f32 %v5330, %v5892
        %5894 = vdwg.mxu0
        %5895 = vmatpush.bf16.msra.mxu0 %v5741
        %5896 = vmatpush.bf16.msra.mxu0 %v5737
        %5897 = vmatpush.bf16.msra.mxu0 %v5733
        %5898 = vmatpush.bf16.msra.mxu0 %v5729
        %5899 = vmatpush.bf16.msra.mxu0 %v5725
        %5900 = vmatpush.bf16.msra.mxu0 %v5721
        %5901 = vmatpush.bf16.msra.mxu0 %v5717
        %5902 = vmatpush.bf16.msra.mxu0 %v5713
        %5903 = vmatmul.bf16.gmra.mxu0 %v5473
        %v5904 = vpop.f32.mrf.mxu0
        %v5905 = vadd.f32 %v5876, %v5904
        %v5906 = vpop.f32.mrf.mxu0
        %v5907 = vadd.f32 %v5878, %v5906
        %5908 = vmatmul.bf16.gmra.mxu0 %v5475
        %v5909 = vpop.f32.mrf.mxu0
        %v5910 = vadd.f32 %v5881, %v5909
        %v5911 = vpop.f32.mrf.mxu0
        %v5912 = vadd.f32 %v5883, %v5911
        %5913 = vmatmul.bf16.gmra.mxu0 %v5477
        %v5914 = vpop.f32.mrf.mxu0
        %v5915 = vadd.f32 %v5886, %v5914
        %v5916 = vpop.f32.mrf.mxu0
        %v5917 = vadd.f32 %v5888, %v5916
        %5918 = vmatmul.bf16.gmra.mxu0 %v5479
        %v5919 = vpop.f32.mrf.mxu0
        %v5920 = vadd.f32 %v5891, %v5919
        %v5921 = vpop.f32.mrf.mxu0
        %v5922 = vadd.f32 %v5893, %v5921
        %5923 = vdwg.mxu0
        %5924 = vmatpush.bf16.msra.mxu0 %v5710
        %5925 = vmatpush.bf16.msra.mxu0 %v5706
        %5926 = vmatpush.bf16.msra.mxu0 %v5702
        %5927 = vmatpush.bf16.msra.mxu0 %v5698
        %5928 = vmatpush.bf16.msra.mxu0 %v5694
        %5929 = vmatpush.bf16.msra.mxu0 %v5690
        %5930 = vmatpush.bf16.msra.mxu0 %v5686
        %5931 = vmatpush.bf16.msra.mxu0 %v5682
        %5932 = vmatmul.bf16.gmra.mxu0 %v5472
        %v5933 = vpop.f32.mrf.mxu0
        %v5934 = vadd.f32 %v5371, %v5933
        %v5935 = vpop.f32.mrf.mxu0
        %v5936 = vadd.f32 %v5373, %v5935
        %5937 = vmatmul.bf16.gmra.mxu0 %v5474
        %v5938 = vpop.f32.mrf.mxu0
        %v5939 = vadd.f32 %v5376, %v5938
        %v5940 = vpop.f32.mrf.mxu0
        %v5941 = vadd.f32 %v5378, %v5940
        %5942 = vmatmul.bf16.gmra.mxu0 %v5476
        %v5943 = vpop.f32.mrf.mxu0
        %v5944 = vadd.f32 %v5381, %v5943
        %v5945 = vpop.f32.mrf.mxu0
        %v5946 = vadd.f32 %v5383, %v5945
        %5947 = vmatmul.bf16.gmra.mxu0 %v5478
        %v5948 = vpop.f32.mrf.mxu0
        %v5949 = vadd.f32 %v5386, %v5948
        %v5950 = vpop.f32.mrf.mxu0
        %v5951 = vadd.f32 %v5388, %v5950
        %5952 = vdwg.mxu0
        %5953 = vmatpush.bf16.msra.mxu0 %v5742
        %5954 = vmatpush.bf16.msra.mxu0 %v5738
        %5955 = vmatpush.bf16.msra.mxu0 %v5734
        %5956 = vmatpush.bf16.msra.mxu0 %v5730
        %5957 = vmatpush.bf16.msra.mxu0 %v5726
        %5958 = vmatpush.bf16.msra.mxu0 %v5722
        %5959 = vmatpush.bf16.msra.mxu0 %v5718
        %5960 = vmatpush.bf16.msra.mxu0 %v5714
        %5961 = vmatmul.bf16.gmra.mxu0 %v5473
        %v5962 = vpop.f32.mrf.mxu0
        %v5963 = vadd.f32 %v5934, %v5962
        %v5964 = vpop.f32.mrf.mxu0
        %v5965 = vadd.f32 %v5936, %v5964
        %5966 = vmatmul.bf16.gmra.mxu0 %v5475
        %v5967 = vpop.f32.mrf.mxu0
        %v5968 = vadd.f32 %v5939, %v5967
        %v5969 = vpop.f32.mrf.mxu0
        %v5970 = vadd.f32 %v5941, %v5969
        %5971 = vmatmul.bf16.gmra.mxu0 %v5477
        %v5972 = vpop.f32.mrf.mxu0
        %v5973 = vadd.f32 %v5944, %v5972
        %v5974 = vpop.f32.mrf.mxu0
        %v5975 = vadd.f32 %v5946, %v5974
        %5976 = vmatmul.bf16.gmra.mxu0 %v5479
        %v5977 = vpop.f32.mrf.mxu0
        %v5978 = vadd.f32 %v5949, %v5977
        %v5979 = vpop.f32.mrf.mxu0
        %v5980 = vadd.f32 %v5951, %v5979
        %5981 = vdwg.mxu0
        %5982 = vmatpush.bf16.msra.mxu0 %v5711
        %5983 = vmatpush.bf16.msra.mxu0 %v5707
        %5984 = vmatpush.bf16.msra.mxu0 %v5703
        %5985 = vmatpush.bf16.msra.mxu0 %v5699
        %5986 = vmatpush.bf16.msra.mxu0 %v5695
        %5987 = vmatpush.bf16.msra.mxu0 %v5691
        %5988 = vmatpush.bf16.msra.mxu0 %v5687
        %5989 = vmatpush.bf16.msra.mxu0 %v5683
        %5990 = vmatmul.bf16.gmra.mxu0 %v5472
        %v5991 = vpop.f32.mrf.mxu0
        %v5992 = vadd.f32 %v5429, %v5991
        %v5993 = vpop.f32.mrf.mxu0
        %v5994 = vadd.f32 %v5431, %v5993
        %5995 = vmatmul.bf16.gmra.mxu0 %v5474
        %v5996 = vpop.f32.mrf.mxu0
        %v5997 = vadd.f32 %v5434, %v5996
        %v5998 = vpop.f32.mrf.mxu0
        %v5999 = vadd.f32 %v5436, %v5998
        %6000 = vmatmul.bf16.gmra.mxu0 %v5476
        %v6001 = vpop.f32.mrf.mxu0
        %v6002 = vadd.f32 %v5439, %v6001
        %v6003 = vpop.f32.mrf.mxu0
        %v6004 = vadd.f32 %v5441, %v6003
        %6005 = vmatmul.bf16.gmra.mxu0 %v5478
        %v6006 = vpop.f32.mrf.mxu0
        %v6007 = vadd.f32 %v5444, %v6006
        %v6008 = vpop.f32.mrf.mxu0
        %v6009 = vadd.f32 %v5446, %v6008
        %6010 = vdwg.mxu0
        %6011 = vmatpush.bf16.msra.mxu0 %v5743
        %6012 = vmatpush.bf16.msra.mxu0 %v5739
        %6013 = vmatpush.bf16.msra.mxu0 %v5735
        %6014 = vmatpush.bf16.msra.mxu0 %v5731
        %6015 = vmatpush.bf16.msra.mxu0 %v5727
        %6016 = vmatpush.bf16.msra.mxu0 %v5723
        %6017 = vmatpush.bf16.msra.mxu0 %v5719
        %6018 = vmatpush.bf16.msra.mxu0 %v5715
        %6019 = vmatmul.bf16.gmra.mxu0 %v5473
        %v6020 = vpop.f32.mrf.mxu0
        %v6021 = vadd.f32 %v5992, %v6020
        %v6022 = vpop.f32.mrf.mxu0
        %v6023 = vadd.f32 %v5994, %v6022
        %6024 = vmatmul.bf16.gmra.mxu0 %v5475
        %v6025 = vpop.f32.mrf.mxu0
        %v6026 = vadd.f32 %v5997, %v6025
        %v6027 = vpop.f32.mrf.mxu0
        %v6028 = vadd.f32 %v5999, %v6027
        %6029 = vmatmul.bf16.gmra.mxu0 %v5477
        %v6030 = vpop.f32.mrf.mxu0
        %v6031 = vadd.f32 %v6002, %v6030
        %v6032 = vpop.f32.mrf.mxu0
        %v6033 = vadd.f32 %v6004, %v6032
        %6034 = vmatmul.bf16.gmra.mxu0 %v5479
        %v6035 = vpop.f32.mrf.mxu0
        %v6036 = vadd.f32 %v6007, %v6035
        %v6037 = vpop.f32.mrf.mxu0
        %v6038 = vadd.f32 %v6009, %v6037
        %6039 = vdwg.mxu0
        %s6040 = scalar_lea.vmem %s5, 1024
        %v6041 = vld [vmem:[%s6040] sm:$0xff]
        %v6042 = vld [vmem:[%s6040 + $0x8] sm:$0xff]
        %v6043 = vld [vmem:[%s6040 + $0x10] sm:$0xff]
        %v6044 = vld [vmem:[%s6040 + $0x18] sm:$0xff]
        %v6045 = vld [vmem:[%s6040 + $0x20] sm:$0xff]
        %v6046 = vld [vmem:[%s6040 + $0x28] sm:$0xff]
        %v6047 = vld [vmem:[%s6040 + $0x30] sm:$0xff]
        %v6048 = vld [vmem:[%s6040 + $0x38] sm:$0xff]
        %v6049 = vld [vmem:[%s6040 + $0x40] sm:$0xff]
        %v6050 = vld [vmem:[%s6040 + $0x48] sm:$0xff]
        %v6051 = vld [vmem:[%s6040 + $0x50] sm:$0xff]
        %v6052 = vld [vmem:[%s6040 + $0x58] sm:$0xff]
        %v6053 = vld [vmem:[%s6040 + $0x60] sm:$0xff]
        %v6054 = vld [vmem:[%s6040 + $0x68] sm:$0xff]
        %v6055 = vld [vmem:[%s6040 + $0x70] sm:$0xff]
        %v6056 = vld [vmem:[%s6040 + $0x78] sm:$0xff]
        %v6057 = vld [vmem:[%s6040 + $0x80] sm:$0xff]
        %v6058 = vld [vmem:[%s6040 + $0x88] sm:$0xff]
        %v6059 = vld [vmem:[%s6040 + $0x90] sm:$0xff]
        %v6060 = vld [vmem:[%s6040 + $0x98] sm:$0xff]
        %v6061 = vld [vmem:[%s6040 + $0xa0] sm:$0xff]
        %v6062 = vld [vmem:[%s6040 + $0xa8] sm:$0xff]
        %v6063 = vld [vmem:[%s6040 + $0xb0] sm:$0xff]
        %v6064 = vld [vmem:[%s6040 + $0xb8] sm:$0xff]
        %v6065 = vld [vmem:[%s6040 + $0xc0] sm:$0xff]
        %v6066 = vld [vmem:[%s6040 + $0xc8] sm:$0xff]
        %v6067 = vld [vmem:[%s6040 + $0xd0] sm:$0xff]
        %v6068 = vld [vmem:[%s6040 + $0xd8] sm:$0xff]
        %v6069 = vld [vmem:[%s6040 + $0xe0] sm:$0xff]
        %v6070 = vld [vmem:[%s6040 + $0xe8] sm:$0xff]
        %v6071 = vld [vmem:[%s6040 + $0xf0] sm:$0xff]
        %v6072 = vld [vmem:[%s6040 + $0xf8] sm:$0xff]
        %v6073 = vld [vmem:[%s6040 + $0x100] sm:$0xff]
        %v6074 = vld [vmem:[%s6040 + $0x108] sm:$0xff]
        %v6075 = vld [vmem:[%s6040 + $0x110] sm:$0xff]
        %v6076 = vld [vmem:[%s6040 + $0x118] sm:$0xff]
        %v6077 = vld [vmem:[%s6040 + $0x120] sm:$0xff]
        %v6078 = vld [vmem:[%s6040 + $0x128] sm:$0xff]
        %v6079 = vld [vmem:[%s6040 + $0x130] sm:$0xff]
        %v6080 = vld [vmem:[%s6040 + $0x138] sm:$0xff]
        %v6081 = vld [vmem:[%s6040 + $0x140] sm:$0xff]
        %v6082 = vld [vmem:[%s6040 + $0x148] sm:$0xff]
        %v6083 = vld [vmem:[%s6040 + $0x150] sm:$0xff]
        %v6084 = vld [vmem:[%s6040 + $0x158] sm:$0xff]
        %v6085 = vld [vmem:[%s6040 + $0x160] sm:$0xff]
        %v6086 = vld [vmem:[%s6040 + $0x168] sm:$0xff]
        %v6087 = vld [vmem:[%s6040 + $0x170] sm:$0xff]
        %v6088 = vld [vmem:[%s6040 + $0x178] sm:$0xff]
        %v6089 = vld [vmem:[%s6040 + $0x180] sm:$0xff]
        %v6090 = vld [vmem:[%s6040 + $0x188] sm:$0xff]
        %v6091 = vld [vmem:[%s6040 + $0x190] sm:$0xff]
        %v6092 = vld [vmem:[%s6040 + $0x198] sm:$0xff]
        %v6093 = vld [vmem:[%s6040 + $0x1a0] sm:$0xff]
        %v6094 = vld [vmem:[%s6040 + $0x1a8] sm:$0xff]
        %v6095 = vld [vmem:[%s6040 + $0x1b0] sm:$0xff]
        %v6096 = vld [vmem:[%s6040 + $0x1b8] sm:$0xff]
        %v6097 = vld [vmem:[%s6040 + $0x1c0] sm:$0xff]
        %v6098 = vld [vmem:[%s6040 + $0x1c8] sm:$0xff]
        %v6099 = vld [vmem:[%s6040 + $0x1d0] sm:$0xff]
        %v6100 = vld [vmem:[%s6040 + $0x1d8] sm:$0xff]
        %v6101 = vld [vmem:[%s6040 + $0x1e0] sm:$0xff]
        %v6102 = vld [vmem:[%s6040 + $0x1e8] sm:$0xff]
        %v6103 = vld [vmem:[%s6040 + $0x1f0] sm:$0xff]
        %v6104 = vld [vmem:[%s6040 + $0x1f8] sm:$0xff]
        %v6105 = vunpack.c.l.b16 %v4706
        %v6106 = vunpack.c.h.b16 %v4706
        %v6107 = vunpack.c.l.b16 %v4710
        %v6108 = vunpack.c.h.b16 %v4710
        %v6109 = vunpack.c.l.b16 %v4714
        %v6110 = vunpack.c.h.b16 %v4714
        %v6111 = vunpack.c.l.b16 %v4718
        %v6112 = vunpack.c.h.b16 %v4718
        %v6113 = vunpack.c.l.b16 %v4722
        %v6114 = vunpack.c.h.b16 %v4722
        %v6115 = vunpack.c.l.b16 %v4726
        %v6116 = vunpack.c.h.b16 %v4726
        %v6117 = vunpack.c.l.b16 %v4730
        %v6118 = vunpack.c.h.b16 %v4730
        %v6119 = vunpack.c.l.b16 %v4734
        %v6120 = vunpack.c.h.b16 %v4734
        %v6121 = vpack.c.b16 %v6107, %v6105
        %v6122 = vpack.c.b16 %v6108, %v6106
        %v6123 = vpack.c.b16 %v6111, %v6109
        %v6124 = vpack.c.b16 %v6112, %v6110
        %v6125 = vpack.c.b16 %v6115, %v6113
        %v6126 = vpack.c.b16 %v6116, %v6114
        %v6127 = vpack.c.b16 %v6119, %v6117
        %v6128 = vpack.c.b16 %v6120, %v6118
        %v6201 = vunpack.c.l.b16 %v6041
        %v6202 = vunpack.c.h.b16 %v6041
        %v6203 = vunpack.c.l.b16 %v6042
        %v6204 = vunpack.c.h.b16 %v6042
        %v6205 = vunpack.c.l.b16 %v6043
        %v6206 = vunpack.c.h.b16 %v6043
        %v6207 = vunpack.c.l.b16 %v6044
        %v6208 = vunpack.c.h.b16 %v6044
        %v6209 = vunpack.c.l.b16 %v6045
        %v6210 = vunpack.c.h.b16 %v6045
        %v6211 = vunpack.c.l.b16 %v6046
        %v6212 = vunpack.c.h.b16 %v6046
        %v6213 = vunpack.c.l.b16 %v6047
        %v6214 = vunpack.c.h.b16 %v6047
        %v6215 = vunpack.c.l.b16 %v6048
        %v6216 = vunpack.c.h.b16 %v6048
        %v6217 = vunpack.c.l.b16 %v6049
        %v6218 = vunpack.c.h.b16 %v6049
        %v6219 = vunpack.c.l.b16 %v6050
        %v6220 = vunpack.c.h.b16 %v6050
        %v6221 = vunpack.c.l.b16 %v6051
        %v6222 = vunpack.c.h.b16 %v6051
        %v6223 = vunpack.c.l.b16 %v6052
        %v6224 = vunpack.c.h.b16 %v6052
        %v6225 = vunpack.c.l.b16 %v6053
        %v6226 = vunpack.c.h.b16 %v6053
        %v6227 = vunpack.c.l.b16 %v6054
        %v6228 = vunpack.c.h.b16 %v6054
        %v6229 = vunpack.c.l.b16 %v6055
        %v6230 = vunpack.c.h.b16 %v6055
        %v6231 = vunpack.c.l.b16 %v6056
        %v6232 = vunpack.c.h.b16 %v6056
        %v6233 = vunpack.c.l.b16 %v6057
        %v6234 = vunpack.c.h.b16 %v6057
        %v6235 = vunpack.c.l.b16 %v6058
        %v6236 = vunpack.c.h.b16 %v6058
        %v6237 = vunpack.c.l.b16 %v6059
        %v6238 = vunpack.c.h.b16 %v6059
        %v6239 = vunpack.c.l.b16 %v6060
        %v6240 = vunpack.c.h.b16 %v6060
        %v6241 = vunpack.c.l.b16 %v6061
        %v6242 = vunpack.c.h.b16 %v6061
        %v6243 = vunpack.c.l.b16 %v6062
        %v6244 = vunpack.c.h.b16 %v6062
        %v6245 = vunpack.c.l.b16 %v6063
        %v6246 = vunpack.c.h.b16 %v6063
        %v6247 = vunpack.c.l.b16 %v6064
        %v6248 = vunpack.c.h.b16 %v6064
        %v6249 = vunpack.c.l.b16 %v6065
        %v6250 = vunpack.c.h.b16 %v6065
        %v6251 = vunpack.c.l.b16 %v6066
        %v6252 = vunpack.c.h.b16 %v6066
        %v6253 = vunpack.c.l.b16 %v6067
        %v6254 = vunpack.c.h.b16 %v6067
        %v6255 = vunpack.c.l.b16 %v6068
        %v6256 = vunpack.c.h.b16 %v6068
        %v6257 = vunpack.c.l.b16 %v6069
        %v6258 = vunpack.c.h.b16 %v6069
        %v6259 = vunpack.c.l.b16 %v6070
        %v6260 = vunpack.c.h.b16 %v6070
        %v6261 = vunpack.c.l.b16 %v6071
        %v6262 = vunpack.c.h.b16 %v6071
        %v6263 = vunpack.c.l.b16 %v6072
        %v6264 = vunpack.c.h.b16 %v6072
        %v6265 = vunpack.c.l.b16 %v6073
        %v6266 = vunpack.c.h.b16 %v6073
        %v6267 = vunpack.c.l.b16 %v6074
        %v6268 = vunpack.c.h.b16 %v6074
        %v6269 = vunpack.c.l.b16 %v6075
        %v6270 = vunpack.c.h.b16 %v6075
        %v6271 = vunpack.c.l.b16 %v6076
        %v6272 = vunpack.c.h.b16 %v6076
        %v6273 = vunpack.c.l.b16 %v6077
        %v6274 = vunpack.c.h.b16 %v6077
        %v6275 = vunpack.c.l.b16 %v6078
        %v6276 = vunpack.c.h.b16 %v6078
        %v6277 = vunpack.c.l.b16 %v6079
        %v6278 = vunpack.c.h.b16 %v6079
        %v6279 = vunpack.c.l.b16 %v6080
        %v6280 = vunpack.c.h.b16 %v6080
        %v6281 = vunpack.c.l.b16 %v6081
        %v6282 = vunpack.c.h.b16 %v6081
        %v6283 = vunpack.c.l.b16 %v6082
        %v6284 = vunpack.c.h.b16 %v6082
        %v6285 = vunpack.c.l.b16 %v6083
        %v6286 = vunpack.c.h.b16 %v6083
        %v6287 = vunpack.c.l.b16 %v6084
        %v6288 = vunpack.c.h.b16 %v6084
        %v6289 = vunpack.c.l.b16 %v6085
        %v6290 = vunpack.c.h.b16 %v6085
        %v6291 = vunpack.c.l.b16 %v6086
        %v6292 = vunpack.c.h.b16 %v6086
        %v6293 = vunpack.c.l.b16 %v6087
        %v6294 = vunpack.c.h.b16 %v6087
        %v6295 = vunpack.c.l.b16 %v6088
        %v6296 = vunpack.c.h.b16 %v6088
        %v6297 = vunpack.c.l.b16 %v6089
        %v6298 = vunpack.c.h.b16 %v6089
        %v6299 = vunpack.c.l.b16 %v6090
        %v6300 = vunpack.c.h.b16 %v6090
        %v6301 = vunpack.c.l.b16 %v6091
        %v6302 = vunpack.c.h.b16 %v6091
        %v6303 = vunpack.c.l.b16 %v6092
        %v6304 = vunpack.c.h.b16 %v6092
        %v6305 = vunpack.c.l.b16 %v6093
        %v6306 = vunpack.c.h.b16 %v6093
        %v6307 = vunpack.c.l.b16 %v6094
        %v6308 = vunpack.c.h.b16 %v6094
        %v6309 = vunpack.c.l.b16 %v6095
        %v6310 = vunpack.c.h.b16 %v6095
        %v6311 = vunpack.c.l.b16 %v6096
        %v6312 = vunpack.c.h.b16 %v6096
        %v6313 = vunpack.c.l.b16 %v6097
        %v6314 = vunpack.c.h.b16 %v6097
        %v6315 = vunpack.c.l.b16 %v6098
        %v6316 = vunpack.c.h.b16 %v6098
        %v6317 = vunpack.c.l.b16 %v6099
        %v6318 = vunpack.c.h.b16 %v6099
        %v6319 = vunpack.c.l.b16 %v6100
        %v6320 = vunpack.c.h.b16 %v6100
        %v6321 = vunpack.c.l.b16 %v6101
        %v6322 = vunpack.c.h.b16 %v6101
        %v6323 = vunpack.c.l.b16 %v6102
        %v6324 = vunpack.c.h.b16 %v6102
        %v6325 = vunpack.c.l.b16 %v6103
        %v6326 = vunpack.c.h.b16 %v6103
        %v6327 = vunpack.c.l.b16 %v6104
        %v6328 = vunpack.c.h.b16 %v6104
        %v6329 = vpack.c.b16 %v6205, %v6201
        %v6330 = vpack.c.b16 %v6206, %v6202
        %v6331 = vpack.c.b16 %v6207, %v6203
        %v6332 = vpack.c.b16 %v6208, %v6204
        %v6333 = vpack.c.b16 %v6213, %v6209
        %v6334 = vpack.c.b16 %v6214, %v6210
        %v6335 = vpack.c.b16 %v6215, %v6211
        %v6336 = vpack.c.b16 %v6216, %v6212
        %v6337 = vpack.c.b16 %v6221, %v6217
        %v6338 = vpack.c.b16 %v6222, %v6218
        %v6339 = vpack.c.b16 %v6223, %v6219
        %v6340 = vpack.c.b16 %v6224, %v6220
        %v6341 = vpack.c.b16 %v6229, %v6225
        %v6342 = vpack.c.b16 %v6230, %v6226
        %v6343 = vpack.c.b16 %v6231, %v6227
        %v6344 = vpack.c.b16 %v6232, %v6228
        %v6345 = vpack.c.b16 %v6237, %v6233
        %v6346 = vpack.c.b16 %v6238, %v6234
        %v6347 = vpack.c.b16 %v6239, %v6235
        %v6348 = vpack.c.b16 %v6240, %v6236
        %v6349 = vpack.c.b16 %v6245, %v6241
        %v6350 = vpack.c.b16 %v6246, %v6242
        %v6351 = vpack.c.b16 %v6247, %v6243
        %v6352 = vpack.c.b16 %v6248, %v6244
        %v6353 = vpack.c.b16 %v6253, %v6249
        %v6354 = vpack.c.b16 %v6254, %v6250
        %v6355 = vpack.c.b16 %v6255, %v6251
        %v6356 = vpack.c.b16 %v6256, %v6252
        %v6357 = vpack.c.b16 %v6261, %v6257
        %v6358 = vpack.c.b16 %v6262, %v6258
        %v6359 = vpack.c.b16 %v6263, %v6259
        %v6360 = vpack.c.b16 %v6264, %v6260
        %v6361 = vpack.c.b16 %v6269, %v6265
        %v6362 = vpack.c.b16 %v6270, %v6266
        %v6363 = vpack.c.b16 %v6271, %v6267
        %v6364 = vpack.c.b16 %v6272, %v6268
        %v6365 = vpack.c.b16 %v6277, %v6273
        %v6366 = vpack.c.b16 %v6278, %v6274
        %v6367 = vpack.c.b16 %v6279, %v6275
        %v6368 = vpack.c.b16 %v6280, %v6276
        %v6369 = vpack.c.b16 %v6285, %v6281
        %v6370 = vpack.c.b16 %v6286, %v6282
        %v6371 = vpack.c.b16 %v6287, %v6283
        %v6372 = vpack.c.b16 %v6288, %v6284
        %v6373 = vpack.c.b16 %v6293, %v6289
        %v6374 = vpack.c.b16 %v6294, %v6290
        %v6375 = vpack.c.b16 %v6295, %v6291
        %v6376 = vpack.c.b16 %v6296, %v6292
        %v6377 = vpack.c.b16 %v6301, %v6297
        %v6378 = vpack.c.b16 %v6302, %v6298
        %v6379 = vpack.c.b16 %v6303, %v6299
        %v6380 = vpack.c.b16 %v6304, %v6300
        %v6381 = vpack.c.b16 %v6309, %v6305
        %v6382 = vpack.c.b16 %v6310, %v6306
        %v6383 = vpack.c.b16 %v6311, %v6307
        %v6384 = vpack.c.b16 %v6312, %v6308
        %v6385 = vpack.c.b16 %v6317, %v6313
        %v6386 = vpack.c.b16 %v6318, %v6314
        %v6387 = vpack.c.b16 %v6319, %v6315
        %v6388 = vpack.c.b16 %v6320, %v6316
        %v6389 = vpack.c.b16 %v6325, %v6321
        %v6390 = vpack.c.b16 %v6326, %v6322
        %v6391 = vpack.c.b16 %v6327, %v6323
        %v6392 = vpack.c.b16 %v6328, %v6324
        %6457 = vmatpush.bf16.msra.mxu0 %v6357
        %6458 = vmatpush.bf16.msra.mxu0 %v6353
        %6459 = vmatpush.bf16.msra.mxu0 %v6349
        %6460 = vmatpush.bf16.msra.mxu0 %v6345
        %6461 = vmatpush.bf16.msra.mxu0 %v6341
        %6462 = vmatpush.bf16.msra.mxu0 %v6337
        %6463 = vmatpush.bf16.msra.mxu0 %v6333
        %6464 = vmatpush.bf16.msra.mxu0 %v6329
        %6465 = vmatmul.bf16.gmra.mxu0 %v6121
        %v6466 = vpop.f32.mrf.mxu0
        %v6467 = vadd.f32 0.0, %v6466
        %v6468 = vpop.f32.mrf.mxu0
        %v6469 = vadd.f32 0.0, %v6468
        %6470 = vmatmul.bf16.gmra.mxu0 %v6123
        %v6471 = vpop.f32.mrf.mxu0
        %v6472 = vadd.f32 0.0, %v6471
        %v6473 = vpop.f32.mrf.mxu0
        %v6474 = vadd.f32 0.0, %v6473
        %6475 = vmatmul.bf16.gmra.mxu0 %v6125
        %v6476 = vpop.f32.mrf.mxu0
        %v6477 = vadd.f32 0.0, %v6476
        %v6478 = vpop.f32.mrf.mxu0
        %v6479 = vadd.f32 0.0, %v6478
        %6480 = vmatmul.bf16.gmra.mxu0 %v6127
        %v6481 = vpop.f32.mrf.mxu0
        %v6482 = vadd.f32 0.0, %v6481
        %v6483 = vpop.f32.mrf.mxu0
        %v6484 = vadd.f32 0.0, %v6483
        %6485 = vdwg.mxu0
        %6486 = vmatpush.bf16.msra.mxu0 %v6389
        %6487 = vmatpush.bf16.msra.mxu0 %v6385
        %6488 = vmatpush.bf16.msra.mxu0 %v6381
        %6489 = vmatpush.bf16.msra.mxu0 %v6377
        %6490 = vmatpush.bf16.msra.mxu0 %v6373
        %6491 = vmatpush.bf16.msra.mxu0 %v6369
        %6492 = vmatpush.bf16.msra.mxu0 %v6365
        %6493 = vmatpush.bf16.msra.mxu0 %v6361
        %6494 = vmatmul.bf16.gmra.mxu0 %v6122
        %v6495 = vpop.f32.mrf.mxu0
        %v6496 = vadd.f32 %v6467, %v6495
        %v6497 = vpop.f32.mrf.mxu0
        %v6498 = vadd.f32 %v6469, %v6497
        %6499 = vmatmul.bf16.gmra.mxu0 %v6124
        %v6500 = vpop.f32.mrf.mxu0
        %v6501 = vadd.f32 %v6472, %v6500
        %v6502 = vpop.f32.mrf.mxu0
        %v6503 = vadd.f32 %v6474, %v6502
        %6504 = vmatmul.bf16.gmra.mxu0 %v6126
        %v6505 = vpop.f32.mrf.mxu0
        %v6506 = vadd.f32 %v6477, %v6505
        %v6507 = vpop.f32.mrf.mxu0
        %v6508 = vadd.f32 %v6479, %v6507
        %6509 = vmatmul.bf16.gmra.mxu0 %v6128
        %v6510 = vpop.f32.mrf.mxu0
        %v6511 = vadd.f32 %v6482, %v6510
        %v6512 = vpop.f32.mrf.mxu0
        %v6513 = vadd.f32 %v6484, %v6512
        %6514 = vdwg.mxu0
        %6515 = vmatpush.bf16.msra.mxu0 %v6358
        %6516 = vmatpush.bf16.msra.mxu0 %v6354
        %6517 = vmatpush.bf16.msra.mxu0 %v6350
        %6518 = vmatpush.bf16.msra.mxu0 %v6346
        %6519 = vmatpush.bf16.msra.mxu0 %v6342
        %6520 = vmatpush.bf16.msra.mxu0 %v6338
        %6521 = vmatpush.bf16.msra.mxu0 %v6334
        %6522 = vmatpush.bf16.msra.mxu0 %v6330
        %6523 = vmatmul.bf16.gmra.mxu0 %v6121
        %v6524 = vpop.f32.mrf.mxu0
        %v6525 = vadd.f32 0.0, %v6524
        %v6526 = vpop.f32.mrf.mxu0
        %v6527 = vadd.f32 0.0, %v6526
        %6528 = vmatmul.bf16.gmra.mxu0 %v6123
        %v6529 = vpop.f32.mrf.mxu0
        %v6530 = vadd.f32 0.0, %v6529
        %v6531 = vpop.f32.mrf.mxu0
        %v6532 = vadd.f32 0.0, %v6531
        %6533 = vmatmul.bf16.gmra.mxu0 %v6125
        %v6534 = vpop.f32.mrf.mxu0
        %v6535 = vadd.f32 0.0, %v6534
        %v6536 = vpop.f32.mrf.mxu0
        %v6537 = vadd.f32 0.0, %v6536
        %6538 = vmatmul.bf16.gmra.mxu0 %v6127
        %v6539 = vpop.f32.mrf.mxu0
        %v6540 = vadd.f32 0.0, %v6539
        %v6541 = vpop.f32.mrf.mxu0
        %v6542 = vadd.f32 0.0, %v6541
        %6543 = vdwg.mxu0
        %6544 = vmatpush.bf16.msra.mxu0 %v6390
        %6545 = vmatpush.bf16.msra.mxu0 %v6386
        %6546 = vmatpush.bf16.msra.mxu0 %v6382
        %6547 = vmatpush.bf16.msra.mxu0 %v6378
        %6548 = vmatpush.bf16.msra.mxu0 %v6374
        %6549 = vmatpush.bf16.msra.mxu0 %v6370
        %6550 = vmatpush.bf16.msra.mxu0 %v6366
        %6551 = vmatpush.bf16.msra.mxu0 %v6362
        %6552 = vmatmul.bf16.gmra.mxu0 %v6122
        %v6553 = vpop.f32.mrf.mxu0
        %v6554 = vadd.f32 %v6525, %v6553
        %v6555 = vpop.f32.mrf.mxu0
        %v6556 = vadd.f32 %v6527, %v6555
        %6557 = vmatmul.bf16.gmra.mxu0 %v6124
        %v6558 = vpop.f32.mrf.mxu0
        %v6559 = vadd.f32 %v6530, %v6558
        %v6560 = vpop.f32.mrf.mxu0
        %v6561 = vadd.f32 %v6532, %v6560
        %6562 = vmatmul.bf16.gmra.mxu0 %v6126
        %v6563 = vpop.f32.mrf.mxu0
        %v6564 = vadd.f32 %v6535, %v6563
        %v6565 = vpop.f32.mrf.mxu0
        %v6566 = vadd.f32 %v6537, %v6565
        %6567 = vmatmul.bf16.gmra.mxu0 %v6128
        %v6568 = vpop.f32.mrf.mxu0
        %v6569 = vadd.f32 %v6540, %v6568
        %v6570 = vpop.f32.mrf.mxu0
        %v6571 = vadd.f32 %v6542, %v6570
        %6572 = vdwg.mxu0
        %6573 = vmatpush.bf16.msra.mxu0 %v6359
        %6574 = vmatpush.bf16.msra.mxu0 %v6355
        %6575 = vmatpush.bf16.msra.mxu0 %v6351
        %6576 = vmatpush.bf16.msra.mxu0 %v6347
        %6577 = vmatpush.bf16.msra.mxu0 %v6343
        %6578 = vmatpush.bf16.msra.mxu0 %v6339
        %6579 = vmatpush.bf16.msra.mxu0 %v6335
        %6580 = vmatpush.bf16.msra.mxu0 %v6331
        %6581 = vmatmul.bf16.gmra.mxu0 %v6121
        %v6582 = vpop.f32.mrf.mxu0
        %v6583 = vadd.f32 0.0, %v6582
        %v6584 = vpop.f32.mrf.mxu0
        %v6585 = vadd.f32 0.0, %v6584
        %6586 = vmatmul.bf16.gmra.mxu0 %v6123
        %v6587 = vpop.f32.mrf.mxu0
        %v6588 = vadd.f32 0.0, %v6587
        %v6589 = vpop.f32.mrf.mxu0
        %v6590 = vadd.f32 0.0, %v6589
        %6591 = vmatmul.bf16.gmra.mxu0 %v6125
        %v6592 = vpop.f32.mrf.mxu0
        %v6593 = vadd.f32 0.0, %v6592
        %v6594 = vpop.f32.mrf.mxu0
        %v6595 = vadd.f32 0.0, %v6594
        %6596 = vmatmul.bf16.gmra.mxu0 %v6127
        %v6597 = vpop.f32.mrf.mxu0
        %v6598 = vadd.f32 0.0, %v6597
        %v6599 = vpop.f32.mrf.mxu0
        %v6600 = vadd.f32 0.0, %v6599
        %6601 = vdwg.mxu0
        %6602 = vmatpush.bf16.msra.mxu0 %v6391
        %6603 = vmatpush.bf16.msra.mxu0 %v6387
        %6604 = vmatpush.bf16.msra.mxu0 %v6383
        %6605 = vmatpush.bf16.msra.mxu0 %v6379
        %6606 = vmatpush.bf16.msra.mxu0 %v6375
        %6607 = vmatpush.bf16.msra.mxu0 %v6371
        %6608 = vmatpush.bf16.msra.mxu0 %v6367
        %6609 = vmatpush.bf16.msra.mxu0 %v6363
        %6610 = vmatmul.bf16.gmra.mxu0 %v6122
        %v6611 = vpop.f32.mrf.mxu0
        %v6612 = vadd.f32 %v6583, %v6611
        %v6613 = vpop.f32.mrf.mxu0
        %v6614 = vadd.f32 %v6585, %v6613
        %6615 = vmatmul.bf16.gmra.mxu0 %v6124
        %v6616 = vpop.f32.mrf.mxu0
        %v6617 = vadd.f32 %v6588, %v6616
        %v6618 = vpop.f32.mrf.mxu0
        %v6619 = vadd.f32 %v6590, %v6618
        %6620 = vmatmul.bf16.gmra.mxu0 %v6126
        %v6621 = vpop.f32.mrf.mxu0
        %v6622 = vadd.f32 %v6593, %v6621
        %v6623 = vpop.f32.mrf.mxu0
        %v6624 = vadd.f32 %v6595, %v6623
        %6625 = vmatmul.bf16.gmra.mxu0 %v6128
        %v6626 = vpop.f32.mrf.mxu0
        %v6627 = vadd.f32 %v6598, %v6626
        %v6628 = vpop.f32.mrf.mxu0
        %v6629 = vadd.f32 %v6600, %v6628
        %6630 = vdwg.mxu0
        %6631 = vmatpush.bf16.msra.mxu0 %v6360
        %6632 = vmatpush.bf16.msra.mxu0 %v6356
        %6633 = vmatpush.bf16.msra.mxu0 %v6352
        %6634 = vmatpush.bf16.msra.mxu0 %v6348
        %6635 = vmatpush.bf16.msra.mxu0 %v6344
        %6636 = vmatpush.bf16.msra.mxu0 %v6340
        %6637 = vmatpush.bf16.msra.mxu0 %v6336
        %6638 = vmatpush.bf16.msra.mxu0 %v6332
        %6639 = vmatmul.bf16.gmra.mxu0 %v6121
        %v6640 = vpop.f32.mrf.mxu0
        %v6641 = vadd.f32 0.0, %v6640
        %v6642 = vpop.f32.mrf.mxu0
        %v6643 = vadd.f32 0.0, %v6642
        %6644 = vmatmul.bf16.gmra.mxu0 %v6123
        %v6645 = vpop.f32.mrf.mxu0
        %v6646 = vadd.f32 0.0, %v6645
        %v6647 = vpop.f32.mrf.mxu0
        %v6648 = vadd.f32 0.0, %v6647
        %6649 = vmatmul.bf16.gmra.mxu0 %v6125
        %v6650 = vpop.f32.mrf.mxu0
        %v6651 = vadd.f32 0.0, %v6650
        %v6652 = vpop.f32.mrf.mxu0
        %v6653 = vadd.f32 0.0, %v6652
        %6654 = vmatmul.bf16.gmra.mxu0 %v6127
        %v6655 = vpop.f32.mrf.mxu0
        %v6656 = vadd.f32 0.0, %v6655
        %v6657 = vpop.f32.mrf.mxu0
        %v6658 = vadd.f32 0.0, %v6657
        %6659 = vdwg.mxu0
        %6660 = vmatpush.bf16.msra.mxu0 %v6392
        %6661 = vmatpush.bf16.msra.mxu0 %v6388
        %6662 = vmatpush.bf16.msra.mxu0 %v6384
        %6663 = vmatpush.bf16.msra.mxu0 %v6380
        %6664 = vmatpush.bf16.msra.mxu0 %v6376
        %6665 = vmatpush.bf16.msra.mxu0 %v6372
        %6666 = vmatpush.bf16.msra.mxu0 %v6368
        %6667 = vmatpush.bf16.msra.mxu0 %v6364
        %6668 = vmatmul.bf16.gmra.mxu0 %v6122
        %v6669 = vpop.f32.mrf.mxu0
        %v6670 = vadd.f32 %v6641, %v6669
        %v6671 = vpop.f32.mrf.mxu0
        %v6672 = vadd.f32 %v6643, %v6671
        %6673 = vmatmul.bf16.gmra.mxu0 %v6124
        %v6674 = vpop.f32.mrf.mxu0
        %v6675 = vadd.f32 %v6646, %v6674
        %v6676 = vpop.f32.mrf.mxu0
        %v6677 = vadd.f32 %v6648, %v6676
        %6678 = vmatmul.bf16.gmra.mxu0 %v6126
        %v6679 = vpop.f32.mrf.mxu0
        %v6680 = vadd.f32 %v6651, %v6679
        %v6681 = vpop.f32.mrf.mxu0
        %v6682 = vadd.f32 %v6653, %v6681
        %6683 = vmatmul.bf16.gmra.mxu0 %v6128
        %v6684 = vpop.f32.mrf.mxu0
        %v6685 = vadd.f32 %v6656, %v6684
        %v6686 = vpop.f32.mrf.mxu0
        %v6687 = vadd.f32 %v6658, %v6686
        %6688 = vdwg.mxu0
        %v6689 = vadd.f32 %v5847, %v6496
        %v6690 = vadd.f32 %v5905, %v6554
        %v6691 = vadd.f32 %v5963, %v6612
        %v6692 = vadd.f32 %v6021, %v6670
        %v6693 = vadd.f32 %v5849, %v6498
        %v6694 = vadd.f32 %v5907, %v6556
        %v6695 = vadd.f32 %v5965, %v6614
        %v6696 = vadd.f32 %v6023, %v6672
        %v6697 = vadd.f32 %v5852, %v6501
        %v6698 = vadd.f32 %v5910, %v6559
        %v6699 = vadd.f32 %v5968, %v6617
        %v6700 = vadd.f32 %v6026, %v6675
        %v6701 = vadd.f32 %v5854, %v6503
        %v6702 = vadd.f32 %v5912, %v6561
        %v6703 = vadd.f32 %v5970, %v6619
        %v6704 = vadd.f32 %v6028, %v6677
        %v6705 = vadd.f32 %v5857, %v6506
        %v6706 = vadd.f32 %v5915, %v6564
        %v6707 = vadd.f32 %v5973, %v6622
        %v6708 = vadd.f32 %v6031, %v6680
        %v6709 = vadd.f32 %v5859, %v6508
        %v6710 = vadd.f32 %v5917, %v6566
        %v6711 = vadd.f32 %v5975, %v6624
        %v6712 = vadd.f32 %v6033, %v6682
        %v6713 = vadd.f32 %v5862, %v6511
        %v6714 = vadd.f32 %v5920, %v6569
        %v6715 = vadd.f32 %v5978, %v6627
        %v6716 = vadd.f32 %v6036, %v6685
        %v6717 = vadd.f32 %v5864, %v6513
        %v6718 = vadd.f32 %v5922, %v6571
        %v6719 = vadd.f32 %v5980, %v6629
        %v6720 = vadd.f32 %v6038, %v6687
        %v6721 = vld [vmem:[%s6] sm:$0xf]
        %v6723 = vperm.slane %v6721, 0
        %v6724 = vperm.slane %v6721, 1
        %v6725 = vperm.slane %v6721, 2
        %v6726 = vperm.slane %v6721, 3
        %v6731 = vadd.f32 %v6689, %v6723
        %v6732 = vadd.f32 %v6690, %v6724
        %v6733 = vadd.f32 %v6691, %v6725
        %v6734 = vadd.f32 %v6692, %v6726
        %v6735 = vadd.f32 %v6693, %v6723
        %v6736 = vadd.f32 %v6694, %v6724
        %v6737 = vadd.f32 %v6695, %v6725
        %v6738 = vadd.f32 %v6696, %v6726
        %v6739 = vadd.f32 %v6697, %v6723
        %v6740 = vadd.f32 %v6698, %v6724
        %v6741 = vadd.f32 %v6699, %v6725
        %v6742 = vadd.f32 %v6700, %v6726
        %v6743 = vadd.f32 %v6701, %v6723
        %v6744 = vadd.f32 %v6702, %v6724
        %v6745 = vadd.f32 %v6703, %v6725
        %v6746 = vadd.f32 %v6704, %v6726
        %v6747 = vadd.f32 %v6705, %v6723
        %v6748 = vadd.f32 %v6706, %v6724
        %v6749 = vadd.f32 %v6707, %v6725
        %v6750 = vadd.f32 %v6708, %v6726
        %v6751 = vadd.f32 %v6709, %v6723
        %v6752 = vadd.f32 %v6710, %v6724
        %v6753 = vadd.f32 %v6711, %v6725
        %v6754 = vadd.f32 %v6712, %v6726
        %v6755 = vadd.f32 %v6713, %v6723
        %v6756 = vadd.f32 %v6714, %v6724
        %v6757 = vadd.f32 %v6715, %v6725
        %v6758 = vadd.f32 %v6716, %v6726
        %v6759 = vadd.f32 %v6717, %v6723
        %v6760 = vadd.f32 %v6718, %v6724
        %v6761 = vadd.f32 %v6719, %v6725
        %v6762 = vadd.f32 %v6720, %v6726
        %v6763 = vmax.f32 %v6731, 0.0
        %v6764 = vmax.f32 %v6732, 0.0
        %v6765 = vmax.f32 %v6733, 0.0
        %v6766 = vmax.f32 %v6734, 0.0
        %v6767 = vmax.f32 %v6735, 0.0
        %v6768 = vmax.f32 %v6736, 0.0
        %v6769 = vmax.f32 %v6737, 0.0
        %v6770 = vmax.f32 %v6738, 0.0
        %v6771 = vmax.f32 %v6739, 0.0
        %v6772 = vmax.f32 %v6740, 0.0
        %v6773 = vmax.f32 %v6741, 0.0
        %v6774 = vmax.f32 %v6742, 0.0
        %v6775 = vmax.f32 %v6743, 0.0
        %v6776 = vmax.f32 %v6744, 0.0
        %v6777 = vmax.f32 %v6745, 0.0
        %v6778 = vmax.f32 %v6746, 0.0
        %v6779 = vmax.f32 %v6747, 0.0
        %v6780 = vmax.f32 %v6748, 0.0
        %v6781 = vmax.f32 %v6749, 0.0
        %v6782 = vmax.f32 %v6750, 0.0
        %v6783 = vmax.f32 %v6751, 0.0
        %v6784 = vmax.f32 %v6752, 0.0
        %v6785 = vmax.f32 %v6753, 0.0
        %v6786 = vmax.f32 %v6754, 0.0
        %v6787 = vmax.f32 %v6755, 0.0
        %v6788 = vmax.f32 %v6756, 0.0
        %v6789 = vmax.f32 %v6757, 0.0
        %v6790 = vmax.f32 %v6758, 0.0
        %v6791 = vmax.f32 %v6759, 0.0
        %v6792 = vmax.f32 %v6760, 0.0
        %v6793 = vmax.f32 %v6761, 0.0
        %v6794 = vmax.f32 %v6762, 0.0
        %v6795 = vrot.slane %v6763, 4
        %v6796 = vadd.f32 %v6763, %v6795
        %v6797 = vrot.slane %v6796, 2
        %v6798 = vadd.f32 %v6796, %v6797
        %v6799 = vrot.slane %v6798, 1
        %v6800 = vadd.f32 %v6798, %v6799
        %v6801 = vrot.slane %v6764, 4
        %v6802 = vadd.f32 %v6764, %v6801
        %v6803 = vrot.slane %v6802, 2
        %v6804 = vadd.f32 %v6802, %v6803
        %v6805 = vrot.slane %v6804, 1
        %v6806 = vadd.f32 %v6804, %v6805
        %v6807 = vrot.slane %v6765, 4
        %v6808 = vadd.f32 %v6765, %v6807
        %v6809 = vrot.slane %v6808, 2
        %v6810 = vadd.f32 %v6808, %v6809
        %v6811 = vrot.slane %v6810, 1
        %v6812 = vadd.f32 %v6810, %v6811
        %v6813 = vrot.slane %v6766, 4
        %v6814 = vadd.f32 %v6766, %v6813
        %v6815 = vrot.slane %v6814, 2
        %v6816 = vadd.f32 %v6814, %v6815
        %v6817 = vrot.slane %v6816, 1
        %v6818 = vadd.f32 %v6816, %v6817
        %v6819 = vrot.slane %v6767, 4
        %v6820 = vadd.f32 %v6767, %v6819
        %v6821 = vrot.slane %v6820, 2
        %v6822 = vadd.f32 %v6820, %v6821
        %v6823 = vrot.slane %v6822, 1
        %v6824 = vadd.f32 %v6822, %v6823
        %v6825 = vrot.slane %v6768, 4
        %v6826 = vadd.f32 %v6768, %v6825
        %v6827 = vrot.slane %v6826, 2
        %v6828 = vadd.f32 %v6826, %v6827
        %v6829 = vrot.slane %v6828, 1
        %v6830 = vadd.f32 %v6828, %v6829
        %v6831 = vrot.slane %v6769, 4
        %v6832 = vadd.f32 %v6769, %v6831
        %v6833 = vrot.slane %v6832, 2
        %v6834 = vadd.f32 %v6832, %v6833
        %v6835 = vrot.slane %v6834, 1
        %v6836 = vadd.f32 %v6834, %v6835
        %v6837 = vrot.slane %v6770, 4
        %v6838 = vadd.f32 %v6770, %v6837
        %v6839 = vrot.slane %v6838, 2
        %v6840 = vadd.f32 %v6838, %v6839
        %v6841 = vrot.slane %v6840, 1
        %v6842 = vadd.f32 %v6840, %v6841
        %v6843 = vrot.slane %v6771, 4
        %v6844 = vadd.f32 %v6771, %v6843
        %v6845 = vrot.slane %v6844, 2
        %v6846 = vadd.f32 %v6844, %v6845
        %v6847 = vrot.slane %v6846, 1
        %v6848 = vadd.f32 %v6846, %v6847
        %v6849 = vrot.slane %v6772, 4
        %v6850 = vadd.f32 %v6772, %v6849
        %v6851 = vrot.slane %v6850, 2
        %v6852 = vadd.f32 %v6850, %v6851
        %v6853 = vrot.slane %v6852, 1
        %v6854 = vadd.f32 %v6852, %v6853
        %v6855 = vrot.slane %v6773, 4
        %v6856 = vadd.f32 %v6773, %v6855
        %v6857 = vrot.slane %v6856, 2
        %v6858 = vadd.f32 %v6856, %v6857
        %v6859 = vrot.slane %v6858, 1
        %v6860 = vadd.f32 %v6858, %v6859
        %v6861 = vrot.slane %v6774, 4
        %v6862 = vadd.f32 %v6774, %v6861
        %v6863 = vrot.slane %v6862, 2
        %v6864 = vadd.f32 %v6862, %v6863
        %v6865 = vrot.slane %v6864, 1
        %v6866 = vadd.f32 %v6864, %v6865
        %v6867 = vrot.slane %v6775, 4
        %v6868 = vadd.f32 %v6775, %v6867
        %v6869 = vrot.slane %v6868, 2
        %v6870 = vadd.f32 %v6868, %v6869
        %v6871 = vrot.slane %v6870, 1
        %v6872 = vadd.f32 %v6870, %v6871
        %v6873 = vrot.slane %v6776, 4
        %v6874 = vadd.f32 %v6776, %v6873
        %v6875 = vrot.slane %v6874, 2
        %v6876 = vadd.f32 %v6874, %v6875
        %v6877 = vrot.slane %v6876, 1
        %v6878 = vadd.f32 %v6876, %v6877
        %v6879 = vrot.slane %v6777, 4
        %v6880 = vadd.f32 %v6777, %v6879
        %v6881 = vrot.slane %v6880, 2
        %v6882 = vadd.f32 %v6880, %v6881
        %v6883 = vrot.slane %v6882, 1
        %v6884 = vadd.f32 %v6882, %v6883
        %v6885 = vrot.slane %v6778, 4
        %v6886 = vadd.f32 %v6778, %v6885
        %v6887 = vrot.slane %v6886, 2
        %v6888 = vadd.f32 %v6886, %v6887
        %v6889 = vrot.slane %v6888, 1
        %v6890 = vadd.f32 %v6888, %v6889
        %v6891 = vrot.slane %v6779, 4
        %v6892 = vadd.f32 %v6779, %v6891
        %v6893 = vrot.slane %v6892, 2
        %v6894 = vadd.f32 %v6892, %v6893
        %v6895 = vrot.slane %v6894, 1
        %v6896 = vadd.f32 %v6894, %v6895
        %v6897 = vrot.slane %v6780, 4
        %v6898 = vadd.f32 %v6780, %v6897
        %v6899 = vrot.slane %v6898, 2
        %v6900 = vadd.f32 %v6898, %v6899
        %v6901 = vrot.slane %v6900, 1
        %v6902 = vadd.f32 %v6900, %v6901
        %v6903 = vrot.slane %v6781, 4
        %v6904 = vadd.f32 %v6781, %v6903
        %v6905 = vrot.slane %v6904, 2
        %v6906 = vadd.f32 %v6904, %v6905
        %v6907 = vrot.slane %v6906, 1
        %v6908 = vadd.f32 %v6906, %v6907
        %v6909 = vrot.slane %v6782, 4
        %v6910 = vadd.f32 %v6782, %v6909
        %v6911 = vrot.slane %v6910, 2
        %v6912 = vadd.f32 %v6910, %v6911
        %v6913 = vrot.slane %v6912, 1
        %v6914 = vadd.f32 %v6912, %v6913
        %v6915 = vrot.slane %v6783, 4
        %v6916 = vadd.f32 %v6783, %v6915
        %v6917 = vrot.slane %v6916, 2
        %v6918 = vadd.f32 %v6916, %v6917
        %v6919 = vrot.slane %v6918, 1
        %v6920 = vadd.f32 %v6918, %v6919
        %v6921 = vrot.slane %v6784, 4
        %v6922 = vadd.f32 %v6784, %v6921
        %v6923 = vrot.slane %v6922, 2
        %v6924 = vadd.f32 %v6922, %v6923
        %v6925 = vrot.slane %v6924, 1
        %v6926 = vadd.f32 %v6924, %v6925
        %v6927 = vrot.slane %v6785, 4
        %v6928 = vadd.f32 %v6785, %v6927
        %v6929 = vrot.slane %v6928, 2
        %v6930 = vadd.f32 %v6928, %v6929
        %v6931 = vrot.slane %v6930, 1
        %v6932 = vadd.f32 %v6930, %v6931
        %v6933 = vrot.slane %v6786, 4
        %v6934 = vadd.f32 %v6786, %v6933
        %v6935 = vrot.slane %v6934, 2
        %v6936 = vadd.f32 %v6934, %v6935
        %v6937 = vrot.slane %v6936, 1
        %v6938 = vadd.f32 %v6936, %v6937
        %v6939 = vrot.slane %v6787, 4
        %v6940 = vadd.f32 %v6787, %v6939
        %v6941 = vrot.slane %v6940, 2
        %v6942 = vadd.f32 %v6940, %v6941
        %v6943 = vrot.slane %v6942, 1
        %v6944 = vadd.f32 %v6942, %v6943
        %v6945 = vrot.slane %v6788, 4
        %v6946 = vadd.f32 %v6788, %v6945
        %v6947 = vrot.slane %v6946, 2
        %v6948 = vadd.f32 %v6946, %v6947
        %v6949 = vrot.slane %v6948, 1
        %v6950 = vadd.f32 %v6948, %v6949
        %v6951 = vrot.slane %v6789, 4
        %v6952 = vadd.f32 %v6789, %v6951
        %v6953 = vrot.slane %v6952, 2
        %v6954 = vadd.f32 %v6952, %v6953
        %v6955 = vrot.slane %v6954, 1
        %v6956 = vadd.f32 %v6954, %v6955
        %v6957 = vrot.slane %v6790, 4
        %v6958 = vadd.f32 %v6790, %v6957
        %v6959 = vrot.slane %v6958, 2
        %v6960 = vadd.f32 %v6958, %v6959
        %v6961 = vrot.slane %v6960, 1
        %v6962 = vadd.f32 %v6960, %v6961
        %v6963 = vrot.slane %v6791, 4
        %v6964 = vadd.f32 %v6791, %v6963
        %v6965 = vrot.slane %v6964, 2
        %v6966 = vadd.f32 %v6964, %v6965
        %v6967 = vrot.slane %v6966, 1
        %v6968 = vadd.f32 %v6966, %v6967
        %v6969 = vrot.slane %v6792, 4
        %v6970 = vadd.f32 %v6792, %v6969
        %v6971 = vrot.slane %v6970, 2
        %v6972 = vadd.f32 %v6970, %v6971
        %v6973 = vrot.slane %v6972, 1
        %v6974 = vadd.f32 %v6972, %v6973
        %v6975 = vrot.slane %v6793, 4
        %v6976 = vadd.f32 %v6793, %v6975
        %v6977 = vrot.slane %v6976, 2
        %v6978 = vadd.f32 %v6976, %v6977
        %v6979 = vrot.slane %v6978, 1
        %v6980 = vadd.f32 %v6978, %v6979
        %v6981 = vrot.slane %v6794, 4
        %v6982 = vadd.f32 %v6794, %v6981
        %v6983 = vrot.slane %v6982, 2
        %v6984 = vadd.f32 %v6982, %v6983
        %v6985 = vrot.slane %v6984, 1
        %v6986 = vadd.f32 %v6984, %v6985
        %v6987 = vmul.f32 %v6800, 0.125
        %v6988 = vmul.f32 %v6806, 0.125
        %v6989 = vmul.f32 %v6812, 0.125
        %v6990 = vmul.f32 %v6818, 0.125
        %v6991 = vmul.f32 %v6824, 0.125
        %v6992 = vmul.f32 %v6830, 0.125
        %v6993 = vmul.f32 %v6836, 0.125
        %v6994 = vmul.f32 %v6842, 0.125
        %v6995 = vmul.f32 %v6848, 0.125
        %v6996 = vmul.f32 %v6854, 0.125
        %v6997 = vmul.f32 %v6860, 0.125
        %v6998 = vmul.f32 %v6866, 0.125
        %v6999 = vmul.f32 %v6872, 0.125
        %v7000 = vmul.f32 %v6878, 0.125
        %v7001 = vmul.f32 %v6884, 0.125
        %v7002 = vmul.f32 %v6890, 0.125
        %v7003 = vmul.f32 %v6896, 0.125
        %v7004 = vmul.f32 %v6902, 0.125
        %v7005 = vmul.f32 %v6908, 0.125
        %v7006 = vmul.f32 %v6914, 0.125
        %v7007 = vmul.f32 %v6920, 0.125
        %v7008 = vmul.f32 %v6926, 0.125
        %v7009 = vmul.f32 %v6932, 0.125
        %v7010 = vmul.f32 %v6938, 0.125
        %v7011 = vmul.f32 %v6944, 0.125
        %v7012 = vmul.f32 %v6950, 0.125
        %v7013 = vmul.f32 %v6956, 0.125
        %v7014 = vmul.f32 %v6962, 0.125
        %v7015 = vmul.f32 %v6968, 0.125
        %v7016 = vmul.f32 %v6974, 0.125
        %v7017 = vmul.f32 %v6980, 0.125
        %v7018 = vmul.f32 %v6986, 0.125
        %v7019 = vpack.c.bf16 %v6987, %v6987
        %v7020 = vpack.c.bf16 %v6988, %v6988
        %v7021 = vpack.c.bf16 %v6989, %v6989
        %v7022 = vpack.c.bf16 %v6990, %v6990
        %v7023 = vpack.c.bf16 %v6991, %v6991
        %v7024 = vpack.c.bf16 %v6992, %v6992
        %v7025 = vpack.c.bf16 %v6993, %v6993
        %v7026 = vpack.c.bf16 %v6994, %v6994
        %v7027 = vpack.c.bf16 %v6995, %v6995
        %v7028 = vpack.c.bf16 %v6996, %v6996
        %v7029 = vpack.c.bf16 %v6997, %v6997
        %v7030 = vpack.c.bf16 %v6998, %v6998
        %v7031 = vpack.c.bf16 %v6999, %v6999
        %v7032 = vpack.c.bf16 %v7000, %v7000
        %v7033 = vpack.c.bf16 %v7001, %v7001
        %v7034 = vpack.c.bf16 %v7002, %v7002
        %v7035 = vpack.c.bf16 %v7003, %v7003
        %v7036 = vpack.c.bf16 %v7004, %v7004
        %v7037 = vpack.c.bf16 %v7005, %v7005
        %v7038 = vpack.c.bf16 %v7006, %v7006
        %v7039 = vpack.c.bf16 %v7007, %v7007
        %v7040 = vpack.c.bf16 %v7008, %v7008
        %v7041 = vpack.c.bf16 %v7009, %v7009
        %v7042 = vpack.c.bf16 %v7010, %v7010
        %v7043 = vpack.c.bf16 %v7011, %v7011
        %v7044 = vpack.c.bf16 %v7012, %v7012
        %v7045 = vpack.c.bf16 %v7013, %v7013
        %v7046 = vpack.c.bf16 %v7014, %v7014
        %v7047 = vpack.c.bf16 %v7015, %v7015
        %v7048 = vpack.c.bf16 %v7016, %v7016
        %v7049 = vpack.c.bf16 %v7017, %v7017
        %v7050 = vpack.c.bf16 %v7018, %v7018
        %v7051 = vld [vmem:[%s7] sm:$0xff]
        %v7052 = vld [vmem:[%s7 + $0x8] sm:$0xff]
        %v7053 = vld [vmem:[%s7 + $0x10] sm:$0xff]
        %v7054 = vld [vmem:[%s7 + $0x18] sm:$0xff]
        %v7055 = vld [vmem:[%s7 + $0x20] sm:$0xff]
        %v7056 = vld [vmem:[%s7 + $0x28] sm:$0xff]
        %v7057 = vld [vmem:[%s7 + $0x30] sm:$0xff]
        %v7058 = vld [vmem:[%s7 + $0x38] sm:$0xff]
        %v7059 = vld [vmem:[%s7 + $0x40] sm:$0xff]
        %v7060 = vld [vmem:[%s7 + $0x48] sm:$0xff]
        %v7061 = vld [vmem:[%s7 + $0x50] sm:$0xff]
        %v7062 = vld [vmem:[%s7 + $0x58] sm:$0xff]
        %v7063 = vld [vmem:[%s7 + $0x60] sm:$0xff]
        %v7064 = vld [vmem:[%s7 + $0x68] sm:$0xff]
        %v7065 = vld [vmem:[%s7 + $0x70] sm:$0xff]
        %v7066 = vld [vmem:[%s7 + $0x78] sm:$0xff]
        %v7067 = vld [vmem:[%s7 + $0x80] sm:$0xff]
        %v7068 = vld [vmem:[%s7 + $0x88] sm:$0xff]
        %v7069 = vld [vmem:[%s7 + $0x90] sm:$0xff]
        %v7070 = vld [vmem:[%s7 + $0x98] sm:$0xff]
        %v7071 = vld [vmem:[%s7 + $0xa0] sm:$0xff]
        %v7072 = vld [vmem:[%s7 + $0xa8] sm:$0xff]
        %v7073 = vld [vmem:[%s7 + $0xb0] sm:$0xff]
        %v7074 = vld [vmem:[%s7 + $0xb8] sm:$0xff]
        %v7075 = vld [vmem:[%s7 + $0xc0] sm:$0xff]
        %v7076 = vld [vmem:[%s7 + $0xc8] sm:$0xff]
        %v7077 = vld [vmem:[%s7 + $0xd0] sm:$0xff]
        %v7078 = vld [vmem:[%s7 + $0xd8] sm:$0xff]
        %v7079 = vld [vmem:[%s7 + $0xe0] sm:$0xff]
        %v7080 = vld [vmem:[%s7 + $0xe8] sm:$0xff]
        %v7081 = vld [vmem:[%s7 + $0xf0] sm:$0xff]
        %v7082 = vld [vmem:[%s7 + $0xf8] sm:$0xff]
        %v7083 = vld [vmem:[%s7 + $0x100] sm:$0xff]
        %v7084 = vld [vmem:[%s7 + $0x108] sm:$0xff]
        %v7085 = vld [vmem:[%s7 + $0x110] sm:$0xff]
        %v7086 = vld [vmem:[%s7 + $0x118] sm:$0xff]
        %v7087 = vld [vmem:[%s7 + $0x120] sm:$0xff]
        %v7088 = vld [vmem:[%s7 + $0x128] sm:$0xff]
        %v7089 = vld [vmem:[%s7 + $0x130] sm:$0xff]
        %v7090 = vld [vmem:[%s7 + $0x138] sm:$0xff]
        %v7091 = vld [vmem:[%s7 + $0x140] sm:$0xff]
        %v7092 = vld [vmem:[%s7 + $0x148] sm:$0xff]
        %v7093 = vld [vmem:[%s7 + $0x150] sm:$0xff]
        %v7094 = vld [vmem:[%s7 + $0x158] sm:$0xff]
        %v7095 = vld [vmem:[%s7 + $0x160] sm:$0xff]
        %v7096 = vld [vmem:[%s7 + $0x168] sm:$0xff]
        %v7097 = vld [vmem:[%s7 + $0x170] sm:$0xff]
        %v7098 = vld [vmem:[%s7 + $0x178] sm:$0xff]
        %v7099 = vld [vmem:[%s7 + $0x180] sm:$0xff]
        %v7100 = vld [vmem:[%s7 + $0x188] sm:$0xff]
        %v7101 = vld [vmem:[%s7 + $0x190] sm:$0xff]
        %v7102 = vld [vmem:[%s7 + $0x198] sm:$0xff]
        %v7103 = vld [vmem:[%s7 + $0x1a0] sm:$0xff]
        %v7104 = vld [vmem:[%s7 + $0x1a8] sm:$0xff]
        %v7105 = vld [vmem:[%s7 + $0x1b0] sm:$0xff]
        %v7106 = vld [vmem:[%s7 + $0x1b8] sm:$0xff]
        %v7107 = vld [vmem:[%s7 + $0x1c0] sm:$0xff]
        %v7108 = vld [vmem:[%s7 + $0x1c8] sm:$0xff]
        %v7109 = vld [vmem:[%s7 + $0x1d0] sm:$0xff]
        %v7110 = vld [vmem:[%s7 + $0x1d8] sm:$0xff]
        %v7111 = vld [vmem:[%s7 + $0x1e0] sm:$0xff]
        %v7112 = vld [vmem:[%s7 + $0x1e8] sm:$0xff]
        %v7113 = vld [vmem:[%s7 + $0x1f0] sm:$0xff]
        %v7114 = vld [vmem:[%s7 + $0x1f8] sm:$0xff]
        %v7115 = vld [vmem:[%s7 + $0x200] sm:$0xff]
        %v7116 = vld [vmem:[%s7 + $0x208] sm:$0xff]
        %v7117 = vld [vmem:[%s7 + $0x210] sm:$0xff]
        %v7118 = vld [vmem:[%s7 + $0x218] sm:$0xff]
        %v7119 = vld [vmem:[%s7 + $0x220] sm:$0xff]
        %v7120 = vld [vmem:[%s7 + $0x228] sm:$0xff]
        %v7121 = vld [vmem:[%s7 + $0x230] sm:$0xff]
        %v7122 = vld [vmem:[%s7 + $0x238] sm:$0xff]
        %v7123 = vld [vmem:[%s7 + $0x240] sm:$0xff]
        %v7124 = vld [vmem:[%s7 + $0x248] sm:$0xff]
        %v7125 = vld [vmem:[%s7 + $0x250] sm:$0xff]
        %v7126 = vld [vmem:[%s7 + $0x258] sm:$0xff]
        %v7127 = vld [vmem:[%s7 + $0x260] sm:$0xff]
        %v7128 = vld [vmem:[%s7 + $0x268] sm:$0xff]
        %v7129 = vld [vmem:[%s7 + $0x270] sm:$0xff]
        %v7130 = vld [vmem:[%s7 + $0x278] sm:$0xff]
        %v7131 = vld [vmem:[%s7 + $0x280] sm:$0xff]
        %v7132 = vld [vmem:[%s7 + $0x288] sm:$0xff]
        %v7133 = vld [vmem:[%s7 + $0x290] sm:$0xff]
        %v7134 = vld [vmem:[%s7 + $0x298] sm:$0xff]
        %v7135 = vld [vmem:[%s7 + $0x2a0] sm:$0xff]
        %v7136 = vld [vmem:[%s7 + $0x2a8] sm:$0xff]
        %v7137 = vld [vmem:[%s7 + $0x2b0] sm:$0xff]
        %v7138 = vld [vmem:[%s7 + $0x2b8] sm:$0xff]
        %v7139 = vld [vmem:[%s7 + $0x2c0] sm:$0xff]
        %v7140 = vld [vmem:[%s7 + $0x2c8] sm:$0xff]
        %v7141 = vld [vmem:[%s7 + $0x2d0] sm:$0xff]
        %v7142 = vld [vmem:[%s7 + $0x2d8] sm:$0xff]
        %v7143 = vld [vmem:[%s7 + $0x2e0] sm:$0xff]
        %v7144 = vld [vmem:[%s7 + $0x2e8] sm:$0xff]
        %v7145 = vld [vmem:[%s7 + $0x2f0] sm:$0xff]
        %v7146 = vld [vmem:[%s7 + $0x2f8] sm:$0xff]
        %v7147 = vld [vmem:[%s7 + $0x300] sm:$0xff]
        %v7148 = vld [vmem:[%s7 + $0x308] sm:$0xff]
        %v7149 = vld [vmem:[%s7 + $0x310] sm:$0xff]
        %v7150 = vld [vmem:[%s7 + $0x318] sm:$0xff]
        %v7151 = vld [vmem:[%s7 + $0x320] sm:$0xff]
        %v7152 = vld [vmem:[%s7 + $0x328] sm:$0xff]
        %v7153 = vld [vmem:[%s7 + $0x330] sm:$0xff]
        %v7154 = vld [vmem:[%s7 + $0x338] sm:$0xff]
        %v7155 = vld [vmem:[%s7 + $0x340] sm:$0xff]
        %v7156 = vld [vmem:[%s7 + $0x348] sm:$0xff]
        %v7157 = vld [vmem:[%s7 + $0x350] sm:$0xff]
        %v7158 = vld [vmem:[%s7 + $0x358] sm:$0xff]
        %v7159 = vld [vmem:[%s7 + $0x360] sm:$0xff]
        %v7160 = vld [vmem:[%s7 + $0x368] sm:$0xff]
        %v7161 = vld [vmem:[%s7 + $0x370] sm:$0xff]
        %v7162 = vld [vmem:[%s7 + $0x378] sm:$0xff]
        %v7163 = vld [vmem:[%s7 + $0x380] sm:$0xff]
        %v7164 = vld [vmem:[%s7 + $0x388] sm:$0xff]
        %v7165 = vld [vmem:[%s7 + $0x390] sm:$0xff]
        %v7166 = vld [vmem:[%s7 + $0x398] sm:$0xff]
        %v7167 = vld [vmem:[%s7 + $0x3a0] sm:$0xff]
        %v7168 = vld [vmem:[%s7 + $0x3a8] sm:$0xff]
        %v7169 = vld [vmem:[%s7 + $0x3b0] sm:$0xff]
        %v7170 = vld [vmem:[%s7 + $0x3b8] sm:$0xff]
        %v7171 = vld [vmem:[%s7 + $0x3c0] sm:$0xff]
        %v7172 = vld [vmem:[%s7 + $0x3c8] sm:$0xff]
        %v7173 = vld [vmem:[%s7 + $0x3d0] sm:$0xff]
        %v7174 = vld [vmem:[%s7 + $0x3d8] sm:$0xff]
        %v7175 = vld [vmem:[%s7 + $0x3e0] sm:$0xff]
        %v7176 = vld [vmem:[%s7 + $0x3e8] sm:$0xff]
        %v7177 = vld [vmem:[%s7 + $0x3f0] sm:$0xff]
        %v7178 = vld [vmem:[%s7 + $0x3f8] sm:$0xff]
        %v7179 = vld [vmem:[%s8] sm:$0xf]
        %v7181 = vperm.slane %v7179, 0
        %v7182 = vperm.slane %v7179, 1
        %v7183 = vperm.slane %v7179, 2
        %v7184 = vperm.slane %v7179, 3
        %v7221 = vunpack.c.l.b16 %v7019
        %v7222 = vunpack.c.l.b16 %v7020
        %v7223 = vunpack.c.l.b16 %v7021
        %v7224 = vunpack.c.l.b16 %v7022
        %v7225 = vunpack.c.l.b16 %v7023
        %v7226 = vunpack.c.l.b16 %v7024
        %v7227 = vunpack.c.l.b16 %v7025
        %v7228 = vunpack.c.l.b16 %v7026
        %v7229 = vunpack.c.l.b16 %v7027
        %v7230 = vunpack.c.l.b16 %v7028
        %v7231 = vunpack.c.l.b16 %v7029
        %v7232 = vunpack.c.l.b16 %v7030
        %v7233 = vunpack.c.l.b16 %v7031
        %v7234 = vunpack.c.l.b16 %v7032
        %v7235 = vunpack.c.l.b16 %v7033
        %v7236 = vunpack.c.l.b16 %v7034
        %v7237 = vunpack.c.l.b16 %v7035
        %v7238 = vunpack.c.l.b16 %v7036
        %v7239 = vunpack.c.l.b16 %v7037
        %v7240 = vunpack.c.l.b16 %v7038
        %v7241 = vunpack.c.l.b16 %v7039
        %v7242 = vunpack.c.l.b16 %v7040
        %v7243 = vunpack.c.l.b16 %v7041
        %v7244 = vunpack.c.l.b16 %v7042
        %v7245 = vunpack.c.l.b16 %v7043
        %v7246 = vunpack.c.l.b16 %v7044
        %v7247 = vunpack.c.l.b16 %v7045
        %v7248 = vunpack.c.l.b16 %v7046
        %v7249 = vunpack.c.l.b16 %v7047
        %v7250 = vunpack.c.l.b16 %v7048
        %v7251 = vunpack.c.l.b16 %v7049
        %v7252 = vunpack.c.l.b16 %v7050
        %vm7253 = vcmask 1041409
        %v7254 = vsel %vm7253, %v7225, %v7221
        %vm7255 = vcmask 1042434
        %v7256 = vsel %vm7255, %v7229, %v7254
        %vm7257 = vcmask 1043459
        %v7258 = vsel %vm7257, %v7233, %v7256
        %vm7259 = vcmask 1044484
        %v7260 = vsel %vm7259, %v7237, %v7258
        %vm7261 = vcmask 1045509
        %v7262 = vsel %vm7261, %v7241, %v7260
        %vm7263 = vcmask 1046534
        %v7264 = vsel %vm7263, %v7245, %v7262
        %vm7265 = vcmask 1047559
        %v7266 = vsel %vm7265, %v7249, %v7264
        %v7267 = vsel %vm7253, %v7226, %v7222
        %v7268 = vsel %vm7255, %v7230, %v7267
        %v7269 = vsel %vm7257, %v7234, %v7268
        %v7270 = vsel %vm7259, %v7238, %v7269
        %v7271 = vsel %vm7261, %v7242, %v7270
        %v7272 = vsel %vm7263, %v7246, %v7271
        %v7273 = vsel %vm7265, %v7250, %v7272
        %v7274 = vsel %vm7253, %v7227, %v7223
        %v7275 = vsel %vm7255, %v7231, %v7274
        %v7276 = vsel %vm7257, %v7235, %v7275
        %v7277 = vsel %vm7259, %v7239, %v7276
        %v7278 = vsel %vm7261, %v7243, %v7277
        %v7279 = vsel %vm7263, %v7247, %v7278
        %v7280 = vsel %vm7265, %v7251, %v7279
        %v7281 = vsel %vm7253, %v7228, %v7224
        %v7282 = vsel %vm7255, %v7232, %v7281
        %v7283 = vsel %vm7257, %v7236, %v7282
        %v7284 = vsel %vm7259, %v7240, %v7283
        %v7285 = vsel %vm7261, %v7244, %v7284
        %v7286 = vsel %vm7263, %v7248, %v7285
        %v7287 = vsel %vm7265, %v7252, %v7286
        %v7288 = vpack.c.b16 %v7266, %v7266
        %v7289 = vpack.c.b16 %v7273, %v7273
        %v7290 = vpack.c.b16 %v7280, %v7280
        %v7291 = vpack.c.b16 %v7287, %v7287
        %v7424 = vunpack.c.l.b16 %v7051
        %v7425 = vunpack.c.h.b16 %v7051
        %v7426 = vunpack.c.l.b16 %v7052
        %v7427 = vunpack.c.h.b16 %v7052
        %v7428 = vunpack.c.l.b16 %v7053
        %v7429 = vunpack.c.h.b16 %v7053
        %v7430 = vunpack.c.l.b16 %v7054
        %v7431 = vunpack.c.h.b16 %v7054
        %v7432 = vunpack.c.l.b16 %v7055
        %v7433 = vunpack.c.h.b16 %v7055
        %v7434 = vunpack.c.l.b16 %v7056
        %v7435 = vunpack.c.h.b16 %v7056
        %v7436 = vunpack.c.l.b16 %v7057
        %v7437 = vunpack.c.h.b16 %v7057
        %v7438 = vunpack.c.l.b16 %v7058
        %v7439 = vunpack.c.h.b16 %v7058
        %v7440 = vunpack.c.l.b16 %v7059
        %v7441 = vunpack.c.h.b16 %v7059
        %v7442 = vunpack.c.l.b16 %v7060
        %v7443 = vunpack.c.h.b16 %v7060
        %v7444 = vunpack.c.l.b16 %v7061
        %v7445 = vunpack.c.h.b16 %v7061
        %v7446 = vunpack.c.l.b16 %v7062
        %v7447 = vunpack.c.h.b16 %v7062
        %v7448 = vunpack.c.l.b16 %v7063
        %v7449 = vunpack.c.h.b16 %v7063
        %v7450 = vunpack.c.l.b16 %v7064
        %v7451 = vunpack.c.h.b16 %v7064
        %v7452 = vunpack.c.l.b16 %v7065
        %v7453 = vunpack.c.h.b16 %v7065
        %v7454 = vunpack.c.l.b16 %v7066
        %v7455 = vunpack.c.h.b16 %v7066
        %v7456 = vunpack.c.l.b16 %v7067
        %v7457 = vunpack.c.h.b16 %v7067
        %v7458 = vunpack.c.l.b16 %v7068
        %v7459 = vunpack.c.h.b16 %v7068
        %v7460 = vunpack.c.l.b16 %v7069
        %v7461 = vunpack.c.h.b16 %v7069
        %v7462 = vunpack.c.l.b16 %v7070
        %v7463 = vunpack.c.h.b16 %v7070
        %v7464 = vunpack.c.l.b16 %v7071
        %v7465 = vunpack.c.h.b16 %v7071
        %v7466 = vunpack.c.l.b16 %v7072
        %v7467 = vunpack.c.h.b16 %v7072
        %v7468 = vunpack.c.l.b16 %v7073
        %v7469 = vunpack.c.h.b16 %v7073
        %v7470 = vunpack.c.l.b16 %v7074
        %v7471 = vunpack.c.h.b16 %v7074
        %v7472 = vunpack.c.l.b16 %v7075
        %v7473 = vunpack.c.h.b16 %v7075
        %v7474 = vunpack.c.l.b16 %v7076
        %v7475 = vunpack.c.h.b16 %v7076
        %v7476 = vunpack.c.l.b16 %v7077
        %v7477 = vunpack.c.h.b16 %v7077
        %v7478 = vunpack.c.l.b16 %v7078
        %v7479 = vunpack.c.h.b16 %v7078
        %v7480 = vunpack.c.l.b16 %v7079
        %v7481 = vunpack.c.h.b16 %v7079
        %v7482 = vunpack.c.l.b16 %v7080
        %v7483 = vunpack.c.h.b16 %v7080
        %v7484 = vunpack.c.l.b16 %v7081
        %v7485 = vunpack.c.h.b16 %v7081
        %v7486 = vunpack.c.l.b16 %v7082
        %v7487 = vunpack.c.h.b16 %v7082
        %v7488 = vunpack.c.l.b16 %v7083
        %v7489 = vunpack.c.h.b16 %v7083
        %v7490 = vunpack.c.l.b16 %v7084
        %v7491 = vunpack.c.h.b16 %v7084
        %v7492 = vunpack.c.l.b16 %v7085
        %v7493 = vunpack.c.h.b16 %v7085
        %v7494 = vunpack.c.l.b16 %v7086
        %v7495 = vunpack.c.h.b16 %v7086
        %v7496 = vunpack.c.l.b16 %v7087
        %v7497 = vunpack.c.h.b16 %v7087
        %v7498 = vunpack.c.l.b16 %v7088
        %v7499 = vunpack.c.h.b16 %v7088
        %v7500 = vunpack.c.l.b16 %v7089
        %v7501 = vunpack.c.h.b16 %v7089
        %v7502 = vunpack.c.l.b16 %v7090
        %v7503 = vunpack.c.h.b16 %v7090
        %v7504 = vunpack.c.l.b16 %v7091
        %v7505 = vunpack.c.h.b16 %v7091
        %v7506 = vunpack.c.l.b16 %v7092
        %v7507 = vunpack.c.h.b16 %v7092
        %v7508 = vunpack.c.l.b16 %v7093
        %v7509 = vunpack.c.h.b16 %v7093
        %v7510 = vunpack.c.l.b16 %v7094
        %v7511 = vunpack.c.h.b16 %v7094
        %v7512 = vunpack.c.l.b16 %v7095
        %v7513 = vunpack.c.h.b16 %v7095
        %v7514 = vunpack.c.l.b16 %v7096
        %v7515 = vunpack.c.h.b16 %v7096
        %v7516 = vunpack.c.l.b16 %v7097
        %v7517 = vunpack.c.h.b16 %v7097
        %v7518 = vunpack.c.l.b16 %v7098
        %v7519 = vunpack.c.h.b16 %v7098
        %v7520 = vunpack.c.l.b16 %v7099
        %v7521 = vunpack.c.h.b16 %v7099
        %v7522 = vunpack.c.l.b16 %v7100
        %v7523 = vunpack.c.h.b16 %v7100
        %v7524 = vunpack.c.l.b16 %v7101
        %v7525 = vunpack.c.h.b16 %v7101
        %v7526 = vunpack.c.l.b16 %v7102
        %v7527 = vunpack.c.h.b16 %v7102
        %v7528 = vunpack.c.l.b16 %v7103
        %v7529 = vunpack.c.h.b16 %v7103
        %v7530 = vunpack.c.l.b16 %v7104
        %v7531 = vunpack.c.h.b16 %v7104
        %v7532 = vunpack.c.l.b16 %v7105
        %v7533 = vunpack.c.h.b16 %v7105
        %v7534 = vunpack.c.l.b16 %v7106
        %v7535 = vunpack.c.h.b16 %v7106
        %v7536 = vunpack.c.l.b16 %v7107
        %v7537 = vunpack.c.h.b16 %v7107
        %v7538 = vunpack.c.l.b16 %v7108
        %v7539 = vunpack.c.h.b16 %v7108
        %v7540 = vunpack.c.l.b16 %v7109
        %v7541 = vunpack.c.h.b16 %v7109
        %v7542 = vunpack.c.l.b16 %v7110
        %v7543 = vunpack.c.h.b16 %v7110
        %v7544 = vunpack.c.l.b16 %v7111
        %v7545 = vunpack.c.h.b16 %v7111
        %v7546 = vunpack.c.l.b16 %v7112
        %v7547 = vunpack.c.h.b16 %v7112
        %v7548 = vunpack.c.l.b16 %v7113
        %v7549 = vunpack.c.h.b16 %v7113
        %v7550 = vunpack.c.l.b16 %v7114
        %v7551 = vunpack.c.h.b16 %v7114
        %v7552 = vunpack.c.l.b16 %v7115
        %v7553 = vunpack.c.h.b16 %v7115
        %v7554 = vunpack.c.l.b16 %v7116
        %v7555 = vunpack.c.h.b16 %v7116
        %v7556 = vunpack.c.l.b16 %v7117
        %v7557 = vunpack.c.h.b16 %v7117
        %v7558 = vunpack.c.l.b16 %v7118
        %v7559 = vunpack.c.h.b16 %v7118
        %v7560 = vunpack.c.l.b16 %v7119
        %v7561 = vunpack.c.h.b16 %v7119
        %v7562 = vunpack.c.l.b16 %v7120
        %v7563 = vunpack.c.h.b16 %v7120
        %v7564 = vunpack.c.l.b16 %v7121
        %v7565 = vunpack.c.h.b16 %v7121
        %v7566 = vunpack.c.l.b16 %v7122
        %v7567 = vunpack.c.h.b16 %v7122
        %v7568 = vunpack.c.l.b16 %v7123
        %v7569 = vunpack.c.h.b16 %v7123
        %v7570 = vunpack.c.l.b16 %v7124
        %v7571 = vunpack.c.h.b16 %v7124
        %v7572 = vunpack.c.l.b16 %v7125
        %v7573 = vunpack.c.h.b16 %v7125
        %v7574 = vunpack.c.l.b16 %v7126
        %v7575 = vunpack.c.h.b16 %v7126
        %v7576 = vunpack.c.l.b16 %v7127
        %v7577 = vunpack.c.h.b16 %v7127
        %v7578 = vunpack.c.l.b16 %v7128
        %v7579 = vunpack.c.h.b16 %v7128
        %v7580 = vunpack.c.l.b16 %v7129
        %v7581 = vunpack.c.h.b16 %v7129
        %v7582 = vunpack.c.l.b16 %v7130
        %v7583 = vunpack.c.h.b16 %v7130
        %v7584 = vunpack.c.l.b16 %v7131
        %v7585 = vunpack.c.h.b16 %v7131
        %v7586 = vunpack.c.l.b16 %v7132
        %v7587 = vunpack.c.h.b16 %v7132
        %v7588 = vunpack.c.l.b16 %v7133
        %v7589 = vunpack.c.h.b16 %v7133
        %v7590 = vunpack.c.l.b16 %v7134
        %v7591 = vunpack.c.h.b16 %v7134
        %v7592 = vunpack.c.l.b16 %v7135
        %v7593 = vunpack.c.h.b16 %v7135
        %v7594 = vunpack.c.l.b16 %v7136
        %v7595 = vunpack.c.h.b16 %v7136
        %v7596 = vunpack.c.l.b16 %v7137
        %v7597 = vunpack.c.h.b16 %v7137
        %v7598 = vunpack.c.l.b16 %v7138
        %v7599 = vunpack.c.h.b16 %v7138
        %v7600 = vunpack.c.l.b16 %v7139
        %v7601 = vunpack.c.h.b16 %v7139
        %v7602 = vunpack.c.l.b16 %v7140
        %v7603 = vunpack.c.h.b16 %v7140
        %v7604 = vunpack.c.l.b16 %v7141
        %v7605 = vunpack.c.h.b16 %v7141
        %v7606 = vunpack.c.l.b16 %v7142
        %v7607 = vunpack.c.h.b16 %v7142
        %v7608 = vunpack.c.l.b16 %v7143
        %v7609 = vunpack.c.h.b16 %v7143
        %v7610 = vunpack.c.l.b16 %v7144
        %v7611 = vunpack.c.h.b16 %v7144
        %v7612 = vunpack.c.l.b16 %v7145
        %v7613 = vunpack.c.h.b16 %v7145
        %v7614 = vunpack.c.l.b16 %v7146
        %v7615 = vunpack.c.h.b16 %v7146
        %v7616 = vunpack.c.l.b16 %v7147
        %v7617 = vunpack.c.h.b16 %v7147
        %v7618 = vunpack.c.l.b16 %v7148
        %v7619 = vunpack.c.h.b16 %v7148
        %v7620 = vunpack.c.l.b16 %v7149
        %v7621 = vunpack.c.h.b16 %v7149
        %v7622 = vunpack.c.l.b16 %v7150
        %v7623 = vunpack.c.h.b16 %v7150
        %v7624 = vunpack.c.l.b16 %v7151
        %v7625 = vunpack.c.h.b16 %v7151
        %v7626 = vunpack.c.l.b16 %v7152
        %v7627 = vunpack.c.h.b16 %v7152
        %v7628 = vunpack.c.l.b16 %v7153
        %v7629 = vunpack.c.h.b16 %v7153
        %v7630 = vunpack.c.l.b16 %v7154
        %v7631 = vunpack.c.h.b16 %v7154
        %v7632 = vunpack.c.l.b16 %v7155
        %v7633 = vunpack.c.h.b16 %v7155
        %v7634 = vunpack.c.l.b16 %v7156
        %v7635 = vunpack.c.h.b16 %v7156
        %v7636 = vunpack.c.l.b16 %v7157
        %v7637 = vunpack.c.h.b16 %v7157
        %v7638 = vunpack.c.l.b16 %v7158
        %v7639 = vunpack.c.h.b16 %v7158
        %v7640 = vunpack.c.l.b16 %v7159
        %v7641 = vunpack.c.h.b16 %v7159
        %v7642 = vunpack.c.l.b16 %v7160
        %v7643 = vunpack.c.h.b16 %v7160
        %v7644 = vunpack.c.l.b16 %v7161
        %v7645 = vunpack.c.h.b16 %v7161
        %v7646 = vunpack.c.l.b16 %v7162
        %v7647 = vunpack.c.h.b16 %v7162
        %v7648 = vunpack.c.l.b16 %v7163
        %v7649 = vunpack.c.h.b16 %v7163
        %v7650 = vunpack.c.l.b16 %v7164
        %v7651 = vunpack.c.h.b16 %v7164
        %v7652 = vunpack.c.l.b16 %v7165
        %v7653 = vunpack.c.h.b16 %v7165
        %v7654 = vunpack.c.l.b16 %v7166
        %v7655 = vunpack.c.h.b16 %v7166
        %v7656 = vunpack.c.l.b16 %v7167
        %v7657 = vunpack.c.h.b16 %v7167
        %v7658 = vunpack.c.l.b16 %v7168
        %v7659 = vunpack.c.h.b16 %v7168
        %v7660 = vunpack.c.l.b16 %v7169
        %v7661 = vunpack.c.h.b16 %v7169
        %v7662 = vunpack.c.l.b16 %v7170
        %v7663 = vunpack.c.h.b16 %v7170
        %v7664 = vunpack.c.l.b16 %v7171
        %v7665 = vunpack.c.h.b16 %v7171
        %v7666 = vunpack.c.l.b16 %v7172
        %v7667 = vunpack.c.h.b16 %v7172
        %v7668 = vunpack.c.l.b16 %v7173
        %v7669 = vunpack.c.h.b16 %v7173
        %v7670 = vunpack.c.l.b16 %v7174
        %v7671 = vunpack.c.h.b16 %v7174
        %v7672 = vunpack.c.l.b16 %v7175
        %v7673 = vunpack.c.h.b16 %v7175
        %v7674 = vunpack.c.l.b16 %v7176
        %v7675 = vunpack.c.h.b16 %v7176
        %v7676 = vunpack.c.l.b16 %v7177
        %v7677 = vunpack.c.h.b16 %v7177
        %v7678 = vunpack.c.l.b16 %v7178
        %v7679 = vunpack.c.h.b16 %v7178
        %v7680 = vpack.c.b16 %v7428, %v7424
        %v7681 = vpack.c.b16 %v7429, %v7425
        %v7682 = vpack.c.b16 %v7430, %v7426
        %v7683 = vpack.c.b16 %v7431, %v7427
        %v7684 = vpack.c.b16 %v7436, %v7432
        %v7685 = vpack.c.b16 %v7437, %v7433
        %v7686 = vpack.c.b16 %v7438, %v7434
        %v7687 = vpack.c.b16 %v7439, %v7435
        %v7688 = vpack.c.b16 %v7444, %v7440
        %v7689 = vpack.c.b16 %v7445, %v7441
        %v7690 = vpack.c.b16 %v7446, %v7442
        %v7691 = vpack.c.b16 %v7447, %v7443
        %v7692 = vpack.c.b16 %v7452, %v7448
        %v7693 = vpack.c.b16 %v7453, %v7449
        %v7694 = vpack.c.b16 %v7454, %v7450
        %v7695 = vpack.c.b16 %v7455, %v7451
        %v7696 = vpack.c.b16 %v7460, %v7456
        %v7697 = vpack.c.b16 %v7461, %v7457
        %v7698 = vpack.c.b16 %v7462, %v7458
        %v7699 = vpack.c.b16 %v7463, %v7459
        %v7700 = vpack.c.b16 %v7468, %v7464
        %v7701 = vpack.c.b16 %v7469, %v7465
        %v7702 = vpack.c.b16 %v7470, %v7466
        %v7703 = vpack.c.b16 %v7471, %v7467
        %v7704 = vpack.c.b16 %v7476, %v7472
        %v7705 = vpack.c.b16 %v7477, %v7473
        %v7706 = vpack.c.b16 %v7478, %v7474
        %v7707 = vpack.c.b16 %v7479, %v7475
        %v7708 = vpack.c.b16 %v7484, %v7480
        %v7709 = vpack.c.b16 %v7485, %v7481
        %v7710 = vpack.c.b16 %v7486, %v7482
        %v7711 = vpack.c.b16 %v7487, %v7483
        %v7712 = vpack.c.b16 %v7492, %v7488
        %v7713 = vpack.c.b16 %v7493, %v7489
        %v7714 = vpack.c.b16 %v7494, %v7490
        %v7715 = vpack.c.b16 %v7495, %v7491
        %v7716 = vpack.c.b16 %v7500, %v7496
        %v7717 = vpack.c.b16 %v7501, %v7497
        %v7718 = vpack.c.b16 %v7502, %v7498
        %v7719 = vpack.c.b16 %v7503, %v7499
        %v7720 = vpack.c.b16 %v7508, %v7504
        %v7721 = vpack.c.b16 %v7509, %v7505
        %v7722 = vpack.c.b16 %v7510, %v7506
        %v7723 = vpack.c.b16 %v7511, %v7507
        %v7724 = vpack.c.b16 %v7516, %v7512
        %v7725 = vpack.c.b16 %v7517, %v7513
        %v7726 = vpack.c.b16 %v7518, %v7514
        %v7727 = vpack.c.b16 %v7519, %v7515
        %v7728 = vpack.c.b16 %v7524, %v7520
        %v7729 = vpack.c.b16 %v7525, %v7521
        %v7730 = vpack.c.b16 %v7526, %v7522
        %v7731 = vpack.c.b16 %v7527, %v7523
        %v7732 = vpack.c.b16 %v7532, %v7528
        %v7733 = vpack.c.b16 %v7533, %v7529
        %v7734 = vpack.c.b16 %v7534, %v7530
        %v7735 = vpack.c.b16 %v7535, %v7531
        %v7736 = vpack.c.b16 %v7540, %v7536
        %v7737 = vpack.c.b16 %v7541, %v7537
        %v7738 = vpack.c.b16 %v7542, %v7538
        %v7739 = vpack.c.b16 %v7543, %v7539
        %v7740 = vpack.c.b16 %v7548, %v7544
        %v7741 = vpack.c.b16 %v7549, %v7545
        %v7742 = vpack.c.b16 %v7550, %v7546
        %v7743 = vpack.c.b16 %v7551, %v7547
        %v7744 = vpack.c.b16 %v7556, %v7552
        %v7745 = vpack.c.b16 %v7557, %v7553
        %v7746 = vpack.c.b16 %v7558, %v7554
        %v7747 = vpack.c.b16 %v7559, %v7555
        %v7748 = vpack.c.b16 %v7564, %v7560
        %v7749 = vpack.c.b16 %v7565, %v7561
        %v7750 = vpack.c.b16 %v7566, %v7562
        %v7751 = vpack.c.b16 %v7567, %v7563
        %v7752 = vpack.c.b16 %v7572, %v7568
        %v7753 = vpack.c.b16 %v7573, %v7569
        %v7754 = vpack.c.b16 %v7574, %v7570
        %v7755 = vpack.c.b16 %v7575, %v7571
        %v7756 = vpack.c.b16 %v7580, %v7576
        %v7757 = vpack.c.b16 %v7581, %v7577
        %v7758 = vpack.c.b16 %v7582, %v7578
        %v7759 = vpack.c.b16 %v7583, %v7579
        %v7760 = vpack.c.b16 %v7588, %v7584
        %v7761 = vpack.c.b16 %v7589, %v7585
        %v7762 = vpack.c.b16 %v7590, %v7586
        %v7763 = vpack.c.b16 %v7591, %v7587
        %v7764 = vpack.c.b16 %v7596, %v7592
        %v7765 = vpack.c.b16 %v7597, %v7593
        %v7766 = vpack.c.b16 %v7598, %v7594
        %v7767 = vpack.c.b16 %v7599, %v7595
        %v7768 = vpack.c.b16 %v7604, %v7600
        %v7769 = vpack.c.b16 %v7605, %v7601
        %v7770 = vpack.c.b16 %v7606, %v7602
        %v7771 = vpack.c.b16 %v7607, %v7603
        %v7772 = vpack.c.b16 %v7612, %v7608
        %v7773 = vpack.c.b16 %v7613, %v7609
        %v7774 = vpack.c.b16 %v7614, %v7610
        %v7775 = vpack.c.b16 %v7615, %v7611
        %v7776 = vpack.c.b16 %v7620, %v7616
        %v7777 = vpack.c.b16 %v7621, %v7617
        %v7778 = vpack.c.b16 %v7622, %v7618
        %v7779 = vpack.c.b16 %v7623, %v7619
        %v7780 = vpack.c.b16 %v7628, %v7624
        %v7781 = vpack.c.b16 %v7629, %v7625
        %v7782 = vpack.c.b16 %v7630, %v7626
        %v7783 = vpack.c.b16 %v7631, %v7627
        %v7784 = vpack.c.b16 %v7636, %v7632
        %v7785 = vpack.c.b16 %v7637, %v7633
        %v7786 = vpack.c.b16 %v7638, %v7634
        %v7787 = vpack.c.b16 %v7639, %v7635
        %v7788 = vpack.c.b16 %v7644, %v7640
        %v7789 = vpack.c.b16 %v7645, %v7641
        %v7790 = vpack.c.b16 %v7646, %v7642
        %v7791 = vpack.c.b16 %v7647, %v7643
        %v7792 = vpack.c.b16 %v7652, %v7648
        %v7793 = vpack.c.b16 %v7653, %v7649
        %v7794 = vpack.c.b16 %v7654, %v7650
        %v7795 = vpack.c.b16 %v7655, %v7651
        %v7796 = vpack.c.b16 %v7660, %v7656
        %v7797 = vpack.c.b16 %v7661, %v7657
        %v7798 = vpack.c.b16 %v7662, %v7658
        %v7799 = vpack.c.b16 %v7663, %v7659
        %v7800 = vpack.c.b16 %v7668, %v7664
        %v7801 = vpack.c.b16 %v7669, %v7665
        %v7802 = vpack.c.b16 %v7670, %v7666
        %v7803 = vpack.c.b16 %v7671, %v7667
        %v7804 = vpack.c.b16 %v7676, %v7672
        %v7805 = vpack.c.b16 %v7677, %v7673
        %v7806 = vpack.c.b16 %v7678, %v7674
        %v7807 = vpack.c.b16 %v7679, %v7675
        %7936 = vmatpush.bf16.msra.mxu0 %v7708
        %7937 = vmatpush.bf16.msra.mxu0 %v7704
        %7938 = vmatpush.bf16.msra.mxu0 %v7700
        %7939 = vmatpush.bf16.msra.mxu0 %v7696
        %7940 = vmatpush.bf16.msra.mxu0 %v7692
        %7941 = vmatpush.bf16.msra.mxu0 %v7688
        %7942 = vmatpush.bf16.msra.mxu0 %v7684
        %7943 = vmatpush.bf16.msra.mxu0 %v7680
        %7944 = vmatmul.bf16.gmra.mxu0 %v7288
        %v7945 = vpop.f32.mrf.mxu0
        %v7946 = vadd.f32 %v7181, %v7945
        %v7947 = vpop.f32.mrf.mxu0
        %7948 = vdwg.mxu0
        %7949 = vmatpush.bf16.msra.mxu0 %v7740
        %7950 = vmatpush.bf16.msra.mxu0 %v7736
        %7951 = vmatpush.bf16.msra.mxu0 %v7732
        %7952 = vmatpush.bf16.msra.mxu0 %v7728
        %7953 = vmatpush.bf16.msra.mxu0 %v7724
        %7954 = vmatpush.bf16.msra.mxu0 %v7720
        %7955 = vmatpush.bf16.msra.mxu0 %v7716
        %7956 = vmatpush.bf16.msra.mxu0 %v7712
        %7957 = vmatmul.bf16.gmra.mxu0 %v7289
        %v7958 = vpop.f32.mrf.mxu0
        %v7959 = vadd.f32 %v7946, %v7958
        %v7960 = vpop.f32.mrf.mxu0
        %7961 = vdwg.mxu0
        %7962 = vmatpush.bf16.msra.mxu0 %v7772
        %7963 = vmatpush.bf16.msra.mxu0 %v7768
        %7964 = vmatpush.bf16.msra.mxu0 %v7764
        %7965 = vmatpush.bf16.msra.mxu0 %v7760
        %7966 = vmatpush.bf16.msra.mxu0 %v7756
        %7967 = vmatpush.bf16.msra.mxu0 %v7752
        %7968 = vmatpush.bf16.msra.mxu0 %v7748
        %7969 = vmatpush.bf16.msra.mxu0 %v7744
        %7970 = vmatmul.bf16.gmra.mxu0 %v7290
        %v7971 = vpop.f32.mrf.mxu0
        %v7972 = vadd.f32 %v7959, %v7971
        %v7973 = vpop.f32.mrf.mxu0
        %7974 = vdwg.mxu0
        %7975 = vmatpush.bf16.msra.mxu0 %v7804
        %7976 = vmatpush.bf16.msra.mxu0 %v7800
        %7977 = vmatpush.bf16.msra.mxu0 %v7796
        %7978 = vmatpush.bf16.msra.mxu0 %v7792
        %7979 = vmatpush.bf16.msra.mxu0 %v7788
        %7980 = vmatpush.bf16.msra.mxu0 %v7784
        %7981 = vmatpush.bf16.msra.mxu0 %v7780
        %7982 = vmatpush.bf16.msra.mxu0 %v7776
        %7983 = vmatmul.bf16.gmra.mxu0 %v7291
        %v7984 = vpop.f32.mrf.mxu0
        %v7985 = vadd.f32 %v7972, %v7984
        %v7986 = vpop.f32.mrf.mxu0
        %7987 = vdwg.mxu0
        %7988 = vmatpush.bf16.msra.mxu0 %v7709
        %7989 = vmatpush.bf16.msra.mxu0 %v7705
        %7990 = vmatpush.bf16.msra.mxu0 %v7701
        %7991 = vmatpush.bf16.msra.mxu0 %v7697
        %7992 = vmatpush.bf16.msra.mxu0 %v7693
        %7993 = vmatpush.bf16.msra.mxu0 %v7689
        %7994 = vmatpush.bf16.msra.mxu0 %v7685
        %7995 = vmatpush.bf16.msra.mxu0 %v7681
        %7996 = vmatmul.bf16.gmra.mxu0 %v7288
        %v7997 = vpop.f32.mrf.mxu0
        %v7998 = vadd.f32 %v7182, %v7997
        %v7999 = vpop.f32.mrf.mxu0
        %8000 = vdwg.mxu0
        %8001 = vmatpush.bf16.msra.mxu0 %v7741
        %8002 = vmatpush.bf16.msra.mxu0 %v7737
        %8003 = vmatpush.bf16.msra.mxu0 %v7733
        %8004 = vmatpush.bf16.msra.mxu0 %v7729
        %8005 = vmatpush.bf16.msra.mxu0 %v7725
        %8006 = vmatpush.bf16.msra.mxu0 %v7721
        %8007 = vmatpush.bf16.msra.mxu0 %v7717
        %8008 = vmatpush.bf16.msra.mxu0 %v7713
        %8009 = vmatmul.bf16.gmra.mxu0 %v7289
        %v8010 = vpop.f32.mrf.mxu0
        %v8011 = vadd.f32 %v7998, %v8010
        %v8012 = vpop.f32.mrf.mxu0
        %8013 = vdwg.mxu0
        %8014 = vmatpush.bf16.msra.mxu0 %v7773
        %8015 = vmatpush.bf16.msra.mxu0 %v7769
        %8016 = vmatpush.bf16.msra.mxu0 %v7765
        %8017 = vmatpush.bf16.msra.mxu0 %v7761
        %8018 = vmatpush.bf16.msra.mxu0 %v7757
        %8019 = vmatpush.bf16.msra.mxu0 %v7753
        %8020 = vmatpush.bf16.msra.mxu0 %v7749
        %8021 = vmatpush.bf16.msra.mxu0 %v7745
        %8022 = vmatmul.bf16.gmra.mxu0 %v7290
        %v8023 = vpop.f32.mrf.mxu0
        %v8024 = vadd.f32 %v8011, %v8023
        %v8025 = vpop.f32.mrf.mxu0
        %8026 = vdwg.mxu0
        %8027 = vmatpush.bf16.msra.mxu0 %v7805
        %8028 = vmatpush.bf16.msra.mxu0 %v7801
        %8029 = vmatpush.bf16.msra.mxu0 %v7797
        %8030 = vmatpush.bf16.msra.mxu0 %v7793
        %8031 = vmatpush.bf16.msra.mxu0 %v7789
        %8032 = vmatpush.bf16.msra.mxu0 %v7785
        %8033 = vmatpush.bf16.msra.mxu0 %v7781
        %8034 = vmatpush.bf16.msra.mxu0 %v7777
        %8035 = vmatmul.bf16.gmra.mxu0 %v7291
        %v8036 = vpop.f32.mrf.mxu0
        %v8037 = vadd.f32 %v8024, %v8036
        %v8038 = vpop.f32.mrf.mxu0
        %8039 = vdwg.mxu0
        %8040 = vmatpush.bf16.msra.mxu0 %v7710
        %8041 = vmatpush.bf16.msra.mxu0 %v7706
        %8042 = vmatpush.bf16.msra.mxu0 %v7702
        %8043 = vmatpush.bf16.msra.mxu0 %v7698
        %8044 = vmatpush.bf16.msra.mxu0 %v7694
        %8045 = vmatpush.bf16.msra.mxu0 %v7690
        %8046 = vmatpush.bf16.msra.mxu0 %v7686
        %8047 = vmatpush.bf16.msra.mxu0 %v7682
        %8048 = vmatmul.bf16.gmra.mxu0 %v7288
        %v8049 = vpop.f32.mrf.mxu0
        %v8050 = vadd.f32 %v7183, %v8049
        %v8051 = vpop.f32.mrf.mxu0
        %8052 = vdwg.mxu0
        %8053 = vmatpush.bf16.msra.mxu0 %v7742
        %8054 = vmatpush.bf16.msra.mxu0 %v7738
        %8055 = vmatpush.bf16.msra.mxu0 %v7734
        %8056 = vmatpush.bf16.msra.mxu0 %v7730
        %8057 = vmatpush.bf16.msra.mxu0 %v7726
        %8058 = vmatpush.bf16.msra.mxu0 %v7722
        %8059 = vmatpush.bf16.msra.mxu0 %v7718
        %8060 = vmatpush.bf16.msra.mxu0 %v7714
        %8061 = vmatmul.bf16.gmra.mxu0 %v7289
        %v8062 = vpop.f32.mrf.mxu0
        %v8063 = vadd.f32 %v8050, %v8062
        %v8064 = vpop.f32.mrf.mxu0
        %8065 = vdwg.mxu0
        %8066 = vmatpush.bf16.msra.mxu0 %v7774
        %8067 = vmatpush.bf16.msra.mxu0 %v7770
        %8068 = vmatpush.bf16.msra.mxu0 %v7766
        %8069 = vmatpush.bf16.msra.mxu0 %v7762
        %8070 = vmatpush.bf16.msra.mxu0 %v7758
        %8071 = vmatpush.bf16.msra.mxu0 %v7754
        %8072 = vmatpush.bf16.msra.mxu0 %v7750
        %8073 = vmatpush.bf16.msra.mxu0 %v7746
        %8074 = vmatmul.bf16.gmra.mxu0 %v7290
        %v8075 = vpop.f32.mrf.mxu0
        %v8076 = vadd.f32 %v8063, %v8075
        %v8077 = vpop.f32.mrf.mxu0
        %8078 = vdwg.mxu0
        %8079 = vmatpush.bf16.msra.mxu0 %v7806
        %8080 = vmatpush.bf16.msra.mxu0 %v7802
        %8081 = vmatpush.bf16.msra.mxu0 %v7798
        %8082 = vmatpush.bf16.msra.mxu0 %v7794
        %8083 = vmatpush.bf16.msra.mxu0 %v7790
        %8084 = vmatpush.bf16.msra.mxu0 %v7786
        %8085 = vmatpush.bf16.msra.mxu0 %v7782
        %8086 = vmatpush.bf16.msra.mxu0 %v7778
        %8087 = vmatmul.bf16.gmra.mxu0 %v7291
        %v8088 = vpop.f32.mrf.mxu0
        %v8089 = vadd.f32 %v8076, %v8088
        %v8090 = vpop.f32.mrf.mxu0
        %8091 = vdwg.mxu0
        %8092 = vmatpush.bf16.msra.mxu0 %v7711
        %8093 = vmatpush.bf16.msra.mxu0 %v7707
        %8094 = vmatpush.bf16.msra.mxu0 %v7703
        %8095 = vmatpush.bf16.msra.mxu0 %v7699
        %8096 = vmatpush.bf16.msra.mxu0 %v7695
        %8097 = vmatpush.bf16.msra.mxu0 %v7691
        %8098 = vmatpush.bf16.msra.mxu0 %v7687
        %8099 = vmatpush.bf16.msra.mxu0 %v7683
        %8100 = vmatmul.bf16.gmra.mxu0 %v7288
        %v8101 = vpop.f32.mrf.mxu0
        %v8102 = vadd.f32 %v7184, %v8101
        %v8103 = vpop.f32.mrf.mxu0
        %8104 = vdwg.mxu0
        %8105 = vmatpush.bf16.msra.mxu0 %v7743
        %8106 = vmatpush.bf16.msra.mxu0 %v7739
        %8107 = vmatpush.bf16.msra.mxu0 %v7735
        %8108 = vmatpush.bf16.msra.mxu0 %v7731
        %8109 = vmatpush.bf16.msra.mxu0 %v7727
        %8110 = vmatpush.bf16.msra.mxu0 %v7723
        %8111 = vmatpush.bf16.msra.mxu0 %v7719
        %8112 = vmatpush.bf16.msra.mxu0 %v7715
        %8113 = vmatmul.bf16.gmra.mxu0 %v7289
        %v8114 = vpop.f32.mrf.mxu0
        %v8115 = vadd.f32 %v8102, %v8114
        %v8116 = vpop.f32.mrf.mxu0
        %8117 = vdwg.mxu0
        %8118 = vmatpush.bf16.msra.mxu0 %v7775
        %8119 = vmatpush.bf16.msra.mxu0 %v7771
        %8120 = vmatpush.bf16.msra.mxu0 %v7767
        %8121 = vmatpush.bf16.msra.mxu0 %v7763
        %8122 = vmatpush.bf16.msra.mxu0 %v7759
        %8123 = vmatpush.bf16.msra.mxu0 %v7755
        %8124 = vmatpush.bf16.msra.mxu0 %v7751
        %8125 = vmatpush.bf16.msra.mxu0 %v7747
        %8126 = vmatmul.bf16.gmra.mxu0 %v7290
        %v8127 = vpop.f32.mrf.mxu0
        %v8128 = vadd.f32 %v8115, %v8127
        %v8129 = vpop.f32.mrf.mxu0
        %8130 = vdwg.mxu0
        %8131 = vmatpush.bf16.msra.mxu0 %v7807
        %8132 = vmatpush.bf16.msra.mxu0 %v7803
        %8133 = vmatpush.bf16.msra.mxu0 %v7799
        %8134 = vmatpush.bf16.msra.mxu0 %v7795
        %8135 = vmatpush.bf16.msra.mxu0 %v7791
        %8136 = vmatpush.bf16.msra.mxu0 %v7787
        %8137 = vmatpush.bf16.msra.mxu0 %v7783
        %8138 = vmatpush.bf16.msra.mxu0 %v7779
        %8139 = vmatmul.bf16.gmra.mxu0 %v7291
        %v8140 = vpop.f32.mrf.mxu0
        %v8141 = vadd.f32 %v8128, %v8140
        %v8142 = vpop.f32.mrf.mxu0
        %8143 = vdwg.mxu0
        %8144 = vst [vmem:[%s328] sm:$0xff] %v7985
        %8145 = vst [vmem:[%s328 + $0x8] sm:$0xff] %v8037
        %8146 = vst [vmem:[%s328 + $0x10] sm:$0xff] %v8089
        %8147 = vst [vmem:[%s328 + $0x18] sm:$0xff] %v8141
        %s8148 = sand.u32 %s225, 1
        %s8149 = scalar_lea.sflag [#allocation6], %s8148
        %s8150 = sand.u32 %s225, 1
        %s8151 = smul.addr %s8150, 32
        %s8152 = scalar_lea.vmem [#allocation5], %s8151
        // Predicated region
        $region57: #{eeg_encoder_forward.1} parent=55 // pred_check
          %p8153 = pneg %p235
        $region58: #{eeg_encoder_forward.1} parent=55 // pred_check_branch
          %8155 = sbr.rel (%p8153) target = $region60
        $region59: #{eeg_encoder_forward.1} parent=55 // pred_region
          %8157 = vsyncadd %s8149, 0
          %s8158 = smul.addr %s23, 4
          %s8159 = smul.addr %s8158, 8
          %s8160 = scalar_lea.hbm %s9, %s8159
          %s8162 = sshll.u32 %s8152, 4
          %s8163 = int_to_ptr.vmem [resolvable:$true] %s8162
          %s8164 = sshll.u32 %s8160, 4
          %s8165 = int_to_ptr.hbm [resolvable:$true] %s8164
          %8167 = dma.vmem_to_hbm [thread:$0]  %s8163, 512, %s8165, %s8149
        $region60: #{eeg_encoder_forward.1} parent=55 // pred_fallthru
          _
      $region56: #{eeg_encoder_forward.1} parent=5 // pred_fallthru
        _
      %p8168 = scmp.le.s32.totalorder 2, %s18
      // Predicated region
      $region61: #{eeg_encoder_forward.1} parent=5 // pred_check
        %p8169 = pneg %p8168
      $region62: #{eeg_encoder_forward.1} parent=5 // pred_check_branch
        %8171 = sbr.rel (%p8169) target = $region64
      $region63: #{eeg_encoder_forward.1} parent=5 // pred_region
        %s8172 = ssub.s32 %s18, 2
        // Predicated region
        $region65: #{eeg_encoder_forward.1} parent=63 // pred_check
          %p8173 = pneg %p241
        $region66: #{eeg_encoder_forward.1} parent=63 // pred_check_branch
          %8175 = sbr.rel (%p8173) target = $region68
        $region67: #{eeg_encoder_forward.1} parent=63 // pred_region
          %s8176 = sand.u32 %s226, 1
          %s8177 = scalar_lea.sflag [#allocation6], %s8176
          %s8178 = sand.u32 %s226, 1
          %s8179 = smul.addr %s8178, 32
          %s8180 = scalar_lea.vmem [#allocation5], %s8179
          %8182 = dma.done %s8177, 512
        $region68: #{eeg_encoder_forward.1} parent=63 // pred_fallthru
          _
      $region64: #{eeg_encoder_forward.1} parent=5 // pred_fallthru
        _
    $region6: #{eeg_encoder_forward.1} parent=1 // loop_footer
      %s22 = sadd.s32 1, %s18
    $region7: #{eeg_encoder_forward.1} parent=1 // loop_footer_branch
      %17 = sbr.rel target = $region3
    $region8: #{eeg_encoder_forward.1} parent=1 // loop_exit
      _
    %8183 = vsyncpa [#allocation6], 1
    %s8184 = scalar_lea.sflag [#allocation6], 1
    %8185 = vsyncpa %s8184, 1

</llo_original>
